<compile_context>
chip_gen: v7x
topology: tpu7x:2x2x1
jax: 0.10.0
libtpu: 0.0.40
codegen_flags: <defaults>
</compile_context>

<pallas_src>
import math

import numpy as np
import jax
import jax.numpy as jnp
from jax.experimental import pallas as pl
from jax.experimental.pallas import tpu as pltpu

MXU_DTYPE = jnp.bfloat16      # MXU operand dtype (f32 accumulate)
ACT_DTYPE = jnp.bfloat16      # inter-layer activation storage dtype
LN_EPS = 1e-5


def _round_up(x, m):
    return (x + m - 1) // m * m


def fused_conv_ln_relu(x, w_oihw, b, *, stride, pad, pad_mode,
                       pre_ln=None, post_ln=None, residual=None,
                       out_dtype=ACT_DTYPE, eps=LN_EPS):
    """One fused S_Encoder layer as a single pallas_call.

        y = [post-LN+ReLU]( conv(pad([pre-LN+ReLU](x))) + bias [+ residual] )

    x: (N, Cin, H, W); w_oihw: (Cout, Cin, K, K); b: (Cout,)
    pre_ln / post_ln: optional (gamma, beta) of the module's custom LayerNorm.
    residual: optional (N, Cout, Ho, Wo) skip added after the conv.
    Returns (N, Cout, Ho, Wo) in out_dtype.
    """
    N, Cin, H, W = x.shape
    Cout, _, K, _ = w_oihw.shape
    assert pre_ln is None or (stride == 1 and pad_mode == "reflect"), \
        "pre-LN fusion relies on reflect padding commuting with pointwise LN/ReLU"

    # ---- wrapper-side layout glue (pad / space-to-depth / flatten / cast) ----
    xp = jnp.pad(x, ((0, 0), (0, 0), (pad, pad), (pad, pad)), mode=pad_mode)
    Hp, Wp = H + 2 * pad, W + 2 * pad

    if stride == 1:
        keff, cin_eff, hpe, wpe = K, Cin, Hp, Wp
        xe = xp
        wk = jnp.transpose(w_oihw, (2, 3, 0, 1)).reshape(K * K, Cout, Cin)
    else:  # stride 2: phase (space-to-depth) decomposition -> stride-1 conv
        assert stride == 2 and K % 2 == 0 and Hp % 2 == 0 and Wp % 2 == 0
        keff, cin_eff, hpe, wpe = K // 2, 4 * Cin, Hp // 2, Wp // 2
        xe = xp.reshape(N, Cin, hpe, 2, wpe, 2)
        xe = xe.transpose(0, 3, 5, 1, 2, 4).reshape(N, cin_eff, hpe, wpe)
        w2 = w_oihw.reshape(Cout, Cin, keff, 2, keff, 2)
        w2 = w2.transpose(0, 3, 5, 1, 2, 4).reshape(Cout, cin_eff, keff, keff)
        wk = jnp.transpose(w2, (2, 3, 0, 1)).reshape(keff * keff, Cout, cin_eff)

    kk = keff * keff
    ho, wo = hpe - keff + 1, wpe - keff + 1
    sp = hpe * wpe
    # Flat-spatial conv: output (i, j) lives at lane t = i*wpe + j; lanes with
    # (t % wpe) >= wo are row-wrap garbage and get masked / stripped.
    L = (ho - 1) * wpe + wo
    L_pad = _round_up(L, 128)                       # lane-dense output stores
    max_off = (keff - 1) * (wpe + 1)
    sp_in = _round_up(max(sp, max_off + L_pad), 128)
    cin_p = _round_up(cin_eff, 16)                  # bf16 sublane packing

    xflat = xe.reshape(N, cin_eff, sp).astype(MXU_DTYPE)
    xflat = jnp.pad(xflat, ((0, 0), (0, cin_p - cin_eff), (0, sp_in - sp)))
    wk = jnp.pad(wk, ((0, 0), (0, 0), (0, cin_p - cin_eff))).astype(MXU_DTYPE)
    bias = b.reshape(Cout, 1).astype(jnp.float32)

    args = [xflat, wk, bias]
    in_specs = [
        pl.BlockSpec((1, cin_p, sp_in), lambda n: (n, 0, 0)),
        pl.BlockSpec((kk, Cout, cin_p), lambda n: (0, 0, 0)),   # VMEM-resident
        pl.BlockSpec((Cout, 1), lambda n: (0, 0)),              # VMEM-resident
    ]

    pre_count = float(Cin * H * W)
    if pre_ln is not None:
        # mask of real (unpadded, real-channel) input elements for the stats
        m = np.zeros((cin_p, hpe, wpe), np.float32)
        m[:Cin, pad:pad + H, pad:pad + W] = 1.0
        m = np.pad(m.reshape(cin_p, sp), ((0, 0), (0, sp_in - sp)))
        g = jnp.pad(pre_ln[0].reshape(Cin, 1).astype(jnp.float32),
                    ((0, cin_p - Cin), (0, 0)))
        be = jnp.pad(pre_ln[1].reshape(Cin, 1).astype(jnp.float32),
                     ((0, cin_p - Cin), (0, 0)))
        args += [jnp.asarray(m), g, be]
        in_specs += [pl.BlockSpec((cin_p, sp_in), lambda n: (0, 0)),
                     pl.BlockSpec((cin_p, 1), lambda n: (0, 0)),
                     pl.BlockSpec((cin_p, 1), lambda n: (0, 0))]

    post_count = float(Cout * ho * wo)
    if post_ln is not None:
        mo = np.zeros((ho, wpe), np.float32)
        mo[:, :wo] = 1.0
        mo = np.pad(mo.reshape(ho * wpe)[:L], (0, L_pad - L)).reshape(1, L_pad)
        g = post_ln[0].reshape(Cout, 1).astype(jnp.float32)
        be = post_ln[1].reshape(Cout, 1).astype(jnp.float32)
        args += [jnp.asarray(mo), g, be]
        in_specs += [pl.BlockSpec((1, L_pad), lambda n: (0, 0)),
                     pl.BlockSpec((Cout, 1), lambda n: (0, 0)),
                     pl.BlockSpec((Cout, 1), lambda n: (0, 0))]

    if residual is not None:
        r = jnp.pad(residual.astype(ACT_DTYPE),
                    ((0, 0), (0, 0), (0, 0), (0, wpe - wo)))
        r = r.reshape(N, Cout, ho * wpe)
        if ho * wpe >= L_pad:
            r = r[:, :, :L_pad]
        else:
            r = jnp.pad(r, ((0, 0), (0, 0), (0, L_pad - ho * wpe)))
        args += [r]
        in_specs += [pl.BlockSpec((1, Cout, L_pad), lambda n: (n, 0, 0))]

    def kernel(*refs):
        it = iter(refs)
        x_ref, w_ref, b_ref = next(it), next(it), next(it)
        if pre_ln is not None:
            mpre_ref, gpre_ref, bpre_ref = next(it), next(it), next(it)
        if post_ln is not None:
            mpost_ref, gpost_ref, bpost_ref = next(it), next(it), next(it)
        if residual is not None:
            r_ref = next(it)
        o_ref = next(it)

        xin = x_ref[0]                                   # (cin_p, sp_in) bf16

        if pre_ln is not None:
            # Custom LayerNorm + ReLU fused as the conv prologue.  Stats over
            # interior elements only (two-pass, f32, unbiased, /(std+eps)).
            xf = xin.astype(jnp.float32)
            msk = mpre_ref[...]
            mean = jnp.sum(xf * msk, axis=(0, 1), keepdims=True) / pre_count
            d = (xf - mean) * msk
            var = jnp.sum(d * d, axis=(0, 1), keepdims=True) / max(pre_count - 1.0, 1.0)
            inv = 1.0 / (jnp.sqrt(var) + eps)
            xf = (xf - mean) * inv * gpre_ref[...] + bpre_ref[...]
            xin = jnp.maximum(xf, 0.0).astype(MXU_DTYPE)

        # Conv = keff*keff shifted lane-slices -> MXU matmuls, f32 accumulate.
        acc = jnp.dot(w_ref[0], xin[:, 0:L_pad],
                      preferred_element_type=jnp.float32)
        for k in range(1, kk):
            off = (k // keff) * wpe + (k % keff)
            acc = acc + jnp.dot(w_ref[k], xin[:, off:off + L_pad],
                                preferred_element_type=jnp.float32)
        acc = acc + b_ref[...]

        if residual is not None:
            acc = acc + r_ref[0].astype(jnp.float32)

        if post_ln is not None:
            # Custom LayerNorm + ReLU fused as the conv epilogue (stats over the
            # valid output lanes only; garbage lanes are stripped outside).
            msk = mpost_ref[...]
            mean = jnp.sum(acc * msk, axis=(0, 1), keepdims=True) / post_count
            d = (acc - mean) * msk
            var = jnp.sum(d * d, axis=(0, 1), keepdims=True) / max(post_count - 1.0, 1.0)
            inv = 1.0 / (jnp.sqrt(var) + eps)
            acc = (acc - mean) * inv * gpost_ref[...] + bpost_ref[...]
            acc = jnp.maximum(acc, 0.0)

        o_ref[0] = acc.astype(o_ref.dtype)

    # Conservative, shape-derived VMEM budget (safe on v5e/v6e/v7x alike).
    est = (2 * cin_p * sp_in * 2 + kk * Cout * cin_p * 2
           + cin_p * sp_in * 4 + 4 * Cout * L_pad * 4)
    vmem_limit = int(min(48 * 2 ** 20, max(16 * 2 ** 20, 8 * est)))

    out = pl.pallas_call(
        kernel,
        out_shape=jax.ShapeDtypeStruct((N, Cout, L_pad), out_dtype),
        grid=(N,),
        in_specs=in_specs,
        out_specs=pl.BlockSpec((1, Cout, L_pad), lambda n: (n, 0, 0)),
        compiler_params=pltpu.CompilerParams(
            dimension_semantics=("parallel",),
            vmem_limit_bytes=vmem_limit),
    )(*args)

    # Strip the row-stride garbage lanes (wrapper glue; fuses with the next
    # layer's pad/cast in XLA).
    out = out[:, :, :L]
    out = jnp.pad(out, ((0, 0), (0, 0), (0, ho * wpe - L)))
    out = out.reshape(N, Cout, ho, wpe)[:, :, :, :wo]
    return out


# ------------------------- parameters & forward ------------------------------

def init_params(key, inc=3, depth=3, ndf=8):
    keys = iter(jax.random.split(key, 64))
    nk = lambda: next(keys)

    def conv_p(K, cin, cout):
        std = math.sqrt(2.0 / (cin * K * K + cout * K * K))   # xavier_normal_
        return {"w": jax.random.normal(nk(), (cout, cin, K, K), jnp.float32) * std,
                "b": jnp.zeros((cout,), jnp.float32)}

    def ln_p(c):
        return {"g": jax.random.uniform(nk(), (c,), jnp.float32),
                "b": jnp.zeros((c,), jnp.float32)}

    p = {}
    c = ndf
    p["stem_conv"] = conv_p(3, inc, c)
    p["stem_ln"] = ln_p(c)
    p["down"] = []
    for _ in range(depth - 1):
        p["down"].append({"conv": conv_p(4, c, c * 2), "ln": ln_p(c * 2)})
        c *= 2
    p["mid_conv"] = conv_p(3, c, c * 2)
    c *= 2
    p["res"] = [{"ln1": ln_p(c), "conv1": conv_p(3, c, c),
                 "ln2": ln_p(c), "conv2": conv_p(3, c, c)} for _ in range(3)]
    p["final_ln"] = ln_p(c)
    p["final_conv"] = conv_p(3, c, c)
    return p


def s_encoder_forward(x_nchw, params):
    p = params
    x = x_nchw.astype(jnp.float32)   # NCHW throughout

    # conv_Nolinear(inc, ndf, 3, 1, 1, 'LN'): ReflPad, Conv3x3/s1, LN, ReLU
    x = fused_conv_ln_relu(x, p["stem_conv"]["w"], p["stem_conv"]["b"],
                           stride=1, pad=1, pad_mode="reflect",
                           post_ln=(p["stem_ln"]["g"], p["stem_ln"]["b"]))

    # (depth-1) x conv_Nolinear(c, 2c, 4, 2, 1, 'LN'): ReflPad, Conv4x4/s2, LN, ReLU
    for d in p["down"]:
        x = fused_conv_ln_relu(x, d["conv"]["w"], d["conv"]["b"],
                               stride=2, pad=1, pad_mode="reflect",
                               post_ln=(d["ln"]["g"], d["ln"]["b"]))

    # plain Conv2d(c, 2c, 3, 1, 1): zero pad, no norm, no ReLU
    x = fused_conv_ln_relu(x, p["mid_conv"]["w"], p["mid_conv"]["b"],
                           stride=1, pad=1, pad_mode="constant")

    # 3 x ResBlock(2c, 'LN'): [LN,ReLU,Conv3x3] x 2 + skip  (2 fused calls each)
    # TODO(synk): fuse each whole ResBlock (or the full tail) into one call by
    # reflect-padding the intermediate activation inside VMEM.
    for r in p["res"]:
        skip = x
        h = fused_conv_ln_relu(x, r["conv1"]["w"], r["conv1"]["b"],
                               stride=1, pad=1, pad_mode="reflect",
                               pre_ln=(r["ln1"]["g"], r["ln1"]["b"]))
        x = fused_conv_ln_relu(h, r["conv2"]["w"], r["conv2"]["b"],
                               stride=1, pad=1, pad_mode="reflect",
                               pre_ln=(r["ln2"]["g"], r["ln2"]["b"]),
                               residual=skip)

    # nolinear_Conv(2c, 2c, 3, 1, 1, 'LN'): LN, ReLU, ReflPad, Conv3x3
    x = fused_conv_ln_relu(x, p["final_conv"]["w"], p["final_conv"]["b"],
                           stride=1, pad=1, pad_mode="reflect",
                           pre_ln=(p["final_ln"]["g"], p["final_ln"]["b"]),
                           out_dtype=jnp.float32)
    return x  # NCHW


# ------------------------- plain-JAX f32 reference ---------------------------

def _conv_ref(x, w, b, stride, pad, pad_mode):
    xp = jnp.pad(x, ((0, 0), (0, 0), (pad, pad), (pad, pad)), mode=pad_mode)
    y = jax.lax.conv_general_dilated(
        xp, w, window_strides=(stride, stride), padding="VALID",
        dimension_numbers=("NCHW", "OIHW", "NCHW"))
    return y + b.reshape(1, -1, 1, 1)


def _ln_relu_ref(x, g, bt, relu=True, eps=LN_EPS):
    n = x.shape[0]
    xf = x.reshape(n, -1)
    mean = xf.mean(axis=1).reshape(n, 1, 1, 1)
    std = jnp.std(xf, axis=1, ddof=1).reshape(n, 1, 1, 1)
    y = (x - mean) / (std + eps)
    y = y * g.reshape(1, -1, 1, 1) + bt.reshape(1, -1, 1, 1)
    return jnp.maximum(y, 0.0) if relu else y


def s_encoder_reference(x, p):
    x = x.astype(jnp.float32)
    x = _conv_ref(x, p["stem_conv"]["w"], p["stem_conv"]["b"], 1, 1, "reflect")
    x = _ln_relu_ref(x, p["stem_ln"]["g"], p["stem_ln"]["b"])
    for d in p["down"]:
        x = _conv_ref(x, d["conv"]["w"], d["conv"]["b"], 2, 1, "reflect")
        x = _ln_relu_ref(x, d["ln"]["g"], d["ln"]["b"])
    x = _conv_ref(x, p["mid_conv"]["w"], p["mid_conv"]["b"], 1, 1, "constant")
    for r in p["res"]:
        skip = x
        h = _ln_relu_ref(x, r["ln1"]["g"], r["ln1"]["b"])
        h = _conv_ref(h, r["conv1"]["w"], r["conv1"]["b"], 1, 1, "reflect")
        h = _ln_relu_ref(h, r["ln2"]["g"], r["ln2"]["b"])
        x = _conv_ref(h, r["conv2"]["w"], r["conv2"]["b"], 1, 1, "reflect") + skip
    x = _ln_relu_ref(x, p["final_ln"]["g"], p["final_ln"]["b"])
    x = _conv_ref(x, p["final_conv"]["w"], p["final_conv"]["b"], 1, 1, "reflect")
    return x


if __name__ == "__main__":
    key = jax.random.PRNGKey(0)
    pkey, xkey = jax.random.split(key)

    # Small but shape-consistent config: S_Encoder(inc=3, depth=3, ndf=8)
    inc, depth, ndf = 3, 3, 8
    params = init_params(pkey, inc=inc, depth=depth, ndf=ndf)
    x = jax.random.normal(xkey, (2, inc, 16, 16), jnp.float32)   # NCHW

    fwd = jax.jit(s_encoder_forward)
    y = fwd(x, params)
    jax.block_until_ready(y)

    c_out = ndf * (2 ** (depth - 1)) * 2            # 64
    s_out = 16 // (2 ** (depth - 1))                # 4
    assert y.shape == (2, c_out, s_out, s_out), y.shape
    assert y.dtype == jnp.float32
    assert bool(jnp.all(jnp.isfinite(y)))

    # End-to-end check against a plain-JAX f32 reference; the tolerance covers
    # the deliberate bf16 activation / MXU-operand precision of the Pallas path.
    y_ref = jax.jit(s_encoder_reference)(x, params)
    jax.block_until_ready(y_ref)
    rel = float(jnp.linalg.norm(y - y_ref) / (jnp.linalg.norm(y_ref) + 1e-12))
    assert rel < 0.1, f"relative L2 error vs reference too large: {rel}"

    print("KERNEL_OK")
</pallas_src>

<mosaic_0001>
module attributes {stable_mosaic.version = 11 : i64} {
  func.func @kernel(%arg0: i32, %arg1: memref<1x16x512xbf16, #tpu.memory_space<vmem>>, %arg2: memref<9x8x16xbf16, #tpu.memory_space<vmem>>, %arg3: memref<8x1xf32, #tpu.memory_space<vmem>>, %arg4: memref<1x384xf32, #tpu.memory_space<vmem>>, %arg5: memref<8x1xf32, #tpu.memory_space<vmem>>, %arg6: memref<8x1xf32, #tpu.memory_space<vmem>>, %arg7: memref<1x8x384xbf16, #tpu.memory_space<vmem>>) attributes {dimension_semantics = [#tpu.dimension_semantics<parallel>], iteration_bounds = array<i64: 2>, scalar_prefetch = 0 : i64, scratch_operands = 0 : i64, tpu.core_type = #tpu.core_type<tc>, window_params = [{transform_indices = @transform_0, window_bounds = array<i64: 1, 16, 512>}, {pipeline_mode = #tpu.pipeline_mode<synchronous>, transform_indices = @transform_1, window_bounds = array<i64: 9, 8, 16>}, {pipeline_mode = #tpu.pipeline_mode<synchronous>, transform_indices = @transform_2, window_bounds = array<i64: 8, 1>}, {pipeline_mode = #tpu.pipeline_mode<synchronous>, transform_indices = @transform_3, window_bounds = array<i64: 1, 384>}, {pipeline_mode = #tpu.pipeline_mode<synchronous>, transform_indices = @transform_4, window_bounds = array<i64: 8, 1>}, {pipeline_mode = #tpu.pipeline_mode<synchronous>, transform_indices = @transform_5, window_bounds = array<i64: 8, 1>}, {transform_indices = @transform_6, window_bounds = array<i64: 1, 8, 384>}]} {
    %c0 = arith.constant 0 : index
    %c0_0 = arith.constant 0 : index
    %c0_1 = arith.constant 0 : index
    %0 = vector.load %arg1[%c0, %c0_0, %c0_1] : memref<1x16x512xbf16, #tpu.memory_space<vmem>>, vector<1x16x512xbf16>
    %1 = vector.shape_cast %0 : vector<1x16x512xbf16> to vector<16x512xbf16>
    %c0_2 = arith.constant 0 : index
    %c0_3 = arith.constant 0 : index
    %c0_4 = arith.constant 0 : index
    %2 = vector.load %arg2[%c0_2, %c0_3, %c0_4] : memref<9x8x16xbf16, #tpu.memory_space<vmem>>, vector<1x8x16xbf16>
    %3 = vector.shape_cast %2 : vector<1x8x16xbf16> to vector<8x16xbf16>
    %4 = vector.extract_strided_slice %1 {offsets = [0, 0], sizes = [16, 384], strides = [1, 1]} : vector<16x512xbf16> to vector<16x384xbf16>
    %cst = arith.constant dense<0.000000e+00> : vector<8x384xf32>
    %5 = tpu.matmul %3, %4, %cst {dimension_numbers = #tpu.dot_dimension_numbers<[1], [0], [0], [1], [0, 0, 1, 1], [], []>} : vector<8x16xbf16>, vector<16x384xbf16>, vector<8x384xf32> -> vector<8x384xf32>
    %c1 = arith.constant 1 : index
    %c0_5 = arith.constant 0 : index
    %c0_6 = arith.constant 0 : index
    %6 = vector.load %arg2[%c1, %c0_5, %c0_6] : memref<9x8x16xbf16, #tpu.memory_space<vmem>>, vector<1x8x16xbf16>
    %7 = vector.shape_cast %6 : vector<1x8x16xbf16> to vector<8x16xbf16>
    %8 = vector.extract_strided_slice %1 {offsets = [0, 1], sizes = [16, 384], strides = [1, 1]} : vector<16x512xbf16> to vector<16x384xbf16>
    %cst_7 = arith.constant dense<0.000000e+00> : vector<8x384xf32>
    %9 = tpu.matmul %7, %8, %cst_7 {dimension_numbers = #tpu.dot_dimension_numbers<[1], [0], [0], [1], [0, 0, 1, 1], [], []>} : vector<8x16xbf16>, vector<16x384xbf16>, vector<8x384xf32> -> vector<8x384xf32>
    %10 = arith.addf %5, %9 : vector<8x384xf32>
    %c2 = arith.constant 2 : index
    %c0_8 = arith.constant 0 : index
    %c0_9 = arith.constant 0 : index
    %11 = vector.load %arg2[%c2, %c0_8, %c0_9] : memref<9x8x16xbf16, #tpu.memory_space<vmem>>, vector<1x8x16xbf16>
    %12 = vector.shape_cast %11 : vector<1x8x16xbf16> to vector<8x16xbf16>
    %13 = vector.extract_strided_slice %1 {offsets = [0, 2], sizes = [16, 384], strides = [1, 1]} : vector<16x512xbf16> to vector<16x384xbf16>
    %cst_10 = arith.constant dense<0.000000e+00> : vector<8x384xf32>
    %14 = tpu.matmul %12, %13, %cst_10 {dimension_numbers = #tpu.dot_dimension_numbers<[1], [0], [0], [1], [0, 0, 1, 1], [], []>} : vector<8x16xbf16>, vector<16x384xbf16>, vector<8x384xf32> -> vector<8x384xf32>
    %15 = arith.addf %10, %14 : vector<8x384xf32>
    %c3 = arith.constant 3 : index
    %c0_11 = arith.constant 0 : index
    %c0_12 = arith.constant 0 : index
    %16 = vector.load %arg2[%c3, %c0_11, %c0_12] : memref<9x8x16xbf16, #tpu.memory_space<vmem>>, vector<1x8x16xbf16>
    %17 = vector.shape_cast %16 : vector<1x8x16xbf16> to vector<8x16xbf16>
    %18 = vector.extract_strided_slice %1 {offsets = [0, 18], sizes = [16, 384], strides = [1, 1]} : vector<16x512xbf16> to vector<16x384xbf16>
    %cst_13 = arith.constant dense<0.000000e+00> : vector<8x384xf32>
    %19 = tpu.matmul %17, %18, %cst_13 {dimension_numbers = #tpu.dot_dimension_numbers<[1], [0], [0], [1], [0, 0, 1, 1], [], []>} : vector<8x16xbf16>, vector<16x384xbf16>, vector<8x384xf32> -> vector<8x384xf32>
    %20 = arith.addf %15, %19 : vector<8x384xf32>
    %c4 = arith.constant 4 : index
    %c0_14 = arith.constant 0 : index
    %c0_15 = arith.constant 0 : index
    %21 = vector.load %arg2[%c4, %c0_14, %c0_15] : memref<9x8x16xbf16, #tpu.memory_space<vmem>>, vector<1x8x16xbf16>
    %22 = vector.shape_cast %21 : vector<1x8x16xbf16> to vector<8x16xbf16>
    %23 = vector.extract_strided_slice %1 {offsets = [0, 19], sizes = [16, 384], strides = [1, 1]} : vector<16x512xbf16> to vector<16x384xbf16>
    %cst_16 = arith.constant dense<0.000000e+00> : vector<8x384xf32>
    %24 = tpu.matmul %22, %23, %cst_16 {dimension_numbers = #tpu.dot_dimension_numbers<[1], [0], [0], [1], [0, 0, 1, 1], [], []>} : vector<8x16xbf16>, vector<16x384xbf16>, vector<8x384xf32> -> vector<8x384xf32>
    %25 = arith.addf %20, %24 : vector<8x384xf32>
    %c5 = arith.constant 5 : index
    %c0_17 = arith.constant 0 : index
    %c0_18 = arith.constant 0 : index
    %26 = vector.load %arg2[%c5, %c0_17, %c0_18] : memref<9x8x16xbf16, #tpu.memory_space<vmem>>, vector<1x8x16xbf16>
    %27 = vector.shape_cast %26 : vector<1x8x16xbf16> to vector<8x16xbf16>
    %28 = vector.extract_strided_slice %1 {offsets = [0, 20], sizes = [16, 384], strides = [1, 1]} : vector<16x512xbf16> to vector<16x384xbf16>
    %cst_19 = arith.constant dense<0.000000e+00> : vector<8x384xf32>
    %29 = tpu.matmul %27, %28, %cst_19 {dimension_numbers = #tpu.dot_dimension_numbers<[1], [0], [0], [1], [0, 0, 1, 1], [], []>} : vector<8x16xbf16>, vector<16x384xbf16>, vector<8x384xf32> -> vector<8x384xf32>
    %30 = arith.addf %25, %29 : vector<8x384xf32>
    %c6 = arith.constant 6 : index
    %c0_20 = arith.constant 0 : index
    %c0_21 = arith.constant 0 : index
    %31 = vector.load %arg2[%c6, %c0_20, %c0_21] : memref<9x8x16xbf16, #tpu.memory_space<vmem>>, vector<1x8x16xbf16>
    %32 = vector.shape_cast %31 : vector<1x8x16xbf16> to vector<8x16xbf16>
    %33 = vector.extract_strided_slice %1 {offsets = [0, 36], sizes = [16, 384], strides = [1, 1]} : vector<16x512xbf16> to vector<16x384xbf16>
    %cst_22 = arith.constant dense<0.000000e+00> : vector<8x384xf32>
    %34 = tpu.matmul %32, %33, %cst_22 {dimension_numbers = #tpu.dot_dimension_numbers<[1], [0], [0], [1], [0, 0, 1, 1], [], []>} : vector<8x16xbf16>, vector<16x384xbf16>, vector<8x384xf32> -> vector<8x384xf32>
    %35 = arith.addf %30, %34 : vector<8x384xf32>
    %c7 = arith.constant 7 : index
    %c0_23 = arith.constant 0 : index
    %c0_24 = arith.constant 0 : index
    %36 = vector.load %arg2[%c7, %c0_23, %c0_24] : memref<9x8x16xbf16, #tpu.memory_space<vmem>>, vector<1x8x16xbf16>
    %37 = vector.shape_cast %36 : vector<1x8x16xbf16> to vector<8x16xbf16>
    %38 = vector.extract_strided_slice %1 {offsets = [0, 37], sizes = [16, 384], strides = [1, 1]} : vector<16x512xbf16> to vector<16x384xbf16>
    %cst_25 = arith.constant dense<0.000000e+00> : vector<8x384xf32>
    %39 = tpu.matmul %37, %38, %cst_25 {dimension_numbers = #tpu.dot_dimension_numbers<[1], [0], [0], [1], [0, 0, 1, 1], [], []>} : vector<8x16xbf16>, vector<16x384xbf16>, vector<8x384xf32> -> vector<8x384xf32>
    %40 = arith.addf %35, %39 : vector<8x384xf32>
    %c8 = arith.constant 8 : index
    %c0_26 = arith.constant 0 : index
    %c0_27 = arith.constant 0 : index
    %41 = vector.load %arg2[%c8, %c0_26, %c0_27] : memref<9x8x16xbf16, #tpu.memory_space<vmem>>, vector<1x8x16xbf16>
    %42 = vector.shape_cast %41 : vector<1x8x16xbf16> to vector<8x16xbf16>
    %43 = vector.extract_strided_slice %1 {offsets = [0, 38], sizes = [16, 384], strides = [1, 1]} : vector<16x512xbf16> to vector<16x384xbf16>
    %cst_28 = arith.constant dense<0.000000e+00> : vector<8x384xf32>
    %44 = tpu.matmul %42, %43, %cst_28 {dimension_numbers = #tpu.dot_dimension_numbers<[1], [0], [0], [1], [0, 0, 1, 1], [], []>} : vector<8x16xbf16>, vector<16x384xbf16>, vector<8x384xf32> -> vector<8x384xf32>
    %45 = arith.addf %40, %44 : vector<8x384xf32>
    %c0_29 = arith.constant 0 : index
    %c0_30 = arith.constant 0 : index
    %46 = vector.load %arg3[%c0_29, %c0_30] : memref<8x1xf32, #tpu.memory_space<vmem>>, vector<8x1xf32>
    %47 = vector.broadcast %46 : vector<8x1xf32> to vector<8x384xf32>
    %48 = arith.addf %45, %47 : vector<8x384xf32>
    %c0_31 = arith.constant 0 : index
    %c0_32 = arith.constant 0 : index
    %49 = vector.load %arg4[%c0_31, %c0_32] : memref<1x384xf32, #tpu.memory_space<vmem>>, vector<1x384xf32>
    %50 = vector.broadcast %49 : vector<1x384xf32> to vector<8x384xf32>
    %51 = arith.mulf %48, %50 : vector<8x384xf32>
    %52 = vector.shape_cast %51 : vector<8x384xf32> to vector<1x8x384xf32>
    %cst_33 = arith.constant dense<0.000000e+00> : vector<1xf32>
    %53 = vector.multi_reduction <add>, %52, %cst_33 [1, 2] : vector<1x8x384xf32> to vector<1xf32>
    %54 = vector.shape_cast %53 : vector<1xf32> to vector<1x1x1xf32>
    %55 = vector.extract %54[0, 0, 0] : f32 from vector<1x1x1xf32>
    %56 = vector.broadcast %55 : f32 to vector<1x1xf32>
    %cst_34 = arith.constant 2.048000e+03 : f32
    %57 = vector.broadcast %cst_34 : f32 to vector<1x1xf32>
    %58 = arith.divf %56, %57 : vector<1x1xf32>
    %59 = vector.broadcast %58 : vector<1x1xf32> to vector<8x384xf32>
    %60 = arith.subf %48, %59 : vector<8x384xf32>
    %61 = vector.broadcast %49 : vector<1x384xf32> to vector<8x384xf32>
    %62 = arith.mulf %60, %61 : vector<8x384xf32>
    %63 = arith.mulf %62, %62 : vector<8x384xf32>
    %64 = vector.shape_cast %63 : vector<8x384xf32> to vector<1x8x384xf32>
    %cst_35 = arith.constant dense<0.000000e+00> : vector<1xf32>
    %65 = vector.multi_reduction <add>, %64, %cst_35 [1, 2] : vector<1x8x384xf32> to vector<1xf32>
    %66 = vector.shape_cast %65 : vector<1xf32> to vector<1x1x1xf32>
    %67 = vector.extract %66[0, 0, 0] : f32 from vector<1x1x1xf32>
    %68 = vector.broadcast %67 : f32 to vector<1x1xf32>
    %cst_36 = arith.constant 2.047000e+03 : f32
    %69 = vector.broadcast %cst_36 : f32 to vector<1x1xf32>
    %70 = arith.divf %68, %69 : vector<1x1xf32>
    %71 = math.sqrt %70 : vector<1x1xf32>
    %cst_37 = arith.constant 9.99999974E-6 : f32
    %72 = vector.broadcast %cst_37 : f32 to vector<1x1xf32>
    %73 = arith.addf %71, %72 : vector<1x1xf32>
    %cst_38 = arith.constant 1.000000e+00 : f32
    %74 = vector.broadcast %cst_38 : f32 to vector<1x1xf32>
    %75 = arith.divf %74, %73 : vector<1x1xf32>
    %76 = vector.broadcast %58 : vector<1x1xf32> to vector<8x384xf32>
    %77 = arith.subf %48, %76 : vector<8x384xf32>
    %78 = vector.broadcast %75 : vector<1x1xf32> to vector<8x384xf32>
    %79 = arith.mulf %77, %78 : vector<8x384xf32>
    %c0_39 = arith.constant 0 : index
    %c0_40 = arith.constant 0 : index
    %80 = vector.load %arg5[%c0_39, %c0_40] : memref<8x1xf32, #tpu.memory_space<vmem>>, vector<8x1xf32>
    %81 = vector.broadcast %80 : vector<8x1xf32> to vector<8x384xf32>
    %82 = arith.mulf %79, %81 : vector<8x384xf32>
    %c0_41 = arith.constant 0 : index
    %c0_42 = arith.constant 0 : index
    %83 = vector.load %arg6[%c0_41, %c0_42] : memref<8x1xf32, #tpu.memory_space<vmem>>, vector<8x1xf32>
    %84 = vector.broadcast %83 : vector<8x1xf32> to vector<8x384xf32>
    %85 = arith.addf %82, %84 : vector<8x384xf32>
    %cst_43 = arith.constant 0.000000e+00 : f32
    %86 = vector.broadcast %cst_43 : f32 to vector<8x384xf32>
    %87 = arith.maximumf %85, %86 : vector<8x384xf32>
    %88 = arith.truncf %87 : vector<8x384xf32> to vector<8x384xbf16>
    %c0_44 = arith.constant 0 : index
    %c0_45 = arith.constant 0 : index
    %c0_46 = arith.constant 0 : index
    %89 = vector.load %arg7[%c0_44, %c0_45, %c0_46] : memref<1x8x384xbf16, #tpu.memory_space<vmem>>, vector<1x8x384xbf16>
    %90 = vector.shape_cast %89 : vector<1x8x384xbf16> to vector<8x384xbf16>
    %91 = vector.shape_cast %88 : vector<8x384xbf16> to vector<1x8x384xbf16>
    tpu.vector_store %arg7[%c0_44, %c0_45, %c0_46], %91 {strides = array<i32>} : memref<1x8x384xbf16, #tpu.memory_space<vmem>>, vector<1x8x384xbf16>,
    return
  }
  func.func @transform_0(%arg0: i32) -> (i32, i32, i32) {
    %c0_i32 = arith.constant 0 : i32
    %c0_i32_0 = arith.constant 0 : i32
    %c0_i32_1 = arith.constant 0 : i32
    return %arg0, %c0_i32, %c0_i32_0 : i32, i32, i32
  }
  func.func @transform_1(%arg0: i32) -> (i32, i32, i32) {
    %c0_i32 = arith.constant 0 : i32
    %c0_i32_0 = arith.constant 0 : i32
    %c0_i32_1 = arith.constant 0 : i32
    %c0_i32_2 = arith.constant 0 : i32
    return %c0_i32, %c0_i32_0, %c0_i32_1 : i32, i32, i32
  }
  func.func @transform_2(%arg0: i32) -> (i32, i32) {
    %c0_i32 = arith.constant 0 : i32
    %c0_i32_0 = arith.constant 0 : i32
    %c0_i32_1 = arith.constant 0 : i32
    return %c0_i32, %c0_i32_0 : i32, i32
  }
  func.func @transform_3(%arg0: i32) -> (i32, i32) {
    %c0_i32 = arith.constant 0 : i32
    %c0_i32_0 = arith.constant 0 : i32
    %c0_i32_1 = arith.constant 0 : i32
    return %c0_i32, %c0_i32_0 : i32, i32
  }
  func.func @transform_4(%arg0: i32) -> (i32, i32) {
    %c0_i32 = arith.constant 0 : i32
    %c0_i32_0 = arith.constant 0 : i32
    %c0_i32_1 = arith.constant 0 : i32
    return %c0_i32, %c0_i32_0 : i32, i32
  }
  func.func @transform_5(%arg0: i32) -> (i32, i32) {
    %c0_i32 = arith.constant 0 : i32
    %c0_i32_0 = arith.constant 0 : i32
    %c0_i32_1 = arith.constant 0 : i32
    return %c0_i32, %c0_i32_0 : i32, i32
  }
  func.func @transform_6(%arg0: i32) -> (i32, i32, i32) {
    %c0_i32 = arith.constant 0 : i32
    %c0_i32_0 = arith.constant 0 : i32
    %c0_i32_1 = arith.constant 0 : i32
    return %arg0, %c0_i32, %c0_i32_0 : i32, i32, i32
  }
}

module attributes {stable_mosaic.version = 11 : i64} {
  func.func @kernel(%arg0: i32, %arg1: memref<1x32x256xbf16, #tpu.memory_space<vmem>>, %arg2: memref<4x16x32xbf16, #tpu.memory_space<vmem>>, %arg3: memref<16x1xf32, #tpu.memory_space<vmem>>, %arg4: memref<1x128xf32, #tpu.memory_space<vmem>>, %arg5: memref<16x1xf32, #tpu.memory_space<vmem>>, %arg6: memref<16x1xf32, #tpu.memory_space<vmem>>, %arg7: memref<1x16x128xbf16, #tpu.memory_space<vmem>>) attributes {dimension_semantics = [#tpu.dimension_semantics<parallel>], iteration_bounds = array<i64: 2>, scalar_prefetch = 0 : i64, scratch_operands = 0 : i64, tpu.core_type = #tpu.core_type<tc>, window_params = [{transform_indices = @transform_0, window_bounds = array<i64: 1, 32, 256>}, {pipeline_mode = #tpu.pipeline_mode<synchronous>, transform_indices = @transform_1, window_bounds = array<i64: 4, 16, 32>}, {pipeline_mode = #tpu.pipeline_mode<synchronous>, transform_indices = @transform_2, window_bounds = array<i64: 16, 1>}, {pipeline_mode = #tpu.pipeline_mode<synchronous>, transform_indices = @transform_3, window_bounds = array<i64: 1, 128>}, {pipeline_mode = #tpu.pipeline_mode<synchronous>, transform_indices = @transform_4, window_bounds = array<i64: 16, 1>}, {pipeline_mode = #tpu.pipeline_mode<synchronous>, transform_indices = @transform_5, window_bounds = array<i64: 16, 1>}, {transform_indices = @transform_6, window_bounds = array<i64: 1, 16, 128>}]} {
    %c0 = arith.constant 0 : index
    %c0_0 = arith.constant 0 : index
    %c0_1 = arith.constant 0 : index
    %0 = vector.load %arg1[%c0, %c0_0, %c0_1] : memref<1x32x256xbf16, #tpu.memory_space<vmem>>, vector<1x32x256xbf16>
    %1 = vector.shape_cast %0 : vector<1x32x256xbf16> to vector<32x256xbf16>
    %c0_2 = arith.constant 0 : index
    %c0_3 = arith.constant 0 : index
    %c0_4 = arith.constant 0 : index
    %2 = vector.load %arg2[%c0_2, %c0_3, %c0_4] : memref<4x16x32xbf16, #tpu.memory_space<vmem>>, vector<1x16x32xbf16>
    %3 = vector.shape_cast %2 : vector<1x16x32xbf16> to vector<16x32xbf16>
    %4 = vector.extract_strided_slice %1 {offsets = [0, 0], sizes = [32, 128], strides = [1, 1]} : vector<32x256xbf16> to vector<32x128xbf16>
    %cst = arith.constant dense<0.000000e+00> : vector<16x128xf32>
    %5 = tpu.matmul %3, %4, %cst {dimension_numbers = #tpu.dot_dimension_numbers<[1], [0], [0], [1], [0, 0, 1, 1], [], []>} : vector<16x32xbf16>, vector<32x128xbf16>, vector<16x128xf32> -> vector<16x128xf32>
    %c1 = arith.constant 1 : index
    %c0_5 = arith.constant 0 : index
    %c0_6 = arith.constant 0 : index
    %6 = vector.load %arg2[%c1, %c0_5, %c0_6] : memref<4x16x32xbf16, #tpu.memory_space<vmem>>, vector<1x16x32xbf16>
    %7 = vector.shape_cast %6 : vector<1x16x32xbf16> to vector<16x32xbf16>
    %8 = vector.extract_strided_slice %1 {offsets = [0, 1], sizes = [32, 128], strides = [1, 1]} : vector<32x256xbf16> to vector<32x128xbf16>
    %cst_7 = arith.constant dense<0.000000e+00> : vector<16x128xf32>
    %9 = tpu.matmul %7, %8, %cst_7 {dimension_numbers = #tpu.dot_dimension_numbers<[1], [0], [0], [1], [0, 0, 1, 1], [], []>} : vector<16x32xbf16>, vector<32x128xbf16>, vector<16x128xf32> -> vector<16x128xf32>
    %10 = arith.addf %5, %9 : vector<16x128xf32>
    %c2 = arith.constant 2 : index
    %c0_8 = arith.constant 0 : index
    %c0_9 = arith.constant 0 : index
    %11 = vector.load %arg2[%c2, %c0_8, %c0_9] : memref<4x16x32xbf16, #tpu.memory_space<vmem>>, vector<1x16x32xbf16>
    %12 = vector.shape_cast %11 : vector<1x16x32xbf16> to vector<16x32xbf16>
    %13 = vector.extract_strided_slice %1 {offsets = [0, 9], sizes = [32, 128], strides = [1, 1]} : vector<32x256xbf16> to vector<32x128xbf16>
    %cst_10 = arith.constant dense<0.000000e+00> : vector<16x128xf32>
    %14 = tpu.matmul %12, %13, %cst_10 {dimension_numbers = #tpu.dot_dimension_numbers<[1], [0], [0], [1], [0, 0, 1, 1], [], []>} : vector<16x32xbf16>, vector<32x128xbf16>, vector<16x128xf32> -> vector<16x128xf32>
    %15 = arith.addf %10, %14 : vector<16x128xf32>
    %c3 = arith.constant 3 : index
    %c0_11 = arith.constant 0 : index
    %c0_12 = arith.constant 0 : index
    %16 = vector.load %arg2[%c3, %c0_11, %c0_12] : memref<4x16x32xbf16, #tpu.memory_space<vmem>>, vector<1x16x32xbf16>
    %17 = vector.shape_cast %16 : vector<1x16x32xbf16> to vector<16x32xbf16>
    %18 = vector.extract_strided_slice %1 {offsets = [0, 10], sizes = [32, 128], strides = [1, 1]} : vector<32x256xbf16> to vector<32x128xbf16>
    %cst_13 = arith.constant dense<0.000000e+00> : vector<16x128xf32>
    %19 = tpu.matmul %17, %18, %cst_13 {dimension_numbers = #tpu.dot_dimension_numbers<[1], [0], [0], [1], [0, 0, 1, 1], [], []>} : vector<16x32xbf16>, vector<32x128xbf16>, vector<16x128xf32> -> vector<16x128xf32>
    %20 = arith.addf %15, %19 : vector<16x128xf32>
    %c0_14 = arith.constant 0 : index
    %c0_15 = arith.constant 0 : index
    %21 = vector.load %arg3[%c0_14, %c0_15] : memref<16x1xf32, #tpu.memory_space<vmem>>, vector<16x1xf32>
    %22 = vector.broadcast %21 : vector<16x1xf32> to vector<16x128xf32>
    %23 = arith.addf %20, %22 : vector<16x128xf32>
    %c0_16 = arith.constant 0 : index
    %c0_17 = arith.constant 0 : index
    %24 = vector.load %arg4[%c0_16, %c0_17] : memref<1x128xf32, #tpu.memory_space<vmem>>, vector<1x128xf32>
    %25 = vector.broadcast %24 : vector<1x128xf32> to vector<16x128xf32>
    %26 = arith.mulf %23, %25 : vector<16x128xf32>
    %27 = vector.shape_cast %26 : vector<16x128xf32> to vector<1x16x128xf32>
    %cst_18 = arith.constant dense<0.000000e+00> : vector<1xf32>
    %28 = vector.multi_reduction <add>, %27, %cst_18 [1, 2] : vector<1x16x128xf32> to vector<1xf32>
    %29 = vector.shape_cast %28 : vector<1xf32> to vector<1x1x1xf32>
    %30 = vector.extract %29[0, 0, 0] : f32 from vector<1x1x1xf32>
    %31 = vector.broadcast %30 : f32 to vector<1x1xf32>
    %cst_19 = arith.constant 1.024000e+03 : f32
    %32 = vector.broadcast %cst_19 : f32 to vector<1x1xf32>
    %33 = arith.divf %31, %32 : vector<1x1xf32>
    %34 = vector.broadcast %33 : vector<1x1xf32> to vector<16x128xf32>
    %35 = arith.subf %23, %34 : vector<16x128xf32>
    %36 = vector.broadcast %24 : vector<1x128xf32> to vector<16x128xf32>
    %37 = arith.mulf %35, %36 : vector<16x128xf32>
    %38 = arith.mulf %37, %37 : vector<16x128xf32>
    %39 = vector.shape_cast %38 : vector<16x128xf32> to vector<1x16x128xf32>
    %cst_20 = arith.constant dense<0.000000e+00> : vector<1xf32>
    %40 = vector.multi_reduction <add>, %39, %cst_20 [1, 2] : vector<1x16x128xf32> to vector<1xf32>
    %41 = vector.shape_cast %40 : vector<1xf32> to vector<1x1x1xf32>
    %42 = vector.extract %41[0, 0, 0] : f32 from vector<1x1x1xf32>
    %43 = vector.broadcast %42 : f32 to vector<1x1xf32>
    %cst_21 = arith.constant 1.023000e+03 : f32
    %44 = vector.broadcast %cst_21 : f32 to vector<1x1xf32>
    %45 = arith.divf %43, %44 : vector<1x1xf32>
    %46 = math.sqrt %45 : vector<1x1xf32>
    %cst_22 = arith.constant 9.99999974E-6 : f32
    %47 = vector.broadcast %cst_22 : f32 to vector<1x1xf32>
    %48 = arith.addf %46, %47 : vector<1x1xf32>
    %cst_23 = arith.constant 1.000000e+00 : f32
    %49 = vector.broadcast %cst_23 : f32 to vector<1x1xf32>
    %50 = arith.divf %49, %48 : vector<1x1xf32>
    %51 = vector.broadcast %33 : vector<1x1xf32> to vector<16x128xf32>
    %52 = arith.subf %23, %51 : vector<16x128xf32>
    %53 = vector.broadcast %50 : vector<1x1xf32> to vector<16x128xf32>
    %54 = arith.mulf %52, %53 : vector<16x128xf32>
    %c0_24 = arith.constant 0 : index
    %c0_25 = arith.constant 0 : index
    %55 = vector.load %arg5[%c0_24, %c0_25] : memref<16x1xf32, #tpu.memory_space<vmem>>, vector<16x1xf32>
    %56 = vector.broadcast %55 : vector<16x1xf32> to vector<16x128xf32>
    %57 = arith.mulf %54, %56 : vector<16x128xf32>
    %c0_26 = arith.constant 0 : index
    %c0_27 = arith.constant 0 : index
    %58 = vector.load %arg6[%c0_26, %c0_27] : memref<16x1xf32, #tpu.memory_space<vmem>>, vector<16x1xf32>
    %59 = vector.broadcast %58 : vector<16x1xf32> to vector<16x128xf32>
    %60 = arith.addf %57, %59 : vector<16x128xf32>
    %cst_28 = arith.constant 0.000000e+00 : f32
    %61 = vector.broadcast %cst_28 : f32 to vector<16x128xf32>
    %62 = arith.maximumf %60, %61 : vector<16x128xf32>
    %63 = arith.truncf %62 : vector<16x128xf32> to vector<16x128xbf16>
    %c0_29 = arith.constant 0 : index
    %c0_30 = arith.constant 0 : index
    %c0_31 = arith.constant 0 : index
    %64 = vector.load %arg7[%c0_29, %c0_30, %c0_31] : memref<1x16x128xbf16, #tpu.memory_space<vmem>>, vector<1x16x128xbf16>
    %65 = vector.shape_cast %64 : vector<1x16x128xbf16> to vector<16x128xbf16>
    %66 = vector.shape_cast %63 : vector<16x128xbf16> to vector<1x16x128xbf16>
    tpu.vector_store %arg7[%c0_29, %c0_30, %c0_31], %66 {strides = array<i32>} : memref<1x16x128xbf16, #tpu.memory_space<vmem>>, vector<1x16x128xbf16>,
    return
  }
  func.func @transform_0(%arg0: i32) -> (i32, i32, i32) {
    %c0_i32 = arith.constant 0 : i32
    %c0_i32_0 = arith.constant 0 : i32
    %c0_i32_1 = arith.constant 0 : i32
    return %arg0, %c0_i32, %c0_i32_0 : i32, i32, i32
  }
  func.func @transform_1(%arg0: i32) -> (i32, i32, i32) {
    %c0_i32 = arith.constant 0 : i32
    %c0_i32_0 = arith.constant 0 : i32
    %c0_i32_1 = arith.constant 0 : i32
    %c0_i32_2 = arith.constant 0 : i32
    return %c0_i32, %c0_i32_0, %c0_i32_1 : i32, i32, i32
  }
  func.func @transform_2(%arg0: i32) -> (i32, i32) {
    %c0_i32 = arith.constant 0 : i32
    %c0_i32_0 = arith.constant 0 : i32
    %c0_i32_1 = arith.constant 0 : i32
    return %c0_i32, %c0_i32_0 : i32, i32
  }
  func.func @transform_3(%arg0: i32) -> (i32, i32) {
    %c0_i32 = arith.constant 0 : i32
    %c0_i32_0 = arith.constant 0 : i32
    %c0_i32_1 = arith.constant 0 : i32
    return %c0_i32, %c0_i32_0 : i32, i32
  }
  func.func @transform_4(%arg0: i32) -> (i32, i32) {
    %c0_i32 = arith.constant 0 : i32
    %c0_i32_0 = arith.constant 0 : i32
    %c0_i32_1 = arith.constant 0 : i32
    return %c0_i32, %c0_i32_0 : i32, i32
  }
  func.func @transform_5(%arg0: i32) -> (i32, i32) {
    %c0_i32 = arith.constant 0 : i32
    %c0_i32_0 = arith.constant 0 : i32
    %c0_i32_1 = arith.constant 0 : i32
    return %c0_i32, %c0_i32_0 : i32, i32
  }
  func.func @transform_6(%arg0: i32) -> (i32, i32, i32) {
    %c0_i32 = arith.constant 0 : i32
    %c0_i32_0 = arith.constant 0 : i32
    %c0_i32_1 = arith.constant 0 : i32
    return %arg0, %c0_i32, %c0_i32_0 : i32, i32, i32
  }
}

module attributes {stable_mosaic.version = 11 : i64} {
  func.func @kernel(%arg0: i32, %arg1: memref<1x64x256xbf16, #tpu.memory_space<vmem>>, %arg2: memref<4x32x64xbf16, #tpu.memory_space<vmem>>, %arg3: memref<32x1xf32, #tpu.memory_space<vmem>>, %arg4: memref<1x128xf32, #tpu.memory_space<vmem>>, %arg5: memref<32x1xf32, #tpu.memory_space<vmem>>, %arg6: memref<32x1xf32, #tpu.memory_space<vmem>>, %arg7: memref<1x32x128xbf16, #tpu.memory_space<vmem>>) attributes {dimension_semantics = [#tpu.dimension_semantics<parallel>], iteration_bounds = array<i64: 2>, scalar_prefetch = 0 : i64, scratch_operands = 0 : i64, tpu.core_type = #tpu.core_type<tc>, window_params = [{transform_indices = @transform_0, window_bounds = array<i64: 1, 64, 256>}, {pipeline_mode = #tpu.pipeline_mode<synchronous>, transform_indices = @transform_1, window_bounds = array<i64: 4, 32, 64>}, {pipeline_mode = #tpu.pipeline_mode<synchronous>, transform_indices = @transform_2, window_bounds = array<i64: 32, 1>}, {pipeline_mode = #tpu.pipeline_mode<synchronous>, transform_indices = @transform_3, window_bounds = array<i64: 1, 128>}, {pipeline_mode = #tpu.pipeline_mode<synchronous>, transform_indices = @transform_4, window_bounds = array<i64: 32, 1>}, {pipeline_mode = #tpu.pipeline_mode<synchronous>, transform_indices = @transform_5, window_bounds = array<i64: 32, 1>}, {transform_indices = @transform_6, window_bounds = array<i64: 1, 32, 128>}]} {
    %c0 = arith.constant 0 : index
    %c0_0 = arith.constant 0 : index
    %c0_1 = arith.constant 0 : index
    %0 = vector.load %arg1[%c0, %c0_0, %c0_1] : memref<1x64x256xbf16, #tpu.memory_space<vmem>>, vector<1x64x256xbf16>
    %1 = vector.shape_cast %0 : vector<1x64x256xbf16> to vector<64x256xbf16>
    %c0_2 = arith.constant 0 : index
    %c0_3 = arith.constant 0 : index
    %c0_4 = arith.constant 0 : index
    %2 = vector.load %arg2[%c0_2, %c0_3, %c0_4] : memref<4x32x64xbf16, #tpu.memory_space<vmem>>, vector<1x32x64xbf16>
    %3 = vector.shape_cast %2 : vector<1x32x64xbf16> to vector<32x64xbf16>
    %4 = vector.extract_strided_slice %1 {offsets = [0, 0], sizes = [64, 128], strides = [1, 1]} : vector<64x256xbf16> to vector<64x128xbf16>
    %cst = arith.constant dense<0.000000e+00> : vector<32x128xf32>
    %5 = tpu.matmul %3, %4, %cst {dimension_numbers = #tpu.dot_dimension_numbers<[1], [0], [0], [1], [0, 0, 1, 1], [], []>} : vector<32x64xbf16>, vector<64x128xbf16>, vector<32x128xf32> -> vector<32x128xf32>
    %c1 = arith.constant 1 : index
    %c0_5 = arith.constant 0 : index
    %c0_6 = arith.constant 0 : index
    %6 = vector.load %arg2[%c1, %c0_5, %c0_6] : memref<4x32x64xbf16, #tpu.memory_space<vmem>>, vector<1x32x64xbf16>
    %7 = vector.shape_cast %6 : vector<1x32x64xbf16> to vector<32x64xbf16>
    %8 = vector.extract_strided_slice %1 {offsets = [0, 1], sizes = [64, 128], strides = [1, 1]} : vector<64x256xbf16> to vector<64x128xbf16>
    %cst_7 = arith.constant dense<0.000000e+00> : vector<32x128xf32>
    %9 = tpu.matmul %7, %8, %cst_7 {dimension_numbers = #tpu.dot_dimension_numbers<[1], [0], [0], [1], [0, 0, 1, 1], [], []>} : vector<32x64xbf16>, vector<64x128xbf16>, vector<32x128xf32> -> vector<32x128xf32>
    %10 = arith.addf %5, %9 : vector<32x128xf32>
    %c2 = arith.constant 2 : index
    %c0_8 = arith.constant 0 : index
    %c0_9 = arith.constant 0 : index
    %11 = vector.load %arg2[%c2, %c0_8, %c0_9] : memref<4x32x64xbf16, #tpu.memory_space<vmem>>, vector<1x32x64xbf16>
    %12 = vector.shape_cast %11 : vector<1x32x64xbf16> to vector<32x64xbf16>
    %13 = vector.extract_strided_slice %1 {offsets = [0, 5], sizes = [64, 128], strides = [1, 1]} : vector<64x256xbf16> to vector<64x128xbf16>
    %cst_10 = arith.constant dense<0.000000e+00> : vector<32x128xf32>
    %14 = tpu.matmul %12, %13, %cst_10 {dimension_numbers = #tpu.dot_dimension_numbers<[1], [0], [0], [1], [0, 0, 1, 1], [], []>} : vector<32x64xbf16>, vector<64x128xbf16>, vector<32x128xf32> -> vector<32x128xf32>
    %15 = arith.addf %10, %14 : vector<32x128xf32>
    %c3 = arith.constant 3 : index
    %c0_11 = arith.constant 0 : index
    %c0_12 = arith.constant 0 : index
    %16 = vector.load %arg2[%c3, %c0_11, %c0_12] : memref<4x32x64xbf16, #tpu.memory_space<vmem>>, vector<1x32x64xbf16>
    %17 = vector.shape_cast %16 : vector<1x32x64xbf16> to vector<32x64xbf16>
    %18 = vector.extract_strided_slice %1 {offsets = [0, 6], sizes = [64, 128], strides = [1, 1]} : vector<64x256xbf16> to vector<64x128xbf16>
    %cst_13 = arith.constant dense<0.000000e+00> : vector<32x128xf32>
    %19 = tpu.matmul %17, %18, %cst_13 {dimension_numbers = #tpu.dot_dimension_numbers<[1], [0], [0], [1], [0, 0, 1, 1], [], []>} : vector<32x64xbf16>, vector<64x128xbf16>, vector<32x128xf32> -> vector<32x128xf32>
    %20 = arith.addf %15, %19 : vector<32x128xf32>
    %c0_14 = arith.constant 0 : index
    %c0_15 = arith.constant 0 : index
    %21 = vector.load %arg3[%c0_14, %c0_15] : memref<32x1xf32, #tpu.memory_space<vmem>>, vector<32x1xf32>
    %22 = vector.broadcast %21 : vector<32x1xf32> to vector<32x128xf32>
    %23 = arith.addf %20, %22 : vector<32x128xf32>
    %c0_16 = arith.constant 0 : index
    %c0_17 = arith.constant 0 : index
    %24 = vector.load %arg4[%c0_16, %c0_17] : memref<1x128xf32, #tpu.memory_space<vmem>>, vector<1x128xf32>
    %25 = vector.broadcast %24 : vector<1x128xf32> to vector<32x128xf32>
    %26 = arith.mulf %23, %25 : vector<32x128xf32>
    %27 = vector.shape_cast %26 : vector<32x128xf32> to vector<1x32x128xf32>
    %cst_18 = arith.constant dense<0.000000e+00> : vector<1xf32>
    %28 = vector.multi_reduction <add>, %27, %cst_18 [1, 2] : vector<1x32x128xf32> to vector<1xf32>
    %29 = vector.shape_cast %28 : vector<1xf32> to vector<1x1x1xf32>
    %30 = vector.extract %29[0, 0, 0] : f32 from vector<1x1x1xf32>
    %31 = vector.broadcast %30 : f32 to vector<1x1xf32>
    %cst_19 = arith.constant 5.120000e+02 : f32
    %32 = vector.broadcast %cst_19 : f32 to vector<1x1xf32>
    %33 = arith.divf %31, %32 : vector<1x1xf32>
    %34 = vector.broadcast %33 : vector<1x1xf32> to vector<32x128xf32>
    %35 = arith.subf %23, %34 : vector<32x128xf32>
    %36 = vector.broadcast %24 : vector<1x128xf32> to vector<32x128xf32>
    %37 = arith.mulf %35, %36 : vector<32x128xf32>
    %38 = arith.mulf %37, %37 : vector<32x128xf32>
    %39 = vector.shape_cast %38 : vector<32x128xf32> to vector<1x32x128xf32>
    %cst_20 = arith.constant dense<0.000000e+00> : vector<1xf32>
    %40 = vector.multi_reduction <add>, %39, %cst_20 [1, 2] : vector<1x32x128xf32> to vector<1xf32>
    %41 = vector.shape_cast %40 : vector<1xf32> to vector<1x1x1xf32>
    %42 = vector.extract %41[0, 0, 0] : f32 from vector<1x1x1xf32>
    %43 = vector.broadcast %42 : f32 to vector<1x1xf32>
    %cst_21 = arith.constant 5.110000e+02 : f32
    %44 = vector.broadcast %cst_21 : f32 to vector<1x1xf32>
    %45 = arith.divf %43, %44 : vector<1x1xf32>
    %46 = math.sqrt %45 : vector<1x1xf32>
    %cst_22 = arith.constant 9.99999974E-6 : f32
    %47 = vector.broadcast %cst_22 : f32 to vector<1x1xf32>
    %48 = arith.addf %46, %47 : vector<1x1xf32>
    %cst_23 = arith.constant 1.000000e+00 : f32
    %49 = vector.broadcast %cst_23 : f32 to vector<1x1xf32>
    %50 = arith.divf %49, %48 : vector<1x1xf32>
    %51 = vector.broadcast %33 : vector<1x1xf32> to vector<32x128xf32>
    %52 = arith.subf %23, %51 : vector<32x128xf32>
    %53 = vector.broadcast %50 : vector<1x1xf32> to vector<32x128xf32>
    %54 = arith.mulf %52, %53 : vector<32x128xf32>
    %c0_24 = arith.constant 0 : index
    %c0_25 = arith.constant 0 : index
    %55 = vector.load %arg5[%c0_24, %c0_25] : memref<32x1xf32, #tpu.memory_space<vmem>>, vector<32x1xf32>
    %56 = vector.broadcast %55 : vector<32x1xf32> to vector<32x128xf32>
    %57 = arith.mulf %54, %56 : vector<32x128xf32>
    %c0_26 = arith.constant 0 : index
    %c0_27 = arith.constant 0 : index
    %58 = vector.load %arg6[%c0_26, %c0_27] : memref<32x1xf32, #tpu.memory_space<vmem>>, vector<32x1xf32>
    %59 = vector.broadcast %58 : vector<32x1xf32> to vector<32x128xf32>
    %60 = arith.addf %57, %59 : vector<32x128xf32>
    %cst_28 = arith.constant 0.000000e+00 : f32
    %61 = vector.broadcast %cst_28 : f32 to vector<32x128xf32>
    %62 = arith.maximumf %60, %61 : vector<32x128xf32>
    %63 = arith.truncf %62 : vector<32x128xf32> to vector<32x128xbf16>
    %c0_29 = arith.constant 0 : index
    %c0_30 = arith.constant 0 : index
    %c0_31 = arith.constant 0 : index
    %64 = vector.load %arg7[%c0_29, %c0_30, %c0_31] : memref<1x32x128xbf16, #tpu.memory_space<vmem>>, vector<1x32x128xbf16>
    %65 = vector.shape_cast %64 : vector<1x32x128xbf16> to vector<32x128xbf16>
    %66 = vector.shape_cast %63 : vector<32x128xbf16> to vector<1x32x128xbf16>
    tpu.vector_store %arg7[%c0_29, %c0_30, %c0_31], %66 {strides = array<i32>} : memref<1x32x128xbf16, #tpu.memory_space<vmem>>, vector<1x32x128xbf16>,
    return
  }
  func.func @transform_0(%arg0: i32) -> (i32, i32, i32) {
    %c0_i32 = arith.constant 0 : i32
    %c0_i32_0 = arith.constant 0 : i32
    %c0_i32_1 = arith.constant 0 : i32
    return %arg0, %c0_i32, %c0_i32_0 : i32, i32, i32
  }
  func.func @transform_1(%arg0: i32) -> (i32, i32, i32) {
    %c0_i32 = arith.constant 0 : i32
    %c0_i32_0 = arith.constant 0 : i32
    %c0_i32_1 = arith.constant 0 : i32
    %c0_i32_2 = arith.constant 0 : i32
    return %c0_i32, %c0_i32_0, %c0_i32_1 : i32, i32, i32
  }
  func.func @transform_2(%arg0: i32) -> (i32, i32) {
    %c0_i32 = arith.constant 0 : i32
    %c0_i32_0 = arith.constant 0 : i32
    %c0_i32_1 = arith.constant 0 : i32
    return %c0_i32, %c0_i32_0 : i32, i32
  }
  func.func @transform_3(%arg0: i32) -> (i32, i32) {
    %c0_i32 = arith.constant 0 : i32
    %c0_i32_0 = arith.constant 0 : i32
    %c0_i32_1 = arith.constant 0 : i32
    return %c0_i32, %c0_i32_0 : i32, i32
  }
  func.func @transform_4(%arg0: i32) -> (i32, i32) {
    %c0_i32 = arith.constant 0 : i32
    %c0_i32_0 = arith.constant 0 : i32
    %c0_i32_1 = arith.constant 0 : i32
    return %c0_i32, %c0_i32_0 : i32, i32
  }
  func.func @transform_5(%arg0: i32) -> (i32, i32) {
    %c0_i32 = arith.constant 0 : i32
    %c0_i32_0 = arith.constant 0 : i32
    %c0_i32_1 = arith.constant 0 : i32
    return %c0_i32, %c0_i32_0 : i32, i32
  }
  func.func @transform_6(%arg0: i32) -> (i32, i32, i32) {
    %c0_i32 = arith.constant 0 : i32
    %c0_i32_0 = arith.constant 0 : i32
    %c0_i32_1 = arith.constant 0 : i32
    return %arg0, %c0_i32, %c0_i32_0 : i32, i32, i32
  }
}

module attributes {stable_mosaic.version = 11 : i64} {
  func.func @kernel(%arg0: i32, %arg1: memref<1x32x256xbf16, #tpu.memory_space<vmem>>, %arg2: memref<9x64x32xbf16, #tpu.memory_space<vmem>>, %arg3: memref<64x1xf32, #tpu.memory_space<vmem>>, %arg4: memref<1x64x128xbf16, #tpu.memory_space<vmem>>) attributes {dimension_semantics = [#tpu.dimension_semantics<parallel>], iteration_bounds = array<i64: 2>, scalar_prefetch = 0 : i64, scratch_operands = 0 : i64, tpu.core_type = #tpu.core_type<tc>, window_params = [{transform_indices = @transform_0, window_bounds = array<i64: 1, 32, 256>}, {pipeline_mode = #tpu.pipeline_mode<synchronous>, transform_indices = @transform_1, window_bounds = array<i64: 9, 64, 32>}, {pipeline_mode = #tpu.pipeline_mode<synchronous>, transform_indices = @transform_2, window_bounds = array<i64: 64, 1>}, {transform_indices = @transform_3, window_bounds = array<i64: 1, 64, 128>}]} {
    %c0 = arith.constant 0 : index
    %c0_0 = arith.constant 0 : index
    %c0_1 = arith.constant 0 : index
    %0 = vector.load %arg1[%c0, %c0_0, %c0_1] : memref<1x32x256xbf16, #tpu.memory_space<vmem>>, vector<1x32x256xbf16>
    %1 = vector.shape_cast %0 : vector<1x32x256xbf16> to vector<32x256xbf16>
    %c0_2 = arith.constant 0 : index
    %c0_3 = arith.constant 0 : index
    %c0_4 = arith.constant 0 : index
    %2 = vector.load %arg2[%c0_2, %c0_3, %c0_4] : memref<9x64x32xbf16, #tpu.memory_space<vmem>>, vector<1x64x32xbf16>
    %3 = vector.shape_cast %2 : vector<1x64x32xbf16> to vector<64x32xbf16>
    %4 = vector.extract_strided_slice %1 {offsets = [0, 0], sizes = [32, 128], strides = [1, 1]} : vector<32x256xbf16> to vector<32x128xbf16>
    %cst = arith.constant dense<0.000000e+00> : vector<64x128xf32>
    %5 = tpu.matmul %3, %4, %cst {dimension_numbers = #tpu.dot_dimension_numbers<[1], [0], [0], [1], [0, 0, 1, 1], [], []>} : vector<64x32xbf16>, vector<32x128xbf16>, vector<64x128xf32> -> vector<64x128xf32>
    %c1 = arith.constant 1 : index
    %c0_5 = arith.constant 0 : index
    %c0_6 = arith.constant 0 : index
    %6 = vector.load %arg2[%c1, %c0_5, %c0_6] : memref<9x64x32xbf16, #tpu.memory_space<vmem>>, vector<1x64x32xbf16>
    %7 = vector.shape_cast %6 : vector<1x64x32xbf16> to vector<64x32xbf16>
    %8 = vector.extract_strided_slice %1 {offsets = [0, 1], sizes = [32, 128], strides = [1, 1]} : vector<32x256xbf16> to vector<32x128xbf16>
    %cst_7 = arith.constant dense<0.000000e+00> : vector<64x128xf32>
    %9 = tpu.matmul %7, %8, %cst_7 {dimension_numbers = #tpu.dot_dimension_numbers<[1], [0], [0], [1], [0, 0, 1, 1], [], []>} : vector<64x32xbf16>, vector<32x128xbf16>, vector<64x128xf32> -> vector<64x128xf32>
    %10 = arith.addf %5, %9 : vector<64x128xf32>
    %c2 = arith.constant 2 : index
    %c0_8 = arith.constant 0 : index
    %c0_9 = arith.constant 0 : index
    %11 = vector.load %arg2[%c2, %c0_8, %c0_9] : memref<9x64x32xbf16, #tpu.memory_space<vmem>>, vector<1x64x32xbf16>
    %12 = vector.shape_cast %11 : vector<1x64x32xbf16> to vector<64x32xbf16>
    %13 = vector.extract_strided_slice %1 {offsets = [0, 2], sizes = [32, 128], strides = [1, 1]} : vector<32x256xbf16> to vector<32x128xbf16>
    %cst_10 = arith.constant dense<0.000000e+00> : vector<64x128xf32>
    %14 = tpu.matmul %12, %13, %cst_10 {dimension_numbers = #tpu.dot_dimension_numbers<[1], [0], [0], [1], [0, 0, 1, 1], [], []>} : vector<64x32xbf16>, vector<32x128xbf16>, vector<64x128xf32> -> vector<64x128xf32>
    %15 = arith.addf %10, %14 : vector<64x128xf32>
    %c3 = arith.constant 3 : index
    %c0_11 = arith.constant 0 : index
    %c0_12 = arith.constant 0 : index
    %16 = vector.load %arg2[%c3, %c0_11, %c0_12] : memref<9x64x32xbf16, #tpu.memory_space<vmem>>, vector<1x64x32xbf16>
    %17 = vector.shape_cast %16 : vector<1x64x32xbf16> to vector<64x32xbf16>
    %18 = vector.extract_strided_slice %1 {offsets = [0, 6], sizes = [32, 128], strides = [1, 1]} : vector<32x256xbf16> to vector<32x128xbf16>
    %cst_13 = arith.constant dense<0.000000e+00> : vector<64x128xf32>
    %19 = tpu.matmul %17, %18, %cst_13 {dimension_numbers = #tpu.dot_dimension_numbers<[1], [0], [0], [1], [0, 0, 1, 1], [], []>} : vector<64x32xbf16>, vector<32x128xbf16>, vector<64x128xf32> -> vector<64x128xf32>
    %20 = arith.addf %15, %19 : vector<64x128xf32>
    %c4 = arith.constant 4 : index
    %c0_14 = arith.constant 0 : index
    %c0_15 = arith.constant 0 : index
    %21 = vector.load %arg2[%c4, %c0_14, %c0_15] : memref<9x64x32xbf16, #tpu.memory_space<vmem>>, vector<1x64x32xbf16>
    %22 = vector.shape_cast %21 : vector<1x64x32xbf16> to vector<64x32xbf16>
    %23 = vector.extract_strided_slice %1 {offsets = [0, 7], sizes = [32, 128], strides = [1, 1]} : vector<32x256xbf16> to vector<32x128xbf16>
    %cst_16 = arith.constant dense<0.000000e+00> : vector<64x128xf32>
    %24 = tpu.matmul %22, %23, %cst_16 {dimension_numbers = #tpu.dot_dimension_numbers<[1], [0], [0], [1], [0, 0, 1, 1], [], []>} : vector<64x32xbf16>, vector<32x128xbf16>, vector<64x128xf32> -> vector<64x128xf32>
    %25 = arith.addf %20, %24 : vector<64x128xf32>
    %c5 = arith.constant 5 : index
    %c0_17 = arith.constant 0 : index
    %c0_18 = arith.constant 0 : index
    %26 = vector.load %arg2[%c5, %c0_17, %c0_18] : memref<9x64x32xbf16, #tpu.memory_space<vmem>>, vector<1x64x32xbf16>
    %27 = vector.shape_cast %26 : vector<1x64x32xbf16> to vector<64x32xbf16>
    %28 = vector.extract_strided_slice %1 {offsets = [0, 8], sizes = [32, 128], strides = [1, 1]} : vector<32x256xbf16> to vector<32x128xbf16>
    %cst_19 = arith.constant dense<0.000000e+00> : vector<64x128xf32>
    %29 = tpu.matmul %27, %28, %cst_19 {dimension_numbers = #tpu.dot_dimension_numbers<[1], [0], [0], [1], [0, 0, 1, 1], [], []>} : vector<64x32xbf16>, vector<32x128xbf16>, vector<64x128xf32> -> vector<64x128xf32>
    %30 = arith.addf %25, %29 : vector<64x128xf32>
    %c6 = arith.constant 6 : index
    %c0_20 = arith.constant 0 : index
    %c0_21 = arith.constant 0 : index
    %31 = vector.load %arg2[%c6, %c0_20, %c0_21] : memref<9x64x32xbf16, #tpu.memory_space<vmem>>, vector<1x64x32xbf16>
    %32 = vector.shape_cast %31 : vector<1x64x32xbf16> to vector<64x32xbf16>
    %33 = vector.extract_strided_slice %1 {offsets = [0, 12], sizes = [32, 128], strides = [1, 1]} : vector<32x256xbf16> to vector<32x128xbf16>
    %cst_22 = arith.constant dense<0.000000e+00> : vector<64x128xf32>
    %34 = tpu.matmul %32, %33, %cst_22 {dimension_numbers = #tpu.dot_dimension_numbers<[1], [0], [0], [1], [0, 0, 1, 1], [], []>} : vector<64x32xbf16>, vector<32x128xbf16>, vector<64x128xf32> -> vector<64x128xf32>
    %35 = arith.addf %30, %34 : vector<64x128xf32>
    %c7 = arith.constant 7 : index
    %c0_23 = arith.constant 0 : index
    %c0_24 = arith.constant 0 : index
    %36 = vector.load %arg2[%c7, %c0_23, %c0_24] : memref<9x64x32xbf16, #tpu.memory_space<vmem>>, vector<1x64x32xbf16>
    %37 = vector.shape_cast %36 : vector<1x64x32xbf16> to vector<64x32xbf16>
    %38 = vector.extract_strided_slice %1 {offsets = [0, 13], sizes = [32, 128], strides = [1, 1]} : vector<32x256xbf16> to vector<32x128xbf16>
    %cst_25 = arith.constant dense<0.000000e+00> : vector<64x128xf32>
    %39 = tpu.matmul %37, %38, %cst_25 {dimension_numbers = #tpu.dot_dimension_numbers<[1], [0], [0], [1], [0, 0, 1, 1], [], []>} : vector<64x32xbf16>, vector<32x128xbf16>, vector<64x128xf32> -> vector<64x128xf32>
    %40 = arith.addf %35, %39 : vector<64x128xf32>
    %c8 = arith.constant 8 : index
    %c0_26 = arith.constant 0 : index
    %c0_27 = arith.constant 0 : index
    %41 = vector.load %arg2[%c8, %c0_26, %c0_27] : memref<9x64x32xbf16, #tpu.memory_space<vmem>>, vector<1x64x32xbf16>
    %42 = vector.shape_cast %41 : vector<1x64x32xbf16> to vector<64x32xbf16>
    %43 = vector.extract_strided_slice %1 {offsets = [0, 14], sizes = [32, 128], strides = [1, 1]} : vector<32x256xbf16> to vector<32x128xbf16>
    %cst_28 = arith.constant dense<0.000000e+00> : vector<64x128xf32>
    %44 = tpu.matmul %42, %43, %cst_28 {dimension_numbers = #tpu.dot_dimension_numbers<[1], [0], [0], [1], [0, 0, 1, 1], [], []>} : vector<64x32xbf16>, vector<32x128xbf16>, vector<64x128xf32> -> vector<64x128xf32>
    %45 = arith.addf %40, %44 : vector<64x128xf32>
    %c0_29 = arith.constant 0 : index
    %c0_30 = arith.constant 0 : index
    %46 = vector.load %arg3[%c0_29, %c0_30] : memref<64x1xf32, #tpu.memory_space<vmem>>, vector<64x1xf32>
    %47 = vector.broadcast %46 : vector<64x1xf32> to vector<64x128xf32>
    %48 = arith.addf %45, %47 : vector<64x128xf32>
    %49 = arith.truncf %48 : vector<64x128xf32> to vector<64x128xbf16>
    %c0_31 = arith.constant 0 : index
    %c0_32 = arith.constant 0 : index
    %c0_33 = arith.constant 0 : index
    %50 = vector.load %arg4[%c0_31, %c0_32, %c0_33] : memref<1x64x128xbf16, #tpu.memory_space<vmem>>, vector<1x64x128xbf16>
    %51 = vector.shape_cast %50 : vector<1x64x128xbf16> to vector<64x128xbf16>
    %52 = vector.shape_cast %49 : vector<64x128xbf16> to vector<1x64x128xbf16>
    tpu.vector_store %arg4[%c0_31, %c0_32, %c0_33], %52 {strides = array<i32>} : memref<1x64x128xbf16, #tpu.memory_space<vmem>>, vector<1x64x128xbf16>,
    return
  }
  func.func @transform_0(%arg0: i32) -> (i32, i32, i32) {
    %c0_i32 = arith.constant 0 : i32
    %c0_i32_0 = arith.constant 0 : i32
    %c0_i32_1 = arith.constant 0 : i32
    return %arg0, %c0_i32, %c0_i32_0 : i32, i32, i32
  }
  func.func @transform_1(%arg0: i32) -> (i32, i32, i32) {
    %c0_i32 = arith.constant 0 : i32
    %c0_i32_0 = arith.constant 0 : i32
    %c0_i32_1 = arith.constant 0 : i32
    %c0_i32_2 = arith.constant 0 : i32
    return %c0_i32, %c0_i32_0, %c0_i32_1 : i32, i32, i32
  }
  func.func @transform_2(%arg0: i32) -> (i32, i32) {
    %c0_i32 = arith.constant 0 : i32
    %c0_i32_0 = arith.constant 0 : i32
    %c0_i32_1 = arith.constant 0 : i32
    return %c0_i32, %c0_i32_0 : i32, i32
  }
  func.func @transform_3(%arg0: i32) -> (i32, i32, i32) {
    %c0_i32 = arith.constant 0 : i32
    %c0_i32_0 = arith.constant 0 : i32
    %c0_i32_1 = arith.constant 0 : i32
    return %arg0, %c0_i32, %c0_i32_0 : i32, i32, i32
  }
}

module attributes {stable_mosaic.version = 11 : i64} {
  func.func @kernel(%arg0: i32, %arg1: memref<1x64x256xbf16, #tpu.memory_space<vmem>>, %arg2: memref<9x64x64xbf16, #tpu.memory_space<vmem>>, %arg3: memref<64x1xf32, #tpu.memory_space<vmem>>, %arg4: memref<64x256xf32, #tpu.memory_space<vmem>>, %arg5: memref<64x1xf32, #tpu.memory_space<vmem>>, %arg6: memref<64x1xf32, #tpu.memory_space<vmem>>, %arg7: memref<1x64x128xbf16, #tpu.memory_space<vmem>>) attributes {dimension_semantics = [#tpu.dimension_semantics<parallel>], iteration_bounds = array<i64: 2>, scalar_prefetch = 0 : i64, scratch_operands = 0 : i64, tpu.core_type = #tpu.core_type<tc>, window_params = [{transform_indices = @transform_0, window_bounds = array<i64: 1, 64, 256>}, {pipeline_mode = #tpu.pipeline_mode<synchronous>, transform_indices = @transform_1, window_bounds = array<i64: 9, 64, 64>}, {pipeline_mode = #tpu.pipeline_mode<synchronous>, transform_indices = @transform_2, window_bounds = array<i64: 64, 1>}, {pipeline_mode = #tpu.pipeline_mode<synchronous>, transform_indices = @transform_3, window_bounds = array<i64: 64, 256>}, {pipeline_mode = #tpu.pipeline_mode<synchronous>, transform_indices = @transform_4, window_bounds = array<i64: 64, 1>}, {pipeline_mode = #tpu.pipeline_mode<synchronous>, transform_indices = @transform_5, window_bounds = array<i64: 64, 1>}, {transform_indices = @transform_6, window_bounds = array<i64: 1, 64, 128>}]} {
    %c0 = arith.constant 0 : index
    %c0_0 = arith.constant 0 : index
    %c0_1 = arith.constant 0 : index
    %0 = vector.load %arg1[%c0, %c0_0, %c0_1] : memref<1x64x256xbf16, #tpu.memory_space<vmem>>, vector<1x64x256xbf16>
    %1 = vector.shape_cast %0 : vector<1x64x256xbf16> to vector<64x256xbf16>
    %2 = arith.extf %1 : vector<64x256xbf16> to vector<64x256xf32>
    %c0_2 = arith.constant 0 : index
    %c0_3 = arith.constant 0 : index
    %3 = vector.load %arg4[%c0_2, %c0_3] : memref<64x256xf32, #tpu.memory_space<vmem>>, vector<64x256xf32>
    %4 = arith.mulf %2, %3 : vector<64x256xf32>
    %5 = vector.shape_cast %4 : vector<64x256xf32> to vector<1x64x256xf32>
    %cst = arith.constant dense<0.000000e+00> : vector<1xf32>
    %6 = vector.multi_reduction <add>, %5, %cst [1, 2] : vector<1x64x256xf32> to vector<1xf32>
    %7 = vector.shape_cast %6 : vector<1xf32> to vector<1x1x1xf32>
    %8 = vector.extract %7[0, 0, 0] : f32 from vector<1x1x1xf32>
    %9 = vector.broadcast %8 : f32 to vector<1x1xf32>
    %cst_4 = arith.constant 1.024000e+03 : f32
    %10 = vector.broadcast %cst_4 : f32 to vector<1x1xf32>
    %11 = arith.divf %9, %10 : vector<1x1xf32>
    %12 = vector.broadcast %11 : vector<1x1xf32> to vector<64x256xf32>
    %13 = arith.subf %2, %12 : vector<64x256xf32>
    %14 = arith.mulf %13, %3 : vector<64x256xf32>
    %15 = arith.mulf %14, %14 : vector<64x256xf32>
    %16 = vector.shape_cast %15 : vector<64x256xf32> to vector<1x64x256xf32>
    %cst_5 = arith.constant dense<0.000000e+00> : vector<1xf32>
    %17 = vector.multi_reduction <add>, %16, %cst_5 [1, 2] : vector<1x64x256xf32> to vector<1xf32>
    %18 = vector.shape_cast %17 : vector<1xf32> to vector<1x1x1xf32>
    %19 = vector.extract %18[0, 0, 0] : f32 from vector<1x1x1xf32>
    %20 = vector.broadcast %19 : f32 to vector<1x1xf32>
    %cst_6 = arith.constant 1.023000e+03 : f32
    %21 = vector.broadcast %cst_6 : f32 to vector<1x1xf32>
    %22 = arith.divf %20, %21 : vector<1x1xf32>
    %23 = math.sqrt %22 : vector<1x1xf32>
    %cst_7 = arith.constant 9.99999974E-6 : f32
    %24 = vector.broadcast %cst_7 : f32 to vector<1x1xf32>
    %25 = arith.addf %23, %24 : vector<1x1xf32>
    %cst_8 = arith.constant 1.000000e+00 : f32
    %26 = vector.broadcast %cst_8 : f32 to vector<1x1xf32>
    %27 = arith.divf %26, %25 : vector<1x1xf32>
    %28 = vector.broadcast %11 : vector<1x1xf32> to vector<64x256xf32>
    %29 = arith.subf %2, %28 : vector<64x256xf32>
    %30 = vector.broadcast %27 : vector<1x1xf32> to vector<64x256xf32>
    %31 = arith.mulf %29, %30 : vector<64x256xf32>
    %c0_9 = arith.constant 0 : index
    %c0_10 = arith.constant 0 : index
    %32 = vector.load %arg5[%c0_9, %c0_10] : memref<64x1xf32, #tpu.memory_space<vmem>>, vector<64x1xf32>
    %33 = vector.broadcast %32 : vector<64x1xf32> to vector<64x256xf32>
    %34 = arith.mulf %31, %33 : vector<64x256xf32>
    %c0_11 = arith.constant 0 : index
    %c0_12 = arith.constant 0 : index
    %35 = vector.load %arg6[%c0_11, %c0_12] : memref<64x1xf32, #tpu.memory_space<vmem>>, vector<64x1xf32>
    %36 = vector.broadcast %35 : vector<64x1xf32> to vector<64x256xf32>
    %37 = arith.addf %34, %36 : vector<64x256xf32>
    %cst_13 = arith.constant 0.000000e+00 : f32
    %38 = vector.broadcast %cst_13 : f32 to vector<64x256xf32>
    %39 = arith.maximumf %37, %38 : vector<64x256xf32>
    %40 = arith.truncf %39 : vector<64x256xf32> to vector<64x256xbf16>
    %c0_14 = arith.constant 0 : index
    %c0_15 = arith.constant 0 : index
    %c0_16 = arith.constant 0 : index
    %41 = vector.load %arg2[%c0_14, %c0_15, %c0_16] : memref<9x64x64xbf16, #tpu.memory_space<vmem>>, vector<1x64x64xbf16>
    %42 = vector.shape_cast %41 : vector<1x64x64xbf16> to vector<64x64xbf16>
    %43 = vector.extract_strided_slice %40 {offsets = [0, 0], sizes = [64, 128], strides = [1, 1]} : vector<64x256xbf16> to vector<64x128xbf16>
    %cst_17 = arith.constant dense<0.000000e+00> : vector<64x128xf32>
    %44 = tpu.matmul %42, %43, %cst_17 {dimension_numbers = #tpu.dot_dimension_numbers<[1], [0], [0], [1], [0, 0, 1, 1], [], []>} : vector<64x64xbf16>, vector<64x128xbf16>, vector<64x128xf32> -> vector<64x128xf32>
    %c1 = arith.constant 1 : index
    %c0_18 = arith.constant 0 : index
    %c0_19 = arith.constant 0 : index
    %45 = vector.load %arg2[%c1, %c0_18, %c0_19] : memref<9x64x64xbf16, #tpu.memory_space<vmem>>, vector<1x64x64xbf16>
    %46 = vector.shape_cast %45 : vector<1x64x64xbf16> to vector<64x64xbf16>
    %47 = vector.extract_strided_slice %40 {offsets = [0, 1], sizes = [64, 128], strides = [1, 1]} : vector<64x256xbf16> to vector<64x128xbf16>
    %cst_20 = arith.constant dense<0.000000e+00> : vector<64x128xf32>
    %48 = tpu.matmul %46, %47, %cst_20 {dimension_numbers = #tpu.dot_dimension_numbers<[1], [0], [0], [1], [0, 0, 1, 1], [], []>} : vector<64x64xbf16>, vector<64x128xbf16>, vector<64x128xf32> -> vector<64x128xf32>
    %49 = arith.addf %44, %48 : vector<64x128xf32>
    %c2 = arith.constant 2 : index
    %c0_21 = arith.constant 0 : index
    %c0_22 = arith.constant 0 : index
    %50 = vector.load %arg2[%c2, %c0_21, %c0_22] : memref<9x64x64xbf16, #tpu.memory_space<vmem>>, vector<1x64x64xbf16>
    %51 = vector.shape_cast %50 : vector<1x64x64xbf16> to vector<64x64xbf16>
    %52 = vector.extract_strided_slice %40 {offsets = [0, 2], sizes = [64, 128], strides = [1, 1]} : vector<64x256xbf16> to vector<64x128xbf16>
    %cst_23 = arith.constant dense<0.000000e+00> : vector<64x128xf32>
    %53 = tpu.matmul %51, %52, %cst_23 {dimension_numbers = #tpu.dot_dimension_numbers<[1], [0], [0], [1], [0, 0, 1, 1], [], []>} : vector<64x64xbf16>, vector<64x128xbf16>, vector<64x128xf32> -> vector<64x128xf32>
    %54 = arith.addf %49, %53 : vector<64x128xf32>
    %c3 = arith.constant 3 : index
    %c0_24 = arith.constant 0 : index
    %c0_25 = arith.constant 0 : index
    %55 = vector.load %arg2[%c3, %c0_24, %c0_25] : memref<9x64x64xbf16, #tpu.memory_space<vmem>>, vector<1x64x64xbf16>
    %56 = vector.shape_cast %55 : vector<1x64x64xbf16> to vector<64x64xbf16>
    %57 = vector.extract_strided_slice %40 {offsets = [0, 6], sizes = [64, 128], strides = [1, 1]} : vector<64x256xbf16> to vector<64x128xbf16>
    %cst_26 = arith.constant dense<0.000000e+00> : vector<64x128xf32>
    %58 = tpu.matmul %56, %57, %cst_26 {dimension_numbers = #tpu.dot_dimension_numbers<[1], [0], [0], [1], [0, 0, 1, 1], [], []>} : vector<64x64xbf16>, vector<64x128xbf16>, vector<64x128xf32> -> vector<64x128xf32>
    %59 = arith.addf %54, %58 : vector<64x128xf32>
    %c4 = arith.constant 4 : index
    %c0_27 = arith.constant 0 : index
    %c0_28 = arith.constant 0 : index
    %60 = vector.load %arg2[%c4, %c0_27, %c0_28] : memref<9x64x64xbf16, #tpu.memory_space<vmem>>, vector<1x64x64xbf16>
    %61 = vector.shape_cast %60 : vector<1x64x64xbf16> to vector<64x64xbf16>
    %62 = vector.extract_strided_slice %40 {offsets = [0, 7], sizes = [64, 128], strides = [1, 1]} : vector<64x256xbf16> to vector<64x128xbf16>
    %cst_29 = arith.constant dense<0.000000e+00> : vector<64x128xf32>
    %63 = tpu.matmul %61, %62, %cst_29 {dimension_numbers = #tpu.dot_dimension_numbers<[1], [0], [0], [1], [0, 0, 1, 1], [], []>} : vector<64x64xbf16>, vector<64x128xbf16>, vector<64x128xf32> -> vector<64x128xf32>
    %64 = arith.addf %59, %63 : vector<64x128xf32>
    %c5 = arith.constant 5 : index
    %c0_30 = arith.constant 0 : index
    %c0_31 = arith.constant 0 : index
    %65 = vector.load %arg2[%c5, %c0_30, %c0_31] : memref<9x64x64xbf16, #tpu.memory_space<vmem>>, vector<1x64x64xbf16>
    %66 = vector.shape_cast %65 : vector<1x64x64xbf16> to vector<64x64xbf16>
    %67 = vector.extract_strided_slice %40 {offsets = [0, 8], sizes = [64, 128], strides = [1, 1]} : vector<64x256xbf16> to vector<64x128xbf16>
    %cst_32 = arith.constant dense<0.000000e+00> : vector<64x128xf32>
    %68 = tpu.matmul %66, %67, %cst_32 {dimension_numbers = #tpu.dot_dimension_numbers<[1], [0], [0], [1], [0, 0, 1, 1], [], []>} : vector<64x64xbf16>, vector<64x128xbf16>, vector<64x128xf32> -> vector<64x128xf32>
    %69 = arith.addf %64, %68 : vector<64x128xf32>
    %c6 = arith.constant 6 : index
    %c0_33 = arith.constant 0 : index
    %c0_34 = arith.constant 0 : index
    %70 = vector.load %arg2[%c6, %c0_33, %c0_34] : memref<9x64x64xbf16, #tpu.memory_space<vmem>>, vector<1x64x64xbf16>
    %71 = vector.shape_cast %70 : vector<1x64x64xbf16> to vector<64x64xbf16>
    %72 = vector.extract_strided_slice %40 {offsets = [0, 12], sizes = [64, 128], strides = [1, 1]} : vector<64x256xbf16> to vector<64x128xbf16>
    %cst_35 = arith.constant dense<0.000000e+00> : vector<64x128xf32>
    %73 = tpu.matmul %71, %72, %cst_35 {dimension_numbers = #tpu.dot_dimension_numbers<[1], [0], [0], [1], [0, 0, 1, 1], [], []>} : vector<64x64xbf16>, vector<64x128xbf16>, vector<64x128xf32> -> vector<64x128xf32>
    %74 = arith.addf %69, %73 : vector<64x128xf32>
    %c7 = arith.constant 7 : index
    %c0_36 = arith.constant 0 : index
    %c0_37 = arith.constant 0 : index
    %75 = vector.load %arg2[%c7, %c0_36, %c0_37] : memref<9x64x64xbf16, #tpu.memory_space<vmem>>, vector<1x64x64xbf16>
    %76 = vector.shape_cast %75 : vector<1x64x64xbf16> to vector<64x64xbf16>
    %77 = vector.extract_strided_slice %40 {offsets = [0, 13], sizes = [64, 128], strides = [1, 1]} : vector<64x256xbf16> to vector<64x128xbf16>
    %cst_38 = arith.constant dense<0.000000e+00> : vector<64x128xf32>
    %78 = tpu.matmul %76, %77, %cst_38 {dimension_numbers = #tpu.dot_dimension_numbers<[1], [0], [0], [1], [0, 0, 1, 1], [], []>} : vector<64x64xbf16>, vector<64x128xbf16>, vector<64x128xf32> -> vector<64x128xf32>
    %79 = arith.addf %74, %78 : vector<64x128xf32>
    %c8 = arith.constant 8 : index
    %c0_39 = arith.constant 0 : index
    %c0_40 = arith.constant 0 : index
    %80 = vector.load %arg2[%c8, %c0_39, %c0_40] : memref<9x64x64xbf16, #tpu.memory_space<vmem>>, vector<1x64x64xbf16>
    %81 = vector.shape_cast %80 : vector<1x64x64xbf16> to vector<64x64xbf16>
    %82 = vector.extract_strided_slice %40 {offsets = [0, 14], sizes = [64, 128], strides = [1, 1]} : vector<64x256xbf16> to vector<64x128xbf16>
    %cst_41 = arith.constant dense<0.000000e+00> : vector<64x128xf32>
    %83 = tpu.matmul %81, %82, %cst_41 {dimension_numbers = #tpu.dot_dimension_numbers<[1], [0], [0], [1], [0, 0, 1, 1], [], []>} : vector<64x64xbf16>, vector<64x128xbf16>, vector<64x128xf32> -> vector<64x128xf32>
    %84 = arith.addf %79, %83 : vector<64x128xf32>
    %c0_42 = arith.constant 0 : index
    %c0_43 = arith.constant 0 : index
    %85 = vector.load %arg3[%c0_42, %c0_43] : memref<64x1xf32, #tpu.memory_space<vmem>>, vector<64x1xf32>
    %86 = vector.broadcast %85 : vector<64x1xf32> to vector<64x128xf32>
    %87 = arith.addf %84, %86 : vector<64x128xf32>
    %88 = arith.truncf %87 : vector<64x128xf32> to vector<64x128xbf16>
    %c0_44 = arith.constant 0 : index
    %c0_45 = arith.constant 0 : index
    %c0_46 = arith.constant 0 : index
    %89 = vector.load %arg7[%c0_44, %c0_45, %c0_46] : memref<1x64x128xbf16, #tpu.memory_space<vmem>>, vector<1x64x128xbf16>
    %90 = vector.shape_cast %89 : vector<1x64x128xbf16> to vector<64x128xbf16>
    %91 = vector.shape_cast %88 : vector<64x128xbf16> to vector<1x64x128xbf16>
    tpu.vector_store %arg7[%c0_44, %c0_45, %c0_46], %91 {strides = array<i32>} : memref<1x64x128xbf16, #tpu.memory_space<vmem>>, vector<1x64x128xbf16>,
    return
  }
  func.func @transform_0(%arg0: i32) -> (i32, i32, i32) {
    %c0_i32 = arith.constant 0 : i32
    %c0_i32_0 = arith.constant 0 : i32
    %c0_i32_1 = arith.constant 0 : i32
    return %arg0, %c0_i32, %c0_i32_0 : i32, i32, i32
  }
  func.func @transform_1(%arg0: i32) -> (i32, i32, i32) {
    %c0_i32 = arith.constant 0 : i32
    %c0_i32_0 = arith.constant 0 : i32
    %c0_i32_1 = arith.constant 0 : i32
    %c0_i32_2 = arith.constant 0 : i32
    return %c0_i32, %c0_i32_0, %c0_i32_1 : i32, i32, i32
  }
  func.func @transform_2(%arg0: i32) -> (i32, i32) {
    %c0_i32 = arith.constant 0 : i32
    %c0_i32_0 = arith.constant 0 : i32
    %c0_i32_1 = arith.constant 0 : i32
    return %c0_i32, %c0_i32_0 : i32, i32
  }
  func.func @transform_3(%arg0: i32) -> (i32, i32) {
    %c0_i32 = arith.constant 0 : i32
    %c0_i32_0 = arith.constant 0 : i32
    %c0_i32_1 = arith.constant 0 : i32
    return %c0_i32, %c0_i32_0 : i32, i32
  }
  func.func @transform_4(%arg0: i32) -> (i32, i32) {
    %c0_i32 = arith.constant 0 : i32
    %c0_i32_0 = arith.constant 0 : i32
    %c0_i32_1 = arith.constant 0 : i32
    return %c0_i32, %c0_i32_0 : i32, i32
  }
  func.func @transform_5(%arg0: i32) -> (i32, i32) {
    %c0_i32 = arith.constant 0 : i32
    %c0_i32_0 = arith.constant 0 : i32
    %c0_i32_1 = arith.constant 0 : i32
    return %c0_i32, %c0_i32_0 : i32, i32
  }
  func.func @transform_6(%arg0: i32) -> (i32, i32, i32) {
    %c0_i32 = arith.constant 0 : i32
    %c0_i32_0 = arith.constant 0 : i32
    %c0_i32_1 = arith.constant 0 : i32
    return %arg0, %c0_i32, %c0_i32_0 : i32, i32, i32
  }
}

module attributes {stable_mosaic.version = 11 : i64} {
  func.func @kernel(%arg0: i32, %arg1: memref<1x64x256xbf16, #tpu.memory_space<vmem>>, %arg2: memref<9x64x64xbf16, #tpu.memory_space<vmem>>, %arg3: memref<64x1xf32, #tpu.memory_space<vmem>>, %arg4: memref<64x256xf32, #tpu.memory_space<vmem>>, %arg5: memref<64x1xf32, #tpu.memory_space<vmem>>, %arg6: memref<64x1xf32, #tpu.memory_space<vmem>>, %arg7: memref<1x64x128xbf16, #tpu.memory_space<vmem>>, %arg8: memref<1x64x128xbf16, #tpu.memory_space<vmem>>) attributes {dimension_semantics = [#tpu.dimension_semantics<parallel>], iteration_bounds = array<i64: 2>, scalar_prefetch = 0 : i64, scratch_operands = 0 : i64, tpu.core_type = #tpu.core_type<tc>, window_params = [{transform_indices = @transform_0, window_bounds = array<i64: 1, 64, 256>}, {pipeline_mode = #tpu.pipeline_mode<synchronous>, transform_indices = @transform_1, window_bounds = array<i64: 9, 64, 64>}, {pipeline_mode = #tpu.pipeline_mode<synchronous>, transform_indices = @transform_2, window_bounds = array<i64: 64, 1>}, {pipeline_mode = #tpu.pipeline_mode<synchronous>, transform_indices = @transform_3, window_bounds = array<i64: 64, 256>}, {pipeline_mode = #tpu.pipeline_mode<synchronous>, transform_indices = @transform_4, window_bounds = array<i64: 64, 1>}, {pipeline_mode = #tpu.pipeline_mode<synchronous>, transform_indices = @transform_5, window_bounds = array<i64: 64, 1>}, {transform_indices = @transform_6, window_bounds = array<i64: 1, 64, 128>}, {transform_indices = @transform_7, window_bounds = array<i64: 1, 64, 128>}]} {
    %c0 = arith.constant 0 : index
    %c0_0 = arith.constant 0 : index
    %c0_1 = arith.constant 0 : index
    %0 = vector.load %arg1[%c0, %c0_0, %c0_1] : memref<1x64x256xbf16, #tpu.memory_space<vmem>>, vector<1x64x256xbf16>
    %1 = vector.shape_cast %0 : vector<1x64x256xbf16> to vector<64x256xbf16>
    %2 = arith.extf %1 : vector<64x256xbf16> to vector<64x256xf32>
    %c0_2 = arith.constant 0 : index
    %c0_3 = arith.constant 0 : index
    %3 = vector.load %arg4[%c0_2, %c0_3] : memref<64x256xf32, #tpu.memory_space<vmem>>, vector<64x256xf32>
    %4 = arith.mulf %2, %3 : vector<64x256xf32>
    %5 = vector.shape_cast %4 : vector<64x256xf32> to vector<1x64x256xf32>
    %cst = arith.constant dense<0.000000e+00> : vector<1xf32>
    %6 = vector.multi_reduction <add>, %5, %cst [1, 2] : vector<1x64x256xf32> to vector<1xf32>
    %7 = vector.shape_cast %6 : vector<1xf32> to vector<1x1x1xf32>
    %8 = vector.extract %7[0, 0, 0] : f32 from vector<1x1x1xf32>
    %9 = vector.broadcast %8 : f32 to vector<1x1xf32>
    %cst_4 = arith.constant 1.024000e+03 : f32
    %10 = vector.broadcast %cst_4 : f32 to vector<1x1xf32>
    %11 = arith.divf %9, %10 : vector<1x1xf32>
    %12 = vector.broadcast %11 : vector<1x1xf32> to vector<64x256xf32>
    %13 = arith.subf %2, %12 : vector<64x256xf32>
    %14 = arith.mulf %13, %3 : vector<64x256xf32>
    %15 = arith.mulf %14, %14 : vector<64x256xf32>
    %16 = vector.shape_cast %15 : vector<64x256xf32> to vector<1x64x256xf32>
    %cst_5 = arith.constant dense<0.000000e+00> : vector<1xf32>
    %17 = vector.multi_reduction <add>, %16, %cst_5 [1, 2] : vector<1x64x256xf32> to vector<1xf32>
    %18 = vector.shape_cast %17 : vector<1xf32> to vector<1x1x1xf32>
    %19 = vector.extract %18[0, 0, 0] : f32 from vector<1x1x1xf32>
    %20 = vector.broadcast %19 : f32 to vector<1x1xf32>
    %cst_6 = arith.constant 1.023000e+03 : f32
    %21 = vector.broadcast %cst_6 : f32 to vector<1x1xf32>
    %22 = arith.divf %20, %21 : vector<1x1xf32>
    %23 = math.sqrt %22 : vector<1x1xf32>
    %cst_7 = arith.constant 9.99999974E-6 : f32
    %24 = vector.broadcast %cst_7 : f32 to vector<1x1xf32>
    %25 = arith.addf %23, %24 : vector<1x1xf32>
    %cst_8 = arith.constant 1.000000e+00 : f32
    %26 = vector.broadcast %cst_8 : f32 to vector<1x1xf32>
    %27 = arith.divf %26, %25 : vector<1x1xf32>
    %28 = vector.broadcast %11 : vector<1x1xf32> to vector<64x256xf32>
    %29 = arith.subf %2, %28 : vector<64x256xf32>
    %30 = vector.broadcast %27 : vector<1x1xf32> to vector<64x256xf32>
    %31 = arith.mulf %29, %30 : vector<64x256xf32>
    %c0_9 = arith.constant 0 : index
    %c0_10 = arith.constant 0 : index
    %32 = vector.load %arg5[%c0_9, %c0_10] : memref<64x1xf32, #tpu.memory_space<vmem>>, vector<64x1xf32>
    %33 = vector.broadcast %32 : vector<64x1xf32> to vector<64x256xf32>
    %34 = arith.mulf %31, %33 : vector<64x256xf32>
    %c0_11 = arith.constant 0 : index
    %c0_12 = arith.constant 0 : index
    %35 = vector.load %arg6[%c0_11, %c0_12] : memref<64x1xf32, #tpu.memory_space<vmem>>, vector<64x1xf32>
    %36 = vector.broadcast %35 : vector<64x1xf32> to vector<64x256xf32>
    %37 = arith.addf %34, %36 : vector<64x256xf32>
    %cst_13 = arith.constant 0.000000e+00 : f32
    %38 = vector.broadcast %cst_13 : f32 to vector<64x256xf32>
    %39 = arith.maximumf %37, %38 : vector<64x256xf32>
    %40 = arith.truncf %39 : vector<64x256xf32> to vector<64x256xbf16>
    %c0_14 = arith.constant 0 : index
    %c0_15 = arith.constant 0 : index
    %c0_16 = arith.constant 0 : index
    %41 = vector.load %arg2[%c0_14, %c0_15, %c0_16] : memref<9x64x64xbf16, #tpu.memory_space<vmem>>, vector<1x64x64xbf16>
    %42 = vector.shape_cast %41 : vector<1x64x64xbf16> to vector<64x64xbf16>
    %43 = vector.extract_strided_slice %40 {offsets = [0, 0], sizes = [64, 128], strides = [1, 1]} : vector<64x256xbf16> to vector<64x128xbf16>
    %cst_17 = arith.constant dense<0.000000e+00> : vector<64x128xf32>
    %44 = tpu.matmul %42, %43, %cst_17 {dimension_numbers = #tpu.dot_dimension_numbers<[1], [0], [0], [1], [0, 0, 1, 1], [], []>} : vector<64x64xbf16>, vector<64x128xbf16>, vector<64x128xf32> -> vector<64x128xf32>
    %c1 = arith.constant 1 : index
    %c0_18 = arith.constant 0 : index
    %c0_19 = arith.constant 0 : index
    %45 = vector.load %arg2[%c1, %c0_18, %c0_19] : memref<9x64x64xbf16, #tpu.memory_space<vmem>>, vector<1x64x64xbf16>
    %46 = vector.shape_cast %45 : vector<1x64x64xbf16> to vector<64x64xbf16>
    %47 = vector.extract_strided_slice %40 {offsets = [0, 1], sizes = [64, 128], strides = [1, 1]} : vector<64x256xbf16> to vector<64x128xbf16>
    %cst_20 = arith.constant dense<0.000000e+00> : vector<64x128xf32>
    %48 = tpu.matmul %46, %47, %cst_20 {dimension_numbers = #tpu.dot_dimension_numbers<[1], [0], [0], [1], [0, 0, 1, 1], [], []>} : vector<64x64xbf16>, vector<64x128xbf16>, vector<64x128xf32> -> vector<64x128xf32>
    %49 = arith.addf %44, %48 : vector<64x128xf32>
    %c2 = arith.constant 2 : index
    %c0_21 = arith.constant 0 : index
    %c0_22 = arith.constant 0 : index
    %50 = vector.load %arg2[%c2, %c0_21, %c0_22] : memref<9x64x64xbf16, #tpu.memory_space<vmem>>, vector<1x64x64xbf16>
    %51 = vector.shape_cast %50 : vector<1x64x64xbf16> to vector<64x64xbf16>
    %52 = vector.extract_strided_slice %40 {offsets = [0, 2], sizes = [64, 128], strides = [1, 1]} : vector<64x256xbf16> to vector<64x128xbf16>
    %cst_23 = arith.constant dense<0.000000e+00> : vector<64x128xf32>
    %53 = tpu.matmul %51, %52, %cst_23 {dimension_numbers = #tpu.dot_dimension_numbers<[1], [0], [0], [1], [0, 0, 1, 1], [], []>} : vector<64x64xbf16>, vector<64x128xbf16>, vector<64x128xf32> -> vector<64x128xf32>
    %54 = arith.addf %49, %53 : vector<64x128xf32>
    %c3 = arith.constant 3 : index
    %c0_24 = arith.constant 0 : index
    %c0_25 = arith.constant 0 : index
    %55 = vector.load %arg2[%c3, %c0_24, %c0_25] : memref<9x64x64xbf16, #tpu.memory_space<vmem>>, vector<1x64x64xbf16>
    %56 = vector.shape_cast %55 : vector<1x64x64xbf16> to vector<64x64xbf16>
    %57 = vector.extract_strided_slice %40 {offsets = [0, 6], sizes = [64, 128], strides = [1, 1]} : vector<64x256xbf16> to vector<64x128xbf16>
    %cst_26 = arith.constant dense<0.000000e+00> : vector<64x128xf32>
    %58 = tpu.matmul %56, %57, %cst_26 {dimension_numbers = #tpu.dot_dimension_numbers<[1], [0], [0], [1], [0, 0, 1, 1], [], []>} : vector<64x64xbf16>, vector<64x128xbf16>, vector<64x128xf32> -> vector<64x128xf32>
    %59 = arith.addf %54, %58 : vector<64x128xf32>
    %c4 = arith.constant 4 : index
    %c0_27 = arith.constant 0 : index
    %c0_28 = arith.constant 0 : index
    %60 = vector.load %arg2[%c4, %c0_27, %c0_28] : memref<9x64x64xbf16, #tpu.memory_space<vmem>>, vector<1x64x64xbf16>
    %61 = vector.shape_cast %60 : vector<1x64x64xbf16> to vector<64x64xbf16>
    %62 = vector.extract_strided_slice %40 {offsets = [0, 7], sizes = [64, 128], strides = [1, 1]} : vector<64x256xbf16> to vector<64x128xbf16>
    %cst_29 = arith.constant dense<0.000000e+00> : vector<64x128xf32>
    %63 = tpu.matmul %61, %62, %cst_29 {dimension_numbers = #tpu.dot_dimension_numbers<[1], [0], [0], [1], [0, 0, 1, 1], [], []>} : vector<64x64xbf16>, vector<64x128xbf16>, vector<64x128xf32> -> vector<64x128xf32>
    %64 = arith.addf %59, %63 : vector<64x128xf32>
    %c5 = arith.constant 5 : index
    %c0_30 = arith.constant 0 : index
    %c0_31 = arith.constant 0 : index
    %65 = vector.load %arg2[%c5, %c0_30, %c0_31] : memref<9x64x64xbf16, #tpu.memory_space<vmem>>, vector<1x64x64xbf16>
    %66 = vector.shape_cast %65 : vector<1x64x64xbf16> to vector<64x64xbf16>
    %67 = vector.extract_strided_slice %40 {offsets = [0, 8], sizes = [64, 128], strides = [1, 1]} : vector<64x256xbf16> to vector<64x128xbf16>
    %cst_32 = arith.constant dense<0.000000e+00> : vector<64x128xf32>
    %68 = tpu.matmul %66, %67, %cst_32 {dimension_numbers = #tpu.dot_dimension_numbers<[1], [0], [0], [1], [0, 0, 1, 1], [], []>} : vector<64x64xbf16>, vector<64x128xbf16>, vector<64x128xf32> -> vector<64x128xf32>
    %69 = arith.addf %64, %68 : vector<64x128xf32>
    %c6 = arith.constant 6 : index
    %c0_33 = arith.constant 0 : index
    %c0_34 = arith.constant 0 : index
    %70 = vector.load %arg2[%c6, %c0_33, %c0_34] : memref<9x64x64xbf16, #tpu.memory_space<vmem>>, vector<1x64x64xbf16>
    %71 = vector.shape_cast %70 : vector<1x64x64xbf16> to vector<64x64xbf16>
    %72 = vector.extract_strided_slice %40 {offsets = [0, 12], sizes = [64, 128], strides = [1, 1]} : vector<64x256xbf16> to vector<64x128xbf16>
    %cst_35 = arith.constant dense<0.000000e+00> : vector<64x128xf32>
    %73 = tpu.matmul %71, %72, %cst_35 {dimension_numbers = #tpu.dot_dimension_numbers<[1], [0], [0], [1], [0, 0, 1, 1], [], []>} : vector<64x64xbf16>, vector<64x128xbf16>, vector<64x128xf32> -> vector<64x128xf32>
    %74 = arith.addf %69, %73 : vector<64x128xf32>
    %c7 = arith.constant 7 : index
    %c0_36 = arith.constant 0 : index
    %c0_37 = arith.constant 0 : index
    %75 = vector.load %arg2[%c7, %c0_36, %c0_37] : memref<9x64x64xbf16, #tpu.memory_space<vmem>>, vector<1x64x64xbf16>
    %76 = vector.shape_cast %75 : vector<1x64x64xbf16> to vector<64x64xbf16>
    %77 = vector.extract_strided_slice %40 {offsets = [0, 13], sizes = [64, 128], strides = [1, 1]} : vector<64x256xbf16> to vector<64x128xbf16>
    %cst_38 = arith.constant dense<0.000000e+00> : vector<64x128xf32>
    %78 = tpu.matmul %76, %77, %cst_38 {dimension_numbers = #tpu.dot_dimension_numbers<[1], [0], [0], [1], [0, 0, 1, 1], [], []>} : vector<64x64xbf16>, vector<64x128xbf16>, vector<64x128xf32> -> vector<64x128xf32>
    %79 = arith.addf %74, %78 : vector<64x128xf32>
    %c8 = arith.constant 8 : index
    %c0_39 = arith.constant 0 : index
    %c0_40 = arith.constant 0 : index
    %80 = vector.load %arg2[%c8, %c0_39, %c0_40] : memref<9x64x64xbf16, #tpu.memory_space<vmem>>, vector<1x64x64xbf16>
    %81 = vector.shape_cast %80 : vector<1x64x64xbf16> to vector<64x64xbf16>
    %82 = vector.extract_strided_slice %40 {offsets = [0, 14], sizes = [64, 128], strides = [1, 1]} : vector<64x256xbf16> to vector<64x128xbf16>
    %cst_41 = arith.constant dense<0.000000e+00> : vector<64x128xf32>
    %83 = tpu.matmul %81, %82, %cst_41 {dimension_numbers = #tpu.dot_dimension_numbers<[1], [0], [0], [1], [0, 0, 1, 1], [], []>} : vector<64x64xbf16>, vector<64x128xbf16>, vector<64x128xf32> -> vector<64x128xf32>
    %84 = arith.addf %79, %83 : vector<64x128xf32>
    %c0_42 = arith.constant 0 : index
    %c0_43 = arith.constant 0 : index
    %85 = vector.load %arg3[%c0_42, %c0_43] : memref<64x1xf32, #tpu.memory_space<vmem>>, vector<64x1xf32>
    %86 = vector.broadcast %85 : vector<64x1xf32> to vector<64x128xf32>
    %87 = arith.addf %84, %86 : vector<64x128xf32>
    %c0_44 = arith.constant 0 : index
    %c0_45 = arith.constant 0 : index
    %c0_46 = arith.constant 0 : index
    %88 = vector.load %arg7[%c0_44, %c0_45, %c0_46] : memref<1x64x128xbf16, #tpu.memory_space<vmem>>, vector<1x64x128xbf16>
    %89 = vector.shape_cast %88 : vector<1x64x128xbf16> to vector<64x128xbf16>
    %90 = arith.extf %89 : vector<64x128xbf16> to vector<64x128xf32>
    %91 = arith.addf %87, %90 : vector<64x128xf32>
    %92 = arith.truncf %91 : vector<64x128xf32> to vector<64x128xbf16>
    %c0_47 = arith.constant 0 : index
    %c0_48 = arith.constant 0 : index
    %c0_49 = arith.constant 0 : index
    %93 = vector.load %arg8[%c0_47, %c0_48, %c0_49] : memref<1x64x128xbf16, #tpu.memory_space<vmem>>, vector<1x64x128xbf16>
    %94 = vector.shape_cast %93 : vector<1x64x128xbf16> to vector<64x128xbf16>
    %95 = vector.shape_cast %92 : vector<64x128xbf16> to vector<1x64x128xbf16>
    tpu.vector_store %arg8[%c0_47, %c0_48, %c0_49], %95 {strides = array<i32>} : memref<1x64x128xbf16, #tpu.memory_space<vmem>>, vector<1x64x128xbf16>,
    return
  }
  func.func @transform_0(%arg0: i32) -> (i32, i32, i32) {
    %c0_i32 = arith.constant 0 : i32
    %c0_i32_0 = arith.constant 0 : i32
    %c0_i32_1 = arith.constant 0 : i32
    return %arg0, %c0_i32, %c0_i32_0 : i32, i32, i32
  }
  func.func @transform_1(%arg0: i32) -> (i32, i32, i32) {
    %c0_i32 = arith.constant 0 : i32
    %c0_i32_0 = arith.constant 0 : i32
    %c0_i32_1 = arith.constant 0 : i32
    %c0_i32_2 = arith.constant 0 : i32
    return %c0_i32, %c0_i32_0, %c0_i32_1 : i32, i32, i32
  }
  func.func @transform_2(%arg0: i32) -> (i32, i32) {
    %c0_i32 = arith.constant 0 : i32
    %c0_i32_0 = arith.constant 0 : i32
    %c0_i32_1 = arith.constant 0 : i32
    return %c0_i32, %c0_i32_0 : i32, i32
  }
  func.func @transform_3(%arg0: i32) -> (i32, i32) {
    %c0_i32 = arith.constant 0 : i32
    %c0_i32_0 = arith.constant 0 : i32
    %c0_i32_1 = arith.constant 0 : i32
    return %c0_i32, %c0_i32_0 : i32, i32
  }
  func.func @transform_4(%arg0: i32) -> (i32, i32) {
    %c0_i32 = arith.constant 0 : i32
    %c0_i32_0 = arith.constant 0 : i32
    %c0_i32_1 = arith.constant 0 : i32
    return %c0_i32, %c0_i32_0 : i32, i32
  }
  func.func @transform_5(%arg0: i32) -> (i32, i32) {
    %c0_i32 = arith.constant 0 : i32
    %c0_i32_0 = arith.constant 0 : i32
    %c0_i32_1 = arith.constant 0 : i32
    return %c0_i32, %c0_i32_0 : i32, i32
  }
  func.func @transform_6(%arg0: i32) -> (i32, i32, i32) {
    %c0_i32 = arith.constant 0 : i32
    %c0_i32_0 = arith.constant 0 : i32
    %c0_i32_1 = arith.constant 0 : i32
    return %arg0, %c0_i32, %c0_i32_0 : i32, i32, i32
  }
  func.func @transform_7(%arg0: i32) -> (i32, i32, i32) {
    %c0_i32 = arith.constant 0 : i32
    %c0_i32_0 = arith.constant 0 : i32
    %c0_i32_1 = arith.constant 0 : i32
    return %arg0, %c0_i32, %c0_i32_0 : i32, i32, i32
  }
}

module attributes {stable_mosaic.version = 11 : i64} {
  func.func @kernel(%arg0: i32, %arg1: memref<1x64x256xbf16, #tpu.memory_space<vmem>>, %arg2: memref<9x64x64xbf16, #tpu.memory_space<vmem>>, %arg3: memref<64x1xf32, #tpu.memory_space<vmem>>, %arg4: memref<64x256xf32, #tpu.memory_space<vmem>>, %arg5: memref<64x1xf32, #tpu.memory_space<vmem>>, %arg6: memref<64x1xf32, #tpu.memory_space<vmem>>, %arg7: memref<1x64x128xf32, #tpu.memory_space<vmem>>) attributes {dimension_semantics = [#tpu.dimension_semantics<parallel>], iteration_bounds = array<i64: 2>, scalar_prefetch = 0 : i64, scratch_operands = 0 : i64, tpu.core_type = #tpu.core_type<tc>, window_params = [{transform_indices = @transform_0, window_bounds = array<i64: 1, 64, 256>}, {pipeline_mode = #tpu.pipeline_mode<synchronous>, transform_indices = @transform_1, window_bounds = array<i64: 9, 64, 64>}, {pipeline_mode = #tpu.pipeline_mode<synchronous>, transform_indices = @transform_2, window_bounds = array<i64: 64, 1>}, {pipeline_mode = #tpu.pipeline_mode<synchronous>, transform_indices = @transform_3, window_bounds = array<i64: 64, 256>}, {pipeline_mode = #tpu.pipeline_mode<synchronous>, transform_indices = @transform_4, window_bounds = array<i64: 64, 1>}, {pipeline_mode = #tpu.pipeline_mode<synchronous>, transform_indices = @transform_5, window_bounds = array<i64: 64, 1>}, {transform_indices = @transform_6, window_bounds = array<i64: 1, 64, 128>}]} {
    %c0 = arith.constant 0 : index
    %c0_0 = arith.constant 0 : index
    %c0_1 = arith.constant 0 : index
    %0 = vector.load %arg1[%c0, %c0_0, %c0_1] : memref<1x64x256xbf16, #tpu.memory_space<vmem>>, vector<1x64x256xbf16>
    %1 = vector.shape_cast %0 : vector<1x64x256xbf16> to vector<64x256xbf16>
    %2 = arith.extf %1 : vector<64x256xbf16> to vector<64x256xf32>
    %c0_2 = arith.constant 0 : index
    %c0_3 = arith.constant 0 : index
    %3 = vector.load %arg4[%c0_2, %c0_3] : memref<64x256xf32, #tpu.memory_space<vmem>>, vector<64x256xf32>
    %4 = arith.mulf %2, %3 : vector<64x256xf32>
    %5 = vector.shape_cast %4 : vector<64x256xf32> to vector<1x64x256xf32>
    %cst = arith.constant dense<0.000000e+00> : vector<1xf32>
    %6 = vector.multi_reduction <add>, %5, %cst [1, 2] : vector<1x64x256xf32> to vector<1xf32>
    %7 = vector.shape_cast %6 : vector<1xf32> to vector<1x1x1xf32>
    %8 = vector.extract %7[0, 0, 0] : f32 from vector<1x1x1xf32>
    %9 = vector.broadcast %8 : f32 to vector<1x1xf32>
    %cst_4 = arith.constant 1.024000e+03 : f32
    %10 = vector.broadcast %cst_4 : f32 to vector<1x1xf32>
    %11 = arith.divf %9, %10 : vector<1x1xf32>
    %12 = vector.broadcast %11 : vector<1x1xf32> to vector<64x256xf32>
    %13 = arith.subf %2, %12 : vector<64x256xf32>
    %14 = arith.mulf %13, %3 : vector<64x256xf32>
    %15 = arith.mulf %14, %14 : vector<64x256xf32>
    %16 = vector.shape_cast %15 : vector<64x256xf32> to vector<1x64x256xf32>
    %cst_5 = arith.constant dense<0.000000e+00> : vector<1xf32>
    %17 = vector.multi_reduction <add>, %16, %cst_5 [1, 2] : vector<1x64x256xf32> to vector<1xf32>
    %18 = vector.shape_cast %17 : vector<1xf32> to vector<1x1x1xf32>
    %19 = vector.extract %18[0, 0, 0] : f32 from vector<1x1x1xf32>
    %20 = vector.broadcast %19 : f32 to vector<1x1xf32>
    %cst_6 = arith.constant 1.023000e+03 : f32
    %21 = vector.broadcast %cst_6 : f32 to vector<1x1xf32>
    %22 = arith.divf %20, %21 : vector<1x1xf32>
    %23 = math.sqrt %22 : vector<1x1xf32>
    %cst_7 = arith.constant 9.99999974E-6 : f32
    %24 = vector.broadcast %cst_7 : f32 to vector<1x1xf32>
    %25 = arith.addf %23, %24 : vector<1x1xf32>
    %cst_8 = arith.constant 1.000000e+00 : f32
    %26 = vector.broadcast %cst_8 : f32 to vector<1x1xf32>
    %27 = arith.divf %26, %25 : vector<1x1xf32>
    %28 = vector.broadcast %11 : vector<1x1xf32> to vector<64x256xf32>
    %29 = arith.subf %2, %28 : vector<64x256xf32>
    %30 = vector.broadcast %27 : vector<1x1xf32> to vector<64x256xf32>
    %31 = arith.mulf %29, %30 : vector<64x256xf32>
    %c0_9 = arith.constant 0 : index
    %c0_10 = arith.constant 0 : index
    %32 = vector.load %arg5[%c0_9, %c0_10] : memref<64x1xf32, #tpu.memory_space<vmem>>, vector<64x1xf32>
    %33 = vector.broadcast %32 : vector<64x1xf32> to vector<64x256xf32>
    %34 = arith.mulf %31, %33 : vector<64x256xf32>
    %c0_11 = arith.constant 0 : index
    %c0_12 = arith.constant 0 : index
    %35 = vector.load %arg6[%c0_11, %c0_12] : memref<64x1xf32, #tpu.memory_space<vmem>>, vector<64x1xf32>
    %36 = vector.broadcast %35 : vector<64x1xf32> to vector<64x256xf32>
    %37 = arith.addf %34, %36 : vector<64x256xf32>
    %cst_13 = arith.constant 0.000000e+00 : f32
    %38 = vector.broadcast %cst_13 : f32 to vector<64x256xf32>
    %39 = arith.maximumf %37, %38 : vector<64x256xf32>
    %40 = arith.truncf %39 : vector<64x256xf32> to vector<64x256xbf16>
    %c0_14 = arith.constant 0 : index
    %c0_15 = arith.constant 0 : index
    %c0_16 = arith.constant 0 : index
    %41 = vector.load %arg2[%c0_14, %c0_15, %c0_16] : memref<9x64x64xbf16, #tpu.memory_space<vmem>>, vector<1x64x64xbf16>
    %42 = vector.shape_cast %41 : vector<1x64x64xbf16> to vector<64x64xbf16>
    %43 = vector.extract_strided_slice %40 {offsets = [0, 0], sizes = [64, 128], strides = [1, 1]} : vector<64x256xbf16> to vector<64x128xbf16>
    %cst_17 = arith.constant dense<0.000000e+00> : vector<64x128xf32>
    %44 = tpu.matmul %42, %43, %cst_17 {dimension_numbers = #tpu.dot_dimension_numbers<[1], [0], [0], [1], [0, 0, 1, 1], [], []>} : vector<64x64xbf16>, vector<64x128xbf16>, vector<64x128xf32> -> vector<64x128xf32>
    %c1 = arith.constant 1 : index
    %c0_18 = arith.constant 0 : index
    %c0_19 = arith.constant 0 : index
    %45 = vector.load %arg2[%c1, %c0_18, %c0_19] : memref<9x64x64xbf16, #tpu.memory_space<vmem>>, vector<1x64x64xbf16>
    %46 = vector.shape_cast %45 : vector<1x64x64xbf16> to vector<64x64xbf16>
    %47 = vector.extract_strided_slice %40 {offsets = [0, 1], sizes = [64, 128], strides = [1, 1]} : vector<64x256xbf16> to vector<64x128xbf16>
    %cst_20 = arith.constant dense<0.000000e+00> : vector<64x128xf32>
    %48 = tpu.matmul %46, %47, %cst_20 {dimension_numbers = #tpu.dot_dimension_numbers<[1], [0], [0], [1], [0, 0, 1, 1], [], []>} : vector<64x64xbf16>, vector<64x128xbf16>, vector<64x128xf32> -> vector<64x128xf32>
    %49 = arith.addf %44, %48 : vector<64x128xf32>
    %c2 = arith.constant 2 : index
    %c0_21 = arith.constant 0 : index
    %c0_22 = arith.constant 0 : index
    %50 = vector.load %arg2[%c2, %c0_21, %c0_22] : memref<9x64x64xbf16, #tpu.memory_space<vmem>>, vector<1x64x64xbf16>
    %51 = vector.shape_cast %50 : vector<1x64x64xbf16> to vector<64x64xbf16>
    %52 = vector.extract_strided_slice %40 {offsets = [0, 2], sizes = [64, 128], strides = [1, 1]} : vector<64x256xbf16> to vector<64x128xbf16>
    %cst_23 = arith.constant dense<0.000000e+00> : vector<64x128xf32>
    %53 = tpu.matmul %51, %52, %cst_23 {dimension_numbers = #tpu.dot_dimension_numbers<[1], [0], [0], [1], [0, 0, 1, 1], [], []>} : vector<64x64xbf16>, vector<64x128xbf16>, vector<64x128xf32> -> vector<64x128xf32>
    %54 = arith.addf %49, %53 : vector<64x128xf32>
    %c3 = arith.constant 3 : index
    %c0_24 = arith.constant 0 : index
    %c0_25 = arith.constant 0 : index
    %55 = vector.load %arg2[%c3, %c0_24, %c0_25] : memref<9x64x64xbf16, #tpu.memory_space<vmem>>, vector<1x64x64xbf16>
    %56 = vector.shape_cast %55 : vector<1x64x64xbf16> to vector<64x64xbf16>
    %57 = vector.extract_strided_slice %40 {offsets = [0, 6], sizes = [64, 128], strides = [1, 1]} : vector<64x256xbf16> to vector<64x128xbf16>
    %cst_26 = arith.constant dense<0.000000e+00> : vector<64x128xf32>
    %58 = tpu.matmul %56, %57, %cst_26 {dimension_numbers = #tpu.dot_dimension_numbers<[1], [0], [0], [1], [0, 0, 1, 1], [], []>} : vector<64x64xbf16>, vector<64x128xbf16>, vector<64x128xf32> -> vector<64x128xf32>
    %59 = arith.addf %54, %58 : vector<64x128xf32>
    %c4 = arith.constant 4 : index
    %c0_27 = arith.constant 0 : index
    %c0_28 = arith.constant 0 : index
    %60 = vector.load %arg2[%c4, %c0_27, %c0_28] : memref<9x64x64xbf16, #tpu.memory_space<vmem>>, vector<1x64x64xbf16>
    %61 = vector.shape_cast %60 : vector<1x64x64xbf16> to vector<64x64xbf16>
    %62 = vector.extract_strided_slice %40 {offsets = [0, 7], sizes = [64, 128], strides = [1, 1]} : vector<64x256xbf16> to vector<64x128xbf16>
    %cst_29 = arith.constant dense<0.000000e+00> : vector<64x128xf32>
    %63 = tpu.matmul %61, %62, %cst_29 {dimension_numbers = #tpu.dot_dimension_numbers<[1], [0], [0], [1], [0, 0, 1, 1], [], []>} : vector<64x64xbf16>, vector<64x128xbf16>, vector<64x128xf32> -> vector<64x128xf32>
    %64 = arith.addf %59, %63 : vector<64x128xf32>
    %c5 = arith.constant 5 : index
    %c0_30 = arith.constant 0 : index
    %c0_31 = arith.constant 0 : index
    %65 = vector.load %arg2[%c5, %c0_30, %c0_31] : memref<9x64x64xbf16, #tpu.memory_space<vmem>>, vector<1x64x64xbf16>
    %66 = vector.shape_cast %65 : vector<1x64x64xbf16> to vector<64x64xbf16>
    %67 = vector.extract_strided_slice %40 {offsets = [0, 8], sizes = [64, 128], strides = [1, 1]} : vector<64x256xbf16> to vector<64x128xbf16>
    %cst_32 = arith.constant dense<0.000000e+00> : vector<64x128xf32>
    %68 = tpu.matmul %66, %67, %cst_32 {dimension_numbers = #tpu.dot_dimension_numbers<[1], [0], [0], [1], [0, 0, 1, 1], [], []>} : vector<64x64xbf16>, vector<64x128xbf16>, vector<64x128xf32> -> vector<64x128xf32>
    %69 = arith.addf %64, %68 : vector<64x128xf32>
    %c6 = arith.constant 6 : index
    %c0_33 = arith.constant 0 : index
    %c0_34 = arith.constant 0 : index
    %70 = vector.load %arg2[%c6, %c0_33, %c0_34] : memref<9x64x64xbf16, #tpu.memory_space<vmem>>, vector<1x64x64xbf16>
    %71 = vector.shape_cast %70 : vector<1x64x64xbf16> to vector<64x64xbf16>
    %72 = vector.extract_strided_slice %40 {offsets = [0, 12], sizes = [64, 128], strides = [1, 1]} : vector<64x256xbf16> to vector<64x128xbf16>
    %cst_35 = arith.constant dense<0.000000e+00> : vector<64x128xf32>
    %73 = tpu.matmul %71, %72, %cst_35 {dimension_numbers = #tpu.dot_dimension_numbers<[1], [0], [0], [1], [0, 0, 1, 1], [], []>} : vector<64x64xbf16>, vector<64x128xbf16>, vector<64x128xf32> -> vector<64x128xf32>
    %74 = arith.addf %69, %73 : vector<64x128xf32>
    %c7 = arith.constant 7 : index
    %c0_36 = arith.constant 0 : index
    %c0_37 = arith.constant 0 : index
    %75 = vector.load %arg2[%c7, %c0_36, %c0_37] : memref<9x64x64xbf16, #tpu.memory_space<vmem>>, vector<1x64x64xbf16>
    %76 = vector.shape_cast %75 : vector<1x64x64xbf16> to vector<64x64xbf16>
    %77 = vector.extract_strided_slice %40 {offsets = [0, 13], sizes = [64, 128], strides = [1, 1]} : vector<64x256xbf16> to vector<64x128xbf16>
    %cst_38 = arith.constant dense<0.000000e+00> : vector<64x128xf32>
    %78 = tpu.matmul %76, %77, %cst_38 {dimension_numbers = #tpu.dot_dimension_numbers<[1], [0], [0], [1], [0, 0, 1, 1], [], []>} : vector<64x64xbf16>, vector<64x128xbf16>, vector<64x128xf32> -> vector<64x128xf32>
    %79 = arith.addf %74, %78 : vector<64x128xf32>
    %c8 = arith.constant 8 : index
    %c0_39 = arith.constant 0 : index
    %c0_40 = arith.constant 0 : index
    %80 = vector.load %arg2[%c8, %c0_39, %c0_40] : memref<9x64x64xbf16, #tpu.memory_space<vmem>>, vector<1x64x64xbf16>
    %81 = vector.shape_cast %80 : vector<1x64x64xbf16> to vector<64x64xbf16>
    %82 = vector.extract_strided_slice %40 {offsets = [0, 14], sizes = [64, 128], strides = [1, 1]} : vector<64x256xbf16> to vector<64x128xbf16>
    %cst_41 = arith.constant dense<0.000000e+00> : vector<64x128xf32>
    %83 = tpu.matmul %81, %82, %cst_41 {dimension_numbers = #tpu.dot_dimension_numbers<[1], [0], [0], [1], [0, 0, 1, 1], [], []>} : vector<64x64xbf16>, vector<64x128xbf16>, vector<64x128xf32> -> vector<64x128xf32>
    %84 = arith.addf %79, %83 : vector<64x128xf32>
    %c0_42 = arith.constant 0 : index
    %c0_43 = arith.constant 0 : index
    %85 = vector.load %arg3[%c0_42, %c0_43] : memref<64x1xf32, #tpu.memory_space<vmem>>, vector<64x1xf32>
    %86 = vector.broadcast %85 : vector<64x1xf32> to vector<64x128xf32>
    %87 = arith.addf %84, %86 : vector<64x128xf32>
    %c0_44 = arith.constant 0 : index
    %c0_45 = arith.constant 0 : index
    %c0_46 = arith.constant 0 : index
    %88 = vector.load %arg7[%c0_44, %c0_45, %c0_46] : memref<1x64x128xf32, #tpu.memory_space<vmem>>, vector<1x64x128xf32>
    %89 = vector.shape_cast %88 : vector<1x64x128xf32> to vector<64x128xf32>
    %90 = vector.shape_cast %87 : vector<64x128xf32> to vector<1x64x128xf32>
    tpu.vector_store %arg7[%c0_44, %c0_45, %c0_46], %90 {strides = array<i32>} : memref<1x64x128xf32, #tpu.memory_space<vmem>>, vector<1x64x128xf32>,
    return
  }
  func.func @transform_0(%arg0: i32) -> (i32, i32, i32) {
    %c0_i32 = arith.constant 0 : i32
    %c0_i32_0 = arith.constant 0 : i32
    %c0_i32_1 = arith.constant 0 : i32
    return %arg0, %c0_i32, %c0_i32_0 : i32, i32, i32
  }
  func.func @transform_1(%arg0: i32) -> (i32, i32, i32) {
    %c0_i32 = arith.constant 0 : i32
    %c0_i32_0 = arith.constant 0 : i32
    %c0_i32_1 = arith.constant 0 : i32
    %c0_i32_2 = arith.constant 0 : i32
    return %c0_i32, %c0_i32_0, %c0_i32_1 : i32, i32, i32
  }
  func.func @transform_2(%arg0: i32) -> (i32, i32) {
    %c0_i32 = arith.constant 0 : i32
    %c0_i32_0 = arith.constant 0 : i32
    %c0_i32_1 = arith.constant 0 : i32
    return %c0_i32, %c0_i32_0 : i32, i32
  }
  func.func @transform_3(%arg0: i32) -> (i32, i32) {
    %c0_i32 = arith.constant 0 : i32
    %c0_i32_0 = arith.constant 0 : i32
    %c0_i32_1 = arith.constant 0 : i32
    return %c0_i32, %c0_i32_0 : i32, i32
  }
  func.func @transform_4(%arg0: i32) -> (i32, i32) {
    %c0_i32 = arith.constant 0 : i32
    %c0_i32_0 = arith.constant 0 : i32
    %c0_i32_1 = arith.constant 0 : i32
    return %c0_i32, %c0_i32_0 : i32, i32
  }
  func.func @transform_5(%arg0: i32) -> (i32, i32) {
    %c0_i32 = arith.constant 0 : i32
    %c0_i32_0 = arith.constant 0 : i32
    %c0_i32_1 = arith.constant 0 : i32
    return %c0_i32, %c0_i32_0 : i32, i32
  }
  func.func @transform_6(%arg0: i32) -> (i32, i32, i32) {
    %c0_i32 = arith.constant 0 : i32
    %c0_i32_0 = arith.constant 0 : i32
    %c0_i32_1 = arith.constant 0 : i32
    return %arg0, %c0_i32, %c0_i32_0 : i32, i32, i32
  }
}

</mosaic_0001>

<llo_original>
// kernel: s_encoder_forward.11
$region0: #{s_encoder_forward.11}
  #allocation0 [shape = 'u32[]', space=smem, size = 0x4, offset = 0x4, fixed_abs, tag = 'smem constant byte address 0x4 - core index']
  #allocation1 [shape = 'u32[144,128]{1,0:T(1,128)}', space=vmem, size = 0x12000, scoped, tag = 'internal scratch']
  %s0 = inlined_call_operand.vmem [shape: bf16[2,16,512], index: 0, kind: input, shape index: {}]
  %s1 = inlined_call_operand.vmem [shape: bf16[9,8,16], index: 1, kind: input, shape index: {}]
  %s2 = inlined_call_operand.vmem [shape: f32[8,1], index: 2, kind: input, shape index: {}]
  %s3 = inlined_call_operand.vmem [shape: f32[1,384], index: 3, kind: input, shape index: {}]
  %s4 = inlined_call_operand.vmem [shape: f32[8,1], index: 4, kind: input, shape index: {}]
  %s5 = inlined_call_operand.vmem [shape: f32[8,1], index: 5, kind: input, shape index: {}]
  %s6 = inlined_call_operand.vmem [shape: bf16[2,8,384], index: 6, kind: output, shape index: {}]
  %s7 = sld [smem:[#allocation0]]
  $region57: #{s_encoder_forward.11} parent=0
    _
  %s9 = ssub.s32 1, %s7
  %s10 = scalar_select 0, %s9, %s7
  loop: start=0, step=1, limit=4
  $region2: #{s_encoder_forward.11} parent=0 // loop_pre_header
    _
  $region3: #{s_encoder_forward.11} parent=0 // loop_header
    %s12 = sphi 0, %s16
    %p13 = scmp.ge.s32.totalorder %s12, 4
    %s22 = sphi 0, %s24
    %s25 = sphi 0, %s22
    %s26 = sphi 0, %s25
    %s42 = sphi 0, %s26
    %s46 = sphi 0, %s46
    %s48 = sphi 0, %s46
    %s49 = sphi 0, %s48
    %s63 = sphi 0, %s49
    %s67 = sphi 0, %s67
    %s69 = sphi 0, %s67
    %s70 = sphi 0, %s69
    %s84 = sphi 0, %s70
    %s88 = sphi 0, %s88
    %s90 = sphi 0, %s88
    %s91 = sphi 0, %s90
    %s105 = sphi 0, %s91
    %s109 = sphi 0, %s109
    %s111 = sphi 0, %s109
    %s112 = sphi 0, %s111
    %s126 = sphi 0, %s112
    %s130 = sphi 0, %s130
    %s132 = sphi 0, %s130
    %s133 = sphi 0, %s132
    %s147 = sphi 0, %s133
    %s153 = sphi 0, %s155
    %s156 = sphi 0, %s153
    %s157 = sphi 0, %s156
    %s173 = sphi 0, %s157
  $region4: #{s_encoder_forward.11} parent=0 // loop_header_branch
    %15 = sbr.rel (%p13) target = $region8
  $region5: #{s_encoder_forward.11} parent=0 // loop_body
    %s17 = ssub.s32 %s12, 1
    %s18 = ssub.s32 %s12, 2
    %s19 = sadd.s32 %s12, 1
    %s20 = ssub.s32 %s12, %s19
    %p21 = scmp.eq.s32.totalorder %s20, 0
    %s23 = sadd.s32 %s22, 1
    %s24 = scalar_select %p21, %s22, %s23
    %p27 = pneg %p21
    %p28 = scmp.eq.s32.totalorder %s12, 1
    %p29 = por %p27, %p28
    %p30 = scmp.ne.s32.totalorder %s22, %s25
    %p31 = scmp.eq.s32.totalorder %s12, 0
    %p32 = por %p30, %p31
    %p33 = scmp.ne.s32.totalorder %s22, %s25
    %p34 = scmp.eq.s32.totalorder %s17, 1
    %p35 = por %p33, %p34
    %p36 = scmp.ne.s32.totalorder %s25, %s26
    %p37 = scmp.eq.s32.totalorder %s17, 0
    %p38 = por %p36, %p37
    %p39 = scmp.ne.s32.totalorder %s25, %s26
    %p40 = scmp.eq.s32.totalorder %s18, 1
    %p41 = por %p39, %p40
    %p43 = scmp.ne.s32.totalorder %s26, %s42
    %p44 = scmp.eq.s32.totalorder %s18, 0
    %p45 = por %p43, %p44
    %s47 = sadd.s32 %s46, 1
    %p50 = scmp.eq.s32.totalorder %s12, 1
    %p51 = scmp.ne.s32.totalorder %s46, %s48
    %p52 = scmp.eq.s32.totalorder %s12, 0
    %p53 = por %p51, %p52
    %p54 = scmp.ne.s32.totalorder %s46, %s48
    %p55 = scmp.eq.s32.totalorder %s17, 1
    %p56 = por %p54, %p55
    %p57 = scmp.ne.s32.totalorder %s48, %s49
    %p58 = scmp.eq.s32.totalorder %s17, 0
    %p59 = por %p57, %p58
    %p60 = scmp.ne.s32.totalorder %s48, %s49
    %p61 = scmp.eq.s32.totalorder %s18, 1
    %p62 = por %p60, %p61
    %p64 = scmp.ne.s32.totalorder %s49, %s63
    %p65 = scmp.eq.s32.totalorder %s18, 0
    %p66 = por %p64, %p65
    %s68 = sadd.s32 %s67, 1
    %p71 = scmp.eq.s32.totalorder %s12, 1
    %p72 = scmp.ne.s32.totalorder %s67, %s69
    %p73 = scmp.eq.s32.totalorder %s12, 0
    %p74 = por %p72, %p73
    %p75 = scmp.ne.s32.totalorder %s67, %s69
    %p76 = scmp.eq.s32.totalorder %s17, 1
    %p77 = por %p75, %p76
    %p78 = scmp.ne.s32.totalorder %s69, %s70
    %p79 = scmp.eq.s32.totalorder %s17, 0
    %p80 = por %p78, %p79
    %p81 = scmp.ne.s32.totalorder %s69, %s70
    %p82 = scmp.eq.s32.totalorder %s18, 1
    %p83 = por %p81, %p82
    %p85 = scmp.ne.s32.totalorder %s70, %s84
    %p86 = scmp.eq.s32.totalorder %s18, 0
    %p87 = por %p85, %p86
    %s89 = sadd.s32 %s88, 1
    %p92 = scmp.eq.s32.totalorder %s12, 1
    %p93 = scmp.ne.s32.totalorder %s88, %s90
    %p94 = scmp.eq.s32.totalorder %s12, 0
    %p95 = por %p93, %p94
    %p96 = scmp.ne.s32.totalorder %s88, %s90
    %p97 = scmp.eq.s32.totalorder %s17, 1
    %p98 = por %p96, %p97
    %p99 = scmp.ne.s32.totalorder %s90, %s91
    %p100 = scmp.eq.s32.totalorder %s17, 0
    %p101 = por %p99, %p100
    %p102 = scmp.ne.s32.totalorder %s90, %s91
    %p103 = scmp.eq.s32.totalorder %s18, 1
    %p104 = por %p102, %p103
    %p106 = scmp.ne.s32.totalorder %s91, %s105
    %p107 = scmp.eq.s32.totalorder %s18, 0
    %p108 = por %p106, %p107
    %s110 = sadd.s32 %s109, 1
    %p113 = scmp.eq.s32.totalorder %s12, 1
    %p114 = scmp.ne.s32.totalorder %s109, %s111
    %p115 = scmp.eq.s32.totalorder %s12, 0
    %p116 = por %p114, %p115
    %p117 = scmp.ne.s32.totalorder %s109, %s111
    %p118 = scmp.eq.s32.totalorder %s17, 1
    %p119 = por %p117, %p118
    %p120 = scmp.ne.s32.totalorder %s111, %s112
    %p121 = scmp.eq.s32.totalorder %s17, 0
    %p122 = por %p120, %p121
    %p123 = scmp.ne.s32.totalorder %s111, %s112
    %p124 = scmp.eq.s32.totalorder %s18, 1
    %p125 = por %p123, %p124
    %p127 = scmp.ne.s32.totalorder %s112, %s126
    %p128 = scmp.eq.s32.totalorder %s18, 0
    %p129 = por %p127, %p128
    %s131 = sadd.s32 %s130, 1
    %p134 = scmp.eq.s32.totalorder %s12, 1
    %p135 = scmp.ne.s32.totalorder %s130, %s132
    %p136 = scmp.eq.s32.totalorder %s12, 0
    %p137 = por %p135, %p136
    %p138 = scmp.ne.s32.totalorder %s130, %s132
    %p139 = scmp.eq.s32.totalorder %s17, 1
    %p140 = por %p138, %p139
    %p141 = scmp.ne.s32.totalorder %s132, %s133
    %p142 = scmp.eq.s32.totalorder %s17, 0
    %p143 = por %p141, %p142
    %p144 = scmp.ne.s32.totalorder %s132, %s133
    %p145 = scmp.eq.s32.totalorder %s18, 1
    %p146 = por %p144, %p145
    %p148 = scmp.ne.s32.totalorder %s133, %s147
    %p149 = scmp.eq.s32.totalorder %s18, 0
    %p150 = por %p148, %p149
    %s151 = ssub.s32 %s12, %s19
    %p152 = scmp.eq.s32.totalorder %s151, 0
    %s154 = sadd.s32 %s153, 1
    %s155 = scalar_select %p152, %s153, %s154
    %p158 = pneg %p152
    %p159 = scmp.eq.s32.totalorder %s12, 1
    %p160 = por %p158, %p159
    %p161 = scmp.ne.s32.totalorder %s153, %s156
    %p162 = scmp.eq.s32.totalorder %s12, 0
    %p163 = por %p161, %p162
    %p164 = scmp.ne.s32.totalorder %s153, %s156
    %p165 = scmp.eq.s32.totalorder %s17, 1
    %p166 = por %p164, %p165
    %p167 = scmp.ne.s32.totalorder %s156, %s157
    %p168 = scmp.eq.s32.totalorder %s17, 0
    %p169 = por %p167, %p168
    %p170 = scmp.ne.s32.totalorder %s156, %s157
    %p171 = scmp.eq.s32.totalorder %s18, 1
    %p172 = por %p170, %p171
    %p174 = scmp.ne.s32.totalorder %s157, %s173
    %p175 = scmp.eq.s32.totalorder %s18, 0
    %p176 = por %p174, %p175
    %p177 = scmp.le.s32.totalorder 1, %s12
    %p178 = scmp.lt.s32.totalorder %s12, 3
    %p179 = pnand %p177, %p178
    %p180 = pneg %p179
    // Predicated region
    $region9: #{s_encoder_forward.11} parent=5 // pred_check
      _
    $region10: #{s_encoder_forward.11} parent=5 // pred_check_branch
      %182 = sbr.rel (%p179) target = $region12
    $region11: #{s_encoder_forward.11} parent=5 // pred_region
      %s183 = ssub.s32 %s12, 1
      // Predicated region
      $region13: #{s_encoder_forward.11} parent=11 // pred_check
        %p184 = pneg %p59
      $region14: #{s_encoder_forward.11} parent=11 // pred_check_branch
        %186 = sbr.rel (%p184) target = $region16
      $region15: #{s_encoder_forward.11} parent=11 // pred_region
        _
      $region16: #{s_encoder_forward.11} parent=11 // pred_fallthru
        _
      // Predicated region
      $region17: #{s_encoder_forward.11} parent=11 // pred_check
        %p187 = pneg %p80
      $region18: #{s_encoder_forward.11} parent=11 // pred_check_branch
        %189 = sbr.rel (%p187) target = $region20
      $region19: #{s_encoder_forward.11} parent=11 // pred_region
        _
      $region20: #{s_encoder_forward.11} parent=11 // pred_fallthru
        _
      // Predicated region
      $region21: #{s_encoder_forward.11} parent=11 // pred_check
        %p190 = pneg %p101
      $region22: #{s_encoder_forward.11} parent=11 // pred_check_branch
        %192 = sbr.rel (%p190) target = $region24
      $region23: #{s_encoder_forward.11} parent=11 // pred_region
        _
      $region24: #{s_encoder_forward.11} parent=11 // pred_fallthru
        _
      // Predicated region
      $region25: #{s_encoder_forward.11} parent=11 // pred_check
        %p193 = pneg %p122
      $region26: #{s_encoder_forward.11} parent=11 // pred_check_branch
        %195 = sbr.rel (%p193) target = $region28
      $region27: #{s_encoder_forward.11} parent=11 // pred_region
        _
      $region28: #{s_encoder_forward.11} parent=11 // pred_fallthru
        _
      // Predicated region
      $region29: #{s_encoder_forward.11} parent=11 // pred_check
        %p196 = pneg %p143
      $region30: #{s_encoder_forward.11} parent=11 // pred_check_branch
        %198 = sbr.rel (%p196) target = $region32
      $region31: #{s_encoder_forward.11} parent=11 // pred_region
        _
      $region32: #{s_encoder_forward.11} parent=11 // pred_fallthru
        _
    $region12: #{s_encoder_forward.11} parent=5 // pred_fallthru
      _
    %p199 = scmp.lt.s32.totalorder %s12, 2
    // Predicated region
    $region33: #{s_encoder_forward.11} parent=5 // pred_check
      %p200 = pneg %p199
    $region34: #{s_encoder_forward.11} parent=5 // pred_check_branch
      %202 = sbr.rel (%p200) target = $region36
    $region35: #{s_encoder_forward.11} parent=5 // pred_region
      // Predicated region
      $region37: #{s_encoder_forward.11} parent=35 // pred_check
        %p203 = pneg %p32
      $region38: #{s_encoder_forward.11} parent=35 // pred_check_branch
        %205 = sbr.rel (%p203) target = $region40
      $region39: #{s_encoder_forward.11} parent=35 // pred_region
        %p206 = scmp.lt.s32.totalorder %s12, 1
        %s207 = scalar_select %p206, %s12, 1
        %s208 = smul.addr %s207, 8
        %s209 = smul.addr %s208, 4
        %s210 = scalar_lea.vmem %s0, %s209
      $region40: #{s_encoder_forward.11} parent=35 // pred_fallthru
        _
    $region36: #{s_encoder_forward.11} parent=5 // pred_fallthru
      _
    %p211 = scmp.le.s32.totalorder 1, %s12
    %p212 = scmp.lt.s32.totalorder %s12, 3
    %p213 = pnand %p211, %p212
    %p214 = pneg %p213
    // Predicated region
    $region41: #{s_encoder_forward.11} parent=5 // pred_check
      _
    $region42: #{s_encoder_forward.11} parent=5 // pred_check_branch
      %216 = sbr.rel (%p213) target = $region44
    $region43: #{s_encoder_forward.11} parent=5 // pred_region
      %s217 = ssub.s32 %s12, 1
      %p218 = scmp.lt.s32.totalorder %s17, 1
      %s219 = scalar_select %p218, %s17, 1
      %s220 = smul.addr %s219, 8
      %s221 = smul.addr %s220, 4
      %s222 = scalar_lea.vmem %s0, %s221
      %p223 = pneg %p38
      %p224 = pneg %p35
      %p225 = pneg %p59
      %p226 = pneg %p56
      %p227 = pneg %p80
      %p228 = pneg %p77
      %p229 = pneg %p101
      %p230 = pneg %p98
      %p231 = pneg %p122
      %p232 = pneg %p119
      %p233 = pneg %p143
      %p234 = pneg %p140
      %p235 = pneg %p169
      %p236 = pneg %p166
      %p237 = scmp.lt.s32.totalorder %s17, 1
      %s238 = scalar_select %p237, %s17, 1
      %s239 = smul.addr %s238, 3
      %s240 = smul.addr %s239, 4
      %s241 = scalar_lea.vmem %s6, %s240
      %p242 = scmp.lt.s32.totalorder %s17, 1
      %s243 = scalar_select %p242, %s17, 1
      %s244 = smul.addr %s243, 8
      %s245 = smul.addr %s244, 4
      %s246 = scalar_lea.vmem %s0, %s245
      %p247 = scmp.lt.s32.totalorder %s17, 1
      %s248 = scalar_select %p247, %s17, 1
      %s249 = smul.addr %s248, 3
      %s250 = smul.addr %s249, 4
      %s251 = scalar_lea.vmem %s6, %s250
      %v253 = vld [vmem:[%s246] sm:$0xff]
      %v254 = vld [vmem:[%s246 + $0x8] sm:$0xff]
      %v255 = vld [vmem:[%s246 + $0x10] sm:$0xff]
      %v256 = vld [vmem:[%s246 + $0x18] sm:$0xff]
      %v257 = vld [vmem:[%s1] sm:$0xf]
      %s258 = scalar_lea.vmem %s1, 4
      %v259 = vld [vmem:[%s258] sm:$0xf]
      %v264 = vunpack.c.l.b16 %v253
      %v265 = vunpack.c.h.b16 %v253
      %v266 = vunpack.c.l.b16 %v254
      %v267 = vunpack.c.h.b16 %v254
      %v268 = vunpack.c.l.b16 %v255
      %v269 = vunpack.c.h.b16 %v255
      %v270 = vunpack.c.l.b16 %v256
      %v271 = vunpack.c.h.b16 %v256
      %v272 = vpack.c.b16 %v268, %v264
      %v273 = vpack.c.b16 %v269, %v265
      %v274 = vpack.c.b16 %v270, %v266
      %v275 = vpack.c.b16 %v271, %v267
      %276 = vrot.lane.b32.xlu0 %v272, 127
      %v277 = vpop.permute.xlu0 %276
      %278 = vrot.lane.b32.xlu0 %v273, 127
      %v279 = vpop.permute.xlu0 %278
      %280 = vrot.lane.b32.xlu0 %v274, 127
      %v281 = vpop.permute.xlu0 %280
      %282 = vrot.lane.b32.xlu0 %v275, 127
      %v283 = vpop.permute.xlu0 %282
      %vm284 = vcmask 1039360
      %v285 = vsel %vm284, %v277, %v279
      %v286 = vsel %vm284, %v279, %v281
      %v287 = vsel %vm284, %v281, %v283
      %vm291 = vcmask 130048
      %v293 = vsel %vm291, %v259, 0
      %295 = vmatprep.subr.bf16.mxu0 %v286
      %296 = vmatpush1.bf16.msra.mxu0 %v285
      %297 = vmatprep.subr.bf16.mxu0 0
      %298 = vmatpush1.bf16.msra.mxu0 0
      %299 = vmatprep.subr.bf16.mxu0 0
      %300 = vmatpush1.bf16.msra.mxu0 0
      %301 = vmatprep.subr.bf16.mxu0 0
      %302 = vmatpush1.bf16.msra.mxu0 0
      %303 = vmatprep.subr.bf16.mxu0 0
      %304 = vmatpush1.bf16.msra.mxu0 0
      %305 = vmatprep.subr.bf16.mxu0 0
      %306 = vmatpush1.bf16.msra.mxu0 0
      %307 = vmatprep.subr.bf16.mxu0 0
      %308 = vmatpush1.bf16.msra.mxu0 0
      %309 = vmatprep.subr.bf16.mxu0 0
      %310 = vmatpush1.bf16.msra.mxu0 0
      %311 = vmatprep.subr.bf16.mxu0 0
      %312 = vmatpush1.bf16.msra.mxu0 0
      %313 = vmatprep.subr.bf16.mxu0 0
      %314 = vmatpush1.bf16.msra.mxu0 0
      %315 = vmatprep.subr.bf16.mxu0 0
      %316 = vmatpush1.bf16.msra.mxu0 0
      %317 = vmatprep.subr.bf16.mxu0 0
      %318 = vmatpush1.bf16.msra.mxu0 0
      %319 = vmatprep.subr.bf16.mxu0 0
      %320 = vmatpush1.bf16.msra.mxu0 0
      %321 = vmatprep.subr.bf16.mxu0 0
      %322 = vmatpush1.bf16.msra.mxu0 0
      %323 = vmatprep.subr.bf16.mxu0 0
      %324 = vmatpush1.bf16.msra.mxu0 0
      %325 = vmatprep.subr.bf16.mxu0 0
      %326 = vmatpush1.bf16.msra.mxu0 0
      %327 = vmatprep.mubr.bf16.mxu0 0
      %328 = vmatmul.mubr.bf16.gmra.mrb[0].mxu0 %v293
      %v329 = vpop.f32.mrb[0].mxu0
      %v330 = vadd.f32 0.0, %v329
      %v331 = vpop.f32.mrb[0].mxu0
      %v332 = vadd.f32 0.0, %v331
      %v333 = vpop.f32.mrb[0].mxu0
      %v334 = vpop.f32.mrb[0].mxu0
      %335 = vdwg.mxu0
      %336 = vmatprep.subr.bf16.mxu0 0
      %337 = vmatpush1.bf16.msra.mxu0 %v287
      %338 = vmatprep.subr.bf16.mxu0 0
      %339 = vmatpush1.bf16.msra.mxu0 0
      %340 = vmatprep.subr.bf16.mxu0 0
      %341 = vmatpush1.bf16.msra.mxu0 0
      %342 = vmatprep.subr.bf16.mxu0 0
      %343 = vmatpush1.bf16.msra.mxu0 0
      %344 = vmatprep.subr.bf16.mxu0 0
      %345 = vmatpush1.bf16.msra.mxu0 0
      %346 = vmatprep.subr.bf16.mxu0 0
      %347 = vmatpush1.bf16.msra.mxu0 0
      %348 = vmatprep.subr.bf16.mxu0 0
      %349 = vmatpush1.bf16.msra.mxu0 0
      %350 = vmatprep.subr.bf16.mxu0 0
      %351 = vmatpush1.bf16.msra.mxu0 0
      %352 = vmatprep.subr.bf16.mxu0 0
      %353 = vmatpush1.bf16.msra.mxu0 0
      %354 = vmatprep.subr.bf16.mxu0 0
      %355 = vmatpush1.bf16.msra.mxu0 0
      %356 = vmatprep.subr.bf16.mxu0 0
      %357 = vmatpush1.bf16.msra.mxu0 0
      %358 = vmatprep.subr.bf16.mxu0 0
      %359 = vmatpush1.bf16.msra.mxu0 0
      %360 = vmatprep.subr.bf16.mxu0 0
      %361 = vmatpush1.bf16.msra.mxu0 0
      %362 = vmatprep.subr.bf16.mxu0 0
      %363 = vmatpush1.bf16.msra.mxu0 0
      %364 = vmatprep.subr.bf16.mxu0 0
      %365 = vmatpush1.bf16.msra.mxu0 0
      %366 = vmatprep.subr.bf16.mxu0 0
      %367 = vmatpush1.bf16.msra.mxu0 0
      %368 = vmatprep.mubr.bf16.mxu0 0
      %369 = vmatmul.mubr.bf16.gmra.mrb[0].mxu0 %v293
      %v370 = vpop.f32.mrb[0].mxu0
      %v371 = vadd.f32 0.0, %v370
      %v372 = vpop.f32.mrb[0].mxu0
      %v373 = vpop.f32.mrb[0].mxu0
      %v374 = vpop.f32.mrb[0].mxu0
      %375 = vdwg.mxu0
      %v380 = vsel %vm291, %v257, 0
      %382 = vmatprep.subr.bf16.mxu0 %v273
      %383 = vmatpush1.bf16.msra.mxu0 %v272
      %384 = vmatprep.subr.bf16.mxu0 0
      %385 = vmatpush1.bf16.msra.mxu0 0
      %386 = vmatprep.subr.bf16.mxu0 0
      %387 = vmatpush1.bf16.msra.mxu0 0
      %388 = vmatprep.subr.bf16.mxu0 0
      %389 = vmatpush1.bf16.msra.mxu0 0
      %390 = vmatprep.subr.bf16.mxu0 0
      %391 = vmatpush1.bf16.msra.mxu0 0
      %392 = vmatprep.subr.bf16.mxu0 0
      %393 = vmatpush1.bf16.msra.mxu0 0
      %394 = vmatprep.subr.bf16.mxu0 0
      %395 = vmatpush1.bf16.msra.mxu0 0
      %396 = vmatprep.subr.bf16.mxu0 0
      %397 = vmatpush1.bf16.msra.mxu0 0
      %398 = vmatprep.subr.bf16.mxu0 0
      %399 = vmatpush1.bf16.msra.mxu0 0
      %400 = vmatprep.subr.bf16.mxu0 0
      %401 = vmatpush1.bf16.msra.mxu0 0
      %402 = vmatprep.subr.bf16.mxu0 0
      %403 = vmatpush1.bf16.msra.mxu0 0
      %404 = vmatprep.subr.bf16.mxu0 0
      %405 = vmatpush1.bf16.msra.mxu0 0
      %406 = vmatprep.subr.bf16.mxu0 0
      %407 = vmatpush1.bf16.msra.mxu0 0
      %408 = vmatprep.subr.bf16.mxu0 0
      %409 = vmatpush1.bf16.msra.mxu0 0
      %410 = vmatprep.subr.bf16.mxu0 0
      %411 = vmatpush1.bf16.msra.mxu0 0
      %412 = vmatprep.subr.bf16.mxu0 0
      %413 = vmatpush1.bf16.msra.mxu0 0
      %414 = vmatprep.mubr.bf16.mxu0 0
      %415 = vmatmul.mubr.bf16.gmra.mrb[0].mxu0 %v380
      %v416 = vpop.f32.mrb[0].mxu0
      %v417 = vadd.f32 %v330, %v416
      %v418 = vpop.f32.mrb[0].mxu0
      %v419 = vadd.f32 %v332, %v418
      %v420 = vpop.f32.mrb[0].mxu0
      %v421 = vpop.f32.mrb[0].mxu0
      %422 = vdwg.mxu0
      %423 = vmatprep.subr.bf16.mxu0 0
      %424 = vmatpush1.bf16.msra.mxu0 %v274
      %425 = vmatprep.subr.bf16.mxu0 0
      %426 = vmatpush1.bf16.msra.mxu0 0
      %427 = vmatprep.subr.bf16.mxu0 0
      %428 = vmatpush1.bf16.msra.mxu0 0
      %429 = vmatprep.subr.bf16.mxu0 0
      %430 = vmatpush1.bf16.msra.mxu0 0
      %431 = vmatprep.subr.bf16.mxu0 0
      %432 = vmatpush1.bf16.msra.mxu0 0
      %433 = vmatprep.subr.bf16.mxu0 0
      %434 = vmatpush1.bf16.msra.mxu0 0
      %435 = vmatprep.subr.bf16.mxu0 0
      %436 = vmatpush1.bf16.msra.mxu0 0
      %437 = vmatprep.subr.bf16.mxu0 0
      %438 = vmatpush1.bf16.msra.mxu0 0
      %439 = vmatprep.subr.bf16.mxu0 0
      %440 = vmatpush1.bf16.msra.mxu0 0
      %441 = vmatprep.subr.bf16.mxu0 0
      %442 = vmatpush1.bf16.msra.mxu0 0
      %443 = vmatprep.subr.bf16.mxu0 0
      %444 = vmatpush1.bf16.msra.mxu0 0
      %445 = vmatprep.subr.bf16.mxu0 0
      %446 = vmatpush1.bf16.msra.mxu0 0
      %447 = vmatprep.subr.bf16.mxu0 0
      %448 = vmatpush1.bf16.msra.mxu0 0
      %449 = vmatprep.subr.bf16.mxu0 0
      %450 = vmatpush1.bf16.msra.mxu0 0
      %451 = vmatprep.subr.bf16.mxu0 0
      %452 = vmatpush1.bf16.msra.mxu0 0
      %453 = vmatprep.subr.bf16.mxu0 0
      %454 = vmatpush1.bf16.msra.mxu0 0
      %455 = vmatprep.mubr.bf16.mxu0 0
      %456 = vmatmul.mubr.bf16.gmra.mrb[0].mxu0 %v380
      %v457 = vpop.f32.mrb[0].mxu0
      %v458 = vadd.f32 %v371, %v457
      %v459 = vpop.f32.mrb[0].mxu0
      %v460 = vpop.f32.mrb[0].mxu0
      %v461 = vpop.f32.mrb[0].mxu0
      %462 = vdwg.mxu0
      %s463 = scalar_lea.vmem %s1, 8
      %v464 = vld [vmem:[%s463] sm:$0xf]
      %465 = vrot.lane.b32.xlu0 %v272, 126
      %v466 = vpop.permute.xlu0 %465
      %467 = vrot.lane.b32.xlu0 %v273, 126
      %v468 = vpop.permute.xlu0 %467
      %469 = vrot.lane.b32.xlu0 %v274, 126
      %v470 = vpop.permute.xlu0 %469
      %471 = vrot.lane.b32.xlu0 %v275, 126
      %v472 = vpop.permute.xlu0 %471
      %vm473 = vcmask 1031168
      %v474 = vsel %vm473, %v466, %v468
      %v475 = vsel %vm473, %v468, %v470
      %v476 = vsel %vm473, %v470, %v472
      %v481 = vsel %vm291, %v464, 0
      %483 = vmatprep.subr.bf16.mxu0 %v475
      %484 = vmatpush1.bf16.msra.mxu0 %v474
      %485 = vmatprep.subr.bf16.mxu0 0
      %486 = vmatpush1.bf16.msra.mxu0 0
      %487 = vmatprep.subr.bf16.mxu0 0
      %488 = vmatpush1.bf16.msra.mxu0 0
      %489 = vmatprep.subr.bf16.mxu0 0
      %490 = vmatpush1.bf16.msra.mxu0 0
      %491 = vmatprep.subr.bf16.mxu0 0
      %492 = vmatpush1.bf16.msra.mxu0 0
      %493 = vmatprep.subr.bf16.mxu0 0
      %494 = vmatpush1.bf16.msra.mxu0 0
      %495 = vmatprep.subr.bf16.mxu0 0
      %496 = vmatpush1.bf16.msra.mxu0 0
      %497 = vmatprep.subr.bf16.mxu0 0
      %498 = vmatpush1.bf16.msra.mxu0 0
      %499 = vmatprep.subr.bf16.mxu0 0
      %500 = vmatpush1.bf16.msra.mxu0 0
      %501 = vmatprep.subr.bf16.mxu0 0
      %502 = vmatpush1.bf16.msra.mxu0 0
      %503 = vmatprep.subr.bf16.mxu0 0
      %504 = vmatpush1.bf16.msra.mxu0 0
      %505 = vmatprep.subr.bf16.mxu0 0
      %506 = vmatpush1.bf16.msra.mxu0 0
      %507 = vmatprep.subr.bf16.mxu0 0
      %508 = vmatpush1.bf16.msra.mxu0 0
      %509 = vmatprep.subr.bf16.mxu0 0
      %510 = vmatpush1.bf16.msra.mxu0 0
      %511 = vmatprep.subr.bf16.mxu0 0
      %512 = vmatpush1.bf16.msra.mxu0 0
      %513 = vmatprep.subr.bf16.mxu0 0
      %514 = vmatpush1.bf16.msra.mxu0 0
      %515 = vmatprep.mubr.bf16.mxu0 0
      %516 = vmatmul.mubr.bf16.gmra.mrb[0].mxu0 %v481
      %v517 = vpop.f32.mrb[0].mxu0
      %v518 = vadd.f32 0.0, %v517
      %v519 = vpop.f32.mrb[0].mxu0
      %v520 = vadd.f32 0.0, %v519
      %v521 = vpop.f32.mrb[0].mxu0
      %v522 = vpop.f32.mrb[0].mxu0
      %523 = vdwg.mxu0
      %524 = vmatprep.subr.bf16.mxu0 0
      %525 = vmatpush1.bf16.msra.mxu0 %v476
      %526 = vmatprep.subr.bf16.mxu0 0
      %527 = vmatpush1.bf16.msra.mxu0 0
      %528 = vmatprep.subr.bf16.mxu0 0
      %529 = vmatpush1.bf16.msra.mxu0 0
      %530 = vmatprep.subr.bf16.mxu0 0
      %531 = vmatpush1.bf16.msra.mxu0 0
      %532 = vmatprep.subr.bf16.mxu0 0
      %533 = vmatpush1.bf16.msra.mxu0 0
      %534 = vmatprep.subr.bf16.mxu0 0
      %535 = vmatpush1.bf16.msra.mxu0 0
      %536 = vmatprep.subr.bf16.mxu0 0
      %537 = vmatpush1.bf16.msra.mxu0 0
      %538 = vmatprep.subr.bf16.mxu0 0
      %539 = vmatpush1.bf16.msra.mxu0 0
      %540 = vmatprep.subr.bf16.mxu0 0
      %541 = vmatpush1.bf16.msra.mxu0 0
      %542 = vmatprep.subr.bf16.mxu0 0
      %543 = vmatpush1.bf16.msra.mxu0 0
      %544 = vmatprep.subr.bf16.mxu0 0
      %545 = vmatpush1.bf16.msra.mxu0 0
      %546 = vmatprep.subr.bf16.mxu0 0
      %547 = vmatpush1.bf16.msra.mxu0 0
      %548 = vmatprep.subr.bf16.mxu0 0
      %549 = vmatpush1.bf16.msra.mxu0 0
      %550 = vmatprep.subr.bf16.mxu0 0
      %551 = vmatpush1.bf16.msra.mxu0 0
      %552 = vmatprep.subr.bf16.mxu0 0
      %553 = vmatpush1.bf16.msra.mxu0 0
      %554 = vmatprep.subr.bf16.mxu0 0
      %555 = vmatpush1.bf16.msra.mxu0 0
      %556 = vmatprep.mubr.bf16.mxu0 0
      %557 = vmatmul.mubr.bf16.gmra.mrb[0].mxu0 %v481
      %v558 = vpop.f32.mrb[0].mxu0
      %v559 = vadd.f32 0.0, %v558
      %v560 = vpop.f32.mrb[0].mxu0
      %v561 = vpop.f32.mrb[0].mxu0
      %v562 = vpop.f32.mrb[0].mxu0
      %563 = vdwg.mxu0
      %v564 = vadd.f32 %v417, %v518
      %v565 = vadd.f32 %v419, %v520
      %v566 = vadd.f32 %v458, %v559
      %s567 = scalar_lea.vmem %s1, 12
      %v568 = vld [vmem:[%s567] sm:$0xf]
      %569 = vrot.lane.b32.xlu0 %v272, 110
      %v570 = vpop.permute.xlu0 %569
      %571 = vrot.lane.b32.xlu0 %v273, 110
      %v572 = vpop.permute.xlu0 %571
      %573 = vrot.lane.b32.xlu0 %v274, 110
      %v574 = vpop.permute.xlu0 %573
      %575 = vrot.lane.b32.xlu0 %v275, 110
      %v576 = vpop.permute.xlu0 %575
      %vm577 = vcmask 900096
      %v578 = vsel %vm577, %v570, %v572
      %v579 = vsel %vm577, %v572, %v574
      %v580 = vsel %vm577, %v574, %v576
      %v585 = vsel %vm291, %v568, 0
      %587 = vmatprep.subr.bf16.mxu0 %v579
      %588 = vmatpush1.bf16.msra.mxu0 %v578
      %589 = vmatprep.subr.bf16.mxu0 0
      %590 = vmatpush1.bf16.msra.mxu0 0
      %591 = vmatprep.subr.bf16.mxu0 0
      %592 = vmatpush1.bf16.msra.mxu0 0
      %593 = vmatprep.subr.bf16.mxu0 0
      %594 = vmatpush1.bf16.msra.mxu0 0
      %595 = vmatprep.subr.bf16.mxu0 0
      %596 = vmatpush1.bf16.msra.mxu0 0
      %597 = vmatprep.subr.bf16.mxu0 0
      %598 = vmatpush1.bf16.msra.mxu0 0
      %599 = vmatprep.subr.bf16.mxu0 0
      %600 = vmatpush1.bf16.msra.mxu0 0
      %601 = vmatprep.subr.bf16.mxu0 0
      %602 = vmatpush1.bf16.msra.mxu0 0
      %603 = vmatprep.subr.bf16.mxu0 0
      %604 = vmatpush1.bf16.msra.mxu0 0
      %605 = vmatprep.subr.bf16.mxu0 0
      %606 = vmatpush1.bf16.msra.mxu0 0
      %607 = vmatprep.subr.bf16.mxu0 0
      %608 = vmatpush1.bf16.msra.mxu0 0
      %609 = vmatprep.subr.bf16.mxu0 0
      %610 = vmatpush1.bf16.msra.mxu0 0
      %611 = vmatprep.subr.bf16.mxu0 0
      %612 = vmatpush1.bf16.msra.mxu0 0
      %613 = vmatprep.subr.bf16.mxu0 0
      %614 = vmatpush1.bf16.msra.mxu0 0
      %615 = vmatprep.subr.bf16.mxu0 0
      %616 = vmatpush1.bf16.msra.mxu0 0
      %617 = vmatprep.subr.bf16.mxu0 0
      %618 = vmatpush1.bf16.msra.mxu0 0
      %619 = vmatprep.mubr.bf16.mxu0 0
      %620 = vmatmul.mubr.bf16.gmra.mrb[0].mxu0 %v585
      %v621 = vpop.f32.mrb[0].mxu0
      %v622 = vadd.f32 0.0, %v621
      %v623 = vpop.f32.mrb[0].mxu0
      %v624 = vadd.f32 0.0, %v623
      %v625 = vpop.f32.mrb[0].mxu0
      %v626 = vpop.f32.mrb[0].mxu0
      %627 = vdwg.mxu0
      %628 = vmatprep.subr.bf16.mxu0 0
      %629 = vmatpush1.bf16.msra.mxu0 %v580
      %630 = vmatprep.subr.bf16.mxu0 0
      %631 = vmatpush1.bf16.msra.mxu0 0
      %632 = vmatprep.subr.bf16.mxu0 0
      %633 = vmatpush1.bf16.msra.mxu0 0
      %634 = vmatprep.subr.bf16.mxu0 0
      %635 = vmatpush1.bf16.msra.mxu0 0
      %636 = vmatprep.subr.bf16.mxu0 0
      %637 = vmatpush1.bf16.msra.mxu0 0
      %638 = vmatprep.subr.bf16.mxu0 0
      %639 = vmatpush1.bf16.msra.mxu0 0
      %640 = vmatprep.subr.bf16.mxu0 0
      %641 = vmatpush1.bf16.msra.mxu0 0
      %642 = vmatprep.subr.bf16.mxu0 0
      %643 = vmatpush1.bf16.msra.mxu0 0
      %644 = vmatprep.subr.bf16.mxu0 0
      %645 = vmatpush1.bf16.msra.mxu0 0
      %646 = vmatprep.subr.bf16.mxu0 0
      %647 = vmatpush1.bf16.msra.mxu0 0
      %648 = vmatprep.subr.bf16.mxu0 0
      %649 = vmatpush1.bf16.msra.mxu0 0
      %650 = vmatprep.subr.bf16.mxu0 0
      %651 = vmatpush1.bf16.msra.mxu0 0
      %652 = vmatprep.subr.bf16.mxu0 0
      %653 = vmatpush1.bf16.msra.mxu0 0
      %654 = vmatprep.subr.bf16.mxu0 0
      %655 = vmatpush1.bf16.msra.mxu0 0
      %656 = vmatprep.subr.bf16.mxu0 0
      %657 = vmatpush1.bf16.msra.mxu0 0
      %658 = vmatprep.subr.bf16.mxu0 0
      %659 = vmatpush1.bf16.msra.mxu0 0
      %660 = vmatprep.mubr.bf16.mxu0 0
      %661 = vmatmul.mubr.bf16.gmra.mrb[0].mxu0 %v585
      %v662 = vpop.f32.mrb[0].mxu0
      %v663 = vadd.f32 0.0, %v662
      %v664 = vpop.f32.mrb[0].mxu0
      %v665 = vpop.f32.mrb[0].mxu0
      %v666 = vpop.f32.mrb[0].mxu0
      %667 = vdwg.mxu0
      %v668 = vadd.f32 %v564, %v622
      %v669 = vadd.f32 %v565, %v624
      %v670 = vadd.f32 %v566, %v663
      %s671 = scalar_lea.vmem %s1, 16
      %v672 = vld [vmem:[%s671] sm:$0xf]
      %673 = vrot.lane.b32.xlu0 %v272, 109
      %v674 = vpop.permute.xlu0 %673
      %675 = vrot.lane.b32.xlu0 %v273, 109
      %v676 = vpop.permute.xlu0 %675
      %677 = vrot.lane.b32.xlu0 %v274, 109
      %v678 = vpop.permute.xlu0 %677
      %679 = vrot.lane.b32.xlu0 %v275, 109
      %v680 = vpop.permute.xlu0 %679
      %vm681 = vcmask 891904
      %v682 = vsel %vm681, %v674, %v676
      %v683 = vsel %vm681, %v676, %v678
      %v684 = vsel %vm681, %v678, %v680
      %v689 = vsel %vm291, %v672, 0
      %691 = vmatprep.subr.bf16.mxu0 %v683
      %692 = vmatpush1.bf16.msra.mxu0 %v682
      %693 = vmatprep.subr.bf16.mxu0 0
      %694 = vmatpush1.bf16.msra.mxu0 0
      %695 = vmatprep.subr.bf16.mxu0 0
      %696 = vmatpush1.bf16.msra.mxu0 0
      %697 = vmatprep.subr.bf16.mxu0 0
      %698 = vmatpush1.bf16.msra.mxu0 0
      %699 = vmatprep.subr.bf16.mxu0 0
      %700 = vmatpush1.bf16.msra.mxu0 0
      %701 = vmatprep.subr.bf16.mxu0 0
      %702 = vmatpush1.bf16.msra.mxu0 0
      %703 = vmatprep.subr.bf16.mxu0 0
      %704 = vmatpush1.bf16.msra.mxu0 0
      %705 = vmatprep.subr.bf16.mxu0 0
      %706 = vmatpush1.bf16.msra.mxu0 0
      %707 = vmatprep.subr.bf16.mxu0 0
      %708 = vmatpush1.bf16.msra.mxu0 0
      %709 = vmatprep.subr.bf16.mxu0 0
      %710 = vmatpush1.bf16.msra.mxu0 0
      %711 = vmatprep.subr.bf16.mxu0 0
      %712 = vmatpush1.bf16.msra.mxu0 0
      %713 = vmatprep.subr.bf16.mxu0 0
      %714 = vmatpush1.bf16.msra.mxu0 0
      %715 = vmatprep.subr.bf16.mxu0 0
      %716 = vmatpush1.bf16.msra.mxu0 0
      %717 = vmatprep.subr.bf16.mxu0 0
      %718 = vmatpush1.bf16.msra.mxu0 0
      %719 = vmatprep.subr.bf16.mxu0 0
      %720 = vmatpush1.bf16.msra.mxu0 0
      %721 = vmatprep.subr.bf16.mxu0 0
      %722 = vmatpush1.bf16.msra.mxu0 0
      %723 = vmatprep.mubr.bf16.mxu0 0
      %724 = vmatmul.mubr.bf16.gmra.mrb[0].mxu0 %v689
      %v725 = vpop.f32.mrb[0].mxu0
      %v726 = vadd.f32 0.0, %v725
      %v727 = vpop.f32.mrb[0].mxu0
      %v728 = vadd.f32 0.0, %v727
      %v729 = vpop.f32.mrb[0].mxu0
      %v730 = vpop.f32.mrb[0].mxu0
      %731 = vdwg.mxu0
      %732 = vmatprep.subr.bf16.mxu0 0
      %733 = vmatpush1.bf16.msra.mxu0 %v684
      %734 = vmatprep.subr.bf16.mxu0 0
      %735 = vmatpush1.bf16.msra.mxu0 0
      %736 = vmatprep.subr.bf16.mxu0 0
      %737 = vmatpush1.bf16.msra.mxu0 0
      %738 = vmatprep.subr.bf16.mxu0 0
      %739 = vmatpush1.bf16.msra.mxu0 0
      %740 = vmatprep.subr.bf16.mxu0 0
      %741 = vmatpush1.bf16.msra.mxu0 0
      %742 = vmatprep.subr.bf16.mxu0 0
      %743 = vmatpush1.bf16.msra.mxu0 0
      %744 = vmatprep.subr.bf16.mxu0 0
      %745 = vmatpush1.bf16.msra.mxu0 0
      %746 = vmatprep.subr.bf16.mxu0 0
      %747 = vmatpush1.bf16.msra.mxu0 0
      %748 = vmatprep.subr.bf16.mxu0 0
      %749 = vmatpush1.bf16.msra.mxu0 0
      %750 = vmatprep.subr.bf16.mxu0 0
      %751 = vmatpush1.bf16.msra.mxu0 0
      %752 = vmatprep.subr.bf16.mxu0 0
      %753 = vmatpush1.bf16.msra.mxu0 0
      %754 = vmatprep.subr.bf16.mxu0 0
      %755 = vmatpush1.bf16.msra.mxu0 0
      %756 = vmatprep.subr.bf16.mxu0 0
      %757 = vmatpush1.bf16.msra.mxu0 0
      %758 = vmatprep.subr.bf16.mxu0 0
      %759 = vmatpush1.bf16.msra.mxu0 0
      %760 = vmatprep.subr.bf16.mxu0 0
      %761 = vmatpush1.bf16.msra.mxu0 0
      %762 = vmatprep.subr.bf16.mxu0 0
      %763 = vmatpush1.bf16.msra.mxu0 0
      %764 = vmatprep.mubr.bf16.mxu0 0
      %765 = vmatmul.mubr.bf16.gmra.mrb[0].mxu0 %v689
      %v766 = vpop.f32.mrb[0].mxu0
      %v767 = vadd.f32 0.0, %v766
      %v768 = vpop.f32.mrb[0].mxu0
      %v769 = vpop.f32.mrb[0].mxu0
      %v770 = vpop.f32.mrb[0].mxu0
      %771 = vdwg.mxu0
      %v772 = vadd.f32 %v668, %v726
      %v773 = vadd.f32 %v669, %v728
      %v774 = vadd.f32 %v670, %v767
      %s775 = scalar_lea.vmem %s1, 20
      %v776 = vld [vmem:[%s775] sm:$0xf]
      %777 = vrot.lane.b32.xlu0 %v272, 108
      %v778 = vpop.permute.xlu0 %777
      %779 = vrot.lane.b32.xlu0 %v273, 108
      %v780 = vpop.permute.xlu0 %779
      %781 = vrot.lane.b32.xlu0 %v274, 108
      %v782 = vpop.permute.xlu0 %781
      %783 = vrot.lane.b32.xlu0 %v275, 108
      %v784 = vpop.permute.xlu0 %783
      %vm785 = vcmask 883712
      %v786 = vsel %vm785, %v778, %v780
      %v787 = vsel %vm785, %v780, %v782
      %v788 = vsel %vm785, %v782, %v784
      %v793 = vsel %vm291, %v776, 0
      %795 = vmatprep.subr.bf16.mxu0 %v787
      %796 = vmatpush1.bf16.msra.mxu0 %v786
      %797 = vmatprep.subr.bf16.mxu0 0
      %798 = vmatpush1.bf16.msra.mxu0 0
      %799 = vmatprep.subr.bf16.mxu0 0
      %800 = vmatpush1.bf16.msra.mxu0 0
      %801 = vmatprep.subr.bf16.mxu0 0
      %802 = vmatpush1.bf16.msra.mxu0 0
      %803 = vmatprep.subr.bf16.mxu0 0
      %804 = vmatpush1.bf16.msra.mxu0 0
      %805 = vmatprep.subr.bf16.mxu0 0
      %806 = vmatpush1.bf16.msra.mxu0 0
      %807 = vmatprep.subr.bf16.mxu0 0
      %808 = vmatpush1.bf16.msra.mxu0 0
      %809 = vmatprep.subr.bf16.mxu0 0
      %810 = vmatpush1.bf16.msra.mxu0 0
      %811 = vmatprep.subr.bf16.mxu0 0
      %812 = vmatpush1.bf16.msra.mxu0 0
      %813 = vmatprep.subr.bf16.mxu0 0
      %814 = vmatpush1.bf16.msra.mxu0 0
      %815 = vmatprep.subr.bf16.mxu0 0
      %816 = vmatpush1.bf16.msra.mxu0 0
      %817 = vmatprep.subr.bf16.mxu0 0
      %818 = vmatpush1.bf16.msra.mxu0 0
      %819 = vmatprep.subr.bf16.mxu0 0
      %820 = vmatpush1.bf16.msra.mxu0 0
      %821 = vmatprep.subr.bf16.mxu0 0
      %822 = vmatpush1.bf16.msra.mxu0 0
      %823 = vmatprep.subr.bf16.mxu0 0
      %824 = vmatpush1.bf16.msra.mxu0 0
      %825 = vmatprep.subr.bf16.mxu0 0
      %826 = vmatpush1.bf16.msra.mxu0 0
      %827 = vmatprep.mubr.bf16.mxu0 0
      %828 = vmatmul.mubr.bf16.gmra.mrb[0].mxu0 %v793
      %v829 = vpop.f32.mrb[0].mxu0
      %v830 = vadd.f32 0.0, %v829
      %v831 = vpop.f32.mrb[0].mxu0
      %v832 = vadd.f32 0.0, %v831
      %v833 = vpop.f32.mrb[0].mxu0
      %v834 = vpop.f32.mrb[0].mxu0
      %835 = vdwg.mxu0
      %836 = vmatprep.subr.bf16.mxu0 0
      %837 = vmatpush1.bf16.msra.mxu0 %v788
      %838 = vmatprep.subr.bf16.mxu0 0
      %839 = vmatpush1.bf16.msra.mxu0 0
      %840 = vmatprep.subr.bf16.mxu0 0
      %841 = vmatpush1.bf16.msra.mxu0 0
      %842 = vmatprep.subr.bf16.mxu0 0
      %843 = vmatpush1.bf16.msra.mxu0 0
      %844 = vmatprep.subr.bf16.mxu0 0
      %845 = vmatpush1.bf16.msra.mxu0 0
      %846 = vmatprep.subr.bf16.mxu0 0
      %847 = vmatpush1.bf16.msra.mxu0 0
      %848 = vmatprep.subr.bf16.mxu0 0
      %849 = vmatpush1.bf16.msra.mxu0 0
      %850 = vmatprep.subr.bf16.mxu0 0
      %851 = vmatpush1.bf16.msra.mxu0 0
      %852 = vmatprep.subr.bf16.mxu0 0
      %853 = vmatpush1.bf16.msra.mxu0 0
      %854 = vmatprep.subr.bf16.mxu0 0
      %855 = vmatpush1.bf16.msra.mxu0 0
      %856 = vmatprep.subr.bf16.mxu0 0
      %857 = vmatpush1.bf16.msra.mxu0 0
      %858 = vmatprep.subr.bf16.mxu0 0
      %859 = vmatpush1.bf16.msra.mxu0 0
      %860 = vmatprep.subr.bf16.mxu0 0
      %861 = vmatpush1.bf16.msra.mxu0 0
      %862 = vmatprep.subr.bf16.mxu0 0
      %863 = vmatpush1.bf16.msra.mxu0 0
      %864 = vmatprep.subr.bf16.mxu0 0
      %865 = vmatpush1.bf16.msra.mxu0 0
      %866 = vmatprep.subr.bf16.mxu0 0
      %867 = vmatpush1.bf16.msra.mxu0 0
      %868 = vmatprep.mubr.bf16.mxu0 0
      %869 = vmatmul.mubr.bf16.gmra.mrb[0].mxu0 %v793
      %v870 = vpop.f32.mrb[0].mxu0
      %v871 = vadd.f32 0.0, %v870
      %v872 = vpop.f32.mrb[0].mxu0
      %v873 = vpop.f32.mrb[0].mxu0
      %v874 = vpop.f32.mrb[0].mxu0
      %875 = vdwg.mxu0
      %v876 = vadd.f32 %v772, %v830
      %v877 = vadd.f32 %v773, %v832
      %v878 = vadd.f32 %v774, %v871
      %s879 = scalar_lea.vmem %s1, 24
      %v880 = vld [vmem:[%s879] sm:$0xf]
      %881 = vrot.lane.b32.xlu0 %v272, 92
      %v882 = vpop.permute.xlu0 %881
      %883 = vrot.lane.b32.xlu0 %v273, 92
      %v884 = vpop.permute.xlu0 %883
      %885 = vrot.lane.b32.xlu0 %v274, 92
      %v886 = vpop.permute.xlu0 %885
      %887 = vrot.lane.b32.xlu0 %v275, 92
      %v888 = vpop.permute.xlu0 %887
      %vm889 = vcmask 752640
      %v890 = vsel %vm889, %v882, %v884
      %v891 = vsel %vm889, %v884, %v886
      %v892 = vsel %vm889, %v886, %v888
      %v897 = vsel %vm291, %v880, 0
      %899 = vmatprep.subr.bf16.mxu0 %v891
      %900 = vmatpush1.bf16.msra.mxu0 %v890
      %901 = vmatprep.subr.bf16.mxu0 0
      %902 = vmatpush1.bf16.msra.mxu0 0
      %903 = vmatprep.subr.bf16.mxu0 0
      %904 = vmatpush1.bf16.msra.mxu0 0
      %905 = vmatprep.subr.bf16.mxu0 0
      %906 = vmatpush1.bf16.msra.mxu0 0
      %907 = vmatprep.subr.bf16.mxu0 0
      %908 = vmatpush1.bf16.msra.mxu0 0
      %909 = vmatprep.subr.bf16.mxu0 0
      %910 = vmatpush1.bf16.msra.mxu0 0
      %911 = vmatprep.subr.bf16.mxu0 0
      %912 = vmatpush1.bf16.msra.mxu0 0
      %913 = vmatprep.subr.bf16.mxu0 0
      %914 = vmatpush1.bf16.msra.mxu0 0
      %915 = vmatprep.subr.bf16.mxu0 0
      %916 = vmatpush1.bf16.msra.mxu0 0
      %917 = vmatprep.subr.bf16.mxu0 0
      %918 = vmatpush1.bf16.msra.mxu0 0
      %919 = vmatprep.subr.bf16.mxu0 0
      %920 = vmatpush1.bf16.msra.mxu0 0
      %921 = vmatprep.subr.bf16.mxu0 0
      %922 = vmatpush1.bf16.msra.mxu0 0
      %923 = vmatprep.subr.bf16.mxu0 0
      %924 = vmatpush1.bf16.msra.mxu0 0
      %925 = vmatprep.subr.bf16.mxu0 0
      %926 = vmatpush1.bf16.msra.mxu0 0
      %927 = vmatprep.subr.bf16.mxu0 0
      %928 = vmatpush1.bf16.msra.mxu0 0
      %929 = vmatprep.subr.bf16.mxu0 0
      %930 = vmatpush1.bf16.msra.mxu0 0
      %931 = vmatprep.mubr.bf16.mxu0 0
      %932 = vmatmul.mubr.bf16.gmra.mrb[0].mxu0 %v897
      %v933 = vpop.f32.mrb[0].mxu0
      %v934 = vadd.f32 0.0, %v933
      %v935 = vpop.f32.mrb[0].mxu0
      %v936 = vadd.f32 0.0, %v935
      %v937 = vpop.f32.mrb[0].mxu0
      %v938 = vpop.f32.mrb[0].mxu0
      %939 = vdwg.mxu0
      %940 = vmatprep.subr.bf16.mxu0 0
      %941 = vmatpush1.bf16.msra.mxu0 %v892
      %942 = vmatprep.subr.bf16.mxu0 0
      %943 = vmatpush1.bf16.msra.mxu0 0
      %944 = vmatprep.subr.bf16.mxu0 0
      %945 = vmatpush1.bf16.msra.mxu0 0
      %946 = vmatprep.subr.bf16.mxu0 0
      %947 = vmatpush1.bf16.msra.mxu0 0
      %948 = vmatprep.subr.bf16.mxu0 0
      %949 = vmatpush1.bf16.msra.mxu0 0
      %950 = vmatprep.subr.bf16.mxu0 0
      %951 = vmatpush1.bf16.msra.mxu0 0
      %952 = vmatprep.subr.bf16.mxu0 0
      %953 = vmatpush1.bf16.msra.mxu0 0
      %954 = vmatprep.subr.bf16.mxu0 0
      %955 = vmatpush1.bf16.msra.mxu0 0
      %956 = vmatprep.subr.bf16.mxu0 0
      %957 = vmatpush1.bf16.msra.mxu0 0
      %958 = vmatprep.subr.bf16.mxu0 0
      %959 = vmatpush1.bf16.msra.mxu0 0
      %960 = vmatprep.subr.bf16.mxu0 0
      %961 = vmatpush1.bf16.msra.mxu0 0
      %962 = vmatprep.subr.bf16.mxu0 0
      %963 = vmatpush1.bf16.msra.mxu0 0
      %964 = vmatprep.subr.bf16.mxu0 0
      %965 = vmatpush1.bf16.msra.mxu0 0
      %966 = vmatprep.subr.bf16.mxu0 0
      %967 = vmatpush1.bf16.msra.mxu0 0
      %968 = vmatprep.subr.bf16.mxu0 0
      %969 = vmatpush1.bf16.msra.mxu0 0
      %970 = vmatprep.subr.bf16.mxu0 0
      %971 = vmatpush1.bf16.msra.mxu0 0
      %972 = vmatprep.mubr.bf16.mxu0 0
      %973 = vmatmul.mubr.bf16.gmra.mrb[0].mxu0 %v897
      %v974 = vpop.f32.mrb[0].mxu0
      %v975 = vadd.f32 0.0, %v974
      %v976 = vpop.f32.mrb[0].mxu0
      %v977 = vpop.f32.mrb[0].mxu0
      %v978 = vpop.f32.mrb[0].mxu0
      %979 = vdwg.mxu0
      %v980 = vadd.f32 %v876, %v934
      %v981 = vadd.f32 %v877, %v936
      %v982 = vadd.f32 %v878, %v975
      %s983 = scalar_lea.vmem %s1, 28
      %v984 = vld [vmem:[%s983] sm:$0xf]
      %985 = vrot.lane.b32.xlu0 %v272, 91
      %v986 = vpop.permute.xlu0 %985
      %987 = vrot.lane.b32.xlu0 %v273, 91
      %v988 = vpop.permute.xlu0 %987
      %989 = vrot.lane.b32.xlu0 %v274, 91
      %v990 = vpop.permute.xlu0 %989
      %991 = vrot.lane.b32.xlu0 %v275, 91
      %v992 = vpop.permute.xlu0 %991
      %vm993 = vcmask 744448
      %v994 = vsel %vm993, %v986, %v988
      %v995 = vsel %vm993, %v988, %v990
      %v996 = vsel %vm993, %v990, %v992
      %v1001 = vsel %vm291, %v984, 0
      %1003 = vmatprep.subr.bf16.mxu0 %v995
      %1004 = vmatpush1.bf16.msra.mxu0 %v994
      %1005 = vmatprep.subr.bf16.mxu0 0
      %1006 = vmatpush1.bf16.msra.mxu0 0
      %1007 = vmatprep.subr.bf16.mxu0 0
      %1008 = vmatpush1.bf16.msra.mxu0 0
      %1009 = vmatprep.subr.bf16.mxu0 0
      %1010 = vmatpush1.bf16.msra.mxu0 0
      %1011 = vmatprep.subr.bf16.mxu0 0
      %1012 = vmatpush1.bf16.msra.mxu0 0
      %1013 = vmatprep.subr.bf16.mxu0 0
      %1014 = vmatpush1.bf16.msra.mxu0 0
      %1015 = vmatprep.subr.bf16.mxu0 0
      %1016 = vmatpush1.bf16.msra.mxu0 0
      %1017 = vmatprep.subr.bf16.mxu0 0
      %1018 = vmatpush1.bf16.msra.mxu0 0
      %1019 = vmatprep.subr.bf16.mxu0 0
      %1020 = vmatpush1.bf16.msra.mxu0 0
      %1021 = vmatprep.subr.bf16.mxu0 0
      %1022 = vmatpush1.bf16.msra.mxu0 0
      %1023 = vmatprep.subr.bf16.mxu0 0
      %1024 = vmatpush1.bf16.msra.mxu0 0
      %1025 = vmatprep.subr.bf16.mxu0 0
      %1026 = vmatpush1.bf16.msra.mxu0 0
      %1027 = vmatprep.subr.bf16.mxu0 0
      %1028 = vmatpush1.bf16.msra.mxu0 0
      %1029 = vmatprep.subr.bf16.mxu0 0
      %1030 = vmatpush1.bf16.msra.mxu0 0
      %1031 = vmatprep.subr.bf16.mxu0 0
      %1032 = vmatpush1.bf16.msra.mxu0 0
      %1033 = vmatprep.subr.bf16.mxu0 0
      %1034 = vmatpush1.bf16.msra.mxu0 0
      %1035 = vmatprep.mubr.bf16.mxu0 0
      %1036 = vmatmul.mubr.bf16.gmra.mrb[0].mxu0 %v1001
      %v1037 = vpop.f32.mrb[0].mxu0
      %v1038 = vadd.f32 0.0, %v1037
      %v1039 = vpop.f32.mrb[0].mxu0
      %v1040 = vadd.f32 0.0, %v1039
      %v1041 = vpop.f32.mrb[0].mxu0
      %v1042 = vpop.f32.mrb[0].mxu0
      %1043 = vdwg.mxu0
      %1044 = vmatprep.subr.bf16.mxu0 0
      %1045 = vmatpush1.bf16.msra.mxu0 %v996
      %1046 = vmatprep.subr.bf16.mxu0 0
      %1047 = vmatpush1.bf16.msra.mxu0 0
      %1048 = vmatprep.subr.bf16.mxu0 0
      %1049 = vmatpush1.bf16.msra.mxu0 0
      %1050 = vmatprep.subr.bf16.mxu0 0
      %1051 = vmatpush1.bf16.msra.mxu0 0
      %1052 = vmatprep.subr.bf16.mxu0 0
      %1053 = vmatpush1.bf16.msra.mxu0 0
      %1054 = vmatprep.subr.bf16.mxu0 0
      %1055 = vmatpush1.bf16.msra.mxu0 0
      %1056 = vmatprep.subr.bf16.mxu0 0
      %1057 = vmatpush1.bf16.msra.mxu0 0
      %1058 = vmatprep.subr.bf16.mxu0 0
      %1059 = vmatpush1.bf16.msra.mxu0 0
      %1060 = vmatprep.subr.bf16.mxu0 0
      %1061 = vmatpush1.bf16.msra.mxu0 0
      %1062 = vmatprep.subr.bf16.mxu0 0
      %1063 = vmatpush1.bf16.msra.mxu0 0
      %1064 = vmatprep.subr.bf16.mxu0 0
      %1065 = vmatpush1.bf16.msra.mxu0 0
      %1066 = vmatprep.subr.bf16.mxu0 0
      %1067 = vmatpush1.bf16.msra.mxu0 0
      %1068 = vmatprep.subr.bf16.mxu0 0
      %1069 = vmatpush1.bf16.msra.mxu0 0
      %1070 = vmatprep.subr.bf16.mxu0 0
      %1071 = vmatpush1.bf16.msra.mxu0 0
      %1072 = vmatprep.subr.bf16.mxu0 0
      %1073 = vmatpush1.bf16.msra.mxu0 0
      %1074 = vmatprep.subr.bf16.mxu0 0
      %1075 = vmatpush1.bf16.msra.mxu0 0
      %1076 = vmatprep.mubr.bf16.mxu0 0
      %1077 = vmatmul.mubr.bf16.gmra.mrb[0].mxu0 %v1001
      %v1078 = vpop.f32.mrb[0].mxu0
      %v1079 = vadd.f32 0.0, %v1078
      %v1080 = vpop.f32.mrb[0].mxu0
      %v1081 = vpop.f32.mrb[0].mxu0
      %v1082 = vpop.f32.mrb[0].mxu0
      %1083 = vdwg.mxu0
      %v1084 = vadd.f32 %v980, %v1038
      %v1085 = vadd.f32 %v981, %v1040
      %v1086 = vadd.f32 %v982, %v1079
      %s1087 = scalar_lea.vmem %s1, 32
      %v1088 = vld [vmem:[%s1087] sm:$0xf]
      %1089 = vrot.lane.b32.xlu0 %v272, 90
      %v1090 = vpop.permute.xlu0 %1089
      %1091 = vrot.lane.b32.xlu0 %v273, 90
      %v1092 = vpop.permute.xlu0 %1091
      %1093 = vrot.lane.b32.xlu0 %v274, 90
      %v1094 = vpop.permute.xlu0 %1093
      %1095 = vrot.lane.b32.xlu0 %v275, 90
      %v1096 = vpop.permute.xlu0 %1095
      %vm1097 = vcmask 736256
      %v1098 = vsel %vm1097, %v1090, %v1092
      %v1099 = vsel %vm1097, %v1092, %v1094
      %v1100 = vsel %vm1097, %v1094, %v1096
      %v1105 = vsel %vm291, %v1088, 0
      %1107 = vmatprep.subr.bf16.mxu0 %v1099
      %1108 = vmatpush1.bf16.msra.mxu0 %v1098
      %1109 = vmatprep.subr.bf16.mxu0 0
      %1110 = vmatpush1.bf16.msra.mxu0 0
      %1111 = vmatprep.subr.bf16.mxu0 0
      %1112 = vmatpush1.bf16.msra.mxu0 0
      %1113 = vmatprep.subr.bf16.mxu0 0
      %1114 = vmatpush1.bf16.msra.mxu0 0
      %1115 = vmatprep.subr.bf16.mxu0 0
      %1116 = vmatpush1.bf16.msra.mxu0 0
      %1117 = vmatprep.subr.bf16.mxu0 0
      %1118 = vmatpush1.bf16.msra.mxu0 0
      %1119 = vmatprep.subr.bf16.mxu0 0
      %1120 = vmatpush1.bf16.msra.mxu0 0
      %1121 = vmatprep.subr.bf16.mxu0 0
      %1122 = vmatpush1.bf16.msra.mxu0 0
      %1123 = vmatprep.subr.bf16.mxu0 0
      %1124 = vmatpush1.bf16.msra.mxu0 0
      %1125 = vmatprep.subr.bf16.mxu0 0
      %1126 = vmatpush1.bf16.msra.mxu0 0
      %1127 = vmatprep.subr.bf16.mxu0 0
      %1128 = vmatpush1.bf16.msra.mxu0 0
      %1129 = vmatprep.subr.bf16.mxu0 0
      %1130 = vmatpush1.bf16.msra.mxu0 0
      %1131 = vmatprep.subr.bf16.mxu0 0
      %1132 = vmatpush1.bf16.msra.mxu0 0
      %1133 = vmatprep.subr.bf16.mxu0 0
      %1134 = vmatpush1.bf16.msra.mxu0 0
      %1135 = vmatprep.subr.bf16.mxu0 0
      %1136 = vmatpush1.bf16.msra.mxu0 0
      %1137 = vmatprep.subr.bf16.mxu0 0
      %1138 = vmatpush1.bf16.msra.mxu0 0
      %1139 = vmatprep.mubr.bf16.mxu0 0
      %1140 = vmatmul.mubr.bf16.gmra.mrb[0].mxu0 %v1105
      %v1141 = vpop.f32.mrb[0].mxu0
      %v1142 = vadd.f32 0.0, %v1141
      %v1143 = vpop.f32.mrb[0].mxu0
      %v1144 = vadd.f32 0.0, %v1143
      %v1145 = vpop.f32.mrb[0].mxu0
      %v1146 = vpop.f32.mrb[0].mxu0
      %1147 = vdwg.mxu0
      %1148 = vmatprep.subr.bf16.mxu0 0
      %1149 = vmatpush1.bf16.msra.mxu0 %v1100
      %1150 = vmatprep.subr.bf16.mxu0 0
      %1151 = vmatpush1.bf16.msra.mxu0 0
      %1152 = vmatprep.subr.bf16.mxu0 0
      %1153 = vmatpush1.bf16.msra.mxu0 0
      %1154 = vmatprep.subr.bf16.mxu0 0
      %1155 = vmatpush1.bf16.msra.mxu0 0
      %1156 = vmatprep.subr.bf16.mxu0 0
      %1157 = vmatpush1.bf16.msra.mxu0 0
      %1158 = vmatprep.subr.bf16.mxu0 0
      %1159 = vmatpush1.bf16.msra.mxu0 0
      %1160 = vmatprep.subr.bf16.mxu0 0
      %1161 = vmatpush1.bf16.msra.mxu0 0
      %1162 = vmatprep.subr.bf16.mxu0 0
      %1163 = vmatpush1.bf16.msra.mxu0 0
      %1164 = vmatprep.subr.bf16.mxu0 0
      %1165 = vmatpush1.bf16.msra.mxu0 0
      %1166 = vmatprep.subr.bf16.mxu0 0
      %1167 = vmatpush1.bf16.msra.mxu0 0
      %1168 = vmatprep.subr.bf16.mxu0 0
      %1169 = vmatpush1.bf16.msra.mxu0 0
      %1170 = vmatprep.subr.bf16.mxu0 0
      %1171 = vmatpush1.bf16.msra.mxu0 0
      %1172 = vmatprep.subr.bf16.mxu0 0
      %1173 = vmatpush1.bf16.msra.mxu0 0
      %1174 = vmatprep.subr.bf16.mxu0 0
      %1175 = vmatpush1.bf16.msra.mxu0 0
      %1176 = vmatprep.subr.bf16.mxu0 0
      %1177 = vmatpush1.bf16.msra.mxu0 0
      %1178 = vmatprep.subr.bf16.mxu0 0
      %1179 = vmatpush1.bf16.msra.mxu0 0
      %1180 = vmatprep.mubr.bf16.mxu0 0
      %1181 = vmatmul.mubr.bf16.gmra.mrb[0].mxu0 %v1105
      %v1182 = vpop.f32.mrb[0].mxu0
      %v1183 = vadd.f32 0.0, %v1182
      %v1184 = vpop.f32.mrb[0].mxu0
      %v1185 = vpop.f32.mrb[0].mxu0
      %v1186 = vpop.f32.mrb[0].mxu0
      %1187 = vdwg.mxu0
      %v1188 = vadd.f32 %v1084, %v1142
      %v1189 = vadd.f32 %v1085, %v1144
      %v1190 = vadd.f32 %v1086, %v1183
      %v1191 = vld [vmem:[%s2] sm:$0xff]
      %1193 = vset.pattern.permute.xlu0 0
      %1194 = vperm.xlu0 %1193, %v1191
      %v1195 = vpop.permute.xlu0 %1194
      %v1197 = vadd.f32 %v1188, %v1195
      %v1198 = vadd.f32 %v1189, %v1195
      %v1199 = vadd.f32 %v1190, %v1195
      %v1200 = vld [vmem:[%s3] sm:$0x7]
      %v1202 = vlaneseq
      %v1203 = vshrl.u32 %v1202, 7
      %v1204 = vsub.s32 0, %v1203
      %v1205 = vrot.slane %v1200, %v1204
      %v1206 = vlaneseq
      %v1207 = vshrl.u32 %v1206, 7
      %v1208 = vsub.s32 1, %v1207
      %v1209 = vrot.slane %v1200, %v1208
      %v1210 = vlaneseq
      %v1211 = vshrl.u32 %v1210, 7
      %v1212 = vsub.s32 2, %v1211
      %v1213 = vrot.slane %v1200, %v1212
      %v1217 = vmul.f32 %v1197, %v1205
      %v1218 = vmul.f32 %v1198, %v1209
      %v1219 = vmul.f32 %v1199, %v1213
      %v1220 = vadd.f32 %v1217, %v1218
      %v1221 = vadd.f32 %v1220, %v1219
      %1222 = vadd.xlane.f32.xlu0 %v1221
      %v1223 = vpop.xlane.xlu0 %1222
      %v1224 = vrot.slane %v1223, 4
      %v1225 = vadd.f32 %v1223, %v1224
      %v1226 = vrot.slane %v1225, 2
      %v1227 = vadd.f32 %v1225, %v1226
      %v1228 = vrot.slane %v1227, 1
      %v1229 = vadd.f32 %v1227, %v1228
      %s1230 = vtos %v1229
      %v1231 = vstv %s1230
      %v1232 = vrcp.pop 2048.0
      %v1233 = vmul.f32 %v1231, %v1232
      %v1234 = vsub.f32 %v1197, %v1233
      %v1235 = vsub.f32 %v1198, %v1233
      %v1236 = vsub.f32 %v1199, %v1233
      %v1237 = vmul.f32 %v1234, %v1205
      %v1238 = vmul.f32 %v1235, %v1209
      %v1239 = vmul.f32 %v1236, %v1213
      %v1240 = vmul.f32 %v1237, %v1237
      %v1241 = vmul.f32 %v1238, %v1238
      %v1242 = vmul.f32 %v1239, %v1239
      %v1243 = vadd.f32 %v1240, %v1241
      %v1244 = vadd.f32 %v1243, %v1242
      %1245 = vadd.xlane.f32.xlu0 %v1244
      %v1246 = vpop.xlane.xlu0 %1245
      %v1247 = vrot.slane %v1246, 4
      %v1248 = vadd.f32 %v1246, %v1247
      %v1249 = vrot.slane %v1248, 2
      %v1250 = vadd.f32 %v1248, %v1249
      %v1251 = vrot.slane %v1250, 1
      %v1252 = vadd.f32 %v1250, %v1251
      %s1253 = vtos %v1252
      %v1254 = vstv %s1253
      %v1255 = vrcp.pop 2047.0
      %v1256 = vmul.f32 %v1254, %v1255
      %v1257 = vrsqrt.pop %v1256
      %v1258 = vmul.f32 %v1256, %v1257
      %vm1259 = vcmp.eq.f32.partialorder %v1256, inf
      %v1260 = vsel %vm1259, %v1256, %v1258
      %vm1261 = vcmp.eq.f32.partialorder %v1256, 0.0
      %v1262 = vand.u32 %v1256, 2147483648
      %v1263 = vsel %vm1261, %v1262, %v1260
      %v1264 = vadd.f32 %v1263, 1e-05
      %v1265 = vrcp.pop %v1264
      %v1266 = vmul.f32 1.0, %v1265
      %v1267 = vmul.f32 %v1234, %v1266
      %v1268 = vmul.f32 %v1235, %v1266
      %v1269 = vmul.f32 %v1236, %v1266
      %v1270 = vld [vmem:[%s4] sm:$0xff]
      %1272 = vset.pattern.permute.xlu0 0
      %1273 = vperm.xlu0 %1272, %v1270
      %v1274 = vpop.permute.xlu0 %1273
      %v1276 = vmul.f32 %v1267, %v1274
      %v1277 = vmul.f32 %v1268, %v1274
      %v1278 = vmul.f32 %v1269, %v1274
      %v1279 = vld [vmem:[%s5] sm:$0xff]
      %1281 = vset.pattern.permute.xlu0 0
      %1282 = vperm.xlu0 %1281, %v1279
      %v1283 = vpop.permute.xlu0 %1282
      %v1285 = vadd.f32 %v1276, %v1283
      %v1286 = vadd.f32 %v1277, %v1283
      %v1287 = vadd.f32 %v1278, %v1283
      %v1288 = vmax.f32 %v1285, 0.0
      %v1289 = vmax.f32 %v1286, 0.0
      %v1290 = vmax.f32 %v1287, 0.0
      %v1291 = vpack.c.bf16 %v1288, %v1288
      %v1292 = vpack.c.bf16 %v1289, %v1289
      %v1293 = vpack.c.bf16 %v1290, %v1290
      %v1297 = vunpack.c.l.b16 %v1291
      %v1298 = vunpack.c.l.b16 %v1292
      %v1299 = vunpack.c.l.b16 %v1293
      %v1300 = vpack.c.b16 %v1298, %v1297
      %v1301 = vpack.c.b16 %v1299, %v1299
      %1304 = vst [vmem:[%s251] sm:$0xff] %v1300
      %1305 = vst [vmem:[%s251 + $0x8] sm:$0xf] %v1301
      %p1306 = scmp.lt.s32.totalorder %s17, 1
      %s1307 = scalar_select %p1306, %s17, 1
      %s1308 = smul.addr %s1307, 3
      %s1309 = smul.addr %s1308, 4
      %s1310 = scalar_lea.vmem %s6, %s1309
      // Predicated region
      $region45: #{s_encoder_forward.11} parent=43 // pred_check
        %p1311 = pneg %p166
      $region46: #{s_encoder_forward.11} parent=43 // pred_check_branch
        %1313 = sbr.rel (%p1311) target = $region48
      $region47: #{s_encoder_forward.11} parent=43 // pred_region
        _
      $region48: #{s_encoder_forward.11} parent=43 // pred_fallthru
        _
    $region44: #{s_encoder_forward.11} parent=5 // pred_fallthru
      _
    %p1314 = scmp.le.s32.totalorder 2, %s12
    // Predicated region
    $region49: #{s_encoder_forward.11} parent=5 // pred_check
      %p1315 = pneg %p1314
    $region50: #{s_encoder_forward.11} parent=5 // pred_check_branch
      %1317 = sbr.rel (%p1315) target = $region52
    $region51: #{s_encoder_forward.11} parent=5 // pred_region
      %s1318 = ssub.s32 %s12, 2
      // Predicated region
      $region53: #{s_encoder_forward.11} parent=51 // pred_check
        %p1319 = pneg %p172
      $region54: #{s_encoder_forward.11} parent=51 // pred_check_branch
        %1321 = sbr.rel (%p1319) target = $region56
      $region55: #{s_encoder_forward.11} parent=51 // pred_region
        %p1322 = scmp.lt.s32.totalorder %s18, 1
        %s1323 = scalar_select %p1322, %s18, 1
        %s1324 = smul.addr %s1323, 3
        %s1325 = smul.addr %s1324, 4
        %s1326 = scalar_lea.vmem %s6, %s1325
      $region56: #{s_encoder_forward.11} parent=51 // pred_fallthru
        _
    $region52: #{s_encoder_forward.11} parent=5 // pred_fallthru
      _
  $region6: #{s_encoder_forward.11} parent=0 // loop_footer
    %s16 = sadd.s32 1, %s12
  $region7: #{s_encoder_forward.11} parent=0 // loop_footer_branch
    %11 = sbr.rel target = $region3
  $region8: #{s_encoder_forward.11} parent=0 // loop_exit
    _

// kernel: s_encoder_forward.12
$region0: #{s_encoder_forward.12}
  #allocation0 [shape = 'u32[]', space=smem, size = 0x4, offset = 0x4, fixed_abs, tag = 'smem constant byte address 0x4 - core index']
  #allocation1 [shape = 'u32[144,128]{1,0:T(1,128)}', space=vmem, size = 0x12000, scoped, tag = 'internal scratch']
  %s0 = inlined_call_operand.vmem [shape: bf16[2,32,256], index: 0, kind: input, shape index: {}]
  %s1 = inlined_call_operand.vmem [shape: bf16[4,16,32], index: 1, kind: input, shape index: {}]
  %s2 = inlined_call_operand.vmem [shape: f32[16,1], index: 2, kind: input, shape index: {}]
  %s3 = inlined_call_operand.vmem [shape: f32[1,128], index: 3, kind: input, shape index: {}]
  %s4 = inlined_call_operand.vmem [shape: f32[16,1], index: 4, kind: input, shape index: {}]
  %s5 = inlined_call_operand.vmem [shape: f32[16,1], index: 5, kind: input, shape index: {}]
  %s6 = inlined_call_operand.vmem [shape: bf16[2,16,128], index: 6, kind: output, shape index: {}]
  %s7 = sld [smem:[#allocation0]]
  $region57: #{s_encoder_forward.12} parent=0
    _
  %s9 = ssub.s32 1, %s7
  %s10 = scalar_select 0, %s9, %s7
  loop: start=0, step=1, limit=4
  $region2: #{s_encoder_forward.12} parent=0 // loop_pre_header
    _
  $region3: #{s_encoder_forward.12} parent=0 // loop_header
    %s12 = sphi 0, %s16
    %p13 = scmp.ge.s32.totalorder %s12, 4
    %s22 = sphi 0, %s24
    %s25 = sphi 0, %s22
    %s26 = sphi 0, %s25
    %s42 = sphi 0, %s26
    %s46 = sphi 0, %s46
    %s48 = sphi 0, %s46
    %s49 = sphi 0, %s48
    %s63 = sphi 0, %s49
    %s67 = sphi 0, %s67
    %s69 = sphi 0, %s67
    %s70 = sphi 0, %s69
    %s84 = sphi 0, %s70
    %s88 = sphi 0, %s88
    %s90 = sphi 0, %s88
    %s91 = sphi 0, %s90
    %s105 = sphi 0, %s91
    %s109 = sphi 0, %s109
    %s111 = sphi 0, %s109
    %s112 = sphi 0, %s111
    %s126 = sphi 0, %s112
    %s130 = sphi 0, %s130
    %s132 = sphi 0, %s130
    %s133 = sphi 0, %s132
    %s147 = sphi 0, %s133
    %s153 = sphi 0, %s155
    %s156 = sphi 0, %s153
    %s157 = sphi 0, %s156
    %s173 = sphi 0, %s157
  $region4: #{s_encoder_forward.12} parent=0 // loop_header_branch
    %15 = sbr.rel (%p13) target = $region8
  $region5: #{s_encoder_forward.12} parent=0 // loop_body
    %s17 = ssub.s32 %s12, 1
    %s18 = ssub.s32 %s12, 2
    %s19 = sadd.s32 %s12, 1
    %s20 = ssub.s32 %s12, %s19
    %p21 = scmp.eq.s32.totalorder %s20, 0
    %s23 = sadd.s32 %s22, 1
    %s24 = scalar_select %p21, %s22, %s23
    %p27 = pneg %p21
    %p28 = scmp.eq.s32.totalorder %s12, 1
    %p29 = por %p27, %p28
    %p30 = scmp.ne.s32.totalorder %s22, %s25
    %p31 = scmp.eq.s32.totalorder %s12, 0
    %p32 = por %p30, %p31
    %p33 = scmp.ne.s32.totalorder %s22, %s25
    %p34 = scmp.eq.s32.totalorder %s17, 1
    %p35 = por %p33, %p34
    %p36 = scmp.ne.s32.totalorder %s25, %s26
    %p37 = scmp.eq.s32.totalorder %s17, 0
    %p38 = por %p36, %p37
    %p39 = scmp.ne.s32.totalorder %s25, %s26
    %p40 = scmp.eq.s32.totalorder %s18, 1
    %p41 = por %p39, %p40
    %p43 = scmp.ne.s32.totalorder %s26, %s42
    %p44 = scmp.eq.s32.totalorder %s18, 0
    %p45 = por %p43, %p44
    %s47 = sadd.s32 %s46, 1
    %p50 = scmp.eq.s32.totalorder %s12, 1
    %p51 = scmp.ne.s32.totalorder %s46, %s48
    %p52 = scmp.eq.s32.totalorder %s12, 0
    %p53 = por %p51, %p52
    %p54 = scmp.ne.s32.totalorder %s46, %s48
    %p55 = scmp.eq.s32.totalorder %s17, 1
    %p56 = por %p54, %p55
    %p57 = scmp.ne.s32.totalorder %s48, %s49
    %p58 = scmp.eq.s32.totalorder %s17, 0
    %p59 = por %p57, %p58
    %p60 = scmp.ne.s32.totalorder %s48, %s49
    %p61 = scmp.eq.s32.totalorder %s18, 1
    %p62 = por %p60, %p61
    %p64 = scmp.ne.s32.totalorder %s49, %s63
    %p65 = scmp.eq.s32.totalorder %s18, 0
    %p66 = por %p64, %p65
    %s68 = sadd.s32 %s67, 1
    %p71 = scmp.eq.s32.totalorder %s12, 1
    %p72 = scmp.ne.s32.totalorder %s67, %s69
    %p73 = scmp.eq.s32.totalorder %s12, 0
    %p74 = por %p72, %p73
    %p75 = scmp.ne.s32.totalorder %s67, %s69
    %p76 = scmp.eq.s32.totalorder %s17, 1
    %p77 = por %p75, %p76
    %p78 = scmp.ne.s32.totalorder %s69, %s70
    %p79 = scmp.eq.s32.totalorder %s17, 0
    %p80 = por %p78, %p79
    %p81 = scmp.ne.s32.totalorder %s69, %s70
    %p82 = scmp.eq.s32.totalorder %s18, 1
    %p83 = por %p81, %p82
    %p85 = scmp.ne.s32.totalorder %s70, %s84
    %p86 = scmp.eq.s32.totalorder %s18, 0
    %p87 = por %p85, %p86
    %s89 = sadd.s32 %s88, 1
    %p92 = scmp.eq.s32.totalorder %s12, 1
    %p93 = scmp.ne.s32.totalorder %s88, %s90
    %p94 = scmp.eq.s32.totalorder %s12, 0
    %p95 = por %p93, %p94
    %p96 = scmp.ne.s32.totalorder %s88, %s90
    %p97 = scmp.eq.s32.totalorder %s17, 1
    %p98 = por %p96, %p97
    %p99 = scmp.ne.s32.totalorder %s90, %s91
    %p100 = scmp.eq.s32.totalorder %s17, 0
    %p101 = por %p99, %p100
    %p102 = scmp.ne.s32.totalorder %s90, %s91
    %p103 = scmp.eq.s32.totalorder %s18, 1
    %p104 = por %p102, %p103
    %p106 = scmp.ne.s32.totalorder %s91, %s105
    %p107 = scmp.eq.s32.totalorder %s18, 0
    %p108 = por %p106, %p107
    %s110 = sadd.s32 %s109, 1
    %p113 = scmp.eq.s32.totalorder %s12, 1
    %p114 = scmp.ne.s32.totalorder %s109, %s111
    %p115 = scmp.eq.s32.totalorder %s12, 0
    %p116 = por %p114, %p115
    %p117 = scmp.ne.s32.totalorder %s109, %s111
    %p118 = scmp.eq.s32.totalorder %s17, 1
    %p119 = por %p117, %p118
    %p120 = scmp.ne.s32.totalorder %s111, %s112
    %p121 = scmp.eq.s32.totalorder %s17, 0
    %p122 = por %p120, %p121
    %p123 = scmp.ne.s32.totalorder %s111, %s112
    %p124 = scmp.eq.s32.totalorder %s18, 1
    %p125 = por %p123, %p124
    %p127 = scmp.ne.s32.totalorder %s112, %s126
    %p128 = scmp.eq.s32.totalorder %s18, 0
    %p129 = por %p127, %p128
    %s131 = sadd.s32 %s130, 1
    %p134 = scmp.eq.s32.totalorder %s12, 1
    %p135 = scmp.ne.s32.totalorder %s130, %s132
    %p136 = scmp.eq.s32.totalorder %s12, 0
    %p137 = por %p135, %p136
    %p138 = scmp.ne.s32.totalorder %s130, %s132
    %p139 = scmp.eq.s32.totalorder %s17, 1
    %p140 = por %p138, %p139
    %p141 = scmp.ne.s32.totalorder %s132, %s133
    %p142 = scmp.eq.s32.totalorder %s17, 0
    %p143 = por %p141, %p142
    %p144 = scmp.ne.s32.totalorder %s132, %s133
    %p145 = scmp.eq.s32.totalorder %s18, 1
    %p146 = por %p144, %p145
    %p148 = scmp.ne.s32.totalorder %s133, %s147
    %p149 = scmp.eq.s32.totalorder %s18, 0
    %p150 = por %p148, %p149
    %s151 = ssub.s32 %s12, %s19
    %p152 = scmp.eq.s32.totalorder %s151, 0
    %s154 = sadd.s32 %s153, 1
    %s155 = scalar_select %p152, %s153, %s154
    %p158 = pneg %p152
    %p159 = scmp.eq.s32.totalorder %s12, 1
    %p160 = por %p158, %p159
    %p161 = scmp.ne.s32.totalorder %s153, %s156
    %p162 = scmp.eq.s32.totalorder %s12, 0
    %p163 = por %p161, %p162
    %p164 = scmp.ne.s32.totalorder %s153, %s156
    %p165 = scmp.eq.s32.totalorder %s17, 1
    %p166 = por %p164, %p165
    %p167 = scmp.ne.s32.totalorder %s156, %s157
    %p168 = scmp.eq.s32.totalorder %s17, 0
    %p169 = por %p167, %p168
    %p170 = scmp.ne.s32.totalorder %s156, %s157
    %p171 = scmp.eq.s32.totalorder %s18, 1
    %p172 = por %p170, %p171
    %p174 = scmp.ne.s32.totalorder %s157, %s173
    %p175 = scmp.eq.s32.totalorder %s18, 0
    %p176 = por %p174, %p175
    %p177 = scmp.le.s32.totalorder 1, %s12
    %p178 = scmp.lt.s32.totalorder %s12, 3
    %p179 = pnand %p177, %p178
    %p180 = pneg %p179
    // Predicated region
    $region9: #{s_encoder_forward.12} parent=5 // pred_check
      _
    $region10: #{s_encoder_forward.12} parent=5 // pred_check_branch
      %182 = sbr.rel (%p179) target = $region12
    $region11: #{s_encoder_forward.12} parent=5 // pred_region
      %s183 = ssub.s32 %s12, 1
      // Predicated region
      $region13: #{s_encoder_forward.12} parent=11 // pred_check
        %p184 = pneg %p59
      $region14: #{s_encoder_forward.12} parent=11 // pred_check_branch
        %186 = sbr.rel (%p184) target = $region16
      $region15: #{s_encoder_forward.12} parent=11 // pred_region
        _
      $region16: #{s_encoder_forward.12} parent=11 // pred_fallthru
        _
      // Predicated region
      $region17: #{s_encoder_forward.12} parent=11 // pred_check
        %p187 = pneg %p80
      $region18: #{s_encoder_forward.12} parent=11 // pred_check_branch
        %189 = sbr.rel (%p187) target = $region20
      $region19: #{s_encoder_forward.12} parent=11 // pred_region
        _
      $region20: #{s_encoder_forward.12} parent=11 // pred_fallthru
        _
      // Predicated region
      $region21: #{s_encoder_forward.12} parent=11 // pred_check
        %p190 = pneg %p101
      $region22: #{s_encoder_forward.12} parent=11 // pred_check_branch
        %192 = sbr.rel (%p190) target = $region24
      $region23: #{s_encoder_forward.12} parent=11 // pred_region
        _
      $region24: #{s_encoder_forward.12} parent=11 // pred_fallthru
        _
      // Predicated region
      $region25: #{s_encoder_forward.12} parent=11 // pred_check
        %p193 = pneg %p122
      $region26: #{s_encoder_forward.12} parent=11 // pred_check_branch
        %195 = sbr.rel (%p193) target = $region28
      $region27: #{s_encoder_forward.12} parent=11 // pred_region
        _
      $region28: #{s_encoder_forward.12} parent=11 // pred_fallthru
        _
      // Predicated region
      $region29: #{s_encoder_forward.12} parent=11 // pred_check
        %p196 = pneg %p143
      $region30: #{s_encoder_forward.12} parent=11 // pred_check_branch
        %198 = sbr.rel (%p196) target = $region32
      $region31: #{s_encoder_forward.12} parent=11 // pred_region
        _
      $region32: #{s_encoder_forward.12} parent=11 // pred_fallthru
        _
    $region12: #{s_encoder_forward.12} parent=5 // pred_fallthru
      _
    %p199 = scmp.lt.s32.totalorder %s12, 2
    // Predicated region
    $region33: #{s_encoder_forward.12} parent=5 // pred_check
      %p200 = pneg %p199
    $region34: #{s_encoder_forward.12} parent=5 // pred_check_branch
      %202 = sbr.rel (%p200) target = $region36
    $region35: #{s_encoder_forward.12} parent=5 // pred_region
      // Predicated region
      $region37: #{s_encoder_forward.12} parent=35 // pred_check
        %p203 = pneg %p32
      $region38: #{s_encoder_forward.12} parent=35 // pred_check_branch
        %205 = sbr.rel (%p203) target = $region40
      $region39: #{s_encoder_forward.12} parent=35 // pred_region
        %p206 = scmp.lt.s32.totalorder %s12, 1
        %s207 = scalar_select %p206, %s12, 1
        %s208 = smul.addr %s207, 8
        %s209 = smul.addr %s208, 4
        %s210 = scalar_lea.vmem %s0, %s209
      $region40: #{s_encoder_forward.12} parent=35 // pred_fallthru
        _
    $region36: #{s_encoder_forward.12} parent=5 // pred_fallthru
      _
    %p211 = scmp.le.s32.totalorder 1, %s12
    %p212 = scmp.lt.s32.totalorder %s12, 3
    %p213 = pnand %p211, %p212
    %p214 = pneg %p213
    // Predicated region
    $region41: #{s_encoder_forward.12} parent=5 // pred_check
      _
    $region42: #{s_encoder_forward.12} parent=5 // pred_check_branch
      %216 = sbr.rel (%p213) target = $region44
    $region43: #{s_encoder_forward.12} parent=5 // pred_region
      %s217 = ssub.s32 %s12, 1
      %p218 = scmp.lt.s32.totalorder %s17, 1
      %s219 = scalar_select %p218, %s17, 1
      %s220 = smul.addr %s219, 8
      %s221 = smul.addr %s220, 4
      %s222 = scalar_lea.vmem %s0, %s221
      %p223 = pneg %p38
      %p224 = pneg %p35
      %p225 = pneg %p59
      %p226 = pneg %p56
      %p227 = pneg %p80
      %p228 = pneg %p77
      %p229 = pneg %p101
      %p230 = pneg %p98
      %p231 = pneg %p122
      %p232 = pneg %p119
      %p233 = pneg %p143
      %p234 = pneg %p140
      %p235 = pneg %p169
      %p236 = pneg %p166
      %p237 = scmp.lt.s32.totalorder %s17, 1
      %s238 = scalar_select %p237, %s17, 1
      %s239 = smul.addr %s238, 2
      %s240 = smul.addr %s239, 4
      %s241 = scalar_lea.vmem %s6, %s240
      %p242 = scmp.lt.s32.totalorder %s17, 1
      %s243 = scalar_select %p242, %s17, 1
      %s244 = smul.addr %s243, 8
      %s245 = smul.addr %s244, 4
      %s246 = scalar_lea.vmem %s0, %s245
      %p247 = scmp.lt.s32.totalorder %s17, 1
      %s248 = scalar_select %p247, %s17, 1
      %s249 = smul.addr %s248, 2
      %s250 = smul.addr %s249, 4
      %s251 = scalar_lea.vmem %s6, %s250
      %v253 = vld [vmem:[%s246] sm:$0xff]
      %v254 = vld [vmem:[%s246 + $0x8] sm:$0xff]
      %v255 = vld [vmem:[%s246 + $0x10] sm:$0xff]
      %v256 = vld [vmem:[%s246 + $0x18] sm:$0xff]
      %v257 = vld [vmem:[%s1] sm:$0xf]
      %v258 = vld [vmem:[%s1 + $0x4] sm:$0xf]
      %s259 = scalar_lea.vmem %s1, 8
      %v260 = vld [vmem:[%s259] sm:$0xf]
      %v261 = vld [vmem:[%s259 + $0x4] sm:$0xf]
      %v264 = vunpack.c.l.b16 %v260
      %v265 = vunpack.c.l.b16 %v261
      %v266 = vpack.c.b16 %v265, %v264
      %v271 = vunpack.c.l.b16 %v253
      %v272 = vunpack.c.h.b16 %v253
      %v273 = vunpack.c.l.b16 %v254
      %v274 = vunpack.c.h.b16 %v254
      %v275 = vunpack.c.l.b16 %v255
      %v276 = vunpack.c.h.b16 %v255
      %v277 = vunpack.c.l.b16 %v256
      %v278 = vunpack.c.h.b16 %v256
      %v279 = vpack.c.b16 %v273, %v271
      %v280 = vpack.c.b16 %v274, %v272
      %v281 = vpack.c.b16 %v277, %v275
      %v282 = vpack.c.b16 %v278, %v276
      %283 = vrot.lane.b32.xlu0 %v279, 127
      %v284 = vpop.permute.xlu0 %283
      %285 = vrot.lane.b32.xlu0 %v280, 127
      %v286 = vpop.permute.xlu0 %285
      %287 = vrot.lane.b32.xlu0 %v281, 127
      %v288 = vpop.permute.xlu0 %287
      %289 = vrot.lane.b32.xlu0 %v282, 127
      %v290 = vpop.permute.xlu0 %289
      %vm291 = vcmask 1039360
      %v292 = vsel %vm291, %v284, %v286
      %v293 = vsel %vm291, %v288, %v290
      %vm296 = vcmask 261120
      %v298 = vsel %vm296, %v266, 0
      %300 = vmatprep.subr.bf16.mxu0 0
      %301 = vmatpush1.bf16.msra.mxu0 %v292
      %302 = vmatprep.subr.bf16.mxu0 0
      %303 = vmatpush1.bf16.msra.mxu0 %v293
      %304 = vmatprep.subr.bf16.mxu0 0
      %305 = vmatpush1.bf16.msra.mxu0 0
      %306 = vmatprep.subr.bf16.mxu0 0
      %307 = vmatpush1.bf16.msra.mxu0 0
      %308 = vmatprep.subr.bf16.mxu0 0
      %309 = vmatpush1.bf16.msra.mxu0 0
      %310 = vmatprep.subr.bf16.mxu0 0
      %311 = vmatpush1.bf16.msra.mxu0 0
      %312 = vmatprep.subr.bf16.mxu0 0
      %313 = vmatpush1.bf16.msra.mxu0 0
      %314 = vmatprep.subr.bf16.mxu0 0
      %315 = vmatpush1.bf16.msra.mxu0 0
      %316 = vmatprep.subr.bf16.mxu0 0
      %317 = vmatpush1.bf16.msra.mxu0 0
      %318 = vmatprep.subr.bf16.mxu0 0
      %319 = vmatpush1.bf16.msra.mxu0 0
      %320 = vmatprep.subr.bf16.mxu0 0
      %321 = vmatpush1.bf16.msra.mxu0 0
      %322 = vmatprep.subr.bf16.mxu0 0
      %323 = vmatpush1.bf16.msra.mxu0 0
      %324 = vmatprep.subr.bf16.mxu0 0
      %325 = vmatpush1.bf16.msra.mxu0 0
      %326 = vmatprep.subr.bf16.mxu0 0
      %327 = vmatpush1.bf16.msra.mxu0 0
      %328 = vmatprep.subr.bf16.mxu0 0
      %329 = vmatpush1.bf16.msra.mxu0 0
      %330 = vmatprep.subr.bf16.mxu0 0
      %331 = vmatpush1.bf16.msra.mxu0 0
      %332 = vmatprep.mubr.bf16.mxu0 0
      %333 = vmatmul.mubr.bf16.gmra.mrb[0].mxu0 %v298
      %v334 = vpop.f32.mrb[0].mxu0
      %v335 = vadd.f32 0.0, %v334
      %v336 = vpop.f32.mrb[0].mxu0
      %v337 = vpop.f32.mrb[0].mxu0
      %v338 = vadd.f32 0.0, %v337
      %v339 = vpop.f32.mrb[0].mxu0
      %340 = vdwg.mxu0
      %v343 = vunpack.c.l.b16 %v257
      %v344 = vunpack.c.l.b16 %v258
      %v345 = vpack.c.b16 %v344, %v343
      %v349 = vsel %vm296, %v345, 0
      %351 = vmatprep.subr.bf16.mxu0 0
      %352 = vmatpush1.bf16.msra.mxu0 %v279
      %353 = vmatprep.subr.bf16.mxu0 0
      %354 = vmatpush1.bf16.msra.mxu0 %v281
      %355 = vmatprep.subr.bf16.mxu0 0
      %356 = vmatpush1.bf16.msra.mxu0 0
      %357 = vmatprep.subr.bf16.mxu0 0
      %358 = vmatpush1.bf16.msra.mxu0 0
      %359 = vmatprep.subr.bf16.mxu0 0
      %360 = vmatpush1.bf16.msra.mxu0 0
      %361 = vmatprep.subr.bf16.mxu0 0
      %362 = vmatpush1.bf16.msra.mxu0 0
      %363 = vmatprep.subr.bf16.mxu0 0
      %364 = vmatpush1.bf16.msra.mxu0 0
      %365 = vmatprep.subr.bf16.mxu0 0
      %366 = vmatpush1.bf16.msra.mxu0 0
      %367 = vmatprep.subr.bf16.mxu0 0
      %368 = vmatpush1.bf16.msra.mxu0 0
      %369 = vmatprep.subr.bf16.mxu0 0
      %370 = vmatpush1.bf16.msra.mxu0 0
      %371 = vmatprep.subr.bf16.mxu0 0
      %372 = vmatpush1.bf16.msra.mxu0 0
      %373 = vmatprep.subr.bf16.mxu0 0
      %374 = vmatpush1.bf16.msra.mxu0 0
      %375 = vmatprep.subr.bf16.mxu0 0
      %376 = vmatpush1.bf16.msra.mxu0 0
      %377 = vmatprep.subr.bf16.mxu0 0
      %378 = vmatpush1.bf16.msra.mxu0 0
      %379 = vmatprep.subr.bf16.mxu0 0
      %380 = vmatpush1.bf16.msra.mxu0 0
      %381 = vmatprep.subr.bf16.mxu0 0
      %382 = vmatpush1.bf16.msra.mxu0 0
      %383 = vmatprep.mubr.bf16.mxu0 0
      %384 = vmatmul.mubr.bf16.gmra.mrb[0].mxu0 %v349
      %v385 = vpop.f32.mrb[0].mxu0
      %v386 = vadd.f32 %v335, %v385
      %v387 = vpop.f32.mrb[0].mxu0
      %v388 = vpop.f32.mrb[0].mxu0
      %v389 = vadd.f32 %v338, %v388
      %v390 = vpop.f32.mrb[0].mxu0
      %391 = vdwg.mxu0
      %s392 = scalar_lea.vmem %s1, 16
      %v393 = vld [vmem:[%s392] sm:$0xf]
      %v394 = vld [vmem:[%s392 + $0x4] sm:$0xf]
      %v397 = vunpack.c.l.b16 %v393
      %v398 = vunpack.c.l.b16 %v394
      %v399 = vpack.c.b16 %v398, %v397
      %400 = vrot.lane.b32.xlu0 %v279, 119
      %v401 = vpop.permute.xlu0 %400
      %402 = vrot.lane.b32.xlu0 %v280, 119
      %v403 = vpop.permute.xlu0 %402
      %404 = vrot.lane.b32.xlu0 %v281, 119
      %v405 = vpop.permute.xlu0 %404
      %406 = vrot.lane.b32.xlu0 %v282, 119
      %v407 = vpop.permute.xlu0 %406
      %vm408 = vcmask 973824
      %v409 = vsel %vm408, %v401, %v403
      %v410 = vsel %vm408, %v405, %v407
      %v414 = vsel %vm296, %v399, 0
      %416 = vmatprep.subr.bf16.mxu0 0
      %417 = vmatpush1.bf16.msra.mxu0 %v409
      %418 = vmatprep.subr.bf16.mxu0 0
      %419 = vmatpush1.bf16.msra.mxu0 %v410
      %420 = vmatprep.subr.bf16.mxu0 0
      %421 = vmatpush1.bf16.msra.mxu0 0
      %422 = vmatprep.subr.bf16.mxu0 0
      %423 = vmatpush1.bf16.msra.mxu0 0
      %424 = vmatprep.subr.bf16.mxu0 0
      %425 = vmatpush1.bf16.msra.mxu0 0
      %426 = vmatprep.subr.bf16.mxu0 0
      %427 = vmatpush1.bf16.msra.mxu0 0
      %428 = vmatprep.subr.bf16.mxu0 0
      %429 = vmatpush1.bf16.msra.mxu0 0
      %430 = vmatprep.subr.bf16.mxu0 0
      %431 = vmatpush1.bf16.msra.mxu0 0
      %432 = vmatprep.subr.bf16.mxu0 0
      %433 = vmatpush1.bf16.msra.mxu0 0
      %434 = vmatprep.subr.bf16.mxu0 0
      %435 = vmatpush1.bf16.msra.mxu0 0
      %436 = vmatprep.subr.bf16.mxu0 0
      %437 = vmatpush1.bf16.msra.mxu0 0
      %438 = vmatprep.subr.bf16.mxu0 0
      %439 = vmatpush1.bf16.msra.mxu0 0
      %440 = vmatprep.subr.bf16.mxu0 0
      %441 = vmatpush1.bf16.msra.mxu0 0
      %442 = vmatprep.subr.bf16.mxu0 0
      %443 = vmatpush1.bf16.msra.mxu0 0
      %444 = vmatprep.subr.bf16.mxu0 0
      %445 = vmatpush1.bf16.msra.mxu0 0
      %446 = vmatprep.subr.bf16.mxu0 0
      %447 = vmatpush1.bf16.msra.mxu0 0
      %448 = vmatprep.mubr.bf16.mxu0 0
      %449 = vmatmul.mubr.bf16.gmra.mrb[0].mxu0 %v414
      %v450 = vpop.f32.mrb[0].mxu0
      %v451 = vadd.f32 0.0, %v450
      %v452 = vpop.f32.mrb[0].mxu0
      %v453 = vpop.f32.mrb[0].mxu0
      %v454 = vadd.f32 0.0, %v453
      %v455 = vpop.f32.mrb[0].mxu0
      %456 = vdwg.mxu0
      %v457 = vadd.f32 %v386, %v451
      %v458 = vadd.f32 %v389, %v454
      %s459 = scalar_lea.vmem %s1, 24
      %v460 = vld [vmem:[%s459] sm:$0xf]
      %v461 = vld [vmem:[%s459 + $0x4] sm:$0xf]
      %v464 = vunpack.c.l.b16 %v460
      %v465 = vunpack.c.l.b16 %v461
      %v466 = vpack.c.b16 %v465, %v464
      %467 = vrot.lane.b32.xlu0 %v279, 118
      %v468 = vpop.permute.xlu0 %467
      %469 = vrot.lane.b32.xlu0 %v280, 118
      %v470 = vpop.permute.xlu0 %469
      %471 = vrot.lane.b32.xlu0 %v281, 118
      %v472 = vpop.permute.xlu0 %471
      %473 = vrot.lane.b32.xlu0 %v282, 118
      %v474 = vpop.permute.xlu0 %473
      %vm475 = vcmask 965632
      %v476 = vsel %vm475, %v468, %v470
      %v477 = vsel %vm475, %v472, %v474
      %v481 = vsel %vm296, %v466, 0
      %483 = vmatprep.subr.bf16.mxu0 0
      %484 = vmatpush1.bf16.msra.mxu0 %v476
      %485 = vmatprep.subr.bf16.mxu0 0
      %486 = vmatpush1.bf16.msra.mxu0 %v477
      %487 = vmatprep.subr.bf16.mxu0 0
      %488 = vmatpush1.bf16.msra.mxu0 0
      %489 = vmatprep.subr.bf16.mxu0 0
      %490 = vmatpush1.bf16.msra.mxu0 0
      %491 = vmatprep.subr.bf16.mxu0 0
      %492 = vmatpush1.bf16.msra.mxu0 0
      %493 = vmatprep.subr.bf16.mxu0 0
      %494 = vmatpush1.bf16.msra.mxu0 0
      %495 = vmatprep.subr.bf16.mxu0 0
      %496 = vmatpush1.bf16.msra.mxu0 0
      %497 = vmatprep.subr.bf16.mxu0 0
      %498 = vmatpush1.bf16.msra.mxu0 0
      %499 = vmatprep.subr.bf16.mxu0 0
      %500 = vmatpush1.bf16.msra.mxu0 0
      %501 = vmatprep.subr.bf16.mxu0 0
      %502 = vmatpush1.bf16.msra.mxu0 0
      %503 = vmatprep.subr.bf16.mxu0 0
      %504 = vmatpush1.bf16.msra.mxu0 0
      %505 = vmatprep.subr.bf16.mxu0 0
      %506 = vmatpush1.bf16.msra.mxu0 0
      %507 = vmatprep.subr.bf16.mxu0 0
      %508 = vmatpush1.bf16.msra.mxu0 0
      %509 = vmatprep.subr.bf16.mxu0 0
      %510 = vmatpush1.bf16.msra.mxu0 0
      %511 = vmatprep.subr.bf16.mxu0 0
      %512 = vmatpush1.bf16.msra.mxu0 0
      %513 = vmatprep.subr.bf16.mxu0 0
      %514 = vmatpush1.bf16.msra.mxu0 0
      %515 = vmatprep.mubr.bf16.mxu0 0
      %516 = vmatmul.mubr.bf16.gmra.mrb[0].mxu0 %v481
      %v517 = vpop.f32.mrb[0].mxu0
      %v518 = vadd.f32 0.0, %v517
      %v519 = vpop.f32.mrb[0].mxu0
      %v520 = vpop.f32.mrb[0].mxu0
      %v521 = vadd.f32 0.0, %v520
      %v522 = vpop.f32.mrb[0].mxu0
      %523 = vdwg.mxu0
      %v524 = vadd.f32 %v457, %v518
      %v525 = vadd.f32 %v458, %v521
      %v526 = vld [vmem:[%s2] sm:$0xff]
      %v527 = vld [vmem:[%s2 + $0x8] sm:$0xff]
      %529 = vset.pattern.permute.xlu0 0
      %530 = vperm.xlu0 %529, %v526
      %v531 = vpop.permute.xlu0 %530
      %534 = vset.pattern.permute.xlu0 0
      %535 = vperm.xlu0 %534, %v527
      %v536 = vpop.permute.xlu0 %535
      %v538 = vadd.f32 %v524, %v531
      %v539 = vadd.f32 %v525, %v536
      %v540 = vld [vmem:[%s3] sm:$0x1]
      %v542 = vlaneseq
      %v543 = vshrl.u32 %v542, 7
      %v544 = vsub.s32 0, %v543
      %v545 = vrot.slane %v540, %v544
      %v547 = vmul.f32 %v538, %v545
      %v548 = vmul.f32 %v539, %v545
      %v549 = vadd.f32 %v547, %v548
      %550 = vadd.xlane.f32.xlu0 %v549
      %v551 = vpop.xlane.xlu0 %550
      %v552 = vrot.slane %v551, 4
      %v553 = vadd.f32 %v551, %v552
      %v554 = vrot.slane %v553, 2
      %v555 = vadd.f32 %v553, %v554
      %v556 = vrot.slane %v555, 1
      %v557 = vadd.f32 %v555, %v556
      %s558 = vtos %v557
      %v559 = vstv %s558
      %v560 = vrcp.pop 1024.0
      %v561 = vmul.f32 %v559, %v560
      %v562 = vsub.f32 %v538, %v561
      %v563 = vsub.f32 %v539, %v561
      %v564 = vmul.f32 %v562, %v545
      %v565 = vmul.f32 %v563, %v545
      %v566 = vmul.f32 %v564, %v564
      %v567 = vmul.f32 %v565, %v565
      %v568 = vadd.f32 %v566, %v567
      %569 = vadd.xlane.f32.xlu0 %v568
      %v570 = vpop.xlane.xlu0 %569
      %v571 = vrot.slane %v570, 4
      %v572 = vadd.f32 %v570, %v571
      %v573 = vrot.slane %v572, 2
      %v574 = vadd.f32 %v572, %v573
      %v575 = vrot.slane %v574, 1
      %v576 = vadd.f32 %v574, %v575
      %s577 = vtos %v576
      %v578 = vstv %s577
      %v579 = vrcp.pop 1023.0
      %v580 = vmul.f32 %v578, %v579
      %v581 = vrsqrt.pop %v580
      %v582 = vmul.f32 %v580, %v581
      %vm583 = vcmp.eq.f32.partialorder %v580, inf
      %v584 = vsel %vm583, %v580, %v582
      %vm585 = vcmp.eq.f32.partialorder %v580, 0.0
      %v586 = vand.u32 %v580, 2147483648
      %v587 = vsel %vm585, %v586, %v584
      %v588 = vadd.f32 %v587, 1e-05
      %v589 = vrcp.pop %v588
      %v590 = vmul.f32 1.0, %v589
      %v591 = vmul.f32 %v562, %v590
      %v592 = vmul.f32 %v563, %v590
      %v593 = vld [vmem:[%s4] sm:$0xff]
      %v594 = vld [vmem:[%s4 + $0x8] sm:$0xff]
      %596 = vset.pattern.permute.xlu0 0
      %597 = vperm.xlu0 %596, %v593
      %v598 = vpop.permute.xlu0 %597
      %601 = vset.pattern.permute.xlu0 0
      %602 = vperm.xlu0 %601, %v594
      %v603 = vpop.permute.xlu0 %602
      %v605 = vmul.f32 %v591, %v598
      %v606 = vmul.f32 %v592, %v603
      %v607 = vld [vmem:[%s5] sm:$0xff]
      %v608 = vld [vmem:[%s5 + $0x8] sm:$0xff]
      %610 = vset.pattern.permute.xlu0 0
      %611 = vperm.xlu0 %610, %v607
      %v612 = vpop.permute.xlu0 %611
      %615 = vset.pattern.permute.xlu0 0
      %616 = vperm.xlu0 %615, %v608
      %v617 = vpop.permute.xlu0 %616
      %v619 = vadd.f32 %v605, %v612
      %v620 = vadd.f32 %v606, %v617
      %v621 = vmax.f32 %v619, 0.0
      %v622 = vmax.f32 %v620, 0.0
      %v623 = vpack.c.bf16 %v622, %v621
      %v625 = vunpack.c.l.b16 %v623
      %v626 = vunpack.c.h.b16 %v623
      %v627 = vpack.c.b16 %v625, %v625
      %v628 = vpack.c.b16 %v626, %v626
      %631 = vst [vmem:[%s251] sm:$0xf] %v627
      %632 = vst [vmem:[%s251 + $0x4] sm:$0xf] %v628
      %p633 = scmp.lt.s32.totalorder %s17, 1
      %s634 = scalar_select %p633, %s17, 1
      %s635 = smul.addr %s634, 2
      %s636 = smul.addr %s635, 4
      %s637 = scalar_lea.vmem %s6, %s636
      // Predicated region
      $region45: #{s_encoder_forward.12} parent=43 // pred_check
        %p638 = pneg %p166
      $region46: #{s_encoder_forward.12} parent=43 // pred_check_branch
        %640 = sbr.rel (%p638) target = $region48
      $region47: #{s_encoder_forward.12} parent=43 // pred_region
        _
      $region48: #{s_encoder_forward.12} parent=43 // pred_fallthru
        _
    $region44: #{s_encoder_forward.12} parent=5 // pred_fallthru
      _
    %p641 = scmp.le.s32.totalorder 2, %s12
    // Predicated region
    $region49: #{s_encoder_forward.12} parent=5 // pred_check
      %p642 = pneg %p641
    $region50: #{s_encoder_forward.12} parent=5 // pred_check_branch
      %644 = sbr.rel (%p642) target = $region52
    $region51: #{s_encoder_forward.12} parent=5 // pred_region
      %s645 = ssub.s32 %s12, 2
      // Predicated region
      $region53: #{s_encoder_forward.12} parent=51 // pred_check
        %p646 = pneg %p172
      $region54: #{s_encoder_forward.12} parent=51 // pred_check_branch
        %648 = sbr.rel (%p646) target = $region56
      $region55: #{s_encoder_forward.12} parent=51 // pred_region
        %p649 = scmp.lt.s32.totalorder %s18, 1
        %s650 = scalar_select %p649, %s18, 1
        %s651 = smul.addr %s650, 2
        %s652 = smul.addr %s651, 4
        %s653 = scalar_lea.vmem %s6, %s652
      $region56: #{s_encoder_forward.12} parent=51 // pred_fallthru
        _
    $region52: #{s_encoder_forward.12} parent=5 // pred_fallthru
      _
  $region6: #{s_encoder_forward.12} parent=0 // loop_footer
    %s16 = sadd.s32 1, %s12
  $region7: #{s_encoder_forward.12} parent=0 // loop_footer_branch
    %11 = sbr.rel target = $region3
  $region8: #{s_encoder_forward.12} parent=0 // loop_exit
    _

// kernel: s_encoder_forward.13
$region0: #{s_encoder_forward.13}
  #allocation0 [shape = 'u32[]', space=smem, size = 0x4, offset = 0x4, fixed_abs, tag = 'smem constant byte address 0x4 - core index']
  #allocation1 [shape = 'u32[144,128]{1,0:T(1,128)}', space=vmem, size = 0x12000, scoped, tag = 'internal scratch']
  %s0 = inlined_call_operand.vmem [shape: bf16[2,64,256], index: 0, kind: input, shape index: {}]
  %s1 = inlined_call_operand.vmem [shape: bf16[4,32,64], index: 1, kind: input, shape index: {}]
  %s2 = inlined_call_operand.vmem [shape: f32[32,1], index: 2, kind: input, shape index: {}]
  %s3 = inlined_call_operand.vmem [shape: f32[1,128], index: 3, kind: input, shape index: {}]
  %s4 = inlined_call_operand.vmem [shape: f32[32,1], index: 4, kind: input, shape index: {}]
  %s5 = inlined_call_operand.vmem [shape: f32[32,1], index: 5, kind: input, shape index: {}]
  %s6 = inlined_call_operand.vmem [shape: bf16[2,32,128], index: 6, kind: output, shape index: {}]
  %s7 = sld [smem:[#allocation0]]
  $region57: #{s_encoder_forward.13} parent=0
    _
  %s9 = ssub.s32 1, %s7
  %s10 = scalar_select 0, %s9, %s7
  loop: start=0, step=1, limit=4
  $region2: #{s_encoder_forward.13} parent=0 // loop_pre_header
    _
  $region3: #{s_encoder_forward.13} parent=0 // loop_header
    %s12 = sphi 0, %s16
    %p13 = scmp.ge.s32.totalorder %s12, 4
    %s22 = sphi 0, %s24
    %s25 = sphi 0, %s22
    %s26 = sphi 0, %s25
    %s42 = sphi 0, %s26
    %s46 = sphi 0, %s46
    %s48 = sphi 0, %s46
    %s49 = sphi 0, %s48
    %s63 = sphi 0, %s49
    %s67 = sphi 0, %s67
    %s69 = sphi 0, %s67
    %s70 = sphi 0, %s69
    %s84 = sphi 0, %s70
    %s88 = sphi 0, %s88
    %s90 = sphi 0, %s88
    %s91 = sphi 0, %s90
    %s105 = sphi 0, %s91
    %s109 = sphi 0, %s109
    %s111 = sphi 0, %s109
    %s112 = sphi 0, %s111
    %s126 = sphi 0, %s112
    %s130 = sphi 0, %s130
    %s132 = sphi 0, %s130
    %s133 = sphi 0, %s132
    %s147 = sphi 0, %s133
    %s153 = sphi 0, %s155
    %s156 = sphi 0, %s153
    %s157 = sphi 0, %s156
    %s173 = sphi 0, %s157
  $region4: #{s_encoder_forward.13} parent=0 // loop_header_branch
    %15 = sbr.rel (%p13) target = $region8
  $region5: #{s_encoder_forward.13} parent=0 // loop_body
    %s17 = ssub.s32 %s12, 1
    %s18 = ssub.s32 %s12, 2
    %s19 = sadd.s32 %s12, 1
    %s20 = ssub.s32 %s12, %s19
    %p21 = scmp.eq.s32.totalorder %s20, 0
    %s23 = sadd.s32 %s22, 1
    %s24 = scalar_select %p21, %s22, %s23
    %p27 = pneg %p21
    %p28 = scmp.eq.s32.totalorder %s12, 1
    %p29 = por %p27, %p28
    %p30 = scmp.ne.s32.totalorder %s22, %s25
    %p31 = scmp.eq.s32.totalorder %s12, 0
    %p32 = por %p30, %p31
    %p33 = scmp.ne.s32.totalorder %s22, %s25
    %p34 = scmp.eq.s32.totalorder %s17, 1
    %p35 = por %p33, %p34
    %p36 = scmp.ne.s32.totalorder %s25, %s26
    %p37 = scmp.eq.s32.totalorder %s17, 0
    %p38 = por %p36, %p37
    %p39 = scmp.ne.s32.totalorder %s25, %s26
    %p40 = scmp.eq.s32.totalorder %s18, 1
    %p41 = por %p39, %p40
    %p43 = scmp.ne.s32.totalorder %s26, %s42
    %p44 = scmp.eq.s32.totalorder %s18, 0
    %p45 = por %p43, %p44
    %s47 = sadd.s32 %s46, 1
    %p50 = scmp.eq.s32.totalorder %s12, 1
    %p51 = scmp.ne.s32.totalorder %s46, %s48
    %p52 = scmp.eq.s32.totalorder %s12, 0
    %p53 = por %p51, %p52
    %p54 = scmp.ne.s32.totalorder %s46, %s48
    %p55 = scmp.eq.s32.totalorder %s17, 1
    %p56 = por %p54, %p55
    %p57 = scmp.ne.s32.totalorder %s48, %s49
    %p58 = scmp.eq.s32.totalorder %s17, 0
    %p59 = por %p57, %p58
    %p60 = scmp.ne.s32.totalorder %s48, %s49
    %p61 = scmp.eq.s32.totalorder %s18, 1
    %p62 = por %p60, %p61
    %p64 = scmp.ne.s32.totalorder %s49, %s63
    %p65 = scmp.eq.s32.totalorder %s18, 0
    %p66 = por %p64, %p65
    %s68 = sadd.s32 %s67, 1
    %p71 = scmp.eq.s32.totalorder %s12, 1
    %p72 = scmp.ne.s32.totalorder %s67, %s69
    %p73 = scmp.eq.s32.totalorder %s12, 0
    %p74 = por %p72, %p73
    %p75 = scmp.ne.s32.totalorder %s67, %s69
    %p76 = scmp.eq.s32.totalorder %s17, 1
    %p77 = por %p75, %p76
    %p78 = scmp.ne.s32.totalorder %s69, %s70
    %p79 = scmp.eq.s32.totalorder %s17, 0
    %p80 = por %p78, %p79
    %p81 = scmp.ne.s32.totalorder %s69, %s70
    %p82 = scmp.eq.s32.totalorder %s18, 1
    %p83 = por %p81, %p82
    %p85 = scmp.ne.s32.totalorder %s70, %s84
    %p86 = scmp.eq.s32.totalorder %s18, 0
    %p87 = por %p85, %p86
    %s89 = sadd.s32 %s88, 1
    %p92 = scmp.eq.s32.totalorder %s12, 1
    %p93 = scmp.ne.s32.totalorder %s88, %s90
    %p94 = scmp.eq.s32.totalorder %s12, 0
    %p95 = por %p93, %p94
    %p96 = scmp.ne.s32.totalorder %s88, %s90
    %p97 = scmp.eq.s32.totalorder %s17, 1
    %p98 = por %p96, %p97
    %p99 = scmp.ne.s32.totalorder %s90, %s91
    %p100 = scmp.eq.s32.totalorder %s17, 0
    %p101 = por %p99, %p100
    %p102 = scmp.ne.s32.totalorder %s90, %s91
    %p103 = scmp.eq.s32.totalorder %s18, 1
    %p104 = por %p102, %p103
    %p106 = scmp.ne.s32.totalorder %s91, %s105
    %p107 = scmp.eq.s32.totalorder %s18, 0
    %p108 = por %p106, %p107
    %s110 = sadd.s32 %s109, 1
    %p113 = scmp.eq.s32.totalorder %s12, 1
    %p114 = scmp.ne.s32.totalorder %s109, %s111
    %p115 = scmp.eq.s32.totalorder %s12, 0
    %p116 = por %p114, %p115
    %p117 = scmp.ne.s32.totalorder %s109, %s111
    %p118 = scmp.eq.s32.totalorder %s17, 1
    %p119 = por %p117, %p118
    %p120 = scmp.ne.s32.totalorder %s111, %s112
    %p121 = scmp.eq.s32.totalorder %s17, 0
    %p122 = por %p120, %p121
    %p123 = scmp.ne.s32.totalorder %s111, %s112
    %p124 = scmp.eq.s32.totalorder %s18, 1
    %p125 = por %p123, %p124
    %p127 = scmp.ne.s32.totalorder %s112, %s126
    %p128 = scmp.eq.s32.totalorder %s18, 0
    %p129 = por %p127, %p128
    %s131 = sadd.s32 %s130, 1
    %p134 = scmp.eq.s32.totalorder %s12, 1
    %p135 = scmp.ne.s32.totalorder %s130, %s132
    %p136 = scmp.eq.s32.totalorder %s12, 0
    %p137 = por %p135, %p136
    %p138 = scmp.ne.s32.totalorder %s130, %s132
    %p139 = scmp.eq.s32.totalorder %s17, 1
    %p140 = por %p138, %p139
    %p141 = scmp.ne.s32.totalorder %s132, %s133
    %p142 = scmp.eq.s32.totalorder %s17, 0
    %p143 = por %p141, %p142
    %p144 = scmp.ne.s32.totalorder %s132, %s133
    %p145 = scmp.eq.s32.totalorder %s18, 1
    %p146 = por %p144, %p145
    %p148 = scmp.ne.s32.totalorder %s133, %s147
    %p149 = scmp.eq.s32.totalorder %s18, 0
    %p150 = por %p148, %p149
    %s151 = ssub.s32 %s12, %s19
    %p152 = scmp.eq.s32.totalorder %s151, 0
    %s154 = sadd.s32 %s153, 1
    %s155 = scalar_select %p152, %s153, %s154
    %p158 = pneg %p152
    %p159 = scmp.eq.s32.totalorder %s12, 1
    %p160 = por %p158, %p159
    %p161 = scmp.ne.s32.totalorder %s153, %s156
    %p162 = scmp.eq.s32.totalorder %s12, 0
    %p163 = por %p161, %p162
    %p164 = scmp.ne.s32.totalorder %s153, %s156
    %p165 = scmp.eq.s32.totalorder %s17, 1
    %p166 = por %p164, %p165
    %p167 = scmp.ne.s32.totalorder %s156, %s157
    %p168 = scmp.eq.s32.totalorder %s17, 0
    %p169 = por %p167, %p168
    %p170 = scmp.ne.s32.totalorder %s156, %s157
    %p171 = scmp.eq.s32.totalorder %s18, 1
    %p172 = por %p170, %p171
    %p174 = scmp.ne.s32.totalorder %s157, %s173
    %p175 = scmp.eq.s32.totalorder %s18, 0
    %p176 = por %p174, %p175
    %p177 = scmp.le.s32.totalorder 1, %s12
    %p178 = scmp.lt.s32.totalorder %s12, 3
    %p179 = pnand %p177, %p178
    %p180 = pneg %p179
    // Predicated region
    $region9: #{s_encoder_forward.13} parent=5 // pred_check
      _
    $region10: #{s_encoder_forward.13} parent=5 // pred_check_branch
      %182 = sbr.rel (%p179) target = $region12
    $region11: #{s_encoder_forward.13} parent=5 // pred_region
      %s183 = ssub.s32 %s12, 1
      // Predicated region
      $region13: #{s_encoder_forward.13} parent=11 // pred_check
        %p184 = pneg %p59
      $region14: #{s_encoder_forward.13} parent=11 // pred_check_branch
        %186 = sbr.rel (%p184) target = $region16
      $region15: #{s_encoder_forward.13} parent=11 // pred_region
        _
      $region16: #{s_encoder_forward.13} parent=11 // pred_fallthru
        _
      // Predicated region
      $region17: #{s_encoder_forward.13} parent=11 // pred_check
        %p187 = pneg %p80
      $region18: #{s_encoder_forward.13} parent=11 // pred_check_branch
        %189 = sbr.rel (%p187) target = $region20
      $region19: #{s_encoder_forward.13} parent=11 // pred_region
        _
      $region20: #{s_encoder_forward.13} parent=11 // pred_fallthru
        _
      // Predicated region
      $region21: #{s_encoder_forward.13} parent=11 // pred_check
        %p190 = pneg %p101
      $region22: #{s_encoder_forward.13} parent=11 // pred_check_branch
        %192 = sbr.rel (%p190) target = $region24
      $region23: #{s_encoder_forward.13} parent=11 // pred_region
        _
      $region24: #{s_encoder_forward.13} parent=11 // pred_fallthru
        _
      // Predicated region
      $region25: #{s_encoder_forward.13} parent=11 // pred_check
        %p193 = pneg %p122
      $region26: #{s_encoder_forward.13} parent=11 // pred_check_branch
        %195 = sbr.rel (%p193) target = $region28
      $region27: #{s_encoder_forward.13} parent=11 // pred_region
        _
      $region28: #{s_encoder_forward.13} parent=11 // pred_fallthru
        _
      // Predicated region
      $region29: #{s_encoder_forward.13} parent=11 // pred_check
        %p196 = pneg %p143
      $region30: #{s_encoder_forward.13} parent=11 // pred_check_branch
        %198 = sbr.rel (%p196) target = $region32
      $region31: #{s_encoder_forward.13} parent=11 // pred_region
        _
      $region32: #{s_encoder_forward.13} parent=11 // pred_fallthru
        _
    $region12: #{s_encoder_forward.13} parent=5 // pred_fallthru
      _
    %p199 = scmp.lt.s32.totalorder %s12, 2
    // Predicated region
    $region33: #{s_encoder_forward.13} parent=5 // pred_check
      %p200 = pneg %p199
    $region34: #{s_encoder_forward.13} parent=5 // pred_check_branch
      %202 = sbr.rel (%p200) target = $region36
    $region35: #{s_encoder_forward.13} parent=5 // pred_region
      // Predicated region
      $region37: #{s_encoder_forward.13} parent=35 // pred_check
        %p203 = pneg %p32
      $region38: #{s_encoder_forward.13} parent=35 // pred_check_branch
        %205 = sbr.rel (%p203) target = $region40
      $region39: #{s_encoder_forward.13} parent=35 // pred_region
        %p206 = scmp.lt.s32.totalorder %s12, 1
        %s207 = scalar_select %p206, %s12, 1
        %s208 = smul.addr %s207, 16
        %s209 = smul.addr %s208, 4
        %s210 = scalar_lea.vmem %s0, %s209
      $region40: #{s_encoder_forward.13} parent=35 // pred_fallthru
        _
    $region36: #{s_encoder_forward.13} parent=5 // pred_fallthru
      _
    %p211 = scmp.le.s32.totalorder 1, %s12
    %p212 = scmp.lt.s32.totalorder %s12, 3
    %p213 = pnand %p211, %p212
    %p214 = pneg %p213
    // Predicated region
    $region41: #{s_encoder_forward.13} parent=5 // pred_check
      _
    $region42: #{s_encoder_forward.13} parent=5 // pred_check_branch
      %216 = sbr.rel (%p213) target = $region44
    $region43: #{s_encoder_forward.13} parent=5 // pred_region
      %s217 = ssub.s32 %s12, 1
      %p218 = scmp.lt.s32.totalorder %s17, 1
      %s219 = scalar_select %p218, %s17, 1
      %s220 = smul.addr %s219, 16
      %s221 = smul.addr %s220, 4
      %s222 = scalar_lea.vmem %s0, %s221
      %p223 = pneg %p38
      %p224 = pneg %p35
      %p225 = pneg %p59
      %p226 = pneg %p56
      %p227 = pneg %p80
      %p228 = pneg %p77
      %p229 = pneg %p101
      %p230 = pneg %p98
      %p231 = pneg %p122
      %p232 = pneg %p119
      %p233 = pneg %p143
      %p234 = pneg %p140
      %p235 = pneg %p169
      %p236 = pneg %p166
      %p237 = scmp.lt.s32.totalorder %s17, 1
      %s238 = scalar_select %p237, %s17, 1
      %s239 = smul.addr %s238, 4
      %s240 = smul.addr %s239, 4
      %s241 = scalar_lea.vmem %s6, %s240
      %p242 = scmp.lt.s32.totalorder %s17, 1
      %s243 = scalar_select %p242, %s17, 1
      %s244 = smul.addr %s243, 16
      %s245 = smul.addr %s244, 4
      %s246 = scalar_lea.vmem %s0, %s245
      %p247 = scmp.lt.s32.totalorder %s17, 1
      %s248 = scalar_select %p247, %s17, 1
      %s249 = smul.addr %s248, 4
      %s250 = smul.addr %s249, 4
      %s251 = scalar_lea.vmem %s6, %s250
      %v253 = vld [vmem:[%s246] sm:$0xff]
      %v254 = vld [vmem:[%s246 + $0x8] sm:$0xff]
      %v255 = vld [vmem:[%s246 + $0x10] sm:$0xff]
      %v256 = vld [vmem:[%s246 + $0x18] sm:$0xff]
      %v257 = vld [vmem:[%s246 + $0x20] sm:$0xff]
      %v258 = vld [vmem:[%s246 + $0x28] sm:$0xff]
      %v259 = vld [vmem:[%s246 + $0x30] sm:$0xff]
      %v260 = vld [vmem:[%s246 + $0x38] sm:$0xff]
      %v261 = vld [vmem:[%s1] sm:$0xf]
      %v262 = vld [vmem:[%s1 + $0x4] sm:$0xf]
      %v263 = vld [vmem:[%s1 + $0x8] sm:$0xf]
      %v264 = vld [vmem:[%s1 + $0xc] sm:$0xf]
      %s265 = scalar_lea.vmem %s1, 16
      %v266 = vld [vmem:[%s265] sm:$0xf]
      %v267 = vld [vmem:[%s265 + $0x4] sm:$0xf]
      %v268 = vld [vmem:[%s265 + $0x8] sm:$0xf]
      %v269 = vld [vmem:[%s265 + $0xc] sm:$0xf]
      %v274 = vunpack.c.l.b16 %v266
      %v275 = vunpack.c.l.b16 %v267
      %v276 = vunpack.c.l.b16 %v268
      %v277 = vunpack.c.l.b16 %v269
      %v278 = vpack.c.b16 %v275, %v274
      %v279 = vpack.c.b16 %v277, %v276
      %v288 = vunpack.c.l.b16 %v253
      %v289 = vunpack.c.h.b16 %v253
      %v290 = vunpack.c.l.b16 %v254
      %v291 = vunpack.c.h.b16 %v254
      %v292 = vunpack.c.l.b16 %v255
      %v293 = vunpack.c.h.b16 %v255
      %v294 = vunpack.c.l.b16 %v256
      %v295 = vunpack.c.h.b16 %v256
      %v296 = vunpack.c.l.b16 %v257
      %v297 = vunpack.c.h.b16 %v257
      %v298 = vunpack.c.l.b16 %v258
      %v299 = vunpack.c.h.b16 %v258
      %v300 = vunpack.c.l.b16 %v259
      %v301 = vunpack.c.h.b16 %v259
      %v302 = vunpack.c.l.b16 %v260
      %v303 = vunpack.c.h.b16 %v260
      %v304 = vpack.c.b16 %v290, %v288
      %v305 = vpack.c.b16 %v291, %v289
      %v306 = vpack.c.b16 %v294, %v292
      %v307 = vpack.c.b16 %v295, %v293
      %v308 = vpack.c.b16 %v298, %v296
      %v309 = vpack.c.b16 %v299, %v297
      %v310 = vpack.c.b16 %v302, %v300
      %v311 = vpack.c.b16 %v303, %v301
      %312 = vrot.lane.b32.xlu0 %v304, 127
      %v313 = vpop.permute.xlu0 %312
      %314 = vrot.lane.b32.xlu0 %v305, 127
      %v315 = vpop.permute.xlu0 %314
      %316 = vrot.lane.b32.xlu0 %v306, 127
      %v317 = vpop.permute.xlu0 %316
      %318 = vrot.lane.b32.xlu0 %v307, 127
      %v319 = vpop.permute.xlu0 %318
      %320 = vrot.lane.b32.xlu0 %v308, 127
      %v321 = vpop.permute.xlu0 %320
      %322 = vrot.lane.b32.xlu0 %v309, 127
      %v323 = vpop.permute.xlu0 %322
      %324 = vrot.lane.b32.xlu0 %v310, 127
      %v325 = vpop.permute.xlu0 %324
      %326 = vrot.lane.b32.xlu0 %v311, 127
      %v327 = vpop.permute.xlu0 %326
      %vm328 = vcmask 1039360
      %v329 = vsel %vm328, %v313, %v315
      %v330 = vsel %vm328, %v317, %v319
      %v331 = vsel %vm328, %v321, %v323
      %v332 = vsel %vm328, %v325, %v327
      %vm337 = vcmask 523264
      %v339 = vsel %vm337, %v278, 0
      %v342 = vsel %vm337, %v279, 0
      %344 = vmatprep.subr.bf16.mxu0 0
      %345 = vmatpush1.bf16.msra.mxu0 %v329
      %346 = vmatprep.subr.bf16.mxu0 0
      %347 = vmatpush1.bf16.msra.mxu0 %v330
      %348 = vmatprep.subr.bf16.mxu0 0
      %349 = vmatpush1.bf16.msra.mxu0 %v331
      %350 = vmatprep.subr.bf16.mxu0 0
      %351 = vmatpush1.bf16.msra.mxu0 %v332
      %352 = vmatprep.subr.bf16.mxu0 0
      %353 = vmatpush1.bf16.msra.mxu0 0
      %354 = vmatprep.subr.bf16.mxu0 0
      %355 = vmatpush1.bf16.msra.mxu0 0
      %356 = vmatprep.subr.bf16.mxu0 0
      %357 = vmatpush1.bf16.msra.mxu0 0
      %358 = vmatprep.subr.bf16.mxu0 0
      %359 = vmatpush1.bf16.msra.mxu0 0
      %360 = vmatprep.subr.bf16.mxu0 0
      %361 = vmatpush1.bf16.msra.mxu0 0
      %362 = vmatprep.subr.bf16.mxu0 0
      %363 = vmatpush1.bf16.msra.mxu0 0
      %364 = vmatprep.subr.bf16.mxu0 0
      %365 = vmatpush1.bf16.msra.mxu0 0
      %366 = vmatprep.subr.bf16.mxu0 0
      %367 = vmatpush1.bf16.msra.mxu0 0
      %368 = vmatprep.subr.bf16.mxu0 0
      %369 = vmatpush1.bf16.msra.mxu0 0
      %370 = vmatprep.subr.bf16.mxu0 0
      %371 = vmatpush1.bf16.msra.mxu0 0
      %372 = vmatprep.subr.bf16.mxu0 0
      %373 = vmatpush1.bf16.msra.mxu0 0
      %374 = vmatprep.subr.bf16.mxu0 0
      %375 = vmatpush1.bf16.msra.mxu0 0
      %376 = vmatprep.mubr.bf16.mxu0 0
      %377 = vmatmul.mubr.bf16.gmra.mrb[0].mxu0 %v339
      %v378 = vpop.f32.mrb[0].mxu0
      %v379 = vadd.f32 0.0, %v378
      %v380 = vpop.f32.mrb[0].mxu0
      %v381 = vpop.f32.mrb[0].mxu0
      %v382 = vadd.f32 0.0, %v381
      %v383 = vpop.f32.mrb[0].mxu0
      %384 = vmatprep.mubr.bf16.mxu0 0
      %385 = vmatmul.mubr.bf16.gmra.mrb[0].mxu0 %v342
      %v386 = vpop.f32.mrb[0].mxu0
      %v387 = vadd.f32 0.0, %v386
      %v388 = vpop.f32.mrb[0].mxu0
      %v389 = vpop.f32.mrb[0].mxu0
      %v390 = vadd.f32 0.0, %v389
      %v391 = vpop.f32.mrb[0].mxu0
      %392 = vdwg.mxu0
      %v397 = vunpack.c.l.b16 %v261
      %v398 = vunpack.c.l.b16 %v262
      %v399 = vunpack.c.l.b16 %v263
      %v400 = vunpack.c.l.b16 %v264
      %v401 = vpack.c.b16 %v398, %v397
      %v402 = vpack.c.b16 %v400, %v399
      %v408 = vsel %vm337, %v401, 0
      %v411 = vsel %vm337, %v402, 0
      %413 = vmatprep.subr.bf16.mxu0 0
      %414 = vmatpush1.bf16.msra.mxu0 %v304
      %415 = vmatprep.subr.bf16.mxu0 0
      %416 = vmatpush1.bf16.msra.mxu0 %v306
      %417 = vmatprep.subr.bf16.mxu0 0
      %418 = vmatpush1.bf16.msra.mxu0 %v308
      %419 = vmatprep.subr.bf16.mxu0 0
      %420 = vmatpush1.bf16.msra.mxu0 %v310
      %421 = vmatprep.subr.bf16.mxu0 0
      %422 = vmatpush1.bf16.msra.mxu0 0
      %423 = vmatprep.subr.bf16.mxu0 0
      %424 = vmatpush1.bf16.msra.mxu0 0
      %425 = vmatprep.subr.bf16.mxu0 0
      %426 = vmatpush1.bf16.msra.mxu0 0
      %427 = vmatprep.subr.bf16.mxu0 0
      %428 = vmatpush1.bf16.msra.mxu0 0
      %429 = vmatprep.subr.bf16.mxu0 0
      %430 = vmatpush1.bf16.msra.mxu0 0
      %431 = vmatprep.subr.bf16.mxu0 0
      %432 = vmatpush1.bf16.msra.mxu0 0
      %433 = vmatprep.subr.bf16.mxu0 0
      %434 = vmatpush1.bf16.msra.mxu0 0
      %435 = vmatprep.subr.bf16.mxu0 0
      %436 = vmatpush1.bf16.msra.mxu0 0
      %437 = vmatprep.subr.bf16.mxu0 0
      %438 = vmatpush1.bf16.msra.mxu0 0
      %439 = vmatprep.subr.bf16.mxu0 0
      %440 = vmatpush1.bf16.msra.mxu0 0
      %441 = vmatprep.subr.bf16.mxu0 0
      %442 = vmatpush1.bf16.msra.mxu0 0
      %443 = vmatprep.subr.bf16.mxu0 0
      %444 = vmatpush1.bf16.msra.mxu0 0
      %445 = vmatprep.mubr.bf16.mxu0 0
      %446 = vmatmul.mubr.bf16.gmra.mrb[0].mxu0 %v408
      %v447 = vpop.f32.mrb[0].mxu0
      %v448 = vadd.f32 %v379, %v447
      %v449 = vpop.f32.mrb[0].mxu0
      %v450 = vpop.f32.mrb[0].mxu0
      %v451 = vadd.f32 %v382, %v450
      %v452 = vpop.f32.mrb[0].mxu0
      %453 = vmatprep.mubr.bf16.mxu0 0
      %454 = vmatmul.mubr.bf16.gmra.mrb[0].mxu0 %v411
      %v455 = vpop.f32.mrb[0].mxu0
      %v456 = vadd.f32 %v387, %v455
      %v457 = vpop.f32.mrb[0].mxu0
      %v458 = vpop.f32.mrb[0].mxu0
      %v459 = vadd.f32 %v390, %v458
      %v460 = vpop.f32.mrb[0].mxu0
      %461 = vdwg.mxu0
      %s462 = scalar_lea.vmem %s1, 32
      %v463 = vld [vmem:[%s462] sm:$0xf]
      %v464 = vld [vmem:[%s462 + $0x4] sm:$0xf]
      %v465 = vld [vmem:[%s462 + $0x8] sm:$0xf]
      %v466 = vld [vmem:[%s462 + $0xc] sm:$0xf]
      %v471 = vunpack.c.l.b16 %v463
      %v472 = vunpack.c.l.b16 %v464
      %v473 = vunpack.c.l.b16 %v465
      %v474 = vunpack.c.l.b16 %v466
      %v475 = vpack.c.b16 %v472, %v471
      %v476 = vpack.c.b16 %v474, %v473
      %477 = vrot.lane.b32.xlu0 %v304, 123
      %v478 = vpop.permute.xlu0 %477
      %479 = vrot.lane.b32.xlu0 %v305, 123
      %v480 = vpop.permute.xlu0 %479
      %481 = vrot.lane.b32.xlu0 %v306, 123
      %v482 = vpop.permute.xlu0 %481
      %483 = vrot.lane.b32.xlu0 %v307, 123
      %v484 = vpop.permute.xlu0 %483
      %485 = vrot.lane.b32.xlu0 %v308, 123
      %v486 = vpop.permute.xlu0 %485
      %487 = vrot.lane.b32.xlu0 %v309, 123
      %v488 = vpop.permute.xlu0 %487
      %489 = vrot.lane.b32.xlu0 %v310, 123
      %v490 = vpop.permute.xlu0 %489
      %491 = vrot.lane.b32.xlu0 %v311, 123
      %v492 = vpop.permute.xlu0 %491
      %vm493 = vcmask 1006592
      %v494 = vsel %vm493, %v478, %v480
      %v495 = vsel %vm493, %v482, %v484
      %v496 = vsel %vm493, %v486, %v488
      %v497 = vsel %vm493, %v490, %v492
      %v503 = vsel %vm337, %v475, 0
      %v506 = vsel %vm337, %v476, 0
      %508 = vmatprep.subr.bf16.mxu0 0
      %509 = vmatpush1.bf16.msra.mxu0 %v494
      %510 = vmatprep.subr.bf16.mxu0 0
      %511 = vmatpush1.bf16.msra.mxu0 %v495
      %512 = vmatprep.subr.bf16.mxu0 0
      %513 = vmatpush1.bf16.msra.mxu0 %v496
      %514 = vmatprep.subr.bf16.mxu0 0
      %515 = vmatpush1.bf16.msra.mxu0 %v497
      %516 = vmatprep.subr.bf16.mxu0 0
      %517 = vmatpush1.bf16.msra.mxu0 0
      %518 = vmatprep.subr.bf16.mxu0 0
      %519 = vmatpush1.bf16.msra.mxu0 0
      %520 = vmatprep.subr.bf16.mxu0 0
      %521 = vmatpush1.bf16.msra.mxu0 0
      %522 = vmatprep.subr.bf16.mxu0 0
      %523 = vmatpush1.bf16.msra.mxu0 0
      %524 = vmatprep.subr.bf16.mxu0 0
      %525 = vmatpush1.bf16.msra.mxu0 0
      %526 = vmatprep.subr.bf16.mxu0 0
      %527 = vmatpush1.bf16.msra.mxu0 0
      %528 = vmatprep.subr.bf16.mxu0 0
      %529 = vmatpush1.bf16.msra.mxu0 0
      %530 = vmatprep.subr.bf16.mxu0 0
      %531 = vmatpush1.bf16.msra.mxu0 0
      %532 = vmatprep.subr.bf16.mxu0 0
      %533 = vmatpush1.bf16.msra.mxu0 0
      %534 = vmatprep.subr.bf16.mxu0 0
      %535 = vmatpush1.bf16.msra.mxu0 0
      %536 = vmatprep.subr.bf16.mxu0 0
      %537 = vmatpush1.bf16.msra.mxu0 0
      %538 = vmatprep.subr.bf16.mxu0 0
      %539 = vmatpush1.bf16.msra.mxu0 0
      %540 = vmatprep.mubr.bf16.mxu0 0
      %541 = vmatmul.mubr.bf16.gmra.mrb[0].mxu0 %v503
      %v542 = vpop.f32.mrb[0].mxu0
      %v543 = vadd.f32 0.0, %v542
      %v544 = vpop.f32.mrb[0].mxu0
      %v545 = vpop.f32.mrb[0].mxu0
      %v546 = vadd.f32 0.0, %v545
      %v547 = vpop.f32.mrb[0].mxu0
      %548 = vmatprep.mubr.bf16.mxu0 0
      %549 = vmatmul.mubr.bf16.gmra.mrb[0].mxu0 %v506
      %v550 = vpop.f32.mrb[0].mxu0
      %v551 = vadd.f32 0.0, %v550
      %v552 = vpop.f32.mrb[0].mxu0
      %v553 = vpop.f32.mrb[0].mxu0
      %v554 = vadd.f32 0.0, %v553
      %v555 = vpop.f32.mrb[0].mxu0
      %556 = vdwg.mxu0
      %v557 = vadd.f32 %v448, %v543
      %v558 = vadd.f32 %v451, %v546
      %v559 = vadd.f32 %v456, %v551
      %v560 = vadd.f32 %v459, %v554
      %s561 = scalar_lea.vmem %s1, 48
      %v562 = vld [vmem:[%s561] sm:$0xf]
      %v563 = vld [vmem:[%s561 + $0x4] sm:$0xf]
      %v564 = vld [vmem:[%s561 + $0x8] sm:$0xf]
      %v565 = vld [vmem:[%s561 + $0xc] sm:$0xf]
      %v570 = vunpack.c.l.b16 %v562
      %v571 = vunpack.c.l.b16 %v563
      %v572 = vunpack.c.l.b16 %v564
      %v573 = vunpack.c.l.b16 %v565
      %v574 = vpack.c.b16 %v571, %v570
      %v575 = vpack.c.b16 %v573, %v572
      %576 = vrot.lane.b32.xlu0 %v304, 122
      %v577 = vpop.permute.xlu0 %576
      %578 = vrot.lane.b32.xlu0 %v305, 122
      %v579 = vpop.permute.xlu0 %578
      %580 = vrot.lane.b32.xlu0 %v306, 122
      %v581 = vpop.permute.xlu0 %580
      %582 = vrot.lane.b32.xlu0 %v307, 122
      %v583 = vpop.permute.xlu0 %582
      %584 = vrot.lane.b32.xlu0 %v308, 122
      %v585 = vpop.permute.xlu0 %584
      %586 = vrot.lane.b32.xlu0 %v309, 122
      %v587 = vpop.permute.xlu0 %586
      %588 = vrot.lane.b32.xlu0 %v310, 122
      %v589 = vpop.permute.xlu0 %588
      %590 = vrot.lane.b32.xlu0 %v311, 122
      %v591 = vpop.permute.xlu0 %590
      %vm592 = vcmask 998400
      %v593 = vsel %vm592, %v577, %v579
      %v594 = vsel %vm592, %v581, %v583
      %v595 = vsel %vm592, %v585, %v587
      %v596 = vsel %vm592, %v589, %v591
      %v602 = vsel %vm337, %v574, 0
      %v605 = vsel %vm337, %v575, 0
      %607 = vmatprep.subr.bf16.mxu0 0
      %608 = vmatpush1.bf16.msra.mxu0 %v593
      %609 = vmatprep.subr.bf16.mxu0 0
      %610 = vmatpush1.bf16.msra.mxu0 %v594
      %611 = vmatprep.subr.bf16.mxu0 0
      %612 = vmatpush1.bf16.msra.mxu0 %v595
      %613 = vmatprep.subr.bf16.mxu0 0
      %614 = vmatpush1.bf16.msra.mxu0 %v596
      %615 = vmatprep.subr.bf16.mxu0 0
      %616 = vmatpush1.bf16.msra.mxu0 0
      %617 = vmatprep.subr.bf16.mxu0 0
      %618 = vmatpush1.bf16.msra.mxu0 0
      %619 = vmatprep.subr.bf16.mxu0 0
      %620 = vmatpush1.bf16.msra.mxu0 0
      %621 = vmatprep.subr.bf16.mxu0 0
      %622 = vmatpush1.bf16.msra.mxu0 0
      %623 = vmatprep.subr.bf16.mxu0 0
      %624 = vmatpush1.bf16.msra.mxu0 0
      %625 = vmatprep.subr.bf16.mxu0 0
      %626 = vmatpush1.bf16.msra.mxu0 0
      %627 = vmatprep.subr.bf16.mxu0 0
      %628 = vmatpush1.bf16.msra.mxu0 0
      %629 = vmatprep.subr.bf16.mxu0 0
      %630 = vmatpush1.bf16.msra.mxu0 0
      %631 = vmatprep.subr.bf16.mxu0 0
      %632 = vmatpush1.bf16.msra.mxu0 0
      %633 = vmatprep.subr.bf16.mxu0 0
      %634 = vmatpush1.bf16.msra.mxu0 0
      %635 = vmatprep.subr.bf16.mxu0 0
      %636 = vmatpush1.bf16.msra.mxu0 0
      %637 = vmatprep.subr.bf16.mxu0 0
      %638 = vmatpush1.bf16.msra.mxu0 0
      %639 = vmatprep.mubr.bf16.mxu0 0
      %640 = vmatmul.mubr.bf16.gmra.mrb[0].mxu0 %v602
      %v641 = vpop.f32.mrb[0].mxu0
      %v642 = vadd.f32 0.0, %v641
      %v643 = vpop.f32.mrb[0].mxu0
      %v644 = vpop.f32.mrb[0].mxu0
      %v645 = vadd.f32 0.0, %v644
      %v646 = vpop.f32.mrb[0].mxu0
      %647 = vmatprep.mubr.bf16.mxu0 0
      %648 = vmatmul.mubr.bf16.gmra.mrb[0].mxu0 %v605
      %v649 = vpop.f32.mrb[0].mxu0
      %v650 = vadd.f32 0.0, %v649
      %v651 = vpop.f32.mrb[0].mxu0
      %v652 = vpop.f32.mrb[0].mxu0
      %v653 = vadd.f32 0.0, %v652
      %v654 = vpop.f32.mrb[0].mxu0
      %655 = vdwg.mxu0
      %v656 = vadd.f32 %v557, %v642
      %v657 = vadd.f32 %v558, %v645
      %v658 = vadd.f32 %v559, %v650
      %v659 = vadd.f32 %v560, %v653
      %v660 = vld [vmem:[%s2] sm:$0xff]
      %v661 = vld [vmem:[%s2 + $0x8] sm:$0xff]
      %v662 = vld [vmem:[%s2 + $0x10] sm:$0xff]
      %v663 = vld [vmem:[%s2 + $0x18] sm:$0xff]
      %665 = vset.pattern.permute.xlu0 0
      %666 = vperm.xlu0 %665, %v660
      %v667 = vpop.permute.xlu0 %666
      %670 = vset.pattern.permute.xlu0 0
      %671 = vperm.xlu0 %670, %v661
      %v672 = vpop.permute.xlu0 %671
      %675 = vset.pattern.permute.xlu0 0
      %676 = vperm.xlu0 %675, %v662
      %v677 = vpop.permute.xlu0 %676
      %680 = vset.pattern.permute.xlu0 0
      %681 = vperm.xlu0 %680, %v663
      %v682 = vpop.permute.xlu0 %681
      %v684 = vadd.f32 %v656, %v667
      %v685 = vadd.f32 %v657, %v672
      %v686 = vadd.f32 %v658, %v677
      %v687 = vadd.f32 %v659, %v682
      %v688 = vld [vmem:[%s3] sm:$0x1]
      %v690 = vlaneseq
      %v691 = vshrl.u32 %v690, 7
      %v692 = vsub.s32 0, %v691
      %v693 = vrot.slane %v688, %v692
      %v695 = vmul.f32 %v684, %v693
      %v696 = vmul.f32 %v685, %v693
      %v697 = vmul.f32 %v686, %v693
      %v698 = vmul.f32 %v687, %v693
      %v699 = vadd.f32 %v695, %v696
      %v700 = vadd.f32 %v699, %v697
      %v701 = vadd.f32 %v700, %v698
      %702 = vadd.xlane.f32.xlu0 %v701
      %v703 = vpop.xlane.xlu0 %702
      %v704 = vrot.slane %v703, 4
      %v705 = vadd.f32 %v703, %v704
      %v706 = vrot.slane %v705, 2
      %v707 = vadd.f32 %v705, %v706
      %v708 = vrot.slane %v707, 1
      %v709 = vadd.f32 %v707, %v708
      %s710 = vtos %v709
      %v711 = vstv %s710
      %v712 = vrcp.pop 512.0
      %v713 = vmul.f32 %v711, %v712
      %v714 = vsub.f32 %v684, %v713
      %v715 = vsub.f32 %v685, %v713
      %v716 = vsub.f32 %v686, %v713
      %v717 = vsub.f32 %v687, %v713
      %v718 = vmul.f32 %v714, %v693
      %v719 = vmul.f32 %v715, %v693
      %v720 = vmul.f32 %v716, %v693
      %v721 = vmul.f32 %v717, %v693
      %v722 = vmul.f32 %v718, %v718
      %v723 = vmul.f32 %v719, %v719
      %v724 = vmul.f32 %v720, %v720
      %v725 = vmul.f32 %v721, %v721
      %v726 = vadd.f32 %v722, %v723
      %v727 = vadd.f32 %v726, %v724
      %v728 = vadd.f32 %v727, %v725
      %729 = vadd.xlane.f32.xlu0 %v728
      %v730 = vpop.xlane.xlu0 %729
      %v731 = vrot.slane %v730, 4
      %v732 = vadd.f32 %v730, %v731
      %v733 = vrot.slane %v732, 2
      %v734 = vadd.f32 %v732, %v733
      %v735 = vrot.slane %v734, 1
      %v736 = vadd.f32 %v734, %v735
      %s737 = vtos %v736
      %v738 = vstv %s737
      %v739 = vrcp.pop 511.0
      %v740 = vmul.f32 %v738, %v739
      %v741 = vrsqrt.pop %v740
      %v742 = vmul.f32 %v740, %v741
      %vm743 = vcmp.eq.f32.partialorder %v740, inf
      %v744 = vsel %vm743, %v740, %v742
      %vm745 = vcmp.eq.f32.partialorder %v740, 0.0
      %v746 = vand.u32 %v740, 2147483648
      %v747 = vsel %vm745, %v746, %v744
      %v748 = vadd.f32 %v747, 1e-05
      %v749 = vrcp.pop %v748
      %v750 = vmul.f32 1.0, %v749
      %v751 = vmul.f32 %v714, %v750
      %v752 = vmul.f32 %v715, %v750
      %v753 = vmul.f32 %v716, %v750
      %v754 = vmul.f32 %v717, %v750
      %v755 = vld [vmem:[%s4] sm:$0xff]
      %v756 = vld [vmem:[%s4 + $0x8] sm:$0xff]
      %v757 = vld [vmem:[%s4 + $0x10] sm:$0xff]
      %v758 = vld [vmem:[%s4 + $0x18] sm:$0xff]
      %760 = vset.pattern.permute.xlu0 0
      %761 = vperm.xlu0 %760, %v755
      %v762 = vpop.permute.xlu0 %761
      %765 = vset.pattern.permute.xlu0 0
      %766 = vperm.xlu0 %765, %v756
      %v767 = vpop.permute.xlu0 %766
      %770 = vset.pattern.permute.xlu0 0
      %771 = vperm.xlu0 %770, %v757
      %v772 = vpop.permute.xlu0 %771
      %775 = vset.pattern.permute.xlu0 0
      %776 = vperm.xlu0 %775, %v758
      %v777 = vpop.permute.xlu0 %776
      %v779 = vmul.f32 %v751, %v762
      %v780 = vmul.f32 %v752, %v767
      %v781 = vmul.f32 %v753, %v772
      %v782 = vmul.f32 %v754, %v777
      %v783 = vld [vmem:[%s5] sm:$0xff]
      %v784 = vld [vmem:[%s5 + $0x8] sm:$0xff]
      %v785 = vld [vmem:[%s5 + $0x10] sm:$0xff]
      %v786 = vld [vmem:[%s5 + $0x18] sm:$0xff]
      %788 = vset.pattern.permute.xlu0 0
      %789 = vperm.xlu0 %788, %v783
      %v790 = vpop.permute.xlu0 %789
      %793 = vset.pattern.permute.xlu0 0
      %794 = vperm.xlu0 %793, %v784
      %v795 = vpop.permute.xlu0 %794
      %798 = vset.pattern.permute.xlu0 0
      %799 = vperm.xlu0 %798, %v785
      %v800 = vpop.permute.xlu0 %799
      %803 = vset.pattern.permute.xlu0 0
      %804 = vperm.xlu0 %803, %v786
      %v805 = vpop.permute.xlu0 %804
      %v807 = vadd.f32 %v779, %v790
      %v808 = vadd.f32 %v780, %v795
      %v809 = vadd.f32 %v781, %v800
      %v810 = vadd.f32 %v782, %v805
      %v811 = vmax.f32 %v807, 0.0
      %v812 = vmax.f32 %v808, 0.0
      %v813 = vmax.f32 %v809, 0.0
      %v814 = vmax.f32 %v810, 0.0
      %v815 = vpack.c.bf16 %v812, %v811
      %v816 = vpack.c.bf16 %v814, %v813
      %v819 = vunpack.c.l.b16 %v815
      %v820 = vunpack.c.h.b16 %v815
      %v821 = vunpack.c.l.b16 %v816
      %v822 = vunpack.c.h.b16 %v816
      %v823 = vpack.c.b16 %v819, %v819
      %v824 = vpack.c.b16 %v820, %v820
      %v825 = vpack.c.b16 %v821, %v821
      %v826 = vpack.c.b16 %v822, %v822
      %831 = vst [vmem:[%s251] sm:$0xf] %v823
      %832 = vst [vmem:[%s251 + $0x4] sm:$0xf] %v824
      %833 = vst [vmem:[%s251 + $0x8] sm:$0xf] %v825
      %834 = vst [vmem:[%s251 + $0xc] sm:$0xf] %v826
      %p835 = scmp.lt.s32.totalorder %s17, 1
      %s836 = scalar_select %p835, %s17, 1
      %s837 = smul.addr %s836, 4
      %s838 = smul.addr %s837, 4
      %s839 = scalar_lea.vmem %s6, %s838
      // Predicated region
      $region45: #{s_encoder_forward.13} parent=43 // pred_check
        %p840 = pneg %p166
      $region46: #{s_encoder_forward.13} parent=43 // pred_check_branch
        %842 = sbr.rel (%p840) target = $region48
      $region47: #{s_encoder_forward.13} parent=43 // pred_region
        _
      $region48: #{s_encoder_forward.13} parent=43 // pred_fallthru
        _
    $region44: #{s_encoder_forward.13} parent=5 // pred_fallthru
      _
    %p843 = scmp.le.s32.totalorder 2, %s12
    // Predicated region
    $region49: #{s_encoder_forward.13} parent=5 // pred_check
      %p844 = pneg %p843
    $region50: #{s_encoder_forward.13} parent=5 // pred_check_branch
      %846 = sbr.rel (%p844) target = $region52
    $region51: #{s_encoder_forward.13} parent=5 // pred_region
      %s847 = ssub.s32 %s12, 2
      // Predicated region
      $region53: #{s_encoder_forward.13} parent=51 // pred_check
        %p848 = pneg %p172
      $region54: #{s_encoder_forward.13} parent=51 // pred_check_branch
        %850 = sbr.rel (%p848) target = $region56
      $region55: #{s_encoder_forward.13} parent=51 // pred_region
        %p851 = scmp.lt.s32.totalorder %s18, 1
        %s852 = scalar_select %p851, %s18, 1
        %s853 = smul.addr %s852, 4
        %s854 = smul.addr %s853, 4
        %s855 = scalar_lea.vmem %s6, %s854
      $region56: #{s_encoder_forward.13} parent=51 // pred_fallthru
        _
    $region52: #{s_encoder_forward.13} parent=5 // pred_fallthru
      _
  $region6: #{s_encoder_forward.13} parent=0 // loop_footer
    %s16 = sadd.s32 1, %s12
  $region7: #{s_encoder_forward.13} parent=0 // loop_footer_branch
    %11 = sbr.rel target = $region3
  $region8: #{s_encoder_forward.13} parent=0 // loop_exit
    _

// kernel: s_encoder_forward.14
$region0: #{s_encoder_forward.14}
  #allocation0 [shape = 'u32[]', space=smem, size = 0x4, offset = 0x4, fixed_abs, tag = 'smem constant byte address 0x4 - core index']
  #allocation1 [shape = 'u32[144,128]{1,0:T(1,128)}', space=vmem, size = 0x12000, scoped, tag = 'internal scratch']
  %s0 = inlined_call_operand.vmem [shape: bf16[2,32,256], index: 0, kind: input, shape index: {}]
  %s1 = inlined_call_operand.vmem [shape: bf16[9,64,32], index: 1, kind: input, shape index: {}]
  %s2 = inlined_call_operand.vmem [shape: f32[64,1], index: 2, kind: input, shape index: {}]
  %s3 = inlined_call_operand.vmem [shape: bf16[2,64,128], index: 3, kind: output, shape index: {}]
  %s4 = sld [smem:[#allocation0]]
  $region45: #{s_encoder_forward.14} parent=0
    _
  %s6 = ssub.s32 1, %s4
  %s7 = scalar_select 0, %s6, %s4
  loop: start=0, step=1, limit=4
  $region2: #{s_encoder_forward.14} parent=0 // loop_pre_header
    _
  $region3: #{s_encoder_forward.14} parent=0 // loop_header
    %s9 = sphi 0, %s13
    %p10 = scmp.ge.s32.totalorder %s9, 4
    %s19 = sphi 0, %s21
    %s22 = sphi 0, %s19
    %s23 = sphi 0, %s22
    %s39 = sphi 0, %s23
    %s43 = sphi 0, %s43
    %s45 = sphi 0, %s43
    %s46 = sphi 0, %s45
    %s60 = sphi 0, %s46
    %s64 = sphi 0, %s64
    %s66 = sphi 0, %s64
    %s67 = sphi 0, %s66
    %s81 = sphi 0, %s67
    %s87 = sphi 0, %s89
    %s90 = sphi 0, %s87
    %s91 = sphi 0, %s90
    %s107 = sphi 0, %s91
  $region4: #{s_encoder_forward.14} parent=0 // loop_header_branch
    %12 = sbr.rel (%p10) target = $region8
  $region5: #{s_encoder_forward.14} parent=0 // loop_body
    %s14 = ssub.s32 %s9, 1
    %s15 = ssub.s32 %s9, 2
    %s16 = sadd.s32 %s9, 1
    %s17 = ssub.s32 %s9, %s16
    %p18 = scmp.eq.s32.totalorder %s17, 0
    %s20 = sadd.s32 %s19, 1
    %s21 = scalar_select %p18, %s19, %s20
    %p24 = pneg %p18
    %p25 = scmp.eq.s32.totalorder %s9, 1
    %p26 = por %p24, %p25
    %p27 = scmp.ne.s32.totalorder %s19, %s22
    %p28 = scmp.eq.s32.totalorder %s9, 0
    %p29 = por %p27, %p28
    %p30 = scmp.ne.s32.totalorder %s19, %s22
    %p31 = scmp.eq.s32.totalorder %s14, 1
    %p32 = por %p30, %p31
    %p33 = scmp.ne.s32.totalorder %s22, %s23
    %p34 = scmp.eq.s32.totalorder %s14, 0
    %p35 = por %p33, %p34
    %p36 = scmp.ne.s32.totalorder %s22, %s23
    %p37 = scmp.eq.s32.totalorder %s15, 1
    %p38 = por %p36, %p37
    %p40 = scmp.ne.s32.totalorder %s23, %s39
    %p41 = scmp.eq.s32.totalorder %s15, 0
    %p42 = por %p40, %p41
    %s44 = sadd.s32 %s43, 1
    %p47 = scmp.eq.s32.totalorder %s9, 1
    %p48 = scmp.ne.s32.totalorder %s43, %s45
    %p49 = scmp.eq.s32.totalorder %s9, 0
    %p50 = por %p48, %p49
    %p51 = scmp.ne.s32.totalorder %s43, %s45
    %p52 = scmp.eq.s32.totalorder %s14, 1
    %p53 = por %p51, %p52
    %p54 = scmp.ne.s32.totalorder %s45, %s46
    %p55 = scmp.eq.s32.totalorder %s14, 0
    %p56 = por %p54, %p55
    %p57 = scmp.ne.s32.totalorder %s45, %s46
    %p58 = scmp.eq.s32.totalorder %s15, 1
    %p59 = por %p57, %p58
    %p61 = scmp.ne.s32.totalorder %s46, %s60
    %p62 = scmp.eq.s32.totalorder %s15, 0
    %p63 = por %p61, %p62
    %s65 = sadd.s32 %s64, 1
    %p68 = scmp.eq.s32.totalorder %s9, 1
    %p69 = scmp.ne.s32.totalorder %s64, %s66
    %p70 = scmp.eq.s32.totalorder %s9, 0
    %p71 = por %p69, %p70
    %p72 = scmp.ne.s32.totalorder %s64, %s66
    %p73 = scmp.eq.s32.totalorder %s14, 1
    %p74 = por %p72, %p73
    %p75 = scmp.ne.s32.totalorder %s66, %s67
    %p76 = scmp.eq.s32.totalorder %s14, 0
    %p77 = por %p75, %p76
    %p78 = scmp.ne.s32.totalorder %s66, %s67
    %p79 = scmp.eq.s32.totalorder %s15, 1
    %p80 = por %p78, %p79
    %p82 = scmp.ne.s32.totalorder %s67, %s81
    %p83 = scmp.eq.s32.totalorder %s15, 0
    %p84 = por %p82, %p83
    %s85 = ssub.s32 %s9, %s16
    %p86 = scmp.eq.s32.totalorder %s85, 0
    %s88 = sadd.s32 %s87, 1
    %s89 = scalar_select %p86, %s87, %s88
    %p92 = pneg %p86
    %p93 = scmp.eq.s32.totalorder %s9, 1
    %p94 = por %p92, %p93
    %p95 = scmp.ne.s32.totalorder %s87, %s90
    %p96 = scmp.eq.s32.totalorder %s9, 0
    %p97 = por %p95, %p96
    %p98 = scmp.ne.s32.totalorder %s87, %s90
    %p99 = scmp.eq.s32.totalorder %s14, 1
    %p100 = por %p98, %p99
    %p101 = scmp.ne.s32.totalorder %s90, %s91
    %p102 = scmp.eq.s32.totalorder %s14, 0
    %p103 = por %p101, %p102
    %p104 = scmp.ne.s32.totalorder %s90, %s91
    %p105 = scmp.eq.s32.totalorder %s15, 1
    %p106 = por %p104, %p105
    %p108 = scmp.ne.s32.totalorder %s91, %s107
    %p109 = scmp.eq.s32.totalorder %s15, 0
    %p110 = por %p108, %p109
    %p111 = scmp.le.s32.totalorder 1, %s9
    %p112 = scmp.lt.s32.totalorder %s9, 3
    %p113 = pnand %p111, %p112
    %p114 = pneg %p113
    // Predicated region
    $region9: #{s_encoder_forward.14} parent=5 // pred_check
      _
    $region10: #{s_encoder_forward.14} parent=5 // pred_check_branch
      %116 = sbr.rel (%p113) target = $region12
    $region11: #{s_encoder_forward.14} parent=5 // pred_region
      %s117 = ssub.s32 %s9, 1
      // Predicated region
      $region13: #{s_encoder_forward.14} parent=11 // pred_check
        %p118 = pneg %p56
      $region14: #{s_encoder_forward.14} parent=11 // pred_check_branch
        %120 = sbr.rel (%p118) target = $region16
      $region15: #{s_encoder_forward.14} parent=11 // pred_region
        _
      $region16: #{s_encoder_forward.14} parent=11 // pred_fallthru
        _
      // Predicated region
      $region17: #{s_encoder_forward.14} parent=11 // pred_check
        %p121 = pneg %p77
      $region18: #{s_encoder_forward.14} parent=11 // pred_check_branch
        %123 = sbr.rel (%p121) target = $region20
      $region19: #{s_encoder_forward.14} parent=11 // pred_region
        _
      $region20: #{s_encoder_forward.14} parent=11 // pred_fallthru
        _
    $region12: #{s_encoder_forward.14} parent=5 // pred_fallthru
      _
    %p124 = scmp.lt.s32.totalorder %s9, 2
    // Predicated region
    $region21: #{s_encoder_forward.14} parent=5 // pred_check
      %p125 = pneg %p124
    $region22: #{s_encoder_forward.14} parent=5 // pred_check_branch
      %127 = sbr.rel (%p125) target = $region24
    $region23: #{s_encoder_forward.14} parent=5 // pred_region
      // Predicated region
      $region25: #{s_encoder_forward.14} parent=23 // pred_check
        %p128 = pneg %p29
      $region26: #{s_encoder_forward.14} parent=23 // pred_check_branch
        %130 = sbr.rel (%p128) target = $region28
      $region27: #{s_encoder_forward.14} parent=23 // pred_region
        %p131 = scmp.lt.s32.totalorder %s9, 1
        %s132 = scalar_select %p131, %s9, 1
        %s133 = smul.addr %s132, 8
        %s134 = smul.addr %s133, 4
        %s135 = scalar_lea.vmem %s0, %s134
      $region28: #{s_encoder_forward.14} parent=23 // pred_fallthru
        _
    $region24: #{s_encoder_forward.14} parent=5 // pred_fallthru
      _
    %p136 = scmp.le.s32.totalorder 1, %s9
    %p137 = scmp.lt.s32.totalorder %s9, 3
    %p138 = pnand %p136, %p137
    %p139 = pneg %p138
    // Predicated region
    $region29: #{s_encoder_forward.14} parent=5 // pred_check
      _
    $region30: #{s_encoder_forward.14} parent=5 // pred_check_branch
      %141 = sbr.rel (%p138) target = $region32
    $region31: #{s_encoder_forward.14} parent=5 // pred_region
      %s142 = ssub.s32 %s9, 1
      %p143 = scmp.lt.s32.totalorder %s14, 1
      %s144 = scalar_select %p143, %s14, 1
      %s145 = smul.addr %s144, 8
      %s146 = smul.addr %s145, 4
      %s147 = scalar_lea.vmem %s0, %s146
      %p148 = pneg %p35
      %p149 = pneg %p32
      %p150 = pneg %p56
      %p151 = pneg %p53
      %p152 = pneg %p77
      %p153 = pneg %p74
      %p154 = pneg %p103
      %p155 = pneg %p100
      %p156 = scmp.lt.s32.totalorder %s14, 1
      %s157 = scalar_select %p156, %s14, 1
      %s158 = smul.addr %s157, 8
      %s159 = smul.addr %s158, 4
      %s160 = scalar_lea.vmem %s3, %s159
      %p161 = scmp.lt.s32.totalorder %s14, 1
      %s162 = scalar_select %p161, %s14, 1
      %s163 = smul.addr %s162, 8
      %s164 = smul.addr %s163, 4
      %s165 = scalar_lea.vmem %s0, %s164
      %p166 = scmp.lt.s32.totalorder %s14, 1
      %s167 = scalar_select %p166, %s14, 1
      %s168 = smul.addr %s167, 8
      %s169 = smul.addr %s168, 4
      %s170 = scalar_lea.vmem %s3, %s169
      %v172 = vld [vmem:[%s165] sm:$0xff]
      %v173 = vld [vmem:[%s165 + $0x8] sm:$0xff]
      %v174 = vld [vmem:[%s165 + $0x10] sm:$0xff]
      %v175 = vld [vmem:[%s165 + $0x18] sm:$0xff]
      %v176 = vld [vmem:[%s1] sm:$0xf]
      %v177 = vld [vmem:[%s1 + $0x4] sm:$0xf]
      %v178 = vld [vmem:[%s1 + $0x8] sm:$0xf]
      %v179 = vld [vmem:[%s1 + $0xc] sm:$0xf]
      %v180 = vld [vmem:[%s1 + $0x10] sm:$0xf]
      %v181 = vld [vmem:[%s1 + $0x14] sm:$0xf]
      %v182 = vld [vmem:[%s1 + $0x18] sm:$0xf]
      %v183 = vld [vmem:[%s1 + $0x1c] sm:$0xf]
      %s184 = scalar_lea.vmem %s1, 32
      %v185 = vld [vmem:[%s184] sm:$0xf]
      %v186 = vld [vmem:[%s184 + $0x4] sm:$0xf]
      %v187 = vld [vmem:[%s184 + $0x8] sm:$0xf]
      %v188 = vld [vmem:[%s184 + $0xc] sm:$0xf]
      %v189 = vld [vmem:[%s184 + $0x10] sm:$0xf]
      %v190 = vld [vmem:[%s184 + $0x14] sm:$0xf]
      %v191 = vld [vmem:[%s184 + $0x18] sm:$0xf]
      %v192 = vld [vmem:[%s184 + $0x1c] sm:$0xf]
      %v201 = vunpack.c.l.b16 %v185
      %v202 = vunpack.c.l.b16 %v186
      %v203 = vunpack.c.l.b16 %v187
      %v204 = vunpack.c.l.b16 %v188
      %v205 = vunpack.c.l.b16 %v189
      %v206 = vunpack.c.l.b16 %v190
      %v207 = vunpack.c.l.b16 %v191
      %v208 = vunpack.c.l.b16 %v192
      %v209 = vpack.c.b16 %v202, %v201
      %v210 = vpack.c.b16 %v204, %v203
      %v211 = vpack.c.b16 %v206, %v205
      %v212 = vpack.c.b16 %v208, %v207
      %v217 = vunpack.c.l.b16 %v172
      %v218 = vunpack.c.h.b16 %v172
      %v219 = vunpack.c.l.b16 %v173
      %v220 = vunpack.c.h.b16 %v173
      %v221 = vunpack.c.l.b16 %v174
      %v222 = vunpack.c.h.b16 %v174
      %v223 = vunpack.c.l.b16 %v175
      %v224 = vunpack.c.h.b16 %v175
      %v225 = vpack.c.b16 %v219, %v217
      %v226 = vpack.c.b16 %v220, %v218
      %v227 = vpack.c.b16 %v223, %v221
      %v228 = vpack.c.b16 %v224, %v222
      %229 = vrot.lane.b32.xlu0 %v225, 127
      %v230 = vpop.permute.xlu0 %229
      %231 = vrot.lane.b32.xlu0 %v226, 127
      %v232 = vpop.permute.xlu0 %231
      %233 = vrot.lane.b32.xlu0 %v227, 127
      %v234 = vpop.permute.xlu0 %233
      %235 = vrot.lane.b32.xlu0 %v228, 127
      %v236 = vpop.permute.xlu0 %235
      %vm237 = vcmask 1039360
      %v238 = vsel %vm237, %v230, %v232
      %v239 = vsel %vm237, %v234, %v236
      %vm242 = vcmask 261120
      %v244 = vsel %vm242, %v209, 0
      %v247 = vsel %vm242, %v210, 0
      %v250 = vsel %vm242, %v211, 0
      %v253 = vsel %vm242, %v212, 0
      %255 = vmatprep.subr.bf16.mxu0 0
      %256 = vmatpush1.bf16.msra.mxu0 %v238
      %257 = vmatprep.subr.bf16.mxu0 0
      %258 = vmatpush1.bf16.msra.mxu0 %v239
      %259 = vmatprep.subr.bf16.mxu0 0
      %260 = vmatpush1.bf16.msra.mxu0 0
      %261 = vmatprep.subr.bf16.mxu0 0
      %262 = vmatpush1.bf16.msra.mxu0 0
      %263 = vmatprep.subr.bf16.mxu0 0
      %264 = vmatpush1.bf16.msra.mxu0 0
      %265 = vmatprep.subr.bf16.mxu0 0
      %266 = vmatpush1.bf16.msra.mxu0 0
      %267 = vmatprep.subr.bf16.mxu0 0
      %268 = vmatpush1.bf16.msra.mxu0 0
      %269 = vmatprep.subr.bf16.mxu0 0
      %270 = vmatpush1.bf16.msra.mxu0 0
      %271 = vmatprep.subr.bf16.mxu0 0
      %272 = vmatpush1.bf16.msra.mxu0 0
      %273 = vmatprep.subr.bf16.mxu0 0
      %274 = vmatpush1.bf16.msra.mxu0 0
      %275 = vmatprep.subr.bf16.mxu0 0
      %276 = vmatpush1.bf16.msra.mxu0 0
      %277 = vmatprep.subr.bf16.mxu0 0
      %278 = vmatpush1.bf16.msra.mxu0 0
      %279 = vmatprep.subr.bf16.mxu0 0
      %280 = vmatpush1.bf16.msra.mxu0 0
      %281 = vmatprep.subr.bf16.mxu0 0
      %282 = vmatpush1.bf16.msra.mxu0 0
      %283 = vmatprep.subr.bf16.mxu0 0
      %284 = vmatpush1.bf16.msra.mxu0 0
      %285 = vmatprep.subr.bf16.mxu0 0
      %286 = vmatpush1.bf16.msra.mxu0 0
      %287 = vmatprep.mubr.bf16.mxu0 0
      %288 = vmatmul.mubr.bf16.gmra.mrb[0].mxu0 %v244
      %v289 = vpop.f32.mrb[0].mxu0
      %v290 = vadd.f32 0.0, %v289
      %v291 = vpop.f32.mrb[0].mxu0
      %v292 = vpop.f32.mrb[0].mxu0
      %v293 = vadd.f32 0.0, %v292
      %v294 = vpop.f32.mrb[0].mxu0
      %295 = vmatprep.mubr.bf16.mxu0 0
      %296 = vmatmul.mubr.bf16.gmra.mrb[0].mxu0 %v247
      %v297 = vpop.f32.mrb[0].mxu0
      %v298 = vadd.f32 0.0, %v297
      %v299 = vpop.f32.mrb[0].mxu0
      %v300 = vpop.f32.mrb[0].mxu0
      %v301 = vadd.f32 0.0, %v300
      %v302 = vpop.f32.mrb[0].mxu0
      %303 = vmatprep.mubr.bf16.mxu0 0
      %304 = vmatmul.mubr.bf16.gmra.mrb[0].mxu0 %v250
      %v305 = vpop.f32.mrb[0].mxu0
      %v306 = vadd.f32 0.0, %v305
      %v307 = vpop.f32.mrb[0].mxu0
      %v308 = vpop.f32.mrb[0].mxu0
      %v309 = vadd.f32 0.0, %v308
      %v310 = vpop.f32.mrb[0].mxu0
      %311 = vmatprep.mubr.bf16.mxu0 0
      %312 = vmatmul.mubr.bf16.gmra.mrb[0].mxu0 %v253
      %v313 = vpop.f32.mrb[0].mxu0
      %v314 = vadd.f32 0.0, %v313
      %v315 = vpop.f32.mrb[0].mxu0
      %v316 = vpop.f32.mrb[0].mxu0
      %v317 = vadd.f32 0.0, %v316
      %v318 = vpop.f32.mrb[0].mxu0
      %319 = vdwg.mxu0
      %v328 = vunpack.c.l.b16 %v176
      %v329 = vunpack.c.l.b16 %v177
      %v330 = vunpack.c.l.b16 %v178
      %v331 = vunpack.c.l.b16 %v179
      %v332 = vunpack.c.l.b16 %v180
      %v333 = vunpack.c.l.b16 %v181
      %v334 = vunpack.c.l.b16 %v182
      %v335 = vunpack.c.l.b16 %v183
      %v336 = vpack.c.b16 %v329, %v328
      %v337 = vpack.c.b16 %v331, %v330
      %v338 = vpack.c.b16 %v333, %v332
      %v339 = vpack.c.b16 %v335, %v334
      %v343 = vsel %vm242, %v336, 0
      %v346 = vsel %vm242, %v337, 0
      %v349 = vsel %vm242, %v338, 0
      %v352 = vsel %vm242, %v339, 0
      %354 = vmatprep.subr.bf16.mxu0 0
      %355 = vmatpush1.bf16.msra.mxu0 %v225
      %356 = vmatprep.subr.bf16.mxu0 0
      %357 = vmatpush1.bf16.msra.mxu0 %v227
      %358 = vmatprep.subr.bf16.mxu0 0
      %359 = vmatpush1.bf16.msra.mxu0 0
      %360 = vmatprep.subr.bf16.mxu0 0
      %361 = vmatpush1.bf16.msra.mxu0 0
      %362 = vmatprep.subr.bf16.mxu0 0
      %363 = vmatpush1.bf16.msra.mxu0 0
      %364 = vmatprep.subr.bf16.mxu0 0
      %365 = vmatpush1.bf16.msra.mxu0 0
      %366 = vmatprep.subr.bf16.mxu0 0
      %367 = vmatpush1.bf16.msra.mxu0 0
      %368 = vmatprep.subr.bf16.mxu0 0
      %369 = vmatpush1.bf16.msra.mxu0 0
      %370 = vmatprep.subr.bf16.mxu0 0
      %371 = vmatpush1.bf16.msra.mxu0 0
      %372 = vmatprep.subr.bf16.mxu0 0
      %373 = vmatpush1.bf16.msra.mxu0 0
      %374 = vmatprep.subr.bf16.mxu0 0
      %375 = vmatpush1.bf16.msra.mxu0 0
      %376 = vmatprep.subr.bf16.mxu0 0
      %377 = vmatpush1.bf16.msra.mxu0 0
      %378 = vmatprep.subr.bf16.mxu0 0
      %379 = vmatpush1.bf16.msra.mxu0 0
      %380 = vmatprep.subr.bf16.mxu0 0
      %381 = vmatpush1.bf16.msra.mxu0 0
      %382 = vmatprep.subr.bf16.mxu0 0
      %383 = vmatpush1.bf16.msra.mxu0 0
      %384 = vmatprep.subr.bf16.mxu0 0
      %385 = vmatpush1.bf16.msra.mxu0 0
      %386 = vmatprep.mubr.bf16.mxu0 0
      %387 = vmatmul.mubr.bf16.gmra.mrb[0].mxu0 %v343
      %v388 = vpop.f32.mrb[0].mxu0
      %v389 = vadd.f32 %v290, %v388
      %v390 = vpop.f32.mrb[0].mxu0
      %v391 = vpop.f32.mrb[0].mxu0
      %v392 = vadd.f32 %v293, %v391
      %v393 = vpop.f32.mrb[0].mxu0
      %394 = vmatprep.mubr.bf16.mxu0 0
      %395 = vmatmul.mubr.bf16.gmra.mrb[0].mxu0 %v346
      %v396 = vpop.f32.mrb[0].mxu0
      %v397 = vadd.f32 %v298, %v396
      %v398 = vpop.f32.mrb[0].mxu0
      %v399 = vpop.f32.mrb[0].mxu0
      %v400 = vadd.f32 %v301, %v399
      %v401 = vpop.f32.mrb[0].mxu0
      %402 = vmatprep.mubr.bf16.mxu0 0
      %403 = vmatmul.mubr.bf16.gmra.mrb[0].mxu0 %v349
      %v404 = vpop.f32.mrb[0].mxu0
      %v405 = vadd.f32 %v306, %v404
      %v406 = vpop.f32.mrb[0].mxu0
      %v407 = vpop.f32.mrb[0].mxu0
      %v408 = vadd.f32 %v309, %v407
      %v409 = vpop.f32.mrb[0].mxu0
      %410 = vmatprep.mubr.bf16.mxu0 0
      %411 = vmatmul.mubr.bf16.gmra.mrb[0].mxu0 %v352
      %v412 = vpop.f32.mrb[0].mxu0
      %v413 = vadd.f32 %v314, %v412
      %v414 = vpop.f32.mrb[0].mxu0
      %v415 = vpop.f32.mrb[0].mxu0
      %v416 = vadd.f32 %v317, %v415
      %v417 = vpop.f32.mrb[0].mxu0
      %418 = vdwg.mxu0
      %s419 = scalar_lea.vmem %s1, 64
      %v420 = vld [vmem:[%s419] sm:$0xf]
      %v421 = vld [vmem:[%s419 + $0x4] sm:$0xf]
      %v422 = vld [vmem:[%s419 + $0x8] sm:$0xf]
      %v423 = vld [vmem:[%s419 + $0xc] sm:$0xf]
      %v424 = vld [vmem:[%s419 + $0x10] sm:$0xf]
      %v425 = vld [vmem:[%s419 + $0x14] sm:$0xf]
      %v426 = vld [vmem:[%s419 + $0x18] sm:$0xf]
      %v427 = vld [vmem:[%s419 + $0x1c] sm:$0xf]
      %v436 = vunpack.c.l.b16 %v420
      %v437 = vunpack.c.l.b16 %v421
      %v438 = vunpack.c.l.b16 %v422
      %v439 = vunpack.c.l.b16 %v423
      %v440 = vunpack.c.l.b16 %v424
      %v441 = vunpack.c.l.b16 %v425
      %v442 = vunpack.c.l.b16 %v426
      %v443 = vunpack.c.l.b16 %v427
      %v444 = vpack.c.b16 %v437, %v436
      %v445 = vpack.c.b16 %v439, %v438
      %v446 = vpack.c.b16 %v441, %v440
      %v447 = vpack.c.b16 %v443, %v442
      %448 = vrot.lane.b32.xlu0 %v225, 126
      %v449 = vpop.permute.xlu0 %448
      %450 = vrot.lane.b32.xlu0 %v226, 126
      %v451 = vpop.permute.xlu0 %450
      %452 = vrot.lane.b32.xlu0 %v227, 126
      %v453 = vpop.permute.xlu0 %452
      %454 = vrot.lane.b32.xlu0 %v228, 126
      %v455 = vpop.permute.xlu0 %454
      %vm456 = vcmask 1031168
      %v457 = vsel %vm456, %v449, %v451
      %v458 = vsel %vm456, %v453, %v455
      %v462 = vsel %vm242, %v444, 0
      %v465 = vsel %vm242, %v445, 0
      %v468 = vsel %vm242, %v446, 0
      %v471 = vsel %vm242, %v447, 0
      %473 = vmatprep.subr.bf16.mxu0 0
      %474 = vmatpush1.bf16.msra.mxu0 %v457
      %475 = vmatprep.subr.bf16.mxu0 0
      %476 = vmatpush1.bf16.msra.mxu0 %v458
      %477 = vmatprep.subr.bf16.mxu0 0
      %478 = vmatpush1.bf16.msra.mxu0 0
      %479 = vmatprep.subr.bf16.mxu0 0
      %480 = vmatpush1.bf16.msra.mxu0 0
      %481 = vmatprep.subr.bf16.mxu0 0
      %482 = vmatpush1.bf16.msra.mxu0 0
      %483 = vmatprep.subr.bf16.mxu0 0
      %484 = vmatpush1.bf16.msra.mxu0 0
      %485 = vmatprep.subr.bf16.mxu0 0
      %486 = vmatpush1.bf16.msra.mxu0 0
      %487 = vmatprep.subr.bf16.mxu0 0
      %488 = vmatpush1.bf16.msra.mxu0 0
      %489 = vmatprep.subr.bf16.mxu0 0
      %490 = vmatpush1.bf16.msra.mxu0 0
      %491 = vmatprep.subr.bf16.mxu0 0
      %492 = vmatpush1.bf16.msra.mxu0 0
      %493 = vmatprep.subr.bf16.mxu0 0
      %494 = vmatpush1.bf16.msra.mxu0 0
      %495 = vmatprep.subr.bf16.mxu0 0
      %496 = vmatpush1.bf16.msra.mxu0 0
      %497 = vmatprep.subr.bf16.mxu0 0
      %498 = vmatpush1.bf16.msra.mxu0 0
      %499 = vmatprep.subr.bf16.mxu0 0
      %500 = vmatpush1.bf16.msra.mxu0 0
      %501 = vmatprep.subr.bf16.mxu0 0
      %502 = vmatpush1.bf16.msra.mxu0 0
      %503 = vmatprep.subr.bf16.mxu0 0
      %504 = vmatpush1.bf16.msra.mxu0 0
      %505 = vmatprep.mubr.bf16.mxu0 0
      %506 = vmatmul.mubr.bf16.gmra.mrb[0].mxu0 %v462
      %v507 = vpop.f32.mrb[0].mxu0
      %v508 = vadd.f32 0.0, %v507
      %v509 = vpop.f32.mrb[0].mxu0
      %v510 = vpop.f32.mrb[0].mxu0
      %v511 = vadd.f32 0.0, %v510
      %v512 = vpop.f32.mrb[0].mxu0
      %513 = vmatprep.mubr.bf16.mxu0 0
      %514 = vmatmul.mubr.bf16.gmra.mrb[0].mxu0 %v465
      %v515 = vpop.f32.mrb[0].mxu0
      %v516 = vadd.f32 0.0, %v515
      %v517 = vpop.f32.mrb[0].mxu0
      %v518 = vpop.f32.mrb[0].mxu0
      %v519 = vadd.f32 0.0, %v518
      %v520 = vpop.f32.mrb[0].mxu0
      %521 = vmatprep.mubr.bf16.mxu0 0
      %522 = vmatmul.mubr.bf16.gmra.mrb[0].mxu0 %v468
      %v523 = vpop.f32.mrb[0].mxu0
      %v524 = vadd.f32 0.0, %v523
      %v525 = vpop.f32.mrb[0].mxu0
      %v526 = vpop.f32.mrb[0].mxu0
      %v527 = vadd.f32 0.0, %v526
      %v528 = vpop.f32.mrb[0].mxu0
      %529 = vmatprep.mubr.bf16.mxu0 0
      %530 = vmatmul.mubr.bf16.gmra.mrb[0].mxu0 %v471
      %v531 = vpop.f32.mrb[0].mxu0
      %v532 = vadd.f32 0.0, %v531
      %v533 = vpop.f32.mrb[0].mxu0
      %v534 = vpop.f32.mrb[0].mxu0
      %v535 = vadd.f32 0.0, %v534
      %v536 = vpop.f32.mrb[0].mxu0
      %537 = vdwg.mxu0
      %v538 = vadd.f32 %v389, %v508
      %v539 = vadd.f32 %v392, %v511
      %v540 = vadd.f32 %v397, %v516
      %v541 = vadd.f32 %v400, %v519
      %v542 = vadd.f32 %v405, %v524
      %v543 = vadd.f32 %v408, %v527
      %v544 = vadd.f32 %v413, %v532
      %v545 = vadd.f32 %v416, %v535
      %s546 = scalar_lea.vmem %s1, 96
      %v547 = vld [vmem:[%s546] sm:$0xf]
      %v548 = vld [vmem:[%s546 + $0x4] sm:$0xf]
      %v549 = vld [vmem:[%s546 + $0x8] sm:$0xf]
      %v550 = vld [vmem:[%s546 + $0xc] sm:$0xf]
      %v551 = vld [vmem:[%s546 + $0x10] sm:$0xf]
      %v552 = vld [vmem:[%s546 + $0x14] sm:$0xf]
      %v553 = vld [vmem:[%s546 + $0x18] sm:$0xf]
      %v554 = vld [vmem:[%s546 + $0x1c] sm:$0xf]
      %v563 = vunpack.c.l.b16 %v547
      %v564 = vunpack.c.l.b16 %v548
      %v565 = vunpack.c.l.b16 %v549
      %v566 = vunpack.c.l.b16 %v550
      %v567 = vunpack.c.l.b16 %v551
      %v568 = vunpack.c.l.b16 %v552
      %v569 = vunpack.c.l.b16 %v553
      %v570 = vunpack.c.l.b16 %v554
      %v571 = vpack.c.b16 %v564, %v563
      %v572 = vpack.c.b16 %v566, %v565
      %v573 = vpack.c.b16 %v568, %v567
      %v574 = vpack.c.b16 %v570, %v569
      %575 = vrot.lane.b32.xlu0 %v225, 122
      %v576 = vpop.permute.xlu0 %575
      %577 = vrot.lane.b32.xlu0 %v226, 122
      %v578 = vpop.permute.xlu0 %577
      %579 = vrot.lane.b32.xlu0 %v227, 122
      %v580 = vpop.permute.xlu0 %579
      %581 = vrot.lane.b32.xlu0 %v228, 122
      %v582 = vpop.permute.xlu0 %581
      %vm583 = vcmask 998400
      %v584 = vsel %vm583, %v576, %v578
      %v585 = vsel %vm583, %v580, %v582
      %v589 = vsel %vm242, %v571, 0
      %v592 = vsel %vm242, %v572, 0
      %v595 = vsel %vm242, %v573, 0
      %v598 = vsel %vm242, %v574, 0
      %600 = vmatprep.subr.bf16.mxu0 0
      %601 = vmatpush1.bf16.msra.mxu0 %v584
      %602 = vmatprep.subr.bf16.mxu0 0
      %603 = vmatpush1.bf16.msra.mxu0 %v585
      %604 = vmatprep.subr.bf16.mxu0 0
      %605 = vmatpush1.bf16.msra.mxu0 0
      %606 = vmatprep.subr.bf16.mxu0 0
      %607 = vmatpush1.bf16.msra.mxu0 0
      %608 = vmatprep.subr.bf16.mxu0 0
      %609 = vmatpush1.bf16.msra.mxu0 0
      %610 = vmatprep.subr.bf16.mxu0 0
      %611 = vmatpush1.bf16.msra.mxu0 0
      %612 = vmatprep.subr.bf16.mxu0 0
      %613 = vmatpush1.bf16.msra.mxu0 0
      %614 = vmatprep.subr.bf16.mxu0 0
      %615 = vmatpush1.bf16.msra.mxu0 0
      %616 = vmatprep.subr.bf16.mxu0 0
      %617 = vmatpush1.bf16.msra.mxu0 0
      %618 = vmatprep.subr.bf16.mxu0 0
      %619 = vmatpush1.bf16.msra.mxu0 0
      %620 = vmatprep.subr.bf16.mxu0 0
      %621 = vmatpush1.bf16.msra.mxu0 0
      %622 = vmatprep.subr.bf16.mxu0 0
      %623 = vmatpush1.bf16.msra.mxu0 0
      %624 = vmatprep.subr.bf16.mxu0 0
      %625 = vmatpush1.bf16.msra.mxu0 0
      %626 = vmatprep.subr.bf16.mxu0 0
      %627 = vmatpush1.bf16.msra.mxu0 0
      %628 = vmatprep.subr.bf16.mxu0 0
      %629 = vmatpush1.bf16.msra.mxu0 0
      %630 = vmatprep.subr.bf16.mxu0 0
      %631 = vmatpush1.bf16.msra.mxu0 0
      %632 = vmatprep.mubr.bf16.mxu0 0
      %633 = vmatmul.mubr.bf16.gmra.mrb[0].mxu0 %v589
      %v634 = vpop.f32.mrb[0].mxu0
      %v635 = vadd.f32 0.0, %v634
      %v636 = vpop.f32.mrb[0].mxu0
      %v637 = vpop.f32.mrb[0].mxu0
      %v638 = vadd.f32 0.0, %v637
      %v639 = vpop.f32.mrb[0].mxu0
      %640 = vmatprep.mubr.bf16.mxu0 0
      %641 = vmatmul.mubr.bf16.gmra.mrb[0].mxu0 %v592
      %v642 = vpop.f32.mrb[0].mxu0
      %v643 = vadd.f32 0.0, %v642
      %v644 = vpop.f32.mrb[0].mxu0
      %v645 = vpop.f32.mrb[0].mxu0
      %v646 = vadd.f32 0.0, %v645
      %v647 = vpop.f32.mrb[0].mxu0
      %648 = vmatprep.mubr.bf16.mxu0 0
      %649 = vmatmul.mubr.bf16.gmra.mrb[0].mxu0 %v595
      %v650 = vpop.f32.mrb[0].mxu0
      %v651 = vadd.f32 0.0, %v650
      %v652 = vpop.f32.mrb[0].mxu0
      %v653 = vpop.f32.mrb[0].mxu0
      %v654 = vadd.f32 0.0, %v653
      %v655 = vpop.f32.mrb[0].mxu0
      %656 = vmatprep.mubr.bf16.mxu0 0
      %657 = vmatmul.mubr.bf16.gmra.mrb[0].mxu0 %v598
      %v658 = vpop.f32.mrb[0].mxu0
      %v659 = vadd.f32 0.0, %v658
      %v660 = vpop.f32.mrb[0].mxu0
      %v661 = vpop.f32.mrb[0].mxu0
      %v662 = vadd.f32 0.0, %v661
      %v663 = vpop.f32.mrb[0].mxu0
      %664 = vdwg.mxu0
      %v665 = vadd.f32 %v538, %v635
      %v666 = vadd.f32 %v539, %v638
      %v667 = vadd.f32 %v540, %v643
      %v668 = vadd.f32 %v541, %v646
      %v669 = vadd.f32 %v542, %v651
      %v670 = vadd.f32 %v543, %v654
      %v671 = vadd.f32 %v544, %v659
      %v672 = vadd.f32 %v545, %v662
      %s673 = scalar_lea.vmem %s1, 128
      %v674 = vld [vmem:[%s673] sm:$0xf]
      %v675 = vld [vmem:[%s673 + $0x4] sm:$0xf]
      %v676 = vld [vmem:[%s673 + $0x8] sm:$0xf]
      %v677 = vld [vmem:[%s673 + $0xc] sm:$0xf]
      %v678 = vld [vmem:[%s673 + $0x10] sm:$0xf]
      %v679 = vld [vmem:[%s673 + $0x14] sm:$0xf]
      %v680 = vld [vmem:[%s673 + $0x18] sm:$0xf]
      %v681 = vld [vmem:[%s673 + $0x1c] sm:$0xf]
      %v690 = vunpack.c.l.b16 %v674
      %v691 = vunpack.c.l.b16 %v675
      %v692 = vunpack.c.l.b16 %v676
      %v693 = vunpack.c.l.b16 %v677
      %v694 = vunpack.c.l.b16 %v678
      %v695 = vunpack.c.l.b16 %v679
      %v696 = vunpack.c.l.b16 %v680
      %v697 = vunpack.c.l.b16 %v681
      %v698 = vpack.c.b16 %v691, %v690
      %v699 = vpack.c.b16 %v693, %v692
      %v700 = vpack.c.b16 %v695, %v694
      %v701 = vpack.c.b16 %v697, %v696
      %702 = vrot.lane.b32.xlu0 %v225, 121
      %v703 = vpop.permute.xlu0 %702
      %704 = vrot.lane.b32.xlu0 %v226, 121
      %v705 = vpop.permute.xlu0 %704
      %706 = vrot.lane.b32.xlu0 %v227, 121
      %v707 = vpop.permute.xlu0 %706
      %708 = vrot.lane.b32.xlu0 %v228, 121
      %v709 = vpop.permute.xlu0 %708
      %vm710 = vcmask 990208
      %v711 = vsel %vm710, %v703, %v705
      %v712 = vsel %vm710, %v707, %v709
      %v716 = vsel %vm242, %v698, 0
      %v719 = vsel %vm242, %v699, 0
      %v722 = vsel %vm242, %v700, 0
      %v725 = vsel %vm242, %v701, 0
      %727 = vmatprep.subr.bf16.mxu0 0
      %728 = vmatpush1.bf16.msra.mxu0 %v711
      %729 = vmatprep.subr.bf16.mxu0 0
      %730 = vmatpush1.bf16.msra.mxu0 %v712
      %731 = vmatprep.subr.bf16.mxu0 0
      %732 = vmatpush1.bf16.msra.mxu0 0
      %733 = vmatprep.subr.bf16.mxu0 0
      %734 = vmatpush1.bf16.msra.mxu0 0
      %735 = vmatprep.subr.bf16.mxu0 0
      %736 = vmatpush1.bf16.msra.mxu0 0
      %737 = vmatprep.subr.bf16.mxu0 0
      %738 = vmatpush1.bf16.msra.mxu0 0
      %739 = vmatprep.subr.bf16.mxu0 0
      %740 = vmatpush1.bf16.msra.mxu0 0
      %741 = vmatprep.subr.bf16.mxu0 0
      %742 = vmatpush1.bf16.msra.mxu0 0
      %743 = vmatprep.subr.bf16.mxu0 0
      %744 = vmatpush1.bf16.msra.mxu0 0
      %745 = vmatprep.subr.bf16.mxu0 0
      %746 = vmatpush1.bf16.msra.mxu0 0
      %747 = vmatprep.subr.bf16.mxu0 0
      %748 = vmatpush1.bf16.msra.mxu0 0
      %749 = vmatprep.subr.bf16.mxu0 0
      %750 = vmatpush1.bf16.msra.mxu0 0
      %751 = vmatprep.subr.bf16.mxu0 0
      %752 = vmatpush1.bf16.msra.mxu0 0
      %753 = vmatprep.subr.bf16.mxu0 0
      %754 = vmatpush1.bf16.msra.mxu0 0
      %755 = vmatprep.subr.bf16.mxu0 0
      %756 = vmatpush1.bf16.msra.mxu0 0
      %757 = vmatprep.subr.bf16.mxu0 0
      %758 = vmatpush1.bf16.msra.mxu0 0
      %759 = vmatprep.mubr.bf16.mxu0 0
      %760 = vmatmul.mubr.bf16.gmra.mrb[0].mxu0 %v716
      %v761 = vpop.f32.mrb[0].mxu0
      %v762 = vadd.f32 0.0, %v761
      %v763 = vpop.f32.mrb[0].mxu0
      %v764 = vpop.f32.mrb[0].mxu0
      %v765 = vadd.f32 0.0, %v764
      %v766 = vpop.f32.mrb[0].mxu0
      %767 = vmatprep.mubr.bf16.mxu0 0
      %768 = vmatmul.mubr.bf16.gmra.mrb[0].mxu0 %v719
      %v769 = vpop.f32.mrb[0].mxu0
      %v770 = vadd.f32 0.0, %v769
      %v771 = vpop.f32.mrb[0].mxu0
      %v772 = vpop.f32.mrb[0].mxu0
      %v773 = vadd.f32 0.0, %v772
      %v774 = vpop.f32.mrb[0].mxu0
      %775 = vmatprep.mubr.bf16.mxu0 0
      %776 = vmatmul.mubr.bf16.gmra.mrb[0].mxu0 %v722
      %v777 = vpop.f32.mrb[0].mxu0
      %v778 = vadd.f32 0.0, %v777
      %v779 = vpop.f32.mrb[0].mxu0
      %v780 = vpop.f32.mrb[0].mxu0
      %v781 = vadd.f32 0.0, %v780
      %v782 = vpop.f32.mrb[0].mxu0
      %783 = vmatprep.mubr.bf16.mxu0 0
      %784 = vmatmul.mubr.bf16.gmra.mrb[0].mxu0 %v725
      %v785 = vpop.f32.mrb[0].mxu0
      %v786 = vadd.f32 0.0, %v785
      %v787 = vpop.f32.mrb[0].mxu0
      %v788 = vpop.f32.mrb[0].mxu0
      %v789 = vadd.f32 0.0, %v788
      %v790 = vpop.f32.mrb[0].mxu0
      %791 = vdwg.mxu0
      %v792 = vadd.f32 %v665, %v762
      %v793 = vadd.f32 %v666, %v765
      %v794 = vadd.f32 %v667, %v770
      %v795 = vadd.f32 %v668, %v773
      %v796 = vadd.f32 %v669, %v778
      %v797 = vadd.f32 %v670, %v781
      %v798 = vadd.f32 %v671, %v786
      %v799 = vadd.f32 %v672, %v789
      %s800 = scalar_lea.vmem %s1, 160
      %v801 = vld [vmem:[%s800] sm:$0xf]
      %v802 = vld [vmem:[%s800 + $0x4] sm:$0xf]
      %v803 = vld [vmem:[%s800 + $0x8] sm:$0xf]
      %v804 = vld [vmem:[%s800 + $0xc] sm:$0xf]
      %v805 = vld [vmem:[%s800 + $0x10] sm:$0xf]
      %v806 = vld [vmem:[%s800 + $0x14] sm:$0xf]
      %v807 = vld [vmem:[%s800 + $0x18] sm:$0xf]
      %v808 = vld [vmem:[%s800 + $0x1c] sm:$0xf]
      %v817 = vunpack.c.l.b16 %v801
      %v818 = vunpack.c.l.b16 %v802
      %v819 = vunpack.c.l.b16 %v803
      %v820 = vunpack.c.l.b16 %v804
      %v821 = vunpack.c.l.b16 %v805
      %v822 = vunpack.c.l.b16 %v806
      %v823 = vunpack.c.l.b16 %v807
      %v824 = vunpack.c.l.b16 %v808
      %v825 = vpack.c.b16 %v818, %v817
      %v826 = vpack.c.b16 %v820, %v819
      %v827 = vpack.c.b16 %v822, %v821
      %v828 = vpack.c.b16 %v824, %v823
      %829 = vrot.lane.b32.xlu0 %v225, 120
      %v830 = vpop.permute.xlu0 %829
      %831 = vrot.lane.b32.xlu0 %v226, 120
      %v832 = vpop.permute.xlu0 %831
      %833 = vrot.lane.b32.xlu0 %v227, 120
      %v834 = vpop.permute.xlu0 %833
      %835 = vrot.lane.b32.xlu0 %v228, 120
      %v836 = vpop.permute.xlu0 %835
      %vm837 = vcmask 982016
      %v838 = vsel %vm837, %v830, %v832
      %v839 = vsel %vm837, %v834, %v836
      %v843 = vsel %vm242, %v825, 0
      %v846 = vsel %vm242, %v826, 0
      %v849 = vsel %vm242, %v827, 0
      %v852 = vsel %vm242, %v828, 0
      %854 = vmatprep.subr.bf16.mxu0 0
      %855 = vmatpush1.bf16.msra.mxu0 %v838
      %856 = vmatprep.subr.bf16.mxu0 0
      %857 = vmatpush1.bf16.msra.mxu0 %v839
      %858 = vmatprep.subr.bf16.mxu0 0
      %859 = vmatpush1.bf16.msra.mxu0 0
      %860 = vmatprep.subr.bf16.mxu0 0
      %861 = vmatpush1.bf16.msra.mxu0 0
      %862 = vmatprep.subr.bf16.mxu0 0
      %863 = vmatpush1.bf16.msra.mxu0 0
      %864 = vmatprep.subr.bf16.mxu0 0
      %865 = vmatpush1.bf16.msra.mxu0 0
      %866 = vmatprep.subr.bf16.mxu0 0
      %867 = vmatpush1.bf16.msra.mxu0 0
      %868 = vmatprep.subr.bf16.mxu0 0
      %869 = vmatpush1.bf16.msra.mxu0 0
      %870 = vmatprep.subr.bf16.mxu0 0
      %871 = vmatpush1.bf16.msra.mxu0 0
      %872 = vmatprep.subr.bf16.mxu0 0
      %873 = vmatpush1.bf16.msra.mxu0 0
      %874 = vmatprep.subr.bf16.mxu0 0
      %875 = vmatpush1.bf16.msra.mxu0 0
      %876 = vmatprep.subr.bf16.mxu0 0
      %877 = vmatpush1.bf16.msra.mxu0 0
      %878 = vmatprep.subr.bf16.mxu0 0
      %879 = vmatpush1.bf16.msra.mxu0 0
      %880 = vmatprep.subr.bf16.mxu0 0
      %881 = vmatpush1.bf16.msra.mxu0 0
      %882 = vmatprep.subr.bf16.mxu0 0
      %883 = vmatpush1.bf16.msra.mxu0 0
      %884 = vmatprep.subr.bf16.mxu0 0
      %885 = vmatpush1.bf16.msra.mxu0 0
      %886 = vmatprep.mubr.bf16.mxu0 0
      %887 = vmatmul.mubr.bf16.gmra.mrb[0].mxu0 %v843
      %v888 = vpop.f32.mrb[0].mxu0
      %v889 = vadd.f32 0.0, %v888
      %v890 = vpop.f32.mrb[0].mxu0
      %v891 = vpop.f32.mrb[0].mxu0
      %v892 = vadd.f32 0.0, %v891
      %v893 = vpop.f32.mrb[0].mxu0
      %894 = vmatprep.mubr.bf16.mxu0 0
      %895 = vmatmul.mubr.bf16.gmra.mrb[0].mxu0 %v846
      %v896 = vpop.f32.mrb[0].mxu0
      %v897 = vadd.f32 0.0, %v896
      %v898 = vpop.f32.mrb[0].mxu0
      %v899 = vpop.f32.mrb[0].mxu0
      %v900 = vadd.f32 0.0, %v899
      %v901 = vpop.f32.mrb[0].mxu0
      %902 = vmatprep.mubr.bf16.mxu0 0
      %903 = vmatmul.mubr.bf16.gmra.mrb[0].mxu0 %v849
      %v904 = vpop.f32.mrb[0].mxu0
      %v905 = vadd.f32 0.0, %v904
      %v906 = vpop.f32.mrb[0].mxu0
      %v907 = vpop.f32.mrb[0].mxu0
      %v908 = vadd.f32 0.0, %v907
      %v909 = vpop.f32.mrb[0].mxu0
      %910 = vmatprep.mubr.bf16.mxu0 0
      %911 = vmatmul.mubr.bf16.gmra.mrb[0].mxu0 %v852
      %v912 = vpop.f32.mrb[0].mxu0
      %v913 = vadd.f32 0.0, %v912
      %v914 = vpop.f32.mrb[0].mxu0
      %v915 = vpop.f32.mrb[0].mxu0
      %v916 = vadd.f32 0.0, %v915
      %v917 = vpop.f32.mrb[0].mxu0
      %918 = vdwg.mxu0
      %v919 = vadd.f32 %v792, %v889
      %v920 = vadd.f32 %v793, %v892
      %v921 = vadd.f32 %v794, %v897
      %v922 = vadd.f32 %v795, %v900
      %v923 = vadd.f32 %v796, %v905
      %v924 = vadd.f32 %v797, %v908
      %v925 = vadd.f32 %v798, %v913
      %v926 = vadd.f32 %v799, %v916
      %s927 = scalar_lea.vmem %s1, 192
      %v928 = vld [vmem:[%s927] sm:$0xf]
      %v929 = vld [vmem:[%s927 + $0x4] sm:$0xf]
      %v930 = vld [vmem:[%s927 + $0x8] sm:$0xf]
      %v931 = vld [vmem:[%s927 + $0xc] sm:$0xf]
      %v932 = vld [vmem:[%s927 + $0x10] sm:$0xf]
      %v933 = vld [vmem:[%s927 + $0x14] sm:$0xf]
      %v934 = vld [vmem:[%s927 + $0x18] sm:$0xf]
      %v935 = vld [vmem:[%s927 + $0x1c] sm:$0xf]
      %v944 = vunpack.c.l.b16 %v928
      %v945 = vunpack.c.l.b16 %v929
      %v946 = vunpack.c.l.b16 %v930
      %v947 = vunpack.c.l.b16 %v931
      %v948 = vunpack.c.l.b16 %v932
      %v949 = vunpack.c.l.b16 %v933
      %v950 = vunpack.c.l.b16 %v934
      %v951 = vunpack.c.l.b16 %v935
      %v952 = vpack.c.b16 %v945, %v944
      %v953 = vpack.c.b16 %v947, %v946
      %v954 = vpack.c.b16 %v949, %v948
      %v955 = vpack.c.b16 %v951, %v950
      %956 = vrot.lane.b32.xlu0 %v225, 116
      %v957 = vpop.permute.xlu0 %956
      %958 = vrot.lane.b32.xlu0 %v226, 116
      %v959 = vpop.permute.xlu0 %958
      %960 = vrot.lane.b32.xlu0 %v227, 116
      %v961 = vpop.permute.xlu0 %960
      %962 = vrot.lane.b32.xlu0 %v228, 116
      %v963 = vpop.permute.xlu0 %962
      %vm964 = vcmask 949248
      %v965 = vsel %vm964, %v957, %v959
      %v966 = vsel %vm964, %v961, %v963
      %v970 = vsel %vm242, %v952, 0
      %v973 = vsel %vm242, %v953, 0
      %v976 = vsel %vm242, %v954, 0
      %v979 = vsel %vm242, %v955, 0
      %981 = vmatprep.subr.bf16.mxu0 0
      %982 = vmatpush1.bf16.msra.mxu0 %v965
      %983 = vmatprep.subr.bf16.mxu0 0
      %984 = vmatpush1.bf16.msra.mxu0 %v966
      %985 = vmatprep.subr.bf16.mxu0 0
      %986 = vmatpush1.bf16.msra.mxu0 0
      %987 = vmatprep.subr.bf16.mxu0 0
      %988 = vmatpush1.bf16.msra.mxu0 0
      %989 = vmatprep.subr.bf16.mxu0 0
      %990 = vmatpush1.bf16.msra.mxu0 0
      %991 = vmatprep.subr.bf16.mxu0 0
      %992 = vmatpush1.bf16.msra.mxu0 0
      %993 = vmatprep.subr.bf16.mxu0 0
      %994 = vmatpush1.bf16.msra.mxu0 0
      %995 = vmatprep.subr.bf16.mxu0 0
      %996 = vmatpush1.bf16.msra.mxu0 0
      %997 = vmatprep.subr.bf16.mxu0 0
      %998 = vmatpush1.bf16.msra.mxu0 0
      %999 = vmatprep.subr.bf16.mxu0 0
      %1000 = vmatpush1.bf16.msra.mxu0 0
      %1001 = vmatprep.subr.bf16.mxu0 0
      %1002 = vmatpush1.bf16.msra.mxu0 0
      %1003 = vmatprep.subr.bf16.mxu0 0
      %1004 = vmatpush1.bf16.msra.mxu0 0
      %1005 = vmatprep.subr.bf16.mxu0 0
      %1006 = vmatpush1.bf16.msra.mxu0 0
      %1007 = vmatprep.subr.bf16.mxu0 0
      %1008 = vmatpush1.bf16.msra.mxu0 0
      %1009 = vmatprep.subr.bf16.mxu0 0
      %1010 = vmatpush1.bf16.msra.mxu0 0
      %1011 = vmatprep.subr.bf16.mxu0 0
      %1012 = vmatpush1.bf16.msra.mxu0 0
      %1013 = vmatprep.mubr.bf16.mxu0 0
      %1014 = vmatmul.mubr.bf16.gmra.mrb[0].mxu0 %v970
      %v1015 = vpop.f32.mrb[0].mxu0
      %v1016 = vadd.f32 0.0, %v1015
      %v1017 = vpop.f32.mrb[0].mxu0
      %v1018 = vpop.f32.mrb[0].mxu0
      %v1019 = vadd.f32 0.0, %v1018
      %v1020 = vpop.f32.mrb[0].mxu0
      %1021 = vmatprep.mubr.bf16.mxu0 0
      %1022 = vmatmul.mubr.bf16.gmra.mrb[0].mxu0 %v973
      %v1023 = vpop.f32.mrb[0].mxu0
      %v1024 = vadd.f32 0.0, %v1023
      %v1025 = vpop.f32.mrb[0].mxu0
      %v1026 = vpop.f32.mrb[0].mxu0
      %v1027 = vadd.f32 0.0, %v1026
      %v1028 = vpop.f32.mrb[0].mxu0
      %1029 = vmatprep.mubr.bf16.mxu0 0
      %1030 = vmatmul.mubr.bf16.gmra.mrb[0].mxu0 %v976
      %v1031 = vpop.f32.mrb[0].mxu0
      %v1032 = vadd.f32 0.0, %v1031
      %v1033 = vpop.f32.mrb[0].mxu0
      %v1034 = vpop.f32.mrb[0].mxu0
      %v1035 = vadd.f32 0.0, %v1034
      %v1036 = vpop.f32.mrb[0].mxu0
      %1037 = vmatprep.mubr.bf16.mxu0 0
      %1038 = vmatmul.mubr.bf16.gmra.mrb[0].mxu0 %v979
      %v1039 = vpop.f32.mrb[0].mxu0
      %v1040 = vadd.f32 0.0, %v1039
      %v1041 = vpop.f32.mrb[0].mxu0
      %v1042 = vpop.f32.mrb[0].mxu0
      %v1043 = vadd.f32 0.0, %v1042
      %v1044 = vpop.f32.mrb[0].mxu0
      %1045 = vdwg.mxu0
      %v1046 = vadd.f32 %v919, %v1016
      %v1047 = vadd.f32 %v920, %v1019
      %v1048 = vadd.f32 %v921, %v1024
      %v1049 = vadd.f32 %v922, %v1027
      %v1050 = vadd.f32 %v923, %v1032
      %v1051 = vadd.f32 %v924, %v1035
      %v1052 = vadd.f32 %v925, %v1040
      %v1053 = vadd.f32 %v926, %v1043
      %s1054 = scalar_lea.vmem %s1, 224
      %v1055 = vld [vmem:[%s1054] sm:$0xf]
      %v1056 = vld [vmem:[%s1054 + $0x4] sm:$0xf]
      %v1057 = vld [vmem:[%s1054 + $0x8] sm:$0xf]
      %v1058 = vld [vmem:[%s1054 + $0xc] sm:$0xf]
      %v1059 = vld [vmem:[%s1054 + $0x10] sm:$0xf]
      %v1060 = vld [vmem:[%s1054 + $0x14] sm:$0xf]
      %v1061 = vld [vmem:[%s1054 + $0x18] sm:$0xf]
      %v1062 = vld [vmem:[%s1054 + $0x1c] sm:$0xf]
      %v1071 = vunpack.c.l.b16 %v1055
      %v1072 = vunpack.c.l.b16 %v1056
      %v1073 = vunpack.c.l.b16 %v1057
      %v1074 = vunpack.c.l.b16 %v1058
      %v1075 = vunpack.c.l.b16 %v1059
      %v1076 = vunpack.c.l.b16 %v1060
      %v1077 = vunpack.c.l.b16 %v1061
      %v1078 = vunpack.c.l.b16 %v1062
      %v1079 = vpack.c.b16 %v1072, %v1071
      %v1080 = vpack.c.b16 %v1074, %v1073
      %v1081 = vpack.c.b16 %v1076, %v1075
      %v1082 = vpack.c.b16 %v1078, %v1077
      %1083 = vrot.lane.b32.xlu0 %v225, 115
      %v1084 = vpop.permute.xlu0 %1083
      %1085 = vrot.lane.b32.xlu0 %v226, 115
      %v1086 = vpop.permute.xlu0 %1085
      %1087 = vrot.lane.b32.xlu0 %v227, 115
      %v1088 = vpop.permute.xlu0 %1087
      %1089 = vrot.lane.b32.xlu0 %v228, 115
      %v1090 = vpop.permute.xlu0 %1089
      %vm1091 = vcmask 941056
      %v1092 = vsel %vm1091, %v1084, %v1086
      %v1093 = vsel %vm1091, %v1088, %v1090
      %v1097 = vsel %vm242, %v1079, 0
      %v1100 = vsel %vm242, %v1080, 0
      %v1103 = vsel %vm242, %v1081, 0
      %v1106 = vsel %vm242, %v1082, 0
      %1108 = vmatprep.subr.bf16.mxu0 0
      %1109 = vmatpush1.bf16.msra.mxu0 %v1092
      %1110 = vmatprep.subr.bf16.mxu0 0
      %1111 = vmatpush1.bf16.msra.mxu0 %v1093
      %1112 = vmatprep.subr.bf16.mxu0 0
      %1113 = vmatpush1.bf16.msra.mxu0 0
      %1114 = vmatprep.subr.bf16.mxu0 0
      %1115 = vmatpush1.bf16.msra.mxu0 0
      %1116 = vmatprep.subr.bf16.mxu0 0
      %1117 = vmatpush1.bf16.msra.mxu0 0
      %1118 = vmatprep.subr.bf16.mxu0 0
      %1119 = vmatpush1.bf16.msra.mxu0 0
      %1120 = vmatprep.subr.bf16.mxu0 0
      %1121 = vmatpush1.bf16.msra.mxu0 0
      %1122 = vmatprep.subr.bf16.mxu0 0
      %1123 = vmatpush1.bf16.msra.mxu0 0
      %1124 = vmatprep.subr.bf16.mxu0 0
      %1125 = vmatpush1.bf16.msra.mxu0 0
      %1126 = vmatprep.subr.bf16.mxu0 0
      %1127 = vmatpush1.bf16.msra.mxu0 0
      %1128 = vmatprep.subr.bf16.mxu0 0
      %1129 = vmatpush1.bf16.msra.mxu0 0
      %1130 = vmatprep.subr.bf16.mxu0 0
      %1131 = vmatpush1.bf16.msra.mxu0 0
      %1132 = vmatprep.subr.bf16.mxu0 0
      %1133 = vmatpush1.bf16.msra.mxu0 0
      %1134 = vmatprep.subr.bf16.mxu0 0
      %1135 = vmatpush1.bf16.msra.mxu0 0
      %1136 = vmatprep.subr.bf16.mxu0 0
      %1137 = vmatpush1.bf16.msra.mxu0 0
      %1138 = vmatprep.subr.bf16.mxu0 0
      %1139 = vmatpush1.bf16.msra.mxu0 0
      %1140 = vmatprep.mubr.bf16.mxu0 0
      %1141 = vmatmul.mubr.bf16.gmra.mrb[0].mxu0 %v1097
      %v1142 = vpop.f32.mrb[0].mxu0
      %v1143 = vadd.f32 0.0, %v1142
      %v1144 = vpop.f32.mrb[0].mxu0
      %v1145 = vpop.f32.mrb[0].mxu0
      %v1146 = vadd.f32 0.0, %v1145
      %v1147 = vpop.f32.mrb[0].mxu0
      %1148 = vmatprep.mubr.bf16.mxu0 0
      %1149 = vmatmul.mubr.bf16.gmra.mrb[0].mxu0 %v1100
      %v1150 = vpop.f32.mrb[0].mxu0
      %v1151 = vadd.f32 0.0, %v1150
      %v1152 = vpop.f32.mrb[0].mxu0
      %v1153 = vpop.f32.mrb[0].mxu0
      %v1154 = vadd.f32 0.0, %v1153
      %v1155 = vpop.f32.mrb[0].mxu0
      %1156 = vmatprep.mubr.bf16.mxu0 0
      %1157 = vmatmul.mubr.bf16.gmra.mrb[0].mxu0 %v1103
      %v1158 = vpop.f32.mrb[0].mxu0
      %v1159 = vadd.f32 0.0, %v1158
      %v1160 = vpop.f32.mrb[0].mxu0
      %v1161 = vpop.f32.mrb[0].mxu0
      %v1162 = vadd.f32 0.0, %v1161
      %v1163 = vpop.f32.mrb[0].mxu0
      %1164 = vmatprep.mubr.bf16.mxu0 0
      %1165 = vmatmul.mubr.bf16.gmra.mrb[0].mxu0 %v1106
      %v1166 = vpop.f32.mrb[0].mxu0
      %v1167 = vadd.f32 0.0, %v1166
      %v1168 = vpop.f32.mrb[0].mxu0
      %v1169 = vpop.f32.mrb[0].mxu0
      %v1170 = vadd.f32 0.0, %v1169
      %v1171 = vpop.f32.mrb[0].mxu0
      %1172 = vdwg.mxu0
      %v1173 = vadd.f32 %v1046, %v1143
      %v1174 = vadd.f32 %v1047, %v1146
      %v1175 = vadd.f32 %v1048, %v1151
      %v1176 = vadd.f32 %v1049, %v1154
      %v1177 = vadd.f32 %v1050, %v1159
      %v1178 = vadd.f32 %v1051, %v1162
      %v1179 = vadd.f32 %v1052, %v1167
      %v1180 = vadd.f32 %v1053, %v1170
      %s1181 = scalar_lea.vmem %s1, 256
      %v1182 = vld [vmem:[%s1181] sm:$0xf]
      %v1183 = vld [vmem:[%s1181 + $0x4] sm:$0xf]
      %v1184 = vld [vmem:[%s1181 + $0x8] sm:$0xf]
      %v1185 = vld [vmem:[%s1181 + $0xc] sm:$0xf]
      %v1186 = vld [vmem:[%s1181 + $0x10] sm:$0xf]
      %v1187 = vld [vmem:[%s1181 + $0x14] sm:$0xf]
      %v1188 = vld [vmem:[%s1181 + $0x18] sm:$0xf]
      %v1189 = vld [vmem:[%s1181 + $0x1c] sm:$0xf]
      %v1198 = vunpack.c.l.b16 %v1182
      %v1199 = vunpack.c.l.b16 %v1183
      %v1200 = vunpack.c.l.b16 %v1184
      %v1201 = vunpack.c.l.b16 %v1185
      %v1202 = vunpack.c.l.b16 %v1186
      %v1203 = vunpack.c.l.b16 %v1187
      %v1204 = vunpack.c.l.b16 %v1188
      %v1205 = vunpack.c.l.b16 %v1189
      %v1206 = vpack.c.b16 %v1199, %v1198
      %v1207 = vpack.c.b16 %v1201, %v1200
      %v1208 = vpack.c.b16 %v1203, %v1202
      %v1209 = vpack.c.b16 %v1205, %v1204
      %1210 = vrot.lane.b32.xlu0 %v225, 114
      %v1211 = vpop.permute.xlu0 %1210
      %1212 = vrot.lane.b32.xlu0 %v226, 114
      %v1213 = vpop.permute.xlu0 %1212
      %1214 = vrot.lane.b32.xlu0 %v227, 114
      %v1215 = vpop.permute.xlu0 %1214
      %1216 = vrot.lane.b32.xlu0 %v228, 114
      %v1217 = vpop.permute.xlu0 %1216
      %vm1218 = vcmask 932864
      %v1219 = vsel %vm1218, %v1211, %v1213
      %v1220 = vsel %vm1218, %v1215, %v1217
      %v1224 = vsel %vm242, %v1206, 0
      %v1227 = vsel %vm242, %v1207, 0
      %v1230 = vsel %vm242, %v1208, 0
      %v1233 = vsel %vm242, %v1209, 0
      %1235 = vmatprep.subr.bf16.mxu0 0
      %1236 = vmatpush1.bf16.msra.mxu0 %v1219
      %1237 = vmatprep.subr.bf16.mxu0 0
      %1238 = vmatpush1.bf16.msra.mxu0 %v1220
      %1239 = vmatprep.subr.bf16.mxu0 0
      %1240 = vmatpush1.bf16.msra.mxu0 0
      %1241 = vmatprep.subr.bf16.mxu0 0
      %1242 = vmatpush1.bf16.msra.mxu0 0
      %1243 = vmatprep.subr.bf16.mxu0 0
      %1244 = vmatpush1.bf16.msra.mxu0 0
      %1245 = vmatprep.subr.bf16.mxu0 0
      %1246 = vmatpush1.bf16.msra.mxu0 0
      %1247 = vmatprep.subr.bf16.mxu0 0
      %1248 = vmatpush1.bf16.msra.mxu0 0
      %1249 = vmatprep.subr.bf16.mxu0 0
      %1250 = vmatpush1.bf16.msra.mxu0 0
      %1251 = vmatprep.subr.bf16.mxu0 0
      %1252 = vmatpush1.bf16.msra.mxu0 0
      %1253 = vmatprep.subr.bf16.mxu0 0
      %1254 = vmatpush1.bf16.msra.mxu0 0
      %1255 = vmatprep.subr.bf16.mxu0 0
      %1256 = vmatpush1.bf16.msra.mxu0 0
      %1257 = vmatprep.subr.bf16.mxu0 0
      %1258 = vmatpush1.bf16.msra.mxu0 0
      %1259 = vmatprep.subr.bf16.mxu0 0
      %1260 = vmatpush1.bf16.msra.mxu0 0
      %1261 = vmatprep.subr.bf16.mxu0 0
      %1262 = vmatpush1.bf16.msra.mxu0 0
      %1263 = vmatprep.subr.bf16.mxu0 0
      %1264 = vmatpush1.bf16.msra.mxu0 0
      %1265 = vmatprep.subr.bf16.mxu0 0
      %1266 = vmatpush1.bf16.msra.mxu0 0
      %1267 = vmatprep.mubr.bf16.mxu0 0
      %1268 = vmatmul.mubr.bf16.gmra.mrb[0].mxu0 %v1224
      %v1269 = vpop.f32.mrb[0].mxu0
      %v1270 = vadd.f32 0.0, %v1269
      %v1271 = vpop.f32.mrb[0].mxu0
      %v1272 = vpop.f32.mrb[0].mxu0
      %v1273 = vadd.f32 0.0, %v1272
      %v1274 = vpop.f32.mrb[0].mxu0
      %1275 = vmatprep.mubr.bf16.mxu0 0
      %1276 = vmatmul.mubr.bf16.gmra.mrb[0].mxu0 %v1227
      %v1277 = vpop.f32.mrb[0].mxu0
      %v1278 = vadd.f32 0.0, %v1277
      %v1279 = vpop.f32.mrb[0].mxu0
      %v1280 = vpop.f32.mrb[0].mxu0
      %v1281 = vadd.f32 0.0, %v1280
      %v1282 = vpop.f32.mrb[0].mxu0
      %1283 = vmatprep.mubr.bf16.mxu0 0
      %1284 = vmatmul.mubr.bf16.gmra.mrb[0].mxu0 %v1230
      %v1285 = vpop.f32.mrb[0].mxu0
      %v1286 = vadd.f32 0.0, %v1285
      %v1287 = vpop.f32.mrb[0].mxu0
      %v1288 = vpop.f32.mrb[0].mxu0
      %v1289 = vadd.f32 0.0, %v1288
      %v1290 = vpop.f32.mrb[0].mxu0
      %1291 = vmatprep.mubr.bf16.mxu0 0
      %1292 = vmatmul.mubr.bf16.gmra.mrb[0].mxu0 %v1233
      %v1293 = vpop.f32.mrb[0].mxu0
      %v1294 = vadd.f32 0.0, %v1293
      %v1295 = vpop.f32.mrb[0].mxu0
      %v1296 = vpop.f32.mrb[0].mxu0
      %v1297 = vadd.f32 0.0, %v1296
      %v1298 = vpop.f32.mrb[0].mxu0
      %1299 = vdwg.mxu0
      %v1300 = vadd.f32 %v1173, %v1270
      %v1301 = vadd.f32 %v1174, %v1273
      %v1302 = vadd.f32 %v1175, %v1278
      %v1303 = vadd.f32 %v1176, %v1281
      %v1304 = vadd.f32 %v1177, %v1286
      %v1305 = vadd.f32 %v1178, %v1289
      %v1306 = vadd.f32 %v1179, %v1294
      %v1307 = vadd.f32 %v1180, %v1297
      %v1308 = vld [vmem:[%s2] sm:$0xff]
      %v1309 = vld [vmem:[%s2 + $0x8] sm:$0xff]
      %v1310 = vld [vmem:[%s2 + $0x10] sm:$0xff]
      %v1311 = vld [vmem:[%s2 + $0x18] sm:$0xff]
      %v1312 = vld [vmem:[%s2 + $0x20] sm:$0xff]
      %v1313 = vld [vmem:[%s2 + $0x28] sm:$0xff]
      %v1314 = vld [vmem:[%s2 + $0x30] sm:$0xff]
      %v1315 = vld [vmem:[%s2 + $0x38] sm:$0xff]
      %1317 = vset.pattern.permute.xlu0 0
      %1318 = vperm.xlu0 %1317, %v1308
      %v1319 = vpop.permute.xlu0 %1318
      %1322 = vset.pattern.permute.xlu0 0
      %1323 = vperm.xlu0 %1322, %v1309
      %v1324 = vpop.permute.xlu0 %1323
      %1327 = vset.pattern.permute.xlu0 0
      %1328 = vperm.xlu0 %1327, %v1310
      %v1329 = vpop.permute.xlu0 %1328
      %1332 = vset.pattern.permute.xlu0 0
      %1333 = vperm.xlu0 %1332, %v1311
      %v1334 = vpop.permute.xlu0 %1333
      %1337 = vset.pattern.permute.xlu0 0
      %1338 = vperm.xlu0 %1337, %v1312
      %v1339 = vpop.permute.xlu0 %1338
      %1342 = vset.pattern.permute.xlu0 0
      %1343 = vperm.xlu0 %1342, %v1313
      %v1344 = vpop.permute.xlu0 %1343
      %1347 = vset.pattern.permute.xlu0 0
      %1348 = vperm.xlu0 %1347, %v1314
      %v1349 = vpop.permute.xlu0 %1348
      %1352 = vset.pattern.permute.xlu0 0
      %1353 = vperm.xlu0 %1352, %v1315
      %v1354 = vpop.permute.xlu0 %1353
      %v1356 = vadd.f32 %v1300, %v1319
      %v1357 = vadd.f32 %v1301, %v1324
      %v1358 = vadd.f32 %v1302, %v1329
      %v1359 = vadd.f32 %v1303, %v1334
      %v1360 = vadd.f32 %v1304, %v1339
      %v1361 = vadd.f32 %v1305, %v1344
      %v1362 = vadd.f32 %v1306, %v1349
      %v1363 = vadd.f32 %v1307, %v1354
      %v1364 = vpack.c.bf16 %v1357, %v1356
      %v1365 = vpack.c.bf16 %v1359, %v1358
      %v1366 = vpack.c.bf16 %v1361, %v1360
      %v1367 = vpack.c.bf16 %v1363, %v1362
      %v1372 = vunpack.c.l.b16 %v1364
      %v1373 = vunpack.c.h.b16 %v1364
      %v1374 = vunpack.c.l.b16 %v1365
      %v1375 = vunpack.c.h.b16 %v1365
      %v1376 = vunpack.c.l.b16 %v1366
      %v1377 = vunpack.c.h.b16 %v1366
      %v1378 = vunpack.c.l.b16 %v1367
      %v1379 = vunpack.c.h.b16 %v1367
      %v1380 = vpack.c.b16 %v1372, %v1372
      %v1381 = vpack.c.b16 %v1373, %v1373
      %v1382 = vpack.c.b16 %v1374, %v1374
      %v1383 = vpack.c.b16 %v1375, %v1375
      %v1384 = vpack.c.b16 %v1376, %v1376
      %v1385 = vpack.c.b16 %v1377, %v1377
      %v1386 = vpack.c.b16 %v1378, %v1378
      %v1387 = vpack.c.b16 %v1379, %v1379
      %1396 = vst [vmem:[%s170] sm:$0xf] %v1380
      %1397 = vst [vmem:[%s170 + $0x4] sm:$0xf] %v1381
      %1398 = vst [vmem:[%s170 + $0x8] sm:$0xf] %v1382
      %1399 = vst [vmem:[%s170 + $0xc] sm:$0xf] %v1383
      %1400 = vst [vmem:[%s170 + $0x10] sm:$0xf] %v1384
      %1401 = vst [vmem:[%s170 + $0x14] sm:$0xf] %v1385
      %1402 = vst [vmem:[%s170 + $0x18] sm:$0xf] %v1386
      %1403 = vst [vmem:[%s170 + $0x1c] sm:$0xf] %v1387
      %p1404 = scmp.lt.s32.totalorder %s14, 1
      %s1405 = scalar_select %p1404, %s14, 1
      %s1406 = smul.addr %s1405, 8
      %s1407 = smul.addr %s1406, 4
      %s1408 = scalar_lea.vmem %s3, %s1407
      // Predicated region
      $region33: #{s_encoder_forward.14} parent=31 // pred_check
        %p1409 = pneg %p100
      $region34: #{s_encoder_forward.14} parent=31 // pred_check_branch
        %1411 = sbr.rel (%p1409) target = $region36
      $region35: #{s_encoder_forward.14} parent=31 // pred_region
        _
      $region36: #{s_encoder_forward.14} parent=31 // pred_fallthru
        _
    $region32: #{s_encoder_forward.14} parent=5 // pred_fallthru
      _
    %p1412 = scmp.le.s32.totalorder 2, %s9
    // Predicated region
    $region37: #{s_encoder_forward.14} parent=5 // pred_check
      %p1413 = pneg %p1412
    $region38: #{s_encoder_forward.14} parent=5 // pred_check_branch
      %1415 = sbr.rel (%p1413) target = $region40
    $region39: #{s_encoder_forward.14} parent=5 // pred_region
      %s1416 = ssub.s32 %s9, 2
      // Predicated region
      $region41: #{s_encoder_forward.14} parent=39 // pred_check
        %p1417 = pneg %p106
      $region42: #{s_encoder_forward.14} parent=39 // pred_check_branch
        %1419 = sbr.rel (%p1417) target = $region44
      $region43: #{s_encoder_forward.14} parent=39 // pred_region
        %p1420 = scmp.lt.s32.totalorder %s15, 1
        %s1421 = scalar_select %p1420, %s15, 1
        %s1422 = smul.addr %s1421, 8
        %s1423 = smul.addr %s1422, 4
        %s1424 = scalar_lea.vmem %s3, %s1423
      $region44: #{s_encoder_forward.14} parent=39 // pred_fallthru
        _
    $region40: #{s_encoder_forward.14} parent=5 // pred_fallthru
      _
  $region6: #{s_encoder_forward.14} parent=0 // loop_footer
    %s13 = sadd.s32 1, %s9
  $region7: #{s_encoder_forward.14} parent=0 // loop_footer_branch
    %8 = sbr.rel target = $region3
  $region8: #{s_encoder_forward.14} parent=0 // loop_exit
    _

// kernel: s_encoder_forward.15
$region0: #{s_encoder_forward.15}
  #allocation0 [shape = 'u32[]', space=smem, size = 0x4, offset = 0x4, fixed_abs, tag = 'smem constant byte address 0x4 - core index']
  #allocation1 [shape = 'u32[144,128]{1,0:T(1,128)}', space=vmem, size = 0x12000, scoped, tag = 'internal scratch']
  %s0 = inlined_call_operand.vmem [shape: bf16[2,64,256], index: 0, kind: input, shape index: {}]
  %s1 = inlined_call_operand.vmem [shape: bf16[9,64,64], index: 1, kind: input, shape index: {}]
  %s2 = inlined_call_operand.vmem [shape: f32[64,1], index: 2, kind: input, shape index: {}]
  %s3 = inlined_call_operand.vmem [shape: f32[64,256], index: 3, kind: input, shape index: {}]
  %s4 = inlined_call_operand.vmem [shape: f32[64,1], index: 4, kind: input, shape index: {}]
  %s5 = inlined_call_operand.vmem [shape: f32[64,1], index: 5, kind: input, shape index: {}]
  %s6 = inlined_call_operand.vmem [shape: bf16[2,64,128], index: 6, kind: output, shape index: {}]
  %s7 = sld [smem:[#allocation0]]
  $region57: #{s_encoder_forward.15} parent=0
    _
  %s9 = ssub.s32 1, %s7
  %s10 = scalar_select 0, %s9, %s7
  loop: start=0, step=1, limit=4
  $region2: #{s_encoder_forward.15} parent=0 // loop_pre_header
    _
  $region3: #{s_encoder_forward.15} parent=0 // loop_header
    %s12 = sphi 0, %s16
    %p13 = scmp.ge.s32.totalorder %s12, 4
    %s22 = sphi 0, %s24
    %s25 = sphi 0, %s22
    %s26 = sphi 0, %s25
    %s42 = sphi 0, %s26
    %s46 = sphi 0, %s46
    %s48 = sphi 0, %s46
    %s49 = sphi 0, %s48
    %s63 = sphi 0, %s49
    %s67 = sphi 0, %s67
    %s69 = sphi 0, %s67
    %s70 = sphi 0, %s69
    %s84 = sphi 0, %s70
    %s88 = sphi 0, %s88
    %s90 = sphi 0, %s88
    %s91 = sphi 0, %s90
    %s105 = sphi 0, %s91
    %s109 = sphi 0, %s109
    %s111 = sphi 0, %s109
    %s112 = sphi 0, %s111
    %s126 = sphi 0, %s112
    %s130 = sphi 0, %s130
    %s132 = sphi 0, %s130
    %s133 = sphi 0, %s132
    %s147 = sphi 0, %s133
    %s153 = sphi 0, %s155
    %s156 = sphi 0, %s153
    %s157 = sphi 0, %s156
    %s173 = sphi 0, %s157
  $region4: #{s_encoder_forward.15} parent=0 // loop_header_branch
    %15 = sbr.rel (%p13) target = $region8
  $region5: #{s_encoder_forward.15} parent=0 // loop_body
    %s17 = ssub.s32 %s12, 1
    %s18 = ssub.s32 %s12, 2
    %s19 = sadd.s32 %s12, 1
    %s20 = ssub.s32 %s12, %s19
    %p21 = scmp.eq.s32.totalorder %s20, 0
    %s23 = sadd.s32 %s22, 1
    %s24 = scalar_select %p21, %s22, %s23
    %p27 = pneg %p21
    %p28 = scmp.eq.s32.totalorder %s12, 1
    %p29 = por %p27, %p28
    %p30 = scmp.ne.s32.totalorder %s22, %s25
    %p31 = scmp.eq.s32.totalorder %s12, 0
    %p32 = por %p30, %p31
    %p33 = scmp.ne.s32.totalorder %s22, %s25
    %p34 = scmp.eq.s32.totalorder %s17, 1
    %p35 = por %p33, %p34
    %p36 = scmp.ne.s32.totalorder %s25, %s26
    %p37 = scmp.eq.s32.totalorder %s17, 0
    %p38 = por %p36, %p37
    %p39 = scmp.ne.s32.totalorder %s25, %s26
    %p40 = scmp.eq.s32.totalorder %s18, 1
    %p41 = por %p39, %p40
    %p43 = scmp.ne.s32.totalorder %s26, %s42
    %p44 = scmp.eq.s32.totalorder %s18, 0
    %p45 = por %p43, %p44
    %s47 = sadd.s32 %s46, 1
    %p50 = scmp.eq.s32.totalorder %s12, 1
    %p51 = scmp.ne.s32.totalorder %s46, %s48
    %p52 = scmp.eq.s32.totalorder %s12, 0
    %p53 = por %p51, %p52
    %p54 = scmp.ne.s32.totalorder %s46, %s48
    %p55 = scmp.eq.s32.totalorder %s17, 1
    %p56 = por %p54, %p55
    %p57 = scmp.ne.s32.totalorder %s48, %s49
    %p58 = scmp.eq.s32.totalorder %s17, 0
    %p59 = por %p57, %p58
    %p60 = scmp.ne.s32.totalorder %s48, %s49
    %p61 = scmp.eq.s32.totalorder %s18, 1
    %p62 = por %p60, %p61
    %p64 = scmp.ne.s32.totalorder %s49, %s63
    %p65 = scmp.eq.s32.totalorder %s18, 0
    %p66 = por %p64, %p65
    %s68 = sadd.s32 %s67, 1
    %p71 = scmp.eq.s32.totalorder %s12, 1
    %p72 = scmp.ne.s32.totalorder %s67, %s69
    %p73 = scmp.eq.s32.totalorder %s12, 0
    %p74 = por %p72, %p73
    %p75 = scmp.ne.s32.totalorder %s67, %s69
    %p76 = scmp.eq.s32.totalorder %s17, 1
    %p77 = por %p75, %p76
    %p78 = scmp.ne.s32.totalorder %s69, %s70
    %p79 = scmp.eq.s32.totalorder %s17, 0
    %p80 = por %p78, %p79
    %p81 = scmp.ne.s32.totalorder %s69, %s70
    %p82 = scmp.eq.s32.totalorder %s18, 1
    %p83 = por %p81, %p82
    %p85 = scmp.ne.s32.totalorder %s70, %s84
    %p86 = scmp.eq.s32.totalorder %s18, 0
    %p87 = por %p85, %p86
    %s89 = sadd.s32 %s88, 1
    %p92 = scmp.eq.s32.totalorder %s12, 1
    %p93 = scmp.ne.s32.totalorder %s88, %s90
    %p94 = scmp.eq.s32.totalorder %s12, 0
    %p95 = por %p93, %p94
    %p96 = scmp.ne.s32.totalorder %s88, %s90
    %p97 = scmp.eq.s32.totalorder %s17, 1
    %p98 = por %p96, %p97
    %p99 = scmp.ne.s32.totalorder %s90, %s91
    %p100 = scmp.eq.s32.totalorder %s17, 0
    %p101 = por %p99, %p100
    %p102 = scmp.ne.s32.totalorder %s90, %s91
    %p103 = scmp.eq.s32.totalorder %s18, 1
    %p104 = por %p102, %p103
    %p106 = scmp.ne.s32.totalorder %s91, %s105
    %p107 = scmp.eq.s32.totalorder %s18, 0
    %p108 = por %p106, %p107
    %s110 = sadd.s32 %s109, 1
    %p113 = scmp.eq.s32.totalorder %s12, 1
    %p114 = scmp.ne.s32.totalorder %s109, %s111
    %p115 = scmp.eq.s32.totalorder %s12, 0
    %p116 = por %p114, %p115
    %p117 = scmp.ne.s32.totalorder %s109, %s111
    %p118 = scmp.eq.s32.totalorder %s17, 1
    %p119 = por %p117, %p118
    %p120 = scmp.ne.s32.totalorder %s111, %s112
    %p121 = scmp.eq.s32.totalorder %s17, 0
    %p122 = por %p120, %p121
    %p123 = scmp.ne.s32.totalorder %s111, %s112
    %p124 = scmp.eq.s32.totalorder %s18, 1
    %p125 = por %p123, %p124
    %p127 = scmp.ne.s32.totalorder %s112, %s126
    %p128 = scmp.eq.s32.totalorder %s18, 0
    %p129 = por %p127, %p128
    %s131 = sadd.s32 %s130, 1
    %p134 = scmp.eq.s32.totalorder %s12, 1
    %p135 = scmp.ne.s32.totalorder %s130, %s132
    %p136 = scmp.eq.s32.totalorder %s12, 0
    %p137 = por %p135, %p136
    %p138 = scmp.ne.s32.totalorder %s130, %s132
    %p139 = scmp.eq.s32.totalorder %s17, 1
    %p140 = por %p138, %p139
    %p141 = scmp.ne.s32.totalorder %s132, %s133
    %p142 = scmp.eq.s32.totalorder %s17, 0
    %p143 = por %p141, %p142
    %p144 = scmp.ne.s32.totalorder %s132, %s133
    %p145 = scmp.eq.s32.totalorder %s18, 1
    %p146 = por %p144, %p145
    %p148 = scmp.ne.s32.totalorder %s133, %s147
    %p149 = scmp.eq.s32.totalorder %s18, 0
    %p150 = por %p148, %p149
    %s151 = ssub.s32 %s12, %s19
    %p152 = scmp.eq.s32.totalorder %s151, 0
    %s154 = sadd.s32 %s153, 1
    %s155 = scalar_select %p152, %s153, %s154
    %p158 = pneg %p152
    %p159 = scmp.eq.s32.totalorder %s12, 1
    %p160 = por %p158, %p159
    %p161 = scmp.ne.s32.totalorder %s153, %s156
    %p162 = scmp.eq.s32.totalorder %s12, 0
    %p163 = por %p161, %p162
    %p164 = scmp.ne.s32.totalorder %s153, %s156
    %p165 = scmp.eq.s32.totalorder %s17, 1
    %p166 = por %p164, %p165
    %p167 = scmp.ne.s32.totalorder %s156, %s157
    %p168 = scmp.eq.s32.totalorder %s17, 0
    %p169 = por %p167, %p168
    %p170 = scmp.ne.s32.totalorder %s156, %s157
    %p171 = scmp.eq.s32.totalorder %s18, 1
    %p172 = por %p170, %p171
    %p174 = scmp.ne.s32.totalorder %s157, %s173
    %p175 = scmp.eq.s32.totalorder %s18, 0
    %p176 = por %p174, %p175
    %p177 = scmp.le.s32.totalorder 1, %s12
    %p178 = scmp.lt.s32.totalorder %s12, 3
    %p179 = pnand %p177, %p178
    %p180 = pneg %p179
    // Predicated region
    $region9: #{s_encoder_forward.15} parent=5 // pred_check
      _
    $region10: #{s_encoder_forward.15} parent=5 // pred_check_branch
      %182 = sbr.rel (%p179) target = $region12
    $region11: #{s_encoder_forward.15} parent=5 // pred_region
      %s183 = ssub.s32 %s12, 1
      // Predicated region
      $region13: #{s_encoder_forward.15} parent=11 // pred_check
        %p184 = pneg %p59
      $region14: #{s_encoder_forward.15} parent=11 // pred_check_branch
        %186 = sbr.rel (%p184) target = $region16
      $region15: #{s_encoder_forward.15} parent=11 // pred_region
        _
      $region16: #{s_encoder_forward.15} parent=11 // pred_fallthru
        _
      // Predicated region
      $region17: #{s_encoder_forward.15} parent=11 // pred_check
        %p187 = pneg %p80
      $region18: #{s_encoder_forward.15} parent=11 // pred_check_branch
        %189 = sbr.rel (%p187) target = $region20
      $region19: #{s_encoder_forward.15} parent=11 // pred_region
        _
      $region20: #{s_encoder_forward.15} parent=11 // pred_fallthru
        _
      // Predicated region
      $region21: #{s_encoder_forward.15} parent=11 // pred_check
        %p190 = pneg %p101
      $region22: #{s_encoder_forward.15} parent=11 // pred_check_branch
        %192 = sbr.rel (%p190) target = $region24
      $region23: #{s_encoder_forward.15} parent=11 // pred_region
        _
      $region24: #{s_encoder_forward.15} parent=11 // pred_fallthru
        _
      // Predicated region
      $region25: #{s_encoder_forward.15} parent=11 // pred_check
        %p193 = pneg %p122
      $region26: #{s_encoder_forward.15} parent=11 // pred_check_branch
        %195 = sbr.rel (%p193) target = $region28
      $region27: #{s_encoder_forward.15} parent=11 // pred_region
        _
      $region28: #{s_encoder_forward.15} parent=11 // pred_fallthru
        _
      // Predicated region
      $region29: #{s_encoder_forward.15} parent=11 // pred_check
        %p196 = pneg %p143
      $region30: #{s_encoder_forward.15} parent=11 // pred_check_branch
        %198 = sbr.rel (%p196) target = $region32
      $region31: #{s_encoder_forward.15} parent=11 // pred_region
        _
      $region32: #{s_encoder_forward.15} parent=11 // pred_fallthru
        _
    $region12: #{s_encoder_forward.15} parent=5 // pred_fallthru
      _
    %p199 = scmp.lt.s32.totalorder %s12, 2
    // Predicated region
    $region33: #{s_encoder_forward.15} parent=5 // pred_check
      %p200 = pneg %p199
    $region34: #{s_encoder_forward.15} parent=5 // pred_check_branch
      %202 = sbr.rel (%p200) target = $region36
    $region35: #{s_encoder_forward.15} parent=5 // pred_region
      // Predicated region
      $region37: #{s_encoder_forward.15} parent=35 // pred_check
        %p203 = pneg %p32
      $region38: #{s_encoder_forward.15} parent=35 // pred_check_branch
        %205 = sbr.rel (%p203) target = $region40
      $region39: #{s_encoder_forward.15} parent=35 // pred_region
        %p206 = scmp.lt.s32.totalorder %s12, 1
        %s207 = scalar_select %p206, %s12, 1
        %s208 = smul.addr %s207, 16
        %s209 = smul.addr %s208, 4
        %s210 = scalar_lea.vmem %s0, %s209
      $region40: #{s_encoder_forward.15} parent=35 // pred_fallthru
        _
    $region36: #{s_encoder_forward.15} parent=5 // pred_fallthru
      _
    %p211 = scmp.le.s32.totalorder 1, %s12
    %p212 = scmp.lt.s32.totalorder %s12, 3
    %p213 = pnand %p211, %p212
    %p214 = pneg %p213
    // Predicated region
    $region41: #{s_encoder_forward.15} parent=5 // pred_check
      _
    $region42: #{s_encoder_forward.15} parent=5 // pred_check_branch
      %216 = sbr.rel (%p213) target = $region44
    $region43: #{s_encoder_forward.15} parent=5 // pred_region
      %s217 = ssub.s32 %s12, 1
      %p218 = scmp.lt.s32.totalorder %s17, 1
      %s219 = scalar_select %p218, %s17, 1
      %s220 = smul.addr %s219, 16
      %s221 = smul.addr %s220, 4
      %s222 = scalar_lea.vmem %s0, %s221
      %p223 = pneg %p38
      %p224 = pneg %p35
      %p225 = pneg %p59
      %p226 = pneg %p56
      %p227 = pneg %p80
      %p228 = pneg %p77
      %p229 = pneg %p101
      %p230 = pneg %p98
      %p231 = pneg %p122
      %p232 = pneg %p119
      %p233 = pneg %p143
      %p234 = pneg %p140
      %p235 = pneg %p169
      %p236 = pneg %p166
      %p237 = scmp.lt.s32.totalorder %s17, 1
      %s238 = scalar_select %p237, %s17, 1
      %s239 = smul.addr %s238, 8
      %s240 = smul.addr %s239, 4
      %s241 = scalar_lea.vmem %s6, %s240
      %p242 = scmp.lt.s32.totalorder %s17, 1
      %s243 = scalar_select %p242, %s17, 1
      %s244 = smul.addr %s243, 16
      %s245 = smul.addr %s244, 4
      %s246 = scalar_lea.vmem %s0, %s245
      %p247 = scmp.lt.s32.totalorder %s17, 1
      %s248 = scalar_select %p247, %s17, 1
      %s249 = smul.addr %s248, 8
      %s250 = smul.addr %s249, 4
      %s251 = scalar_lea.vmem %s6, %s250
      %v253 = vld [vmem:[%s246] sm:$0xff]
      %v254 = vld [vmem:[%s246 + $0x8] sm:$0xff]
      %v255 = vld [vmem:[%s246 + $0x10] sm:$0xff]
      %v256 = vld [vmem:[%s246 + $0x18] sm:$0xff]
      %v257 = vld [vmem:[%s246 + $0x20] sm:$0xff]
      %v258 = vld [vmem:[%s246 + $0x28] sm:$0xff]
      %v259 = vld [vmem:[%s246 + $0x30] sm:$0xff]
      %v260 = vld [vmem:[%s246 + $0x38] sm:$0xff]
      %v261 = vunpack.c.l.bf16 %v253
      %v262 = vunpack.c.h.bf16 %v253
      %v263 = vunpack.c.l.bf16 %v254
      %v264 = vunpack.c.h.bf16 %v254
      %v265 = vunpack.c.l.bf16 %v255
      %v266 = vunpack.c.h.bf16 %v255
      %v267 = vunpack.c.l.bf16 %v256
      %v268 = vunpack.c.h.bf16 %v256
      %v269 = vunpack.c.l.bf16 %v257
      %v270 = vunpack.c.h.bf16 %v257
      %v271 = vunpack.c.l.bf16 %v258
      %v272 = vunpack.c.h.bf16 %v258
      %v273 = vunpack.c.l.bf16 %v259
      %v274 = vunpack.c.h.bf16 %v259
      %v275 = vunpack.c.l.bf16 %v260
      %v276 = vunpack.c.h.bf16 %v260
      %v277 = vld [vmem:[%s3] sm:$0xff]
      %v278 = vld [vmem:[%s3 + $0x8] sm:$0xff]
      %v279 = vld [vmem:[%s3 + $0x10] sm:$0xff]
      %v280 = vld [vmem:[%s3 + $0x18] sm:$0xff]
      %v281 = vld [vmem:[%s3 + $0x20] sm:$0xff]
      %v282 = vld [vmem:[%s3 + $0x28] sm:$0xff]
      %v283 = vld [vmem:[%s3 + $0x30] sm:$0xff]
      %v284 = vld [vmem:[%s3 + $0x38] sm:$0xff]
      %v285 = vld [vmem:[%s3 + $0x40] sm:$0xff]
      %v286 = vld [vmem:[%s3 + $0x48] sm:$0xff]
      %v287 = vld [vmem:[%s3 + $0x50] sm:$0xff]
      %v288 = vld [vmem:[%s3 + $0x58] sm:$0xff]
      %v289 = vld [vmem:[%s3 + $0x60] sm:$0xff]
      %v290 = vld [vmem:[%s3 + $0x68] sm:$0xff]
      %v291 = vld [vmem:[%s3 + $0x70] sm:$0xff]
      %v292 = vld [vmem:[%s3 + $0x78] sm:$0xff]
      %v293 = vmul.f32 %v261, %v277
      %v294 = vmul.f32 %v262, %v278
      %v295 = vmul.f32 %v263, %v279
      %v296 = vmul.f32 %v264, %v280
      %v297 = vmul.f32 %v265, %v281
      %v298 = vmul.f32 %v266, %v282
      %v299 = vmul.f32 %v267, %v283
      %v300 = vmul.f32 %v268, %v284
      %v301 = vmul.f32 %v269, %v285
      %v302 = vmul.f32 %v270, %v286
      %v303 = vmul.f32 %v271, %v287
      %v304 = vmul.f32 %v272, %v288
      %v305 = vmul.f32 %v273, %v289
      %v306 = vmul.f32 %v274, %v290
      %v307 = vmul.f32 %v275, %v291
      %v308 = vmul.f32 %v276, %v292
      %v309 = vadd.f32 %v293, %v294
      %v310 = vadd.f32 %v309, %v295
      %v311 = vadd.f32 %v310, %v296
      %v312 = vadd.f32 %v311, %v297
      %v313 = vadd.f32 %v312, %v298
      %v314 = vadd.f32 %v313, %v299
      %v315 = vadd.f32 %v314, %v300
      %v316 = vadd.f32 %v315, %v301
      %v317 = vadd.f32 %v316, %v302
      %v318 = vadd.f32 %v317, %v303
      %v319 = vadd.f32 %v318, %v304
      %v320 = vadd.f32 %v319, %v305
      %v321 = vadd.f32 %v320, %v306
      %v322 = vadd.f32 %v321, %v307
      %v323 = vadd.f32 %v322, %v308
      %324 = vadd.xlane.f32.xlu0 %v323
      %v325 = vpop.xlane.xlu0 %324
      %v326 = vrot.slane %v325, 4
      %v327 = vadd.f32 %v325, %v326
      %v328 = vrot.slane %v327, 2
      %v329 = vadd.f32 %v327, %v328
      %v330 = vrot.slane %v329, 1
      %v331 = vadd.f32 %v329, %v330
      %s332 = vtos %v331
      %v333 = vstv %s332
      %v334 = vrcp.pop 1024.0
      %v335 = vmul.f32 %v333, %v334
      %v336 = vsub.f32 %v261, %v335
      %v337 = vsub.f32 %v262, %v335
      %v338 = vsub.f32 %v263, %v335
      %v339 = vsub.f32 %v264, %v335
      %v340 = vsub.f32 %v265, %v335
      %v341 = vsub.f32 %v266, %v335
      %v342 = vsub.f32 %v267, %v335
      %v343 = vsub.f32 %v268, %v335
      %v344 = vsub.f32 %v269, %v335
      %v345 = vsub.f32 %v270, %v335
      %v346 = vsub.f32 %v271, %v335
      %v347 = vsub.f32 %v272, %v335
      %v348 = vsub.f32 %v273, %v335
      %v349 = vsub.f32 %v274, %v335
      %v350 = vsub.f32 %v275, %v335
      %v351 = vsub.f32 %v276, %v335
      %v352 = vmul.f32 %v336, %v277
      %v353 = vmul.f32 %v337, %v278
      %v354 = vmul.f32 %v338, %v279
      %v355 = vmul.f32 %v339, %v280
      %v356 = vmul.f32 %v340, %v281
      %v357 = vmul.f32 %v341, %v282
      %v358 = vmul.f32 %v342, %v283
      %v359 = vmul.f32 %v343, %v284
      %v360 = vmul.f32 %v344, %v285
      %v361 = vmul.f32 %v345, %v286
      %v362 = vmul.f32 %v346, %v287
      %v363 = vmul.f32 %v347, %v288
      %v364 = vmul.f32 %v348, %v289
      %v365 = vmul.f32 %v349, %v290
      %v366 = vmul.f32 %v350, %v291
      %v367 = vmul.f32 %v351, %v292
      %v368 = vmul.f32 %v352, %v352
      %v369 = vmul.f32 %v353, %v353
      %v370 = vmul.f32 %v354, %v354
      %v371 = vmul.f32 %v355, %v355
      %v372 = vmul.f32 %v356, %v356
      %v373 = vmul.f32 %v357, %v357
      %v374 = vmul.f32 %v358, %v358
      %v375 = vmul.f32 %v359, %v359
      %v376 = vmul.f32 %v360, %v360
      %v377 = vmul.f32 %v361, %v361
      %v378 = vmul.f32 %v362, %v362
      %v379 = vmul.f32 %v363, %v363
      %v380 = vmul.f32 %v364, %v364
      %v381 = vmul.f32 %v365, %v365
      %v382 = vmul.f32 %v366, %v366
      %v383 = vmul.f32 %v367, %v367
      %v384 = vadd.f32 %v368, %v369
      %v385 = vadd.f32 %v384, %v370
      %v386 = vadd.f32 %v385, %v371
      %v387 = vadd.f32 %v386, %v372
      %v388 = vadd.f32 %v387, %v373
      %v389 = vadd.f32 %v388, %v374
      %v390 = vadd.f32 %v389, %v375
      %v391 = vadd.f32 %v390, %v376
      %v392 = vadd.f32 %v391, %v377
      %v393 = vadd.f32 %v392, %v378
      %v394 = vadd.f32 %v393, %v379
      %v395 = vadd.f32 %v394, %v380
      %v396 = vadd.f32 %v395, %v381
      %v397 = vadd.f32 %v396, %v382
      %v398 = vadd.f32 %v397, %v383
      %399 = vadd.xlane.f32.xlu0 %v398
      %v400 = vpop.xlane.xlu0 %399
      %v401 = vrot.slane %v400, 4
      %v402 = vadd.f32 %v400, %v401
      %v403 = vrot.slane %v402, 2
      %v404 = vadd.f32 %v402, %v403
      %v405 = vrot.slane %v404, 1
      %v406 = vadd.f32 %v404, %v405
      %s407 = vtos %v406
      %v408 = vstv %s407
      %v409 = vrcp.pop 1023.0
      %v410 = vmul.f32 %v408, %v409
      %v411 = vrsqrt.pop %v410
      %v412 = vmul.f32 %v410, %v411
      %vm413 = vcmp.eq.f32.partialorder %v410, inf
      %v414 = vsel %vm413, %v410, %v412
      %vm415 = vcmp.eq.f32.partialorder %v410, 0.0
      %v416 = vand.u32 %v410, 2147483648
      %v417 = vsel %vm415, %v416, %v414
      %v418 = vadd.f32 %v417, 1e-05
      %v419 = vrcp.pop %v418
      %v420 = vmul.f32 1.0, %v419
      %v421 = vmul.f32 %v336, %v420
      %v422 = vmul.f32 %v337, %v420
      %v423 = vmul.f32 %v338, %v420
      %v424 = vmul.f32 %v339, %v420
      %v425 = vmul.f32 %v340, %v420
      %v426 = vmul.f32 %v341, %v420
      %v427 = vmul.f32 %v342, %v420
      %v428 = vmul.f32 %v343, %v420
      %v429 = vmul.f32 %v344, %v420
      %v430 = vmul.f32 %v345, %v420
      %v431 = vmul.f32 %v346, %v420
      %v432 = vmul.f32 %v347, %v420
      %v433 = vmul.f32 %v348, %v420
      %v434 = vmul.f32 %v349, %v420
      %v435 = vmul.f32 %v350, %v420
      %v436 = vmul.f32 %v351, %v420
      %v437 = vld [vmem:[%s4] sm:$0xff]
      %v438 = vld [vmem:[%s4 + $0x8] sm:$0xff]
      %v439 = vld [vmem:[%s4 + $0x10] sm:$0xff]
      %v440 = vld [vmem:[%s4 + $0x18] sm:$0xff]
      %v441 = vld [vmem:[%s4 + $0x20] sm:$0xff]
      %v442 = vld [vmem:[%s4 + $0x28] sm:$0xff]
      %v443 = vld [vmem:[%s4 + $0x30] sm:$0xff]
      %v444 = vld [vmem:[%s4 + $0x38] sm:$0xff]
      %446 = vset.pattern.permute.xlu0 0
      %447 = vperm.xlu0 %446, %v437
      %v448 = vpop.permute.xlu0 %447
      %451 = vset.pattern.permute.xlu0 0
      %452 = vperm.xlu0 %451, %v438
      %v453 = vpop.permute.xlu0 %452
      %456 = vset.pattern.permute.xlu0 0
      %457 = vperm.xlu0 %456, %v439
      %v458 = vpop.permute.xlu0 %457
      %461 = vset.pattern.permute.xlu0 0
      %462 = vperm.xlu0 %461, %v440
      %v463 = vpop.permute.xlu0 %462
      %466 = vset.pattern.permute.xlu0 0
      %467 = vperm.xlu0 %466, %v441
      %v468 = vpop.permute.xlu0 %467
      %471 = vset.pattern.permute.xlu0 0
      %472 = vperm.xlu0 %471, %v442
      %v473 = vpop.permute.xlu0 %472
      %476 = vset.pattern.permute.xlu0 0
      %477 = vperm.xlu0 %476, %v443
      %v478 = vpop.permute.xlu0 %477
      %481 = vset.pattern.permute.xlu0 0
      %482 = vperm.xlu0 %481, %v444
      %v483 = vpop.permute.xlu0 %482
      %v485 = vmul.f32 %v421, %v448
      %v486 = vmul.f32 %v422, %v448
      %v487 = vmul.f32 %v423, %v453
      %v488 = vmul.f32 %v424, %v453
      %v489 = vmul.f32 %v425, %v458
      %v490 = vmul.f32 %v426, %v458
      %v491 = vmul.f32 %v427, %v463
      %v492 = vmul.f32 %v428, %v463
      %v493 = vmul.f32 %v429, %v468
      %v494 = vmul.f32 %v430, %v468
      %v495 = vmul.f32 %v431, %v473
      %v496 = vmul.f32 %v432, %v473
      %v497 = vmul.f32 %v433, %v478
      %v498 = vmul.f32 %v434, %v478
      %v499 = vmul.f32 %v435, %v483
      %v500 = vmul.f32 %v436, %v483
      %v501 = vld [vmem:[%s5] sm:$0xff]
      %v502 = vld [vmem:[%s5 + $0x8] sm:$0xff]
      %v503 = vld [vmem:[%s5 + $0x10] sm:$0xff]
      %v504 = vld [vmem:[%s5 + $0x18] sm:$0xff]
      %v505 = vld [vmem:[%s5 + $0x20] sm:$0xff]
      %v506 = vld [vmem:[%s5 + $0x28] sm:$0xff]
      %v507 = vld [vmem:[%s5 + $0x30] sm:$0xff]
      %v508 = vld [vmem:[%s5 + $0x38] sm:$0xff]
      %510 = vset.pattern.permute.xlu0 0
      %511 = vperm.xlu0 %510, %v501
      %v512 = vpop.permute.xlu0 %511
      %515 = vset.pattern.permute.xlu0 0
      %516 = vperm.xlu0 %515, %v502
      %v517 = vpop.permute.xlu0 %516
      %520 = vset.pattern.permute.xlu0 0
      %521 = vperm.xlu0 %520, %v503
      %v522 = vpop.permute.xlu0 %521
      %525 = vset.pattern.permute.xlu0 0
      %526 = vperm.xlu0 %525, %v504
      %v527 = vpop.permute.xlu0 %526
      %530 = vset.pattern.permute.xlu0 0
      %531 = vperm.xlu0 %530, %v505
      %v532 = vpop.permute.xlu0 %531
      %535 = vset.pattern.permute.xlu0 0
      %536 = vperm.xlu0 %535, %v506
      %v537 = vpop.permute.xlu0 %536
      %540 = vset.pattern.permute.xlu0 0
      %541 = vperm.xlu0 %540, %v507
      %v542 = vpop.permute.xlu0 %541
      %545 = vset.pattern.permute.xlu0 0
      %546 = vperm.xlu0 %545, %v508
      %v547 = vpop.permute.xlu0 %546
      %v549 = vadd.f32 %v485, %v512
      %v550 = vadd.f32 %v486, %v512
      %v551 = vadd.f32 %v487, %v517
      %v552 = vadd.f32 %v488, %v517
      %v553 = vadd.f32 %v489, %v522
      %v554 = vadd.f32 %v490, %v522
      %v555 = vadd.f32 %v491, %v527
      %v556 = vadd.f32 %v492, %v527
      %v557 = vadd.f32 %v493, %v532
      %v558 = vadd.f32 %v494, %v532
      %v559 = vadd.f32 %v495, %v537
      %v560 = vadd.f32 %v496, %v537
      %v561 = vadd.f32 %v497, %v542
      %v562 = vadd.f32 %v498, %v542
      %v563 = vadd.f32 %v499, %v547
      %v564 = vadd.f32 %v500, %v547
      %v565 = vmax.f32 %v549, 0.0
      %v566 = vmax.f32 %v550, 0.0
      %v567 = vmax.f32 %v551, 0.0
      %v568 = vmax.f32 %v552, 0.0
      %v569 = vmax.f32 %v553, 0.0
      %v570 = vmax.f32 %v554, 0.0
      %v571 = vmax.f32 %v555, 0.0
      %v572 = vmax.f32 %v556, 0.0
      %v573 = vmax.f32 %v557, 0.0
      %v574 = vmax.f32 %v558, 0.0
      %v575 = vmax.f32 %v559, 0.0
      %v576 = vmax.f32 %v560, 0.0
      %v577 = vmax.f32 %v561, 0.0
      %v578 = vmax.f32 %v562, 0.0
      %v579 = vmax.f32 %v563, 0.0
      %v580 = vmax.f32 %v564, 0.0
      %v581 = vpack.c.bf16 %v567, %v565
      %v582 = vpack.c.bf16 %v568, %v566
      %v583 = vpack.c.bf16 %v571, %v569
      %v584 = vpack.c.bf16 %v572, %v570
      %v585 = vpack.c.bf16 %v575, %v573
      %v586 = vpack.c.bf16 %v576, %v574
      %v587 = vpack.c.bf16 %v579, %v577
      %v588 = vpack.c.bf16 %v580, %v578
      %v589 = vld [vmem:[%s1] sm:$0xf]
      %v590 = vld [vmem:[%s1 + $0x4] sm:$0xf]
      %v591 = vld [vmem:[%s1 + $0x8] sm:$0xf]
      %v592 = vld [vmem:[%s1 + $0xc] sm:$0xf]
      %v593 = vld [vmem:[%s1 + $0x10] sm:$0xf]
      %v594 = vld [vmem:[%s1 + $0x14] sm:$0xf]
      %v595 = vld [vmem:[%s1 + $0x18] sm:$0xf]
      %v596 = vld [vmem:[%s1 + $0x1c] sm:$0xf]
      %s597 = scalar_lea.vmem %s1, 32
      %v598 = vld [vmem:[%s597] sm:$0xf]
      %v599 = vld [vmem:[%s597 + $0x4] sm:$0xf]
      %v600 = vld [vmem:[%s597 + $0x8] sm:$0xf]
      %v601 = vld [vmem:[%s597 + $0xc] sm:$0xf]
      %v602 = vld [vmem:[%s597 + $0x10] sm:$0xf]
      %v603 = vld [vmem:[%s597 + $0x14] sm:$0xf]
      %v604 = vld [vmem:[%s597 + $0x18] sm:$0xf]
      %v605 = vld [vmem:[%s597 + $0x1c] sm:$0xf]
      %v614 = vunpack.c.l.b16 %v598
      %v615 = vunpack.c.l.b16 %v599
      %v616 = vunpack.c.l.b16 %v600
      %v617 = vunpack.c.l.b16 %v601
      %v618 = vunpack.c.l.b16 %v602
      %v619 = vunpack.c.l.b16 %v603
      %v620 = vunpack.c.l.b16 %v604
      %v621 = vunpack.c.l.b16 %v605
      %v622 = vpack.c.b16 %v615, %v614
      %v623 = vpack.c.b16 %v617, %v616
      %v624 = vpack.c.b16 %v619, %v618
      %v625 = vpack.c.b16 %v621, %v620
      %634 = vrot.lane.b32.xlu0 %v581, 127
      %v635 = vpop.permute.xlu0 %634
      %636 = vrot.lane.b32.xlu0 %v582, 127
      %v637 = vpop.permute.xlu0 %636
      %638 = vrot.lane.b32.xlu0 %v583, 127
      %v639 = vpop.permute.xlu0 %638
      %640 = vrot.lane.b32.xlu0 %v584, 127
      %v641 = vpop.permute.xlu0 %640
      %642 = vrot.lane.b32.xlu0 %v585, 127
      %v643 = vpop.permute.xlu0 %642
      %644 = vrot.lane.b32.xlu0 %v586, 127
      %v645 = vpop.permute.xlu0 %644
      %646 = vrot.lane.b32.xlu0 %v587, 127
      %v647 = vpop.permute.xlu0 %646
      %648 = vrot.lane.b32.xlu0 %v588, 127
      %v649 = vpop.permute.xlu0 %648
      %vm650 = vcmask 1039360
      %v651 = vsel %vm650, %v635, %v637
      %v652 = vsel %vm650, %v639, %v641
      %v653 = vsel %vm650, %v643, %v645
      %v654 = vsel %vm650, %v647, %v649
      %vm659 = vcmask 523264
      %v661 = vsel %vm659, %v622, 0
      %v664 = vsel %vm659, %v623, 0
      %v667 = vsel %vm659, %v624, 0
      %v670 = vsel %vm659, %v625, 0
      %672 = vmatprep.subr.bf16.mxu0 0
      %673 = vmatpush1.bf16.msra.mxu0 %v651
      %674 = vmatprep.subr.bf16.mxu0 0
      %675 = vmatpush1.bf16.msra.mxu0 %v652
      %676 = vmatprep.subr.bf16.mxu0 0
      %677 = vmatpush1.bf16.msra.mxu0 %v653
      %678 = vmatprep.subr.bf16.mxu0 0
      %679 = vmatpush1.bf16.msra.mxu0 %v654
      %680 = vmatprep.subr.bf16.mxu0 0
      %681 = vmatpush1.bf16.msra.mxu0 0
      %682 = vmatprep.subr.bf16.mxu0 0
      %683 = vmatpush1.bf16.msra.mxu0 0
      %684 = vmatprep.subr.bf16.mxu0 0
      %685 = vmatpush1.bf16.msra.mxu0 0
      %686 = vmatprep.subr.bf16.mxu0 0
      %687 = vmatpush1.bf16.msra.mxu0 0
      %688 = vmatprep.subr.bf16.mxu0 0
      %689 = vmatpush1.bf16.msra.mxu0 0
      %690 = vmatprep.subr.bf16.mxu0 0
      %691 = vmatpush1.bf16.msra.mxu0 0
      %692 = vmatprep.subr.bf16.mxu0 0
      %693 = vmatpush1.bf16.msra.mxu0 0
      %694 = vmatprep.subr.bf16.mxu0 0
      %695 = vmatpush1.bf16.msra.mxu0 0
      %696 = vmatprep.subr.bf16.mxu0 0
      %697 = vmatpush1.bf16.msra.mxu0 0
      %698 = vmatprep.subr.bf16.mxu0 0
      %699 = vmatpush1.bf16.msra.mxu0 0
      %700 = vmatprep.subr.bf16.mxu0 0
      %701 = vmatpush1.bf16.msra.mxu0 0
      %702 = vmatprep.subr.bf16.mxu0 0
      %703 = vmatpush1.bf16.msra.mxu0 0
      %704 = vmatprep.mubr.bf16.mxu0 0
      %705 = vmatmul.mubr.bf16.gmra.mrb[0].mxu0 %v661
      %v706 = vpop.f32.mrb[0].mxu0
      %v707 = vadd.f32 0.0, %v706
      %v708 = vpop.f32.mrb[0].mxu0
      %v709 = vpop.f32.mrb[0].mxu0
      %v710 = vadd.f32 0.0, %v709
      %v711 = vpop.f32.mrb[0].mxu0
      %712 = vmatprep.mubr.bf16.mxu0 0
      %713 = vmatmul.mubr.bf16.gmra.mrb[0].mxu0 %v664
      %v714 = vpop.f32.mrb[0].mxu0
      %v715 = vadd.f32 0.0, %v714
      %v716 = vpop.f32.mrb[0].mxu0
      %v717 = vpop.f32.mrb[0].mxu0
      %v718 = vadd.f32 0.0, %v717
      %v719 = vpop.f32.mrb[0].mxu0
      %720 = vmatprep.mubr.bf16.mxu0 0
      %721 = vmatmul.mubr.bf16.gmra.mrb[0].mxu0 %v667
      %v722 = vpop.f32.mrb[0].mxu0
      %v723 = vadd.f32 0.0, %v722
      %v724 = vpop.f32.mrb[0].mxu0
      %v725 = vpop.f32.mrb[0].mxu0
      %v726 = vadd.f32 0.0, %v725
      %v727 = vpop.f32.mrb[0].mxu0
      %728 = vmatprep.mubr.bf16.mxu0 0
      %729 = vmatmul.mubr.bf16.gmra.mrb[0].mxu0 %v670
      %v730 = vpop.f32.mrb[0].mxu0
      %v731 = vadd.f32 0.0, %v730
      %v732 = vpop.f32.mrb[0].mxu0
      %v733 = vpop.f32.mrb[0].mxu0
      %v734 = vadd.f32 0.0, %v733
      %v735 = vpop.f32.mrb[0].mxu0
      %736 = vdwg.mxu0
      %v745 = vunpack.c.l.b16 %v589
      %v746 = vunpack.c.l.b16 %v590
      %v747 = vunpack.c.l.b16 %v591
      %v748 = vunpack.c.l.b16 %v592
      %v749 = vunpack.c.l.b16 %v593
      %v750 = vunpack.c.l.b16 %v594
      %v751 = vunpack.c.l.b16 %v595
      %v752 = vunpack.c.l.b16 %v596
      %v753 = vpack.c.b16 %v746, %v745
      %v754 = vpack.c.b16 %v748, %v747
      %v755 = vpack.c.b16 %v750, %v749
      %v756 = vpack.c.b16 %v752, %v751
      %v758 = vsel %vm659, %v753, 0
      %v761 = vsel %vm659, %v754, 0
      %v764 = vsel %vm659, %v755, 0
      %v767 = vsel %vm659, %v756, 0
      %769 = vmatprep.subr.bf16.mxu0 0
      %770 = vmatpush1.bf16.msra.mxu0 %v581
      %771 = vmatprep.subr.bf16.mxu0 0
      %772 = vmatpush1.bf16.msra.mxu0 %v583
      %773 = vmatprep.subr.bf16.mxu0 0
      %774 = vmatpush1.bf16.msra.mxu0 %v585
      %775 = vmatprep.subr.bf16.mxu0 0
      %776 = vmatpush1.bf16.msra.mxu0 %v587
      %777 = vmatprep.subr.bf16.mxu0 0
      %778 = vmatpush1.bf16.msra.mxu0 0
      %779 = vmatprep.subr.bf16.mxu0 0
      %780 = vmatpush1.bf16.msra.mxu0 0
      %781 = vmatprep.subr.bf16.mxu0 0
      %782 = vmatpush1.bf16.msra.mxu0 0
      %783 = vmatprep.subr.bf16.mxu0 0
      %784 = vmatpush1.bf16.msra.mxu0 0
      %785 = vmatprep.subr.bf16.mxu0 0
      %786 = vmatpush1.bf16.msra.mxu0 0
      %787 = vmatprep.subr.bf16.mxu0 0
      %788 = vmatpush1.bf16.msra.mxu0 0
      %789 = vmatprep.subr.bf16.mxu0 0
      %790 = vmatpush1.bf16.msra.mxu0 0
      %791 = vmatprep.subr.bf16.mxu0 0
      %792 = vmatpush1.bf16.msra.mxu0 0
      %793 = vmatprep.subr.bf16.mxu0 0
      %794 = vmatpush1.bf16.msra.mxu0 0
      %795 = vmatprep.subr.bf16.mxu0 0
      %796 = vmatpush1.bf16.msra.mxu0 0
      %797 = vmatprep.subr.bf16.mxu0 0
      %798 = vmatpush1.bf16.msra.mxu0 0
      %799 = vmatprep.subr.bf16.mxu0 0
      %800 = vmatpush1.bf16.msra.mxu0 0
      %801 = vmatprep.mubr.bf16.mxu0 0
      %802 = vmatmul.mubr.bf16.gmra.mrb[0].mxu0 %v758
      %v803 = vpop.f32.mrb[0].mxu0
      %v804 = vadd.f32 %v707, %v803
      %v805 = vpop.f32.mrb[0].mxu0
      %v806 = vpop.f32.mrb[0].mxu0
      %v807 = vadd.f32 %v710, %v806
      %v808 = vpop.f32.mrb[0].mxu0
      %809 = vmatprep.mubr.bf16.mxu0 0
      %810 = vmatmul.mubr.bf16.gmra.mrb[0].mxu0 %v761
      %v811 = vpop.f32.mrb[0].mxu0
      %v812 = vadd.f32 %v715, %v811
      %v813 = vpop.f32.mrb[0].mxu0
      %v814 = vpop.f32.mrb[0].mxu0
      %v815 = vadd.f32 %v718, %v814
      %v816 = vpop.f32.mrb[0].mxu0
      %817 = vmatprep.mubr.bf16.mxu0 0
      %818 = vmatmul.mubr.bf16.gmra.mrb[0].mxu0 %v764
      %v819 = vpop.f32.mrb[0].mxu0
      %v820 = vadd.f32 %v723, %v819
      %v821 = vpop.f32.mrb[0].mxu0
      %v822 = vpop.f32.mrb[0].mxu0
      %v823 = vadd.f32 %v726, %v822
      %v824 = vpop.f32.mrb[0].mxu0
      %825 = vmatprep.mubr.bf16.mxu0 0
      %826 = vmatmul.mubr.bf16.gmra.mrb[0].mxu0 %v767
      %v827 = vpop.f32.mrb[0].mxu0
      %v828 = vadd.f32 %v731, %v827
      %v829 = vpop.f32.mrb[0].mxu0
      %v830 = vpop.f32.mrb[0].mxu0
      %v831 = vadd.f32 %v734, %v830
      %v832 = vpop.f32.mrb[0].mxu0
      %833 = vdwg.mxu0
      %s834 = scalar_lea.vmem %s1, 64
      %v835 = vld [vmem:[%s834] sm:$0xf]
      %v836 = vld [vmem:[%s834 + $0x4] sm:$0xf]
      %v837 = vld [vmem:[%s834 + $0x8] sm:$0xf]
      %v838 = vld [vmem:[%s834 + $0xc] sm:$0xf]
      %v839 = vld [vmem:[%s834 + $0x10] sm:$0xf]
      %v840 = vld [vmem:[%s834 + $0x14] sm:$0xf]
      %v841 = vld [vmem:[%s834 + $0x18] sm:$0xf]
      %v842 = vld [vmem:[%s834 + $0x1c] sm:$0xf]
      %v851 = vunpack.c.l.b16 %v835
      %v852 = vunpack.c.l.b16 %v836
      %v853 = vunpack.c.l.b16 %v837
      %v854 = vunpack.c.l.b16 %v838
      %v855 = vunpack.c.l.b16 %v839
      %v856 = vunpack.c.l.b16 %v840
      %v857 = vunpack.c.l.b16 %v841
      %v858 = vunpack.c.l.b16 %v842
      %v859 = vpack.c.b16 %v852, %v851
      %v860 = vpack.c.b16 %v854, %v853
      %v861 = vpack.c.b16 %v856, %v855
      %v862 = vpack.c.b16 %v858, %v857
      %863 = vrot.lane.b32.xlu0 %v581, 126
      %v864 = vpop.permute.xlu0 %863
      %865 = vrot.lane.b32.xlu0 %v582, 126
      %v866 = vpop.permute.xlu0 %865
      %867 = vrot.lane.b32.xlu0 %v583, 126
      %v868 = vpop.permute.xlu0 %867
      %869 = vrot.lane.b32.xlu0 %v584, 126
      %v870 = vpop.permute.xlu0 %869
      %871 = vrot.lane.b32.xlu0 %v585, 126
      %v872 = vpop.permute.xlu0 %871
      %873 = vrot.lane.b32.xlu0 %v586, 126
      %v874 = vpop.permute.xlu0 %873
      %875 = vrot.lane.b32.xlu0 %v587, 126
      %v876 = vpop.permute.xlu0 %875
      %877 = vrot.lane.b32.xlu0 %v588, 126
      %v878 = vpop.permute.xlu0 %877
      %vm879 = vcmask 1031168
      %v880 = vsel %vm879, %v864, %v866
      %v881 = vsel %vm879, %v868, %v870
      %v882 = vsel %vm879, %v872, %v874
      %v883 = vsel %vm879, %v876, %v878
      %v889 = vsel %vm659, %v859, 0
      %v892 = vsel %vm659, %v860, 0
      %v895 = vsel %vm659, %v861, 0
      %v898 = vsel %vm659, %v862, 0
      %900 = vmatprep.subr.bf16.mxu0 0
      %901 = vmatpush1.bf16.msra.mxu0 %v880
      %902 = vmatprep.subr.bf16.mxu0 0
      %903 = vmatpush1.bf16.msra.mxu0 %v881
      %904 = vmatprep.subr.bf16.mxu0 0
      %905 = vmatpush1.bf16.msra.mxu0 %v882
      %906 = vmatprep.subr.bf16.mxu0 0
      %907 = vmatpush1.bf16.msra.mxu0 %v883
      %908 = vmatprep.subr.bf16.mxu0 0
      %909 = vmatpush1.bf16.msra.mxu0 0
      %910 = vmatprep.subr.bf16.mxu0 0
      %911 = vmatpush1.bf16.msra.mxu0 0
      %912 = vmatprep.subr.bf16.mxu0 0
      %913 = vmatpush1.bf16.msra.mxu0 0
      %914 = vmatprep.subr.bf16.mxu0 0
      %915 = vmatpush1.bf16.msra.mxu0 0
      %916 = vmatprep.subr.bf16.mxu0 0
      %917 = vmatpush1.bf16.msra.mxu0 0
      %918 = vmatprep.subr.bf16.mxu0 0
      %919 = vmatpush1.bf16.msra.mxu0 0
      %920 = vmatprep.subr.bf16.mxu0 0
      %921 = vmatpush1.bf16.msra.mxu0 0
      %922 = vmatprep.subr.bf16.mxu0 0
      %923 = vmatpush1.bf16.msra.mxu0 0
      %924 = vmatprep.subr.bf16.mxu0 0
      %925 = vmatpush1.bf16.msra.mxu0 0
      %926 = vmatprep.subr.bf16.mxu0 0
      %927 = vmatpush1.bf16.msra.mxu0 0
      %928 = vmatprep.subr.bf16.mxu0 0
      %929 = vmatpush1.bf16.msra.mxu0 0
      %930 = vmatprep.subr.bf16.mxu0 0
      %931 = vmatpush1.bf16.msra.mxu0 0
      %932 = vmatprep.mubr.bf16.mxu0 0
      %933 = vmatmul.mubr.bf16.gmra.mrb[0].mxu0 %v889
      %v934 = vpop.f32.mrb[0].mxu0
      %v935 = vadd.f32 0.0, %v934
      %v936 = vpop.f32.mrb[0].mxu0
      %v937 = vpop.f32.mrb[0].mxu0
      %v938 = vadd.f32 0.0, %v937
      %v939 = vpop.f32.mrb[0].mxu0
      %940 = vmatprep.mubr.bf16.mxu0 0
      %941 = vmatmul.mubr.bf16.gmra.mrb[0].mxu0 %v892
      %v942 = vpop.f32.mrb[0].mxu0
      %v943 = vadd.f32 0.0, %v942
      %v944 = vpop.f32.mrb[0].mxu0
      %v945 = vpop.f32.mrb[0].mxu0
      %v946 = vadd.f32 0.0, %v945
      %v947 = vpop.f32.mrb[0].mxu0
      %948 = vmatprep.mubr.bf16.mxu0 0
      %949 = vmatmul.mubr.bf16.gmra.mrb[0].mxu0 %v895
      %v950 = vpop.f32.mrb[0].mxu0
      %v951 = vadd.f32 0.0, %v950
      %v952 = vpop.f32.mrb[0].mxu0
      %v953 = vpop.f32.mrb[0].mxu0
      %v954 = vadd.f32 0.0, %v953
      %v955 = vpop.f32.mrb[0].mxu0
      %956 = vmatprep.mubr.bf16.mxu0 0
      %957 = vmatmul.mubr.bf16.gmra.mrb[0].mxu0 %v898
      %v958 = vpop.f32.mrb[0].mxu0
      %v959 = vadd.f32 0.0, %v958
      %v960 = vpop.f32.mrb[0].mxu0
      %v961 = vpop.f32.mrb[0].mxu0
      %v962 = vadd.f32 0.0, %v961
      %v963 = vpop.f32.mrb[0].mxu0
      %964 = vdwg.mxu0
      %v965 = vadd.f32 %v804, %v935
      %v966 = vadd.f32 %v807, %v938
      %v967 = vadd.f32 %v812, %v943
      %v968 = vadd.f32 %v815, %v946
      %v969 = vadd.f32 %v820, %v951
      %v970 = vadd.f32 %v823, %v954
      %v971 = vadd.f32 %v828, %v959
      %v972 = vadd.f32 %v831, %v962
      %s973 = scalar_lea.vmem %s1, 96
      %v974 = vld [vmem:[%s973] sm:$0xf]
      %v975 = vld [vmem:[%s973 + $0x4] sm:$0xf]
      %v976 = vld [vmem:[%s973 + $0x8] sm:$0xf]
      %v977 = vld [vmem:[%s973 + $0xc] sm:$0xf]
      %v978 = vld [vmem:[%s973 + $0x10] sm:$0xf]
      %v979 = vld [vmem:[%s973 + $0x14] sm:$0xf]
      %v980 = vld [vmem:[%s973 + $0x18] sm:$0xf]
      %v981 = vld [vmem:[%s973 + $0x1c] sm:$0xf]
      %v990 = vunpack.c.l.b16 %v974
      %v991 = vunpack.c.l.b16 %v975
      %v992 = vunpack.c.l.b16 %v976
      %v993 = vunpack.c.l.b16 %v977
      %v994 = vunpack.c.l.b16 %v978
      %v995 = vunpack.c.l.b16 %v979
      %v996 = vunpack.c.l.b16 %v980
      %v997 = vunpack.c.l.b16 %v981
      %v998 = vpack.c.b16 %v991, %v990
      %v999 = vpack.c.b16 %v993, %v992
      %v1000 = vpack.c.b16 %v995, %v994
      %v1001 = vpack.c.b16 %v997, %v996
      %1002 = vrot.lane.b32.xlu0 %v581, 122
      %v1003 = vpop.permute.xlu0 %1002
      %1004 = vrot.lane.b32.xlu0 %v582, 122
      %v1005 = vpop.permute.xlu0 %1004
      %1006 = vrot.lane.b32.xlu0 %v583, 122
      %v1007 = vpop.permute.xlu0 %1006
      %1008 = vrot.lane.b32.xlu0 %v584, 122
      %v1009 = vpop.permute.xlu0 %1008
      %1010 = vrot.lane.b32.xlu0 %v585, 122
      %v1011 = vpop.permute.xlu0 %1010
      %1012 = vrot.lane.b32.xlu0 %v586, 122
      %v1013 = vpop.permute.xlu0 %1012
      %1014 = vrot.lane.b32.xlu0 %v587, 122
      %v1015 = vpop.permute.xlu0 %1014
      %1016 = vrot.lane.b32.xlu0 %v588, 122
      %v1017 = vpop.permute.xlu0 %1016
      %vm1018 = vcmask 998400
      %v1019 = vsel %vm1018, %v1003, %v1005
      %v1020 = vsel %vm1018, %v1007, %v1009
      %v1021 = vsel %vm1018, %v1011, %v1013
      %v1022 = vsel %vm1018, %v1015, %v1017
      %v1028 = vsel %vm659, %v998, 0
      %v1031 = vsel %vm659, %v999, 0
      %v1034 = vsel %vm659, %v1000, 0
      %v1037 = vsel %vm659, %v1001, 0
      %1039 = vmatprep.subr.bf16.mxu0 0
      %1040 = vmatpush1.bf16.msra.mxu0 %v1019
      %1041 = vmatprep.subr.bf16.mxu0 0
      %1042 = vmatpush1.bf16.msra.mxu0 %v1020
      %1043 = vmatprep.subr.bf16.mxu0 0
      %1044 = vmatpush1.bf16.msra.mxu0 %v1021
      %1045 = vmatprep.subr.bf16.mxu0 0
      %1046 = vmatpush1.bf16.msra.mxu0 %v1022
      %1047 = vmatprep.subr.bf16.mxu0 0
      %1048 = vmatpush1.bf16.msra.mxu0 0
      %1049 = vmatprep.subr.bf16.mxu0 0
      %1050 = vmatpush1.bf16.msra.mxu0 0
      %1051 = vmatprep.subr.bf16.mxu0 0
      %1052 = vmatpush1.bf16.msra.mxu0 0
      %1053 = vmatprep.subr.bf16.mxu0 0
      %1054 = vmatpush1.bf16.msra.mxu0 0
      %1055 = vmatprep.subr.bf16.mxu0 0
      %1056 = vmatpush1.bf16.msra.mxu0 0
      %1057 = vmatprep.subr.bf16.mxu0 0
      %1058 = vmatpush1.bf16.msra.mxu0 0
      %1059 = vmatprep.subr.bf16.mxu0 0
      %1060 = vmatpush1.bf16.msra.mxu0 0
      %1061 = vmatprep.subr.bf16.mxu0 0
      %1062 = vmatpush1.bf16.msra.mxu0 0
      %1063 = vmatprep.subr.bf16.mxu0 0
      %1064 = vmatpush1.bf16.msra.mxu0 0
      %1065 = vmatprep.subr.bf16.mxu0 0
      %1066 = vmatpush1.bf16.msra.mxu0 0
      %1067 = vmatprep.subr.bf16.mxu0 0
      %1068 = vmatpush1.bf16.msra.mxu0 0
      %1069 = vmatprep.subr.bf16.mxu0 0
      %1070 = vmatpush1.bf16.msra.mxu0 0
      %1071 = vmatprep.mubr.bf16.mxu0 0
      %1072 = vmatmul.mubr.bf16.gmra.mrb[0].mxu0 %v1028
      %v1073 = vpop.f32.mrb[0].mxu0
      %v1074 = vadd.f32 0.0, %v1073
      %v1075 = vpop.f32.mrb[0].mxu0
      %v1076 = vpop.f32.mrb[0].mxu0
      %v1077 = vadd.f32 0.0, %v1076
      %v1078 = vpop.f32.mrb[0].mxu0
      %1079 = vmatprep.mubr.bf16.mxu0 0
      %1080 = vmatmul.mubr.bf16.gmra.mrb[0].mxu0 %v1031
      %v1081 = vpop.f32.mrb[0].mxu0
      %v1082 = vadd.f32 0.0, %v1081
      %v1083 = vpop.f32.mrb[0].mxu0
      %v1084 = vpop.f32.mrb[0].mxu0
      %v1085 = vadd.f32 0.0, %v1084
      %v1086 = vpop.f32.mrb[0].mxu0
      %1087 = vmatprep.mubr.bf16.mxu0 0
      %1088 = vmatmul.mubr.bf16.gmra.mrb[0].mxu0 %v1034
      %v1089 = vpop.f32.mrb[0].mxu0
      %v1090 = vadd.f32 0.0, %v1089
      %v1091 = vpop.f32.mrb[0].mxu0
      %v1092 = vpop.f32.mrb[0].mxu0
      %v1093 = vadd.f32 0.0, %v1092
      %v1094 = vpop.f32.mrb[0].mxu0
      %1095 = vmatprep.mubr.bf16.mxu0 0
      %1096 = vmatmul.mubr.bf16.gmra.mrb[0].mxu0 %v1037
      %v1097 = vpop.f32.mrb[0].mxu0
      %v1098 = vadd.f32 0.0, %v1097
      %v1099 = vpop.f32.mrb[0].mxu0
      %v1100 = vpop.f32.mrb[0].mxu0
      %v1101 = vadd.f32 0.0, %v1100
      %v1102 = vpop.f32.mrb[0].mxu0
      %1103 = vdwg.mxu0
      %v1104 = vadd.f32 %v965, %v1074
      %v1105 = vadd.f32 %v966, %v1077
      %v1106 = vadd.f32 %v967, %v1082
      %v1107 = vadd.f32 %v968, %v1085
      %v1108 = vadd.f32 %v969, %v1090
      %v1109 = vadd.f32 %v970, %v1093
      %v1110 = vadd.f32 %v971, %v1098
      %v1111 = vadd.f32 %v972, %v1101
      %s1112 = scalar_lea.vmem %s1, 128
      %v1113 = vld [vmem:[%s1112] sm:$0xf]
      %v1114 = vld [vmem:[%s1112 + $0x4] sm:$0xf]
      %v1115 = vld [vmem:[%s1112 + $0x8] sm:$0xf]
      %v1116 = vld [vmem:[%s1112 + $0xc] sm:$0xf]
      %v1117 = vld [vmem:[%s1112 + $0x10] sm:$0xf]
      %v1118 = vld [vmem:[%s1112 + $0x14] sm:$0xf]
      %v1119 = vld [vmem:[%s1112 + $0x18] sm:$0xf]
      %v1120 = vld [vmem:[%s1112 + $0x1c] sm:$0xf]
      %v1129 = vunpack.c.l.b16 %v1113
      %v1130 = vunpack.c.l.b16 %v1114
      %v1131 = vunpack.c.l.b16 %v1115
      %v1132 = vunpack.c.l.b16 %v1116
      %v1133 = vunpack.c.l.b16 %v1117
      %v1134 = vunpack.c.l.b16 %v1118
      %v1135 = vunpack.c.l.b16 %v1119
      %v1136 = vunpack.c.l.b16 %v1120
      %v1137 = vpack.c.b16 %v1130, %v1129
      %v1138 = vpack.c.b16 %v1132, %v1131
      %v1139 = vpack.c.b16 %v1134, %v1133
      %v1140 = vpack.c.b16 %v1136, %v1135
      %1141 = vrot.lane.b32.xlu0 %v581, 121
      %v1142 = vpop.permute.xlu0 %1141
      %1143 = vrot.lane.b32.xlu0 %v582, 121
      %v1144 = vpop.permute.xlu0 %1143
      %1145 = vrot.lane.b32.xlu0 %v583, 121
      %v1146 = vpop.permute.xlu0 %1145
      %1147 = vrot.lane.b32.xlu0 %v584, 121
      %v1148 = vpop.permute.xlu0 %1147
      %1149 = vrot.lane.b32.xlu0 %v585, 121
      %v1150 = vpop.permute.xlu0 %1149
      %1151 = vrot.lane.b32.xlu0 %v586, 121
      %v1152 = vpop.permute.xlu0 %1151
      %1153 = vrot.lane.b32.xlu0 %v587, 121
      %v1154 = vpop.permute.xlu0 %1153
      %1155 = vrot.lane.b32.xlu0 %v588, 121
      %v1156 = vpop.permute.xlu0 %1155
      %vm1157 = vcmask 990208
      %v1158 = vsel %vm1157, %v1142, %v1144
      %v1159 = vsel %vm1157, %v1146, %v1148
      %v1160 = vsel %vm1157, %v1150, %v1152
      %v1161 = vsel %vm1157, %v1154, %v1156
      %v1167 = vsel %vm659, %v1137, 0
      %v1170 = vsel %vm659, %v1138, 0
      %v1173 = vsel %vm659, %v1139, 0
      %v1176 = vsel %vm659, %v1140, 0
      %1178 = vmatprep.subr.bf16.mxu0 0
      %1179 = vmatpush1.bf16.msra.mxu0 %v1158
      %1180 = vmatprep.subr.bf16.mxu0 0
      %1181 = vmatpush1.bf16.msra.mxu0 %v1159
      %1182 = vmatprep.subr.bf16.mxu0 0
      %1183 = vmatpush1.bf16.msra.mxu0 %v1160
      %1184 = vmatprep.subr.bf16.mxu0 0
      %1185 = vmatpush1.bf16.msra.mxu0 %v1161
      %1186 = vmatprep.subr.bf16.mxu0 0
      %1187 = vmatpush1.bf16.msra.mxu0 0
      %1188 = vmatprep.subr.bf16.mxu0 0
      %1189 = vmatpush1.bf16.msra.mxu0 0
      %1190 = vmatprep.subr.bf16.mxu0 0
      %1191 = vmatpush1.bf16.msra.mxu0 0
      %1192 = vmatprep.subr.bf16.mxu0 0
      %1193 = vmatpush1.bf16.msra.mxu0 0
      %1194 = vmatprep.subr.bf16.mxu0 0
      %1195 = vmatpush1.bf16.msra.mxu0 0
      %1196 = vmatprep.subr.bf16.mxu0 0
      %1197 = vmatpush1.bf16.msra.mxu0 0
      %1198 = vmatprep.subr.bf16.mxu0 0
      %1199 = vmatpush1.bf16.msra.mxu0 0
      %1200 = vmatprep.subr.bf16.mxu0 0
      %1201 = vmatpush1.bf16.msra.mxu0 0
      %1202 = vmatprep.subr.bf16.mxu0 0
      %1203 = vmatpush1.bf16.msra.mxu0 0
      %1204 = vmatprep.subr.bf16.mxu0 0
      %1205 = vmatpush1.bf16.msra.mxu0 0
      %1206 = vmatprep.subr.bf16.mxu0 0
      %1207 = vmatpush1.bf16.msra.mxu0 0
      %1208 = vmatprep.subr.bf16.mxu0 0
      %1209 = vmatpush1.bf16.msra.mxu0 0
      %1210 = vmatprep.mubr.bf16.mxu0 0
      %1211 = vmatmul.mubr.bf16.gmra.mrb[0].mxu0 %v1167
      %v1212 = vpop.f32.mrb[0].mxu0
      %v1213 = vadd.f32 0.0, %v1212
      %v1214 = vpop.f32.mrb[0].mxu0
      %v1215 = vpop.f32.mrb[0].mxu0
      %v1216 = vadd.f32 0.0, %v1215
      %v1217 = vpop.f32.mrb[0].mxu0
      %1218 = vmatprep.mubr.bf16.mxu0 0
      %1219 = vmatmul.mubr.bf16.gmra.mrb[0].mxu0 %v1170
      %v1220 = vpop.f32.mrb[0].mxu0
      %v1221 = vadd.f32 0.0, %v1220
      %v1222 = vpop.f32.mrb[0].mxu0
      %v1223 = vpop.f32.mrb[0].mxu0
      %v1224 = vadd.f32 0.0, %v1223
      %v1225 = vpop.f32.mrb[0].mxu0
      %1226 = vmatprep.mubr.bf16.mxu0 0
      %1227 = vmatmul.mubr.bf16.gmra.mrb[0].mxu0 %v1173
      %v1228 = vpop.f32.mrb[0].mxu0
      %v1229 = vadd.f32 0.0, %v1228
      %v1230 = vpop.f32.mrb[0].mxu0
      %v1231 = vpop.f32.mrb[0].mxu0
      %v1232 = vadd.f32 0.0, %v1231
      %v1233 = vpop.f32.mrb[0].mxu0
      %1234 = vmatprep.mubr.bf16.mxu0 0
      %1235 = vmatmul.mubr.bf16.gmra.mrb[0].mxu0 %v1176
      %v1236 = vpop.f32.mrb[0].mxu0
      %v1237 = vadd.f32 0.0, %v1236
      %v1238 = vpop.f32.mrb[0].mxu0
      %v1239 = vpop.f32.mrb[0].mxu0
      %v1240 = vadd.f32 0.0, %v1239
      %v1241 = vpop.f32.mrb[0].mxu0
      %1242 = vdwg.mxu0
      %v1243 = vadd.f32 %v1104, %v1213
      %v1244 = vadd.f32 %v1105, %v1216
      %v1245 = vadd.f32 %v1106, %v1221
      %v1246 = vadd.f32 %v1107, %v1224
      %v1247 = vadd.f32 %v1108, %v1229
      %v1248 = vadd.f32 %v1109, %v1232
      %v1249 = vadd.f32 %v1110, %v1237
      %v1250 = vadd.f32 %v1111, %v1240
      %s1251 = scalar_lea.vmem %s1, 160
      %v1252 = vld [vmem:[%s1251] sm:$0xf]
      %v1253 = vld [vmem:[%s1251 + $0x4] sm:$0xf]
      %v1254 = vld [vmem:[%s1251 + $0x8] sm:$0xf]
      %v1255 = vld [vmem:[%s1251 + $0xc] sm:$0xf]
      %v1256 = vld [vmem:[%s1251 + $0x10] sm:$0xf]
      %v1257 = vld [vmem:[%s1251 + $0x14] sm:$0xf]
      %v1258 = vld [vmem:[%s1251 + $0x18] sm:$0xf]
      %v1259 = vld [vmem:[%s1251 + $0x1c] sm:$0xf]
      %v1268 = vunpack.c.l.b16 %v1252
      %v1269 = vunpack.c.l.b16 %v1253
      %v1270 = vunpack.c.l.b16 %v1254
      %v1271 = vunpack.c.l.b16 %v1255
      %v1272 = vunpack.c.l.b16 %v1256
      %v1273 = vunpack.c.l.b16 %v1257
      %v1274 = vunpack.c.l.b16 %v1258
      %v1275 = vunpack.c.l.b16 %v1259
      %v1276 = vpack.c.b16 %v1269, %v1268
      %v1277 = vpack.c.b16 %v1271, %v1270
      %v1278 = vpack.c.b16 %v1273, %v1272
      %v1279 = vpack.c.b16 %v1275, %v1274
      %1280 = vrot.lane.b32.xlu0 %v581, 120
      %v1281 = vpop.permute.xlu0 %1280
      %1282 = vrot.lane.b32.xlu0 %v582, 120
      %v1283 = vpop.permute.xlu0 %1282
      %1284 = vrot.lane.b32.xlu0 %v583, 120
      %v1285 = vpop.permute.xlu0 %1284
      %1286 = vrot.lane.b32.xlu0 %v584, 120
      %v1287 = vpop.permute.xlu0 %1286
      %1288 = vrot.lane.b32.xlu0 %v585, 120
      %v1289 = vpop.permute.xlu0 %1288
      %1290 = vrot.lane.b32.xlu0 %v586, 120
      %v1291 = vpop.permute.xlu0 %1290
      %1292 = vrot.lane.b32.xlu0 %v587, 120
      %v1293 = vpop.permute.xlu0 %1292
      %1294 = vrot.lane.b32.xlu0 %v588, 120
      %v1295 = vpop.permute.xlu0 %1294
      %vm1296 = vcmask 982016
      %v1297 = vsel %vm1296, %v1281, %v1283
      %v1298 = vsel %vm1296, %v1285, %v1287
      %v1299 = vsel %vm1296, %v1289, %v1291
      %v1300 = vsel %vm1296, %v1293, %v1295
      %v1306 = vsel %vm659, %v1276, 0
      %v1309 = vsel %vm659, %v1277, 0
      %v1312 = vsel %vm659, %v1278, 0
      %v1315 = vsel %vm659, %v1279, 0
      %1317 = vmatprep.subr.bf16.mxu0 0
      %1318 = vmatpush1.bf16.msra.mxu0 %v1297
      %1319 = vmatprep.subr.bf16.mxu0 0
      %1320 = vmatpush1.bf16.msra.mxu0 %v1298
      %1321 = vmatprep.subr.bf16.mxu0 0
      %1322 = vmatpush1.bf16.msra.mxu0 %v1299
      %1323 = vmatprep.subr.bf16.mxu0 0
      %1324 = vmatpush1.bf16.msra.mxu0 %v1300
      %1325 = vmatprep.subr.bf16.mxu0 0
      %1326 = vmatpush1.bf16.msra.mxu0 0
      %1327 = vmatprep.subr.bf16.mxu0 0
      %1328 = vmatpush1.bf16.msra.mxu0 0
      %1329 = vmatprep.subr.bf16.mxu0 0
      %1330 = vmatpush1.bf16.msra.mxu0 0
      %1331 = vmatprep.subr.bf16.mxu0 0
      %1332 = vmatpush1.bf16.msra.mxu0 0
      %1333 = vmatprep.subr.bf16.mxu0 0
      %1334 = vmatpush1.bf16.msra.mxu0 0
      %1335 = vmatprep.subr.bf16.mxu0 0
      %1336 = vmatpush1.bf16.msra.mxu0 0
      %1337 = vmatprep.subr.bf16.mxu0 0
      %1338 = vmatpush1.bf16.msra.mxu0 0
      %1339 = vmatprep.subr.bf16.mxu0 0
      %1340 = vmatpush1.bf16.msra.mxu0 0
      %1341 = vmatprep.subr.bf16.mxu0 0
      %1342 = vmatpush1.bf16.msra.mxu0 0
      %1343 = vmatprep.subr.bf16.mxu0 0
      %1344 = vmatpush1.bf16.msra.mxu0 0
      %1345 = vmatprep.subr.bf16.mxu0 0
      %1346 = vmatpush1.bf16.msra.mxu0 0
      %1347 = vmatprep.subr.bf16.mxu0 0
      %1348 = vmatpush1.bf16.msra.mxu0 0
      %1349 = vmatprep.mubr.bf16.mxu0 0
      %1350 = vmatmul.mubr.bf16.gmra.mrb[0].mxu0 %v1306
      %v1351 = vpop.f32.mrb[0].mxu0
      %v1352 = vadd.f32 0.0, %v1351
      %v1353 = vpop.f32.mrb[0].mxu0
      %v1354 = vpop.f32.mrb[0].mxu0
      %v1355 = vadd.f32 0.0, %v1354
      %v1356 = vpop.f32.mrb[0].mxu0
      %1357 = vmatprep.mubr.bf16.mxu0 0
      %1358 = vmatmul.mubr.bf16.gmra.mrb[0].mxu0 %v1309
      %v1359 = vpop.f32.mrb[0].mxu0
      %v1360 = vadd.f32 0.0, %v1359
      %v1361 = vpop.f32.mrb[0].mxu0
      %v1362 = vpop.f32.mrb[0].mxu0
      %v1363 = vadd.f32 0.0, %v1362
      %v1364 = vpop.f32.mrb[0].mxu0
      %1365 = vmatprep.mubr.bf16.mxu0 0
      %1366 = vmatmul.mubr.bf16.gmra.mrb[0].mxu0 %v1312
      %v1367 = vpop.f32.mrb[0].mxu0
      %v1368 = vadd.f32 0.0, %v1367
      %v1369 = vpop.f32.mrb[0].mxu0
      %v1370 = vpop.f32.mrb[0].mxu0
      %v1371 = vadd.f32 0.0, %v1370
      %v1372 = vpop.f32.mrb[0].mxu0
      %1373 = vmatprep.mubr.bf16.mxu0 0
      %1374 = vmatmul.mubr.bf16.gmra.mrb[0].mxu0 %v1315
      %v1375 = vpop.f32.mrb[0].mxu0
      %v1376 = vadd.f32 0.0, %v1375
      %v1377 = vpop.f32.mrb[0].mxu0
      %v1378 = vpop.f32.mrb[0].mxu0
      %v1379 = vadd.f32 0.0, %v1378
      %v1380 = vpop.f32.mrb[0].mxu0
      %1381 = vdwg.mxu0
      %v1382 = vadd.f32 %v1243, %v1352
      %v1383 = vadd.f32 %v1244, %v1355
      %v1384 = vadd.f32 %v1245, %v1360
      %v1385 = vadd.f32 %v1246, %v1363
      %v1386 = vadd.f32 %v1247, %v1368
      %v1387 = vadd.f32 %v1248, %v1371
      %v1388 = vadd.f32 %v1249, %v1376
      %v1389 = vadd.f32 %v1250, %v1379
      %s1390 = scalar_lea.vmem %s1, 192
      %v1391 = vld [vmem:[%s1390] sm:$0xf]
      %v1392 = vld [vmem:[%s1390 + $0x4] sm:$0xf]
      %v1393 = vld [vmem:[%s1390 + $0x8] sm:$0xf]
      %v1394 = vld [vmem:[%s1390 + $0xc] sm:$0xf]
      %v1395 = vld [vmem:[%s1390 + $0x10] sm:$0xf]
      %v1396 = vld [vmem:[%s1390 + $0x14] sm:$0xf]
      %v1397 = vld [vmem:[%s1390 + $0x18] sm:$0xf]
      %v1398 = vld [vmem:[%s1390 + $0x1c] sm:$0xf]
      %v1407 = vunpack.c.l.b16 %v1391
      %v1408 = vunpack.c.l.b16 %v1392
      %v1409 = vunpack.c.l.b16 %v1393
      %v1410 = vunpack.c.l.b16 %v1394
      %v1411 = vunpack.c.l.b16 %v1395
      %v1412 = vunpack.c.l.b16 %v1396
      %v1413 = vunpack.c.l.b16 %v1397
      %v1414 = vunpack.c.l.b16 %v1398
      %v1415 = vpack.c.b16 %v1408, %v1407
      %v1416 = vpack.c.b16 %v1410, %v1409
      %v1417 = vpack.c.b16 %v1412, %v1411
      %v1418 = vpack.c.b16 %v1414, %v1413
      %1419 = vrot.lane.b32.xlu0 %v581, 116
      %v1420 = vpop.permute.xlu0 %1419
      %1421 = vrot.lane.b32.xlu0 %v582, 116
      %v1422 = vpop.permute.xlu0 %1421
      %1423 = vrot.lane.b32.xlu0 %v583, 116
      %v1424 = vpop.permute.xlu0 %1423
      %1425 = vrot.lane.b32.xlu0 %v584, 116
      %v1426 = vpop.permute.xlu0 %1425
      %1427 = vrot.lane.b32.xlu0 %v585, 116
      %v1428 = vpop.permute.xlu0 %1427
      %1429 = vrot.lane.b32.xlu0 %v586, 116
      %v1430 = vpop.permute.xlu0 %1429
      %1431 = vrot.lane.b32.xlu0 %v587, 116
      %v1432 = vpop.permute.xlu0 %1431
      %1433 = vrot.lane.b32.xlu0 %v588, 116
      %v1434 = vpop.permute.xlu0 %1433
      %vm1435 = vcmask 949248
      %v1436 = vsel %vm1435, %v1420, %v1422
      %v1437 = vsel %vm1435, %v1424, %v1426
      %v1438 = vsel %vm1435, %v1428, %v1430
      %v1439 = vsel %vm1435, %v1432, %v1434
      %v1445 = vsel %vm659, %v1415, 0
      %v1448 = vsel %vm659, %v1416, 0
      %v1451 = vsel %vm659, %v1417, 0
      %v1454 = vsel %vm659, %v1418, 0
      %1456 = vmatprep.subr.bf16.mxu0 0
      %1457 = vmatpush1.bf16.msra.mxu0 %v1436
      %1458 = vmatprep.subr.bf16.mxu0 0
      %1459 = vmatpush1.bf16.msra.mxu0 %v1437
      %1460 = vmatprep.subr.bf16.mxu0 0
      %1461 = vmatpush1.bf16.msra.mxu0 %v1438
      %1462 = vmatprep.subr.bf16.mxu0 0
      %1463 = vmatpush1.bf16.msra.mxu0 %v1439
      %1464 = vmatprep.subr.bf16.mxu0 0
      %1465 = vmatpush1.bf16.msra.mxu0 0
      %1466 = vmatprep.subr.bf16.mxu0 0
      %1467 = vmatpush1.bf16.msra.mxu0 0
      %1468 = vmatprep.subr.bf16.mxu0 0
      %1469 = vmatpush1.bf16.msra.mxu0 0
      %1470 = vmatprep.subr.bf16.mxu0 0
      %1471 = vmatpush1.bf16.msra.mxu0 0
      %1472 = vmatprep.subr.bf16.mxu0 0
      %1473 = vmatpush1.bf16.msra.mxu0 0
      %1474 = vmatprep.subr.bf16.mxu0 0
      %1475 = vmatpush1.bf16.msra.mxu0 0
      %1476 = vmatprep.subr.bf16.mxu0 0
      %1477 = vmatpush1.bf16.msra.mxu0 0
      %1478 = vmatprep.subr.bf16.mxu0 0
      %1479 = vmatpush1.bf16.msra.mxu0 0
      %1480 = vmatprep.subr.bf16.mxu0 0
      %1481 = vmatpush1.bf16.msra.mxu0 0
      %1482 = vmatprep.subr.bf16.mxu0 0
      %1483 = vmatpush1.bf16.msra.mxu0 0
      %1484 = vmatprep.subr.bf16.mxu0 0
      %1485 = vmatpush1.bf16.msra.mxu0 0
      %1486 = vmatprep.subr.bf16.mxu0 0
      %1487 = vmatpush1.bf16.msra.mxu0 0
      %1488 = vmatprep.mubr.bf16.mxu0 0
      %1489 = vmatmul.mubr.bf16.gmra.mrb[0].mxu0 %v1445
      %v1490 = vpop.f32.mrb[0].mxu0
      %v1491 = vadd.f32 0.0, %v1490
      %v1492 = vpop.f32.mrb[0].mxu0
      %v1493 = vpop.f32.mrb[0].mxu0
      %v1494 = vadd.f32 0.0, %v1493
      %v1495 = vpop.f32.mrb[0].mxu0
      %1496 = vmatprep.mubr.bf16.mxu0 0
      %1497 = vmatmul.mubr.bf16.gmra.mrb[0].mxu0 %v1448
      %v1498 = vpop.f32.mrb[0].mxu0
      %v1499 = vadd.f32 0.0, %v1498
      %v1500 = vpop.f32.mrb[0].mxu0
      %v1501 = vpop.f32.mrb[0].mxu0
      %v1502 = vadd.f32 0.0, %v1501
      %v1503 = vpop.f32.mrb[0].mxu0
      %1504 = vmatprep.mubr.bf16.mxu0 0
      %1505 = vmatmul.mubr.bf16.gmra.mrb[0].mxu0 %v1451
      %v1506 = vpop.f32.mrb[0].mxu0
      %v1507 = vadd.f32 0.0, %v1506
      %v1508 = vpop.f32.mrb[0].mxu0
      %v1509 = vpop.f32.mrb[0].mxu0
      %v1510 = vadd.f32 0.0, %v1509
      %v1511 = vpop.f32.mrb[0].mxu0
      %1512 = vmatprep.mubr.bf16.mxu0 0
      %1513 = vmatmul.mubr.bf16.gmra.mrb[0].mxu0 %v1454
      %v1514 = vpop.f32.mrb[0].mxu0
      %v1515 = vadd.f32 0.0, %v1514
      %v1516 = vpop.f32.mrb[0].mxu0
      %v1517 = vpop.f32.mrb[0].mxu0
      %v1518 = vadd.f32 0.0, %v1517
      %v1519 = vpop.f32.mrb[0].mxu0
      %1520 = vdwg.mxu0
      %v1521 = vadd.f32 %v1382, %v1491
      %v1522 = vadd.f32 %v1383, %v1494
      %v1523 = vadd.f32 %v1384, %v1499
      %v1524 = vadd.f32 %v1385, %v1502
      %v1525 = vadd.f32 %v1386, %v1507
      %v1526 = vadd.f32 %v1387, %v1510
      %v1527 = vadd.f32 %v1388, %v1515
      %v1528 = vadd.f32 %v1389, %v1518
      %s1529 = scalar_lea.vmem %s1, 224
      %v1530 = vld [vmem:[%s1529] sm:$0xf]
      %v1531 = vld [vmem:[%s1529 + $0x4] sm:$0xf]
      %v1532 = vld [vmem:[%s1529 + $0x8] sm:$0xf]
      %v1533 = vld [vmem:[%s1529 + $0xc] sm:$0xf]
      %v1534 = vld [vmem:[%s1529 + $0x10] sm:$0xf]
      %v1535 = vld [vmem:[%s1529 + $0x14] sm:$0xf]
      %v1536 = vld [vmem:[%s1529 + $0x18] sm:$0xf]
      %v1537 = vld [vmem:[%s1529 + $0x1c] sm:$0xf]
      %v1546 = vunpack.c.l.b16 %v1530
      %v1547 = vunpack.c.l.b16 %v1531
      %v1548 = vunpack.c.l.b16 %v1532
      %v1549 = vunpack.c.l.b16 %v1533
      %v1550 = vunpack.c.l.b16 %v1534
      %v1551 = vunpack.c.l.b16 %v1535
      %v1552 = vunpack.c.l.b16 %v1536
      %v1553 = vunpack.c.l.b16 %v1537
      %v1554 = vpack.c.b16 %v1547, %v1546
      %v1555 = vpack.c.b16 %v1549, %v1548
      %v1556 = vpack.c.b16 %v1551, %v1550
      %v1557 = vpack.c.b16 %v1553, %v1552
      %1558 = vrot.lane.b32.xlu0 %v581, 115
      %v1559 = vpop.permute.xlu0 %1558
      %1560 = vrot.lane.b32.xlu0 %v582, 115
      %v1561 = vpop.permute.xlu0 %1560
      %1562 = vrot.lane.b32.xlu0 %v583, 115
      %v1563 = vpop.permute.xlu0 %1562
      %1564 = vrot.lane.b32.xlu0 %v584, 115
      %v1565 = vpop.permute.xlu0 %1564
      %1566 = vrot.lane.b32.xlu0 %v585, 115
      %v1567 = vpop.permute.xlu0 %1566
      %1568 = vrot.lane.b32.xlu0 %v586, 115
      %v1569 = vpop.permute.xlu0 %1568
      %1570 = vrot.lane.b32.xlu0 %v587, 115
      %v1571 = vpop.permute.xlu0 %1570
      %1572 = vrot.lane.b32.xlu0 %v588, 115
      %v1573 = vpop.permute.xlu0 %1572
      %vm1574 = vcmask 941056
      %v1575 = vsel %vm1574, %v1559, %v1561
      %v1576 = vsel %vm1574, %v1563, %v1565
      %v1577 = vsel %vm1574, %v1567, %v1569
      %v1578 = vsel %vm1574, %v1571, %v1573
      %v1584 = vsel %vm659, %v1554, 0
      %v1587 = vsel %vm659, %v1555, 0
      %v1590 = vsel %vm659, %v1556, 0
      %v1593 = vsel %vm659, %v1557, 0
      %1595 = vmatprep.subr.bf16.mxu0 0
      %1596 = vmatpush1.bf16.msra.mxu0 %v1575
      %1597 = vmatprep.subr.bf16.mxu0 0
      %1598 = vmatpush1.bf16.msra.mxu0 %v1576
      %1599 = vmatprep.subr.bf16.mxu0 0
      %1600 = vmatpush1.bf16.msra.mxu0 %v1577
      %1601 = vmatprep.subr.bf16.mxu0 0
      %1602 = vmatpush1.bf16.msra.mxu0 %v1578
      %1603 = vmatprep.subr.bf16.mxu0 0
      %1604 = vmatpush1.bf16.msra.mxu0 0
      %1605 = vmatprep.subr.bf16.mxu0 0
      %1606 = vmatpush1.bf16.msra.mxu0 0
      %1607 = vmatprep.subr.bf16.mxu0 0
      %1608 = vmatpush1.bf16.msra.mxu0 0
      %1609 = vmatprep.subr.bf16.mxu0 0
      %1610 = vmatpush1.bf16.msra.mxu0 0
      %1611 = vmatprep.subr.bf16.mxu0 0
      %1612 = vmatpush1.bf16.msra.mxu0 0
      %1613 = vmatprep.subr.bf16.mxu0 0
      %1614 = vmatpush1.bf16.msra.mxu0 0
      %1615 = vmatprep.subr.bf16.mxu0 0
      %1616 = vmatpush1.bf16.msra.mxu0 0
      %1617 = vmatprep.subr.bf16.mxu0 0
      %1618 = vmatpush1.bf16.msra.mxu0 0
      %1619 = vmatprep.subr.bf16.mxu0 0
      %1620 = vmatpush1.bf16.msra.mxu0 0
      %1621 = vmatprep.subr.bf16.mxu0 0
      %1622 = vmatpush1.bf16.msra.mxu0 0
      %1623 = vmatprep.subr.bf16.mxu0 0
      %1624 = vmatpush1.bf16.msra.mxu0 0
      %1625 = vmatprep.subr.bf16.mxu0 0
      %1626 = vmatpush1.bf16.msra.mxu0 0
      %1627 = vmatprep.mubr.bf16.mxu0 0
      %1628 = vmatmul.mubr.bf16.gmra.mrb[0].mxu0 %v1584
      %v1629 = vpop.f32.mrb[0].mxu0
      %v1630 = vadd.f32 0.0, %v1629
      %v1631 = vpop.f32.mrb[0].mxu0
      %v1632 = vpop.f32.mrb[0].mxu0
      %v1633 = vadd.f32 0.0, %v1632
      %v1634 = vpop.f32.mrb[0].mxu0
      %1635 = vmatprep.mubr.bf16.mxu0 0
      %1636 = vmatmul.mubr.bf16.gmra.mrb[0].mxu0 %v1587
      %v1637 = vpop.f32.mrb[0].mxu0
      %v1638 = vadd.f32 0.0, %v1637
      %v1639 = vpop.f32.mrb[0].mxu0
      %v1640 = vpop.f32.mrb[0].mxu0
      %v1641 = vadd.f32 0.0, %v1640
      %v1642 = vpop.f32.mrb[0].mxu0
      %1643 = vmatprep.mubr.bf16.mxu0 0
      %1644 = vmatmul.mubr.bf16.gmra.mrb[0].mxu0 %v1590
      %v1645 = vpop.f32.mrb[0].mxu0
      %v1646 = vadd.f32 0.0, %v1645
      %v1647 = vpop.f32.mrb[0].mxu0
      %v1648 = vpop.f32.mrb[0].mxu0
      %v1649 = vadd.f32 0.0, %v1648
      %v1650 = vpop.f32.mrb[0].mxu0
      %1651 = vmatprep.mubr.bf16.mxu0 0
      %1652 = vmatmul.mubr.bf16.gmra.mrb[0].mxu0 %v1593
      %v1653 = vpop.f32.mrb[0].mxu0
      %v1654 = vadd.f32 0.0, %v1653
      %v1655 = vpop.f32.mrb[0].mxu0
      %v1656 = vpop.f32.mrb[0].mxu0
      %v1657 = vadd.f32 0.0, %v1656
      %v1658 = vpop.f32.mrb[0].mxu0
      %1659 = vdwg.mxu0
      %v1660 = vadd.f32 %v1521, %v1630
      %v1661 = vadd.f32 %v1522, %v1633
      %v1662 = vadd.f32 %v1523, %v1638
      %v1663 = vadd.f32 %v1524, %v1641
      %v1664 = vadd.f32 %v1525, %v1646
      %v1665 = vadd.f32 %v1526, %v1649
      %v1666 = vadd.f32 %v1527, %v1654
      %v1667 = vadd.f32 %v1528, %v1657
      %s1668 = scalar_lea.vmem %s1, 256
      %v1669 = vld [vmem:[%s1668] sm:$0xf]
      %v1670 = vld [vmem:[%s1668 + $0x4] sm:$0xf]
      %v1671 = vld [vmem:[%s1668 + $0x8] sm:$0xf]
      %v1672 = vld [vmem:[%s1668 + $0xc] sm:$0xf]
      %v1673 = vld [vmem:[%s1668 + $0x10] sm:$0xf]
      %v1674 = vld [vmem:[%s1668 + $0x14] sm:$0xf]
      %v1675 = vld [vmem:[%s1668 + $0x18] sm:$0xf]
      %v1676 = vld [vmem:[%s1668 + $0x1c] sm:$0xf]
      %v1685 = vunpack.c.l.b16 %v1669
      %v1686 = vunpack.c.l.b16 %v1670
      %v1687 = vunpack.c.l.b16 %v1671
      %v1688 = vunpack.c.l.b16 %v1672
      %v1689 = vunpack.c.l.b16 %v1673
      %v1690 = vunpack.c.l.b16 %v1674
      %v1691 = vunpack.c.l.b16 %v1675
      %v1692 = vunpack.c.l.b16 %v1676
      %v1693 = vpack.c.b16 %v1686, %v1685
      %v1694 = vpack.c.b16 %v1688, %v1687
      %v1695 = vpack.c.b16 %v1690, %v1689
      %v1696 = vpack.c.b16 %v1692, %v1691
      %1697 = vrot.lane.b32.xlu0 %v581, 114
      %v1698 = vpop.permute.xlu0 %1697
      %1699 = vrot.lane.b32.xlu0 %v582, 114
      %v1700 = vpop.permute.xlu0 %1699
      %1701 = vrot.lane.b32.xlu0 %v583, 114
      %v1702 = vpop.permute.xlu0 %1701
      %1703 = vrot.lane.b32.xlu0 %v584, 114
      %v1704 = vpop.permute.xlu0 %1703
      %1705 = vrot.lane.b32.xlu0 %v585, 114
      %v1706 = vpop.permute.xlu0 %1705
      %1707 = vrot.lane.b32.xlu0 %v586, 114
      %v1708 = vpop.permute.xlu0 %1707
      %1709 = vrot.lane.b32.xlu0 %v587, 114
      %v1710 = vpop.permute.xlu0 %1709
      %1711 = vrot.lane.b32.xlu0 %v588, 114
      %v1712 = vpop.permute.xlu0 %1711
      %vm1713 = vcmask 932864
      %v1714 = vsel %vm1713, %v1698, %v1700
      %v1715 = vsel %vm1713, %v1702, %v1704
      %v1716 = vsel %vm1713, %v1706, %v1708
      %v1717 = vsel %vm1713, %v1710, %v1712
      %v1723 = vsel %vm659, %v1693, 0
      %v1726 = vsel %vm659, %v1694, 0
      %v1729 = vsel %vm659, %v1695, 0
      %v1732 = vsel %vm659, %v1696, 0
      %1734 = vmatprep.subr.bf16.mxu0 0
      %1735 = vmatpush1.bf16.msra.mxu0 %v1714
      %1736 = vmatprep.subr.bf16.mxu0 0
      %1737 = vmatpush1.bf16.msra.mxu0 %v1715
      %1738 = vmatprep.subr.bf16.mxu0 0
      %1739 = vmatpush1.bf16.msra.mxu0 %v1716
      %1740 = vmatprep.subr.bf16.mxu0 0
      %1741 = vmatpush1.bf16.msra.mxu0 %v1717
      %1742 = vmatprep.subr.bf16.mxu0 0
      %1743 = vmatpush1.bf16.msra.mxu0 0
      %1744 = vmatprep.subr.bf16.mxu0 0
      %1745 = vmatpush1.bf16.msra.mxu0 0
      %1746 = vmatprep.subr.bf16.mxu0 0
      %1747 = vmatpush1.bf16.msra.mxu0 0
      %1748 = vmatprep.subr.bf16.mxu0 0
      %1749 = vmatpush1.bf16.msra.mxu0 0
      %1750 = vmatprep.subr.bf16.mxu0 0
      %1751 = vmatpush1.bf16.msra.mxu0 0
      %1752 = vmatprep.subr.bf16.mxu0 0
      %1753 = vmatpush1.bf16.msra.mxu0 0
      %1754 = vmatprep.subr.bf16.mxu0 0
      %1755 = vmatpush1.bf16.msra.mxu0 0
      %1756 = vmatprep.subr.bf16.mxu0 0
      %1757 = vmatpush1.bf16.msra.mxu0 0
      %1758 = vmatprep.subr.bf16.mxu0 0
      %1759 = vmatpush1.bf16.msra.mxu0 0
      %1760 = vmatprep.subr.bf16.mxu0 0
      %1761 = vmatpush1.bf16.msra.mxu0 0
      %1762 = vmatprep.subr.bf16.mxu0 0
      %1763 = vmatpush1.bf16.msra.mxu0 0
      %1764 = vmatprep.subr.bf16.mxu0 0
      %1765 = vmatpush1.bf16.msra.mxu0 0
      %1766 = vmatprep.mubr.bf16.mxu0 0
      %1767 = vmatmul.mubr.bf16.gmra.mrb[0].mxu0 %v1723
      %v1768 = vpop.f32.mrb[0].mxu0
      %v1769 = vadd.f32 0.0, %v1768
      %v1770 = vpop.f32.mrb[0].mxu0
      %v1771 = vpop.f32.mrb[0].mxu0
      %v1772 = vadd.f32 0.0, %v1771
      %v1773 = vpop.f32.mrb[0].mxu0
      %1774 = vmatprep.mubr.bf16.mxu0 0
      %1775 = vmatmul.mubr.bf16.gmra.mrb[0].mxu0 %v1726
      %v1776 = vpop.f32.mrb[0].mxu0
      %v1777 = vadd.f32 0.0, %v1776
      %v1778 = vpop.f32.mrb[0].mxu0
      %v1779 = vpop.f32.mrb[0].mxu0
      %v1780 = vadd.f32 0.0, %v1779
      %v1781 = vpop.f32.mrb[0].mxu0
      %1782 = vmatprep.mubr.bf16.mxu0 0
      %1783 = vmatmul.mubr.bf16.gmra.mrb[0].mxu0 %v1729
      %v1784 = vpop.f32.mrb[0].mxu0
      %v1785 = vadd.f32 0.0, %v1784
      %v1786 = vpop.f32.mrb[0].mxu0
      %v1787 = vpop.f32.mrb[0].mxu0
      %v1788 = vadd.f32 0.0, %v1787
      %v1789 = vpop.f32.mrb[0].mxu0
      %1790 = vmatprep.mubr.bf16.mxu0 0
      %1791 = vmatmul.mubr.bf16.gmra.mrb[0].mxu0 %v1732
      %v1792 = vpop.f32.mrb[0].mxu0
      %v1793 = vadd.f32 0.0, %v1792
      %v1794 = vpop.f32.mrb[0].mxu0
      %v1795 = vpop.f32.mrb[0].mxu0
      %v1796 = vadd.f32 0.0, %v1795
      %v1797 = vpop.f32.mrb[0].mxu0
      %1798 = vdwg.mxu0
      %v1799 = vadd.f32 %v1660, %v1769
      %v1800 = vadd.f32 %v1661, %v1772
      %v1801 = vadd.f32 %v1662, %v1777
      %v1802 = vadd.f32 %v1663, %v1780
      %v1803 = vadd.f32 %v1664, %v1785
      %v1804 = vadd.f32 %v1665, %v1788
      %v1805 = vadd.f32 %v1666, %v1793
      %v1806 = vadd.f32 %v1667, %v1796
      %v1807 = vld [vmem:[%s2] sm:$0xff]
      %v1808 = vld [vmem:[%s2 + $0x8] sm:$0xff]
      %v1809 = vld [vmem:[%s2 + $0x10] sm:$0xff]
      %v1810 = vld [vmem:[%s2 + $0x18] sm:$0xff]
      %v1811 = vld [vmem:[%s2 + $0x20] sm:$0xff]
      %v1812 = vld [vmem:[%s2 + $0x28] sm:$0xff]
      %v1813 = vld [vmem:[%s2 + $0x30] sm:$0xff]
      %v1814 = vld [vmem:[%s2 + $0x38] sm:$0xff]
      %1816 = vset.pattern.permute.xlu0 0
      %1817 = vperm.xlu0 %1816, %v1807
      %v1818 = vpop.permute.xlu0 %1817
      %1821 = vset.pattern.permute.xlu0 0
      %1822 = vperm.xlu0 %1821, %v1808
      %v1823 = vpop.permute.xlu0 %1822
      %1826 = vset.pattern.permute.xlu0 0
      %1827 = vperm.xlu0 %1826, %v1809
      %v1828 = vpop.permute.xlu0 %1827
      %1831 = vset.pattern.permute.xlu0 0
      %1832 = vperm.xlu0 %1831, %v1810
      %v1833 = vpop.permute.xlu0 %1832
      %1836 = vset.pattern.permute.xlu0 0
      %1837 = vperm.xlu0 %1836, %v1811
      %v1838 = vpop.permute.xlu0 %1837
      %1841 = vset.pattern.permute.xlu0 0
      %1842 = vperm.xlu0 %1841, %v1812
      %v1843 = vpop.permute.xlu0 %1842
      %1846 = vset.pattern.permute.xlu0 0
      %1847 = vperm.xlu0 %1846, %v1813
      %v1848 = vpop.permute.xlu0 %1847
      %1851 = vset.pattern.permute.xlu0 0
      %1852 = vperm.xlu0 %1851, %v1814
      %v1853 = vpop.permute.xlu0 %1852
      %v1855 = vadd.f32 %v1799, %v1818
      %v1856 = vadd.f32 %v1800, %v1823
      %v1857 = vadd.f32 %v1801, %v1828
      %v1858 = vadd.f32 %v1802, %v1833
      %v1859 = vadd.f32 %v1803, %v1838
      %v1860 = vadd.f32 %v1804, %v1843
      %v1861 = vadd.f32 %v1805, %v1848
      %v1862 = vadd.f32 %v1806, %v1853
      %v1863 = vpack.c.bf16 %v1856, %v1855
      %v1864 = vpack.c.bf16 %v1858, %v1857
      %v1865 = vpack.c.bf16 %v1860, %v1859
      %v1866 = vpack.c.bf16 %v1862, %v1861
      %v1871 = vunpack.c.l.b16 %v1863
      %v1872 = vunpack.c.h.b16 %v1863
      %v1873 = vunpack.c.l.b16 %v1864
      %v1874 = vunpack.c.h.b16 %v1864
      %v1875 = vunpack.c.l.b16 %v1865
      %v1876 = vunpack.c.h.b16 %v1865
      %v1877 = vunpack.c.l.b16 %v1866
      %v1878 = vunpack.c.h.b16 %v1866
      %v1879 = vpack.c.b16 %v1871, %v1871
      %v1880 = vpack.c.b16 %v1872, %v1872
      %v1881 = vpack.c.b16 %v1873, %v1873
      %v1882 = vpack.c.b16 %v1874, %v1874
      %v1883 = vpack.c.b16 %v1875, %v1875
      %v1884 = vpack.c.b16 %v1876, %v1876
      %v1885 = vpack.c.b16 %v1877, %v1877
      %v1886 = vpack.c.b16 %v1878, %v1878
      %1895 = vst [vmem:[%s251] sm:$0xf] %v1879
      %1896 = vst [vmem:[%s251 + $0x4] sm:$0xf] %v1880
      %1897 = vst [vmem:[%s251 + $0x8] sm:$0xf] %v1881
      %1898 = vst [vmem:[%s251 + $0xc] sm:$0xf] %v1882
      %1899 = vst [vmem:[%s251 + $0x10] sm:$0xf] %v1883
      %1900 = vst [vmem:[%s251 + $0x14] sm:$0xf] %v1884
      %1901 = vst [vmem:[%s251 + $0x18] sm:$0xf] %v1885
      %1902 = vst [vmem:[%s251 + $0x1c] sm:$0xf] %v1886
      %p1903 = scmp.lt.s32.totalorder %s17, 1
      %s1904 = scalar_select %p1903, %s17, 1
      %s1905 = smul.addr %s1904, 8
      %s1906 = smul.addr %s1905, 4
      %s1907 = scalar_lea.vmem %s6, %s1906
      // Predicated region
      $region45: #{s_encoder_forward.15} parent=43 // pred_check
        %p1908 = pneg %p166
      $region46: #{s_encoder_forward.15} parent=43 // pred_check_branch
        %1910 = sbr.rel (%p1908) target = $region48
      $region47: #{s_encoder_forward.15} parent=43 // pred_region
        _
      $region48: #{s_encoder_forward.15} parent=43 // pred_fallthru
        _
    $region44: #{s_encoder_forward.15} parent=5 // pred_fallthru
      _
    %p1911 = scmp.le.s32.totalorder 2, %s12
    // Predicated region
    $region49: #{s_encoder_forward.15} parent=5 // pred_check
      %p1912 = pneg %p1911
    $region50: #{s_encoder_forward.15} parent=5 // pred_check_branch
      %1914 = sbr.rel (%p1912) target = $region52
    $region51: #{s_encoder_forward.15} parent=5 // pred_region
      %s1915 = ssub.s32 %s12, 2
      // Predicated region
      $region53: #{s_encoder_forward.15} parent=51 // pred_check
        %p1916 = pneg %p172
      $region54: #{s_encoder_forward.15} parent=51 // pred_check_branch
        %1918 = sbr.rel (%p1916) target = $region56
      $region55: #{s_encoder_forward.15} parent=51 // pred_region
        %p1919 = scmp.lt.s32.totalorder %s18, 1
        %s1920 = scalar_select %p1919, %s18, 1
        %s1921 = smul.addr %s1920, 8
        %s1922 = smul.addr %s1921, 4
        %s1923 = scalar_lea.vmem %s6, %s1922
      $region56: #{s_encoder_forward.15} parent=51 // pred_fallthru
        _
    $region52: #{s_encoder_forward.15} parent=5 // pred_fallthru
      _
  $region6: #{s_encoder_forward.15} parent=0 // loop_footer
    %s16 = sadd.s32 1, %s12
  $region7: #{s_encoder_forward.15} parent=0 // loop_footer_branch
    %11 = sbr.rel target = $region3
  $region8: #{s_encoder_forward.15} parent=0 // loop_exit
    _

// kernel: s_encoder_forward.16
$region0: #{s_encoder_forward.16}
  #allocation0 [shape = 'u32[]', space=smem, size = 0x4, offset = 0x4, fixed_abs, tag = 'smem constant byte address 0x4 - core index']
  #allocation1 [shape = 'u32[144,128]{1,0:T(1,128)}', space=vmem, size = 0x12000, scoped, tag = 'internal scratch']
  %s0 = inlined_call_operand.vmem [shape: bf16[2,64,256], index: 0, kind: input, shape index: {}]
  %s1 = inlined_call_operand.vmem [shape: bf16[9,64,64], index: 1, kind: input, shape index: {}]
  %s2 = inlined_call_operand.vmem [shape: f32[64,1], index: 2, kind: input, shape index: {}]
  %s3 = inlined_call_operand.vmem [shape: f32[64,256], index: 3, kind: input, shape index: {}]
  %s4 = inlined_call_operand.vmem [shape: f32[64,1], index: 4, kind: input, shape index: {}]
  %s5 = inlined_call_operand.vmem [shape: f32[64,1], index: 5, kind: input, shape index: {}]
  %s6 = inlined_call_operand.vmem [shape: bf16[2,64,128], index: 6, kind: input, shape index: {}]
  %s7 = inlined_call_operand.vmem [shape: bf16[2,64,128], index: 7, kind: output, shape index: {}]
  %s8 = sld [smem:[#allocation0]]
  $region61: #{s_encoder_forward.16} parent=0
    _
  %s10 = ssub.s32 1, %s8
  %s11 = scalar_select 0, %s10, %s8
  loop: start=0, step=1, limit=4
  $region2: #{s_encoder_forward.16} parent=0 // loop_pre_header
    _
  $region3: #{s_encoder_forward.16} parent=0 // loop_header
    %s13 = sphi 0, %s17
    %p14 = scmp.ge.s32.totalorder %s13, 4
    %s23 = sphi 0, %s25
    %s26 = sphi 0, %s23
    %s27 = sphi 0, %s26
    %s43 = sphi 0, %s27
    %s47 = sphi 0, %s47
    %s49 = sphi 0, %s47
    %s50 = sphi 0, %s49
    %s64 = sphi 0, %s50
    %s68 = sphi 0, %s68
    %s70 = sphi 0, %s68
    %s71 = sphi 0, %s70
    %s85 = sphi 0, %s71
    %s89 = sphi 0, %s89
    %s91 = sphi 0, %s89
    %s92 = sphi 0, %s91
    %s106 = sphi 0, %s92
    %s110 = sphi 0, %s110
    %s112 = sphi 0, %s110
    %s113 = sphi 0, %s112
    %s127 = sphi 0, %s113
    %s131 = sphi 0, %s131
    %s133 = sphi 0, %s131
    %s134 = sphi 0, %s133
    %s148 = sphi 0, %s134
    %s154 = sphi 0, %s156
    %s157 = sphi 0, %s154
    %s158 = sphi 0, %s157
    %s174 = sphi 0, %s158
    %s180 = sphi 0, %s182
    %s183 = sphi 0, %s180
    %s184 = sphi 0, %s183
    %s200 = sphi 0, %s184
  $region4: #{s_encoder_forward.16} parent=0 // loop_header_branch
    %16 = sbr.rel (%p14) target = $region8
  $region5: #{s_encoder_forward.16} parent=0 // loop_body
    %s18 = ssub.s32 %s13, 1
    %s19 = ssub.s32 %s13, 2
    %s20 = sadd.s32 %s13, 1
    %s21 = ssub.s32 %s13, %s20
    %p22 = scmp.eq.s32.totalorder %s21, 0
    %s24 = sadd.s32 %s23, 1
    %s25 = scalar_select %p22, %s23, %s24
    %p28 = pneg %p22
    %p29 = scmp.eq.s32.totalorder %s13, 1
    %p30 = por %p28, %p29
    %p31 = scmp.ne.s32.totalorder %s23, %s26
    %p32 = scmp.eq.s32.totalorder %s13, 0
    %p33 = por %p31, %p32
    %p34 = scmp.ne.s32.totalorder %s23, %s26
    %p35 = scmp.eq.s32.totalorder %s18, 1
    %p36 = por %p34, %p35
    %p37 = scmp.ne.s32.totalorder %s26, %s27
    %p38 = scmp.eq.s32.totalorder %s18, 0
    %p39 = por %p37, %p38
    %p40 = scmp.ne.s32.totalorder %s26, %s27
    %p41 = scmp.eq.s32.totalorder %s19, 1
    %p42 = por %p40, %p41
    %p44 = scmp.ne.s32.totalorder %s27, %s43
    %p45 = scmp.eq.s32.totalorder %s19, 0
    %p46 = por %p44, %p45
    %s48 = sadd.s32 %s47, 1
    %p51 = scmp.eq.s32.totalorder %s13, 1
    %p52 = scmp.ne.s32.totalorder %s47, %s49
    %p53 = scmp.eq.s32.totalorder %s13, 0
    %p54 = por %p52, %p53
    %p55 = scmp.ne.s32.totalorder %s47, %s49
    %p56 = scmp.eq.s32.totalorder %s18, 1
    %p57 = por %p55, %p56
    %p58 = scmp.ne.s32.totalorder %s49, %s50
    %p59 = scmp.eq.s32.totalorder %s18, 0
    %p60 = por %p58, %p59
    %p61 = scmp.ne.s32.totalorder %s49, %s50
    %p62 = scmp.eq.s32.totalorder %s19, 1
    %p63 = por %p61, %p62
    %p65 = scmp.ne.s32.totalorder %s50, %s64
    %p66 = scmp.eq.s32.totalorder %s19, 0
    %p67 = por %p65, %p66
    %s69 = sadd.s32 %s68, 1
    %p72 = scmp.eq.s32.totalorder %s13, 1
    %p73 = scmp.ne.s32.totalorder %s68, %s70
    %p74 = scmp.eq.s32.totalorder %s13, 0
    %p75 = por %p73, %p74
    %p76 = scmp.ne.s32.totalorder %s68, %s70
    %p77 = scmp.eq.s32.totalorder %s18, 1
    %p78 = por %p76, %p77
    %p79 = scmp.ne.s32.totalorder %s70, %s71
    %p80 = scmp.eq.s32.totalorder %s18, 0
    %p81 = por %p79, %p80
    %p82 = scmp.ne.s32.totalorder %s70, %s71
    %p83 = scmp.eq.s32.totalorder %s19, 1
    %p84 = por %p82, %p83
    %p86 = scmp.ne.s32.totalorder %s71, %s85
    %p87 = scmp.eq.s32.totalorder %s19, 0
    %p88 = por %p86, %p87
    %s90 = sadd.s32 %s89, 1
    %p93 = scmp.eq.s32.totalorder %s13, 1
    %p94 = scmp.ne.s32.totalorder %s89, %s91
    %p95 = scmp.eq.s32.totalorder %s13, 0
    %p96 = por %p94, %p95
    %p97 = scmp.ne.s32.totalorder %s89, %s91
    %p98 = scmp.eq.s32.totalorder %s18, 1
    %p99 = por %p97, %p98
    %p100 = scmp.ne.s32.totalorder %s91, %s92
    %p101 = scmp.eq.s32.totalorder %s18, 0
    %p102 = por %p100, %p101
    %p103 = scmp.ne.s32.totalorder %s91, %s92
    %p104 = scmp.eq.s32.totalorder %s19, 1
    %p105 = por %p103, %p104
    %p107 = scmp.ne.s32.totalorder %s92, %s106
    %p108 = scmp.eq.s32.totalorder %s19, 0
    %p109 = por %p107, %p108
    %s111 = sadd.s32 %s110, 1
    %p114 = scmp.eq.s32.totalorder %s13, 1
    %p115 = scmp.ne.s32.totalorder %s110, %s112
    %p116 = scmp.eq.s32.totalorder %s13, 0
    %p117 = por %p115, %p116
    %p118 = scmp.ne.s32.totalorder %s110, %s112
    %p119 = scmp.eq.s32.totalorder %s18, 1
    %p120 = por %p118, %p119
    %p121 = scmp.ne.s32.totalorder %s112, %s113
    %p122 = scmp.eq.s32.totalorder %s18, 0
    %p123 = por %p121, %p122
    %p124 = scmp.ne.s32.totalorder %s112, %s113
    %p125 = scmp.eq.s32.totalorder %s19, 1
    %p126 = por %p124, %p125
    %p128 = scmp.ne.s32.totalorder %s113, %s127
    %p129 = scmp.eq.s32.totalorder %s19, 0
    %p130 = por %p128, %p129
    %s132 = sadd.s32 %s131, 1
    %p135 = scmp.eq.s32.totalorder %s13, 1
    %p136 = scmp.ne.s32.totalorder %s131, %s133
    %p137 = scmp.eq.s32.totalorder %s13, 0
    %p138 = por %p136, %p137
    %p139 = scmp.ne.s32.totalorder %s131, %s133
    %p140 = scmp.eq.s32.totalorder %s18, 1
    %p141 = por %p139, %p140
    %p142 = scmp.ne.s32.totalorder %s133, %s134
    %p143 = scmp.eq.s32.totalorder %s18, 0
    %p144 = por %p142, %p143
    %p145 = scmp.ne.s32.totalorder %s133, %s134
    %p146 = scmp.eq.s32.totalorder %s19, 1
    %p147 = por %p145, %p146
    %p149 = scmp.ne.s32.totalorder %s134, %s148
    %p150 = scmp.eq.s32.totalorder %s19, 0
    %p151 = por %p149, %p150
    %s152 = ssub.s32 %s13, %s20
    %p153 = scmp.eq.s32.totalorder %s152, 0
    %s155 = sadd.s32 %s154, 1
    %s156 = scalar_select %p153, %s154, %s155
    %p159 = pneg %p153
    %p160 = scmp.eq.s32.totalorder %s13, 1
    %p161 = por %p159, %p160
    %p162 = scmp.ne.s32.totalorder %s154, %s157
    %p163 = scmp.eq.s32.totalorder %s13, 0
    %p164 = por %p162, %p163
    %p165 = scmp.ne.s32.totalorder %s154, %s157
    %p166 = scmp.eq.s32.totalorder %s18, 1
    %p167 = por %p165, %p166
    %p168 = scmp.ne.s32.totalorder %s157, %s158
    %p169 = scmp.eq.s32.totalorder %s18, 0
    %p170 = por %p168, %p169
    %p171 = scmp.ne.s32.totalorder %s157, %s158
    %p172 = scmp.eq.s32.totalorder %s19, 1
    %p173 = por %p171, %p172
    %p175 = scmp.ne.s32.totalorder %s158, %s174
    %p176 = scmp.eq.s32.totalorder %s19, 0
    %p177 = por %p175, %p176
    %s178 = ssub.s32 %s13, %s20
    %p179 = scmp.eq.s32.totalorder %s178, 0
    %s181 = sadd.s32 %s180, 1
    %s182 = scalar_select %p179, %s180, %s181
    %p185 = pneg %p179
    %p186 = scmp.eq.s32.totalorder %s13, 1
    %p187 = por %p185, %p186
    %p188 = scmp.ne.s32.totalorder %s180, %s183
    %p189 = scmp.eq.s32.totalorder %s13, 0
    %p190 = por %p188, %p189
    %p191 = scmp.ne.s32.totalorder %s180, %s183
    %p192 = scmp.eq.s32.totalorder %s18, 1
    %p193 = por %p191, %p192
    %p194 = scmp.ne.s32.totalorder %s183, %s184
    %p195 = scmp.eq.s32.totalorder %s18, 0
    %p196 = por %p194, %p195
    %p197 = scmp.ne.s32.totalorder %s183, %s184
    %p198 = scmp.eq.s32.totalorder %s19, 1
    %p199 = por %p197, %p198
    %p201 = scmp.ne.s32.totalorder %s184, %s200
    %p202 = scmp.eq.s32.totalorder %s19, 0
    %p203 = por %p201, %p202
    %p204 = scmp.le.s32.totalorder 1, %s13
    %p205 = scmp.lt.s32.totalorder %s13, 3
    %p206 = pnand %p204, %p205
    %p207 = pneg %p206
    // Predicated region
    $region9: #{s_encoder_forward.16} parent=5 // pred_check
      _
    $region10: #{s_encoder_forward.16} parent=5 // pred_check_branch
      %209 = sbr.rel (%p206) target = $region12
    $region11: #{s_encoder_forward.16} parent=5 // pred_region
      %s210 = ssub.s32 %s13, 1
      // Predicated region
      $region13: #{s_encoder_forward.16} parent=11 // pred_check
        %p211 = pneg %p60
      $region14: #{s_encoder_forward.16} parent=11 // pred_check_branch
        %213 = sbr.rel (%p211) target = $region16
      $region15: #{s_encoder_forward.16} parent=11 // pred_region
        _
      $region16: #{s_encoder_forward.16} parent=11 // pred_fallthru
        _
      // Predicated region
      $region17: #{s_encoder_forward.16} parent=11 // pred_check
        %p214 = pneg %p81
      $region18: #{s_encoder_forward.16} parent=11 // pred_check_branch
        %216 = sbr.rel (%p214) target = $region20
      $region19: #{s_encoder_forward.16} parent=11 // pred_region
        _
      $region20: #{s_encoder_forward.16} parent=11 // pred_fallthru
        _
      // Predicated region
      $region21: #{s_encoder_forward.16} parent=11 // pred_check
        %p217 = pneg %p102
      $region22: #{s_encoder_forward.16} parent=11 // pred_check_branch
        %219 = sbr.rel (%p217) target = $region24
      $region23: #{s_encoder_forward.16} parent=11 // pred_region
        _
      $region24: #{s_encoder_forward.16} parent=11 // pred_fallthru
        _
      // Predicated region
      $region25: #{s_encoder_forward.16} parent=11 // pred_check
        %p220 = pneg %p123
      $region26: #{s_encoder_forward.16} parent=11 // pred_check_branch
        %222 = sbr.rel (%p220) target = $region28
      $region27: #{s_encoder_forward.16} parent=11 // pred_region
        _
      $region28: #{s_encoder_forward.16} parent=11 // pred_fallthru
        _
      // Predicated region
      $region29: #{s_encoder_forward.16} parent=11 // pred_check
        %p223 = pneg %p144
      $region30: #{s_encoder_forward.16} parent=11 // pred_check_branch
        %225 = sbr.rel (%p223) target = $region32
      $region31: #{s_encoder_forward.16} parent=11 // pred_region
        _
      $region32: #{s_encoder_forward.16} parent=11 // pred_fallthru
        _
    $region12: #{s_encoder_forward.16} parent=5 // pred_fallthru
      _
    %p226 = scmp.lt.s32.totalorder %s13, 2
    // Predicated region
    $region33: #{s_encoder_forward.16} parent=5 // pred_check
      %p227 = pneg %p226
    $region34: #{s_encoder_forward.16} parent=5 // pred_check_branch
      %229 = sbr.rel (%p227) target = $region36
    $region35: #{s_encoder_forward.16} parent=5 // pred_region
      // Predicated region
      $region37: #{s_encoder_forward.16} parent=35 // pred_check
        %p230 = pneg %p33
      $region38: #{s_encoder_forward.16} parent=35 // pred_check_branch
        %232 = sbr.rel (%p230) target = $region40
      $region39: #{s_encoder_forward.16} parent=35 // pred_region
        %p233 = scmp.lt.s32.totalorder %s13, 1
        %s234 = scalar_select %p233, %s13, 1
        %s235 = smul.addr %s234, 16
        %s236 = smul.addr %s235, 4
        %s237 = scalar_lea.vmem %s0, %s236
      $region40: #{s_encoder_forward.16} parent=35 // pred_fallthru
        _
      // Predicated region
      $region41: #{s_encoder_forward.16} parent=35 // pred_check
        %p238 = pneg %p164
      $region42: #{s_encoder_forward.16} parent=35 // pred_check_branch
        %240 = sbr.rel (%p238) target = $region44
      $region43: #{s_encoder_forward.16} parent=35 // pred_region
        %p241 = scmp.lt.s32.totalorder %s13, 1
        %s242 = scalar_select %p241, %s13, 1
        %s243 = smul.addr %s242, 8
        %s244 = smul.addr %s243, 4
        %s245 = scalar_lea.vmem %s6, %s244
      $region44: #{s_encoder_forward.16} parent=35 // pred_fallthru
        _
    $region36: #{s_encoder_forward.16} parent=5 // pred_fallthru
      _
    %p246 = scmp.le.s32.totalorder 1, %s13
    %p247 = scmp.lt.s32.totalorder %s13, 3
    %p248 = pnand %p246, %p247
    %p249 = pneg %p248
    // Predicated region
    $region45: #{s_encoder_forward.16} parent=5 // pred_check
      _
    $region46: #{s_encoder_forward.16} parent=5 // pred_check_branch
      %251 = sbr.rel (%p248) target = $region48
    $region47: #{s_encoder_forward.16} parent=5 // pred_region
      %s252 = ssub.s32 %s13, 1
      %p253 = scmp.lt.s32.totalorder %s18, 1
      %s254 = scalar_select %p253, %s18, 1
      %s255 = smul.addr %s254, 16
      %s256 = smul.addr %s255, 4
      %s257 = scalar_lea.vmem %s0, %s256
      %p258 = pneg %p39
      %p259 = pneg %p36
      %p260 = pneg %p60
      %p261 = pneg %p57
      %p262 = pneg %p81
      %p263 = pneg %p78
      %p264 = pneg %p102
      %p265 = pneg %p99
      %p266 = pneg %p123
      %p267 = pneg %p120
      %p268 = pneg %p144
      %p269 = pneg %p141
      %p270 = scmp.lt.s32.totalorder %s18, 1
      %s271 = scalar_select %p270, %s18, 1
      %s272 = smul.addr %s271, 8
      %s273 = smul.addr %s272, 4
      %s274 = scalar_lea.vmem %s6, %s273
      %p275 = pneg %p170
      %p276 = pneg %p167
      %p277 = pneg %p196
      %p278 = pneg %p193
      %p279 = scmp.lt.s32.totalorder %s18, 1
      %s280 = scalar_select %p279, %s18, 1
      %s281 = smul.addr %s280, 8
      %s282 = smul.addr %s281, 4
      %s283 = scalar_lea.vmem %s7, %s282
      %p284 = scmp.lt.s32.totalorder %s18, 1
      %s285 = scalar_select %p284, %s18, 1
      %s286 = smul.addr %s285, 16
      %s287 = smul.addr %s286, 4
      %s288 = scalar_lea.vmem %s0, %s287
      %p289 = scmp.lt.s32.totalorder %s18, 1
      %s290 = scalar_select %p289, %s18, 1
      %s291 = smul.addr %s290, 8
      %s292 = smul.addr %s291, 4
      %s293 = scalar_lea.vmem %s6, %s292
      %p294 = scmp.lt.s32.totalorder %s18, 1
      %s295 = scalar_select %p294, %s18, 1
      %s296 = smul.addr %s295, 8
      %s297 = smul.addr %s296, 4
      %s298 = scalar_lea.vmem %s7, %s297
      %v300 = vld [vmem:[%s288] sm:$0xff]
      %v301 = vld [vmem:[%s288 + $0x8] sm:$0xff]
      %v302 = vld [vmem:[%s288 + $0x10] sm:$0xff]
      %v303 = vld [vmem:[%s288 + $0x18] sm:$0xff]
      %v304 = vld [vmem:[%s288 + $0x20] sm:$0xff]
      %v305 = vld [vmem:[%s288 + $0x28] sm:$0xff]
      %v306 = vld [vmem:[%s288 + $0x30] sm:$0xff]
      %v307 = vld [vmem:[%s288 + $0x38] sm:$0xff]
      %v308 = vunpack.c.l.bf16 %v300
      %v309 = vunpack.c.h.bf16 %v300
      %v310 = vunpack.c.l.bf16 %v301
      %v311 = vunpack.c.h.bf16 %v301
      %v312 = vunpack.c.l.bf16 %v302
      %v313 = vunpack.c.h.bf16 %v302
      %v314 = vunpack.c.l.bf16 %v303
      %v315 = vunpack.c.h.bf16 %v303
      %v316 = vunpack.c.l.bf16 %v304
      %v317 = vunpack.c.h.bf16 %v304
      %v318 = vunpack.c.l.bf16 %v305
      %v319 = vunpack.c.h.bf16 %v305
      %v320 = vunpack.c.l.bf16 %v306
      %v321 = vunpack.c.h.bf16 %v306
      %v322 = vunpack.c.l.bf16 %v307
      %v323 = vunpack.c.h.bf16 %v307
      %v324 = vld [vmem:[%s3] sm:$0xff]
      %v325 = vld [vmem:[%s3 + $0x8] sm:$0xff]
      %v326 = vld [vmem:[%s3 + $0x10] sm:$0xff]
      %v327 = vld [vmem:[%s3 + $0x18] sm:$0xff]
      %v328 = vld [vmem:[%s3 + $0x20] sm:$0xff]
      %v329 = vld [vmem:[%s3 + $0x28] sm:$0xff]
      %v330 = vld [vmem:[%s3 + $0x30] sm:$0xff]
      %v331 = vld [vmem:[%s3 + $0x38] sm:$0xff]
      %v332 = vld [vmem:[%s3 + $0x40] sm:$0xff]
      %v333 = vld [vmem:[%s3 + $0x48] sm:$0xff]
      %v334 = vld [vmem:[%s3 + $0x50] sm:$0xff]
      %v335 = vld [vmem:[%s3 + $0x58] sm:$0xff]
      %v336 = vld [vmem:[%s3 + $0x60] sm:$0xff]
      %v337 = vld [vmem:[%s3 + $0x68] sm:$0xff]
      %v338 = vld [vmem:[%s3 + $0x70] sm:$0xff]
      %v339 = vld [vmem:[%s3 + $0x78] sm:$0xff]
      %v340 = vmul.f32 %v308, %v324
      %v341 = vmul.f32 %v309, %v325
      %v342 = vmul.f32 %v310, %v326
      %v343 = vmul.f32 %v311, %v327
      %v344 = vmul.f32 %v312, %v328
      %v345 = vmul.f32 %v313, %v329
      %v346 = vmul.f32 %v314, %v330
      %v347 = vmul.f32 %v315, %v331
      %v348 = vmul.f32 %v316, %v332
      %v349 = vmul.f32 %v317, %v333
      %v350 = vmul.f32 %v318, %v334
      %v351 = vmul.f32 %v319, %v335
      %v352 = vmul.f32 %v320, %v336
      %v353 = vmul.f32 %v321, %v337
      %v354 = vmul.f32 %v322, %v338
      %v355 = vmul.f32 %v323, %v339
      %v356 = vadd.f32 %v340, %v341
      %v357 = vadd.f32 %v356, %v342
      %v358 = vadd.f32 %v357, %v343
      %v359 = vadd.f32 %v358, %v344
      %v360 = vadd.f32 %v359, %v345
      %v361 = vadd.f32 %v360, %v346
      %v362 = vadd.f32 %v361, %v347
      %v363 = vadd.f32 %v362, %v348
      %v364 = vadd.f32 %v363, %v349
      %v365 = vadd.f32 %v364, %v350
      %v366 = vadd.f32 %v365, %v351
      %v367 = vadd.f32 %v366, %v352
      %v368 = vadd.f32 %v367, %v353
      %v369 = vadd.f32 %v368, %v354
      %v370 = vadd.f32 %v369, %v355
      %371 = vadd.xlane.f32.xlu0 %v370
      %v372 = vpop.xlane.xlu0 %371
      %v373 = vrot.slane %v372, 4
      %v374 = vadd.f32 %v372, %v373
      %v375 = vrot.slane %v374, 2
      %v376 = vadd.f32 %v374, %v375
      %v377 = vrot.slane %v376, 1
      %v378 = vadd.f32 %v376, %v377
      %s379 = vtos %v378
      %v380 = vstv %s379
      %v381 = vrcp.pop 1024.0
      %v382 = vmul.f32 %v380, %v381
      %v383 = vsub.f32 %v308, %v382
      %v384 = vsub.f32 %v309, %v382
      %v385 = vsub.f32 %v310, %v382
      %v386 = vsub.f32 %v311, %v382
      %v387 = vsub.f32 %v312, %v382
      %v388 = vsub.f32 %v313, %v382
      %v389 = vsub.f32 %v314, %v382
      %v390 = vsub.f32 %v315, %v382
      %v391 = vsub.f32 %v316, %v382
      %v392 = vsub.f32 %v317, %v382
      %v393 = vsub.f32 %v318, %v382
      %v394 = vsub.f32 %v319, %v382
      %v395 = vsub.f32 %v320, %v382
      %v396 = vsub.f32 %v321, %v382
      %v397 = vsub.f32 %v322, %v382
      %v398 = vsub.f32 %v323, %v382
      %v399 = vmul.f32 %v383, %v324
      %v400 = vmul.f32 %v384, %v325
      %v401 = vmul.f32 %v385, %v326
      %v402 = vmul.f32 %v386, %v327
      %v403 = vmul.f32 %v387, %v328
      %v404 = vmul.f32 %v388, %v329
      %v405 = vmul.f32 %v389, %v330
      %v406 = vmul.f32 %v390, %v331
      %v407 = vmul.f32 %v391, %v332
      %v408 = vmul.f32 %v392, %v333
      %v409 = vmul.f32 %v393, %v334
      %v410 = vmul.f32 %v394, %v335
      %v411 = vmul.f32 %v395, %v336
      %v412 = vmul.f32 %v396, %v337
      %v413 = vmul.f32 %v397, %v338
      %v414 = vmul.f32 %v398, %v339
      %v415 = vmul.f32 %v399, %v399
      %v416 = vmul.f32 %v400, %v400
      %v417 = vmul.f32 %v401, %v401
      %v418 = vmul.f32 %v402, %v402
      %v419 = vmul.f32 %v403, %v403
      %v420 = vmul.f32 %v404, %v404
      %v421 = vmul.f32 %v405, %v405
      %v422 = vmul.f32 %v406, %v406
      %v423 = vmul.f32 %v407, %v407
      %v424 = vmul.f32 %v408, %v408
      %v425 = vmul.f32 %v409, %v409
      %v426 = vmul.f32 %v410, %v410
      %v427 = vmul.f32 %v411, %v411
      %v428 = vmul.f32 %v412, %v412
      %v429 = vmul.f32 %v413, %v413
      %v430 = vmul.f32 %v414, %v414
      %v431 = vadd.f32 %v415, %v416
      %v432 = vadd.f32 %v431, %v417
      %v433 = vadd.f32 %v432, %v418
      %v434 = vadd.f32 %v433, %v419
      %v435 = vadd.f32 %v434, %v420
      %v436 = vadd.f32 %v435, %v421
      %v437 = vadd.f32 %v436, %v422
      %v438 = vadd.f32 %v437, %v423
      %v439 = vadd.f32 %v438, %v424
      %v440 = vadd.f32 %v439, %v425
      %v441 = vadd.f32 %v440, %v426
      %v442 = vadd.f32 %v441, %v427
      %v443 = vadd.f32 %v442, %v428
      %v444 = vadd.f32 %v443, %v429
      %v445 = vadd.f32 %v444, %v430
      %446 = vadd.xlane.f32.xlu0 %v445
      %v447 = vpop.xlane.xlu0 %446
      %v448 = vrot.slane %v447, 4
      %v449 = vadd.f32 %v447, %v448
      %v450 = vrot.slane %v449, 2
      %v451 = vadd.f32 %v449, %v450
      %v452 = vrot.slane %v451, 1
      %v453 = vadd.f32 %v451, %v452
      %s454 = vtos %v453
      %v455 = vstv %s454
      %v456 = vrcp.pop 1023.0
      %v457 = vmul.f32 %v455, %v456
      %v458 = vrsqrt.pop %v457
      %v459 = vmul.f32 %v457, %v458
      %vm460 = vcmp.eq.f32.partialorder %v457, inf
      %v461 = vsel %vm460, %v457, %v459
      %vm462 = vcmp.eq.f32.partialorder %v457, 0.0
      %v463 = vand.u32 %v457, 2147483648
      %v464 = vsel %vm462, %v463, %v461
      %v465 = vadd.f32 %v464, 1e-05
      %v466 = vrcp.pop %v465
      %v467 = vmul.f32 1.0, %v466
      %v468 = vmul.f32 %v383, %v467
      %v469 = vmul.f32 %v384, %v467
      %v470 = vmul.f32 %v385, %v467
      %v471 = vmul.f32 %v386, %v467
      %v472 = vmul.f32 %v387, %v467
      %v473 = vmul.f32 %v388, %v467
      %v474 = vmul.f32 %v389, %v467
      %v475 = vmul.f32 %v390, %v467
      %v476 = vmul.f32 %v391, %v467
      %v477 = vmul.f32 %v392, %v467
      %v478 = vmul.f32 %v393, %v467
      %v479 = vmul.f32 %v394, %v467
      %v480 = vmul.f32 %v395, %v467
      %v481 = vmul.f32 %v396, %v467
      %v482 = vmul.f32 %v397, %v467
      %v483 = vmul.f32 %v398, %v467
      %v484 = vld [vmem:[%s4] sm:$0xff]
      %v485 = vld [vmem:[%s4 + $0x8] sm:$0xff]
      %v486 = vld [vmem:[%s4 + $0x10] sm:$0xff]
      %v487 = vld [vmem:[%s4 + $0x18] sm:$0xff]
      %v488 = vld [vmem:[%s4 + $0x20] sm:$0xff]
      %v489 = vld [vmem:[%s4 + $0x28] sm:$0xff]
      %v490 = vld [vmem:[%s4 + $0x30] sm:$0xff]
      %v491 = vld [vmem:[%s4 + $0x38] sm:$0xff]
      %493 = vset.pattern.permute.xlu0 0
      %494 = vperm.xlu0 %493, %v484
      %v495 = vpop.permute.xlu0 %494
      %498 = vset.pattern.permute.xlu0 0
      %499 = vperm.xlu0 %498, %v485
      %v500 = vpop.permute.xlu0 %499
      %503 = vset.pattern.permute.xlu0 0
      %504 = vperm.xlu0 %503, %v486
      %v505 = vpop.permute.xlu0 %504
      %508 = vset.pattern.permute.xlu0 0
      %509 = vperm.xlu0 %508, %v487
      %v510 = vpop.permute.xlu0 %509
      %513 = vset.pattern.permute.xlu0 0
      %514 = vperm.xlu0 %513, %v488
      %v515 = vpop.permute.xlu0 %514
      %518 = vset.pattern.permute.xlu0 0
      %519 = vperm.xlu0 %518, %v489
      %v520 = vpop.permute.xlu0 %519
      %523 = vset.pattern.permute.xlu0 0
      %524 = vperm.xlu0 %523, %v490
      %v525 = vpop.permute.xlu0 %524
      %528 = vset.pattern.permute.xlu0 0
      %529 = vperm.xlu0 %528, %v491
      %v530 = vpop.permute.xlu0 %529
      %v532 = vmul.f32 %v468, %v495
      %v533 = vmul.f32 %v469, %v495
      %v534 = vmul.f32 %v470, %v500
      %v535 = vmul.f32 %v471, %v500
      %v536 = vmul.f32 %v472, %v505
      %v537 = vmul.f32 %v473, %v505
      %v538 = vmul.f32 %v474, %v510
      %v539 = vmul.f32 %v475, %v510
      %v540 = vmul.f32 %v476, %v515
      %v541 = vmul.f32 %v477, %v515
      %v542 = vmul.f32 %v478, %v520
      %v543 = vmul.f32 %v479, %v520
      %v544 = vmul.f32 %v480, %v525
      %v545 = vmul.f32 %v481, %v525
      %v546 = vmul.f32 %v482, %v530
      %v547 = vmul.f32 %v483, %v530
      %v548 = vld [vmem:[%s5] sm:$0xff]
      %v549 = vld [vmem:[%s5 + $0x8] sm:$0xff]
      %v550 = vld [vmem:[%s5 + $0x10] sm:$0xff]
      %v551 = vld [vmem:[%s5 + $0x18] sm:$0xff]
      %v552 = vld [vmem:[%s5 + $0x20] sm:$0xff]
      %v553 = vld [vmem:[%s5 + $0x28] sm:$0xff]
      %v554 = vld [vmem:[%s5 + $0x30] sm:$0xff]
      %v555 = vld [vmem:[%s5 + $0x38] sm:$0xff]
      %557 = vset.pattern.permute.xlu0 0
      %558 = vperm.xlu0 %557, %v548
      %v559 = vpop.permute.xlu0 %558
      %562 = vset.pattern.permute.xlu0 0
      %563 = vperm.xlu0 %562, %v549
      %v564 = vpop.permute.xlu0 %563
      %567 = vset.pattern.permute.xlu0 0
      %568 = vperm.xlu0 %567, %v550
      %v569 = vpop.permute.xlu0 %568
      %572 = vset.pattern.permute.xlu0 0
      %573 = vperm.xlu0 %572, %v551
      %v574 = vpop.permute.xlu0 %573
      %577 = vset.pattern.permute.xlu0 0
      %578 = vperm.xlu0 %577, %v552
      %v579 = vpop.permute.xlu0 %578
      %582 = vset.pattern.permute.xlu0 0
      %583 = vperm.xlu0 %582, %v553
      %v584 = vpop.permute.xlu0 %583
      %587 = vset.pattern.permute.xlu0 0
      %588 = vperm.xlu0 %587, %v554
      %v589 = vpop.permute.xlu0 %588
      %592 = vset.pattern.permute.xlu0 0
      %593 = vperm.xlu0 %592, %v555
      %v594 = vpop.permute.xlu0 %593
      %v596 = vadd.f32 %v532, %v559
      %v597 = vadd.f32 %v533, %v559
      %v598 = vadd.f32 %v534, %v564
      %v599 = vadd.f32 %v535, %v564
      %v600 = vadd.f32 %v536, %v569
      %v601 = vadd.f32 %v537, %v569
      %v602 = vadd.f32 %v538, %v574
      %v603 = vadd.f32 %v539, %v574
      %v604 = vadd.f32 %v540, %v579
      %v605 = vadd.f32 %v541, %v579
      %v606 = vadd.f32 %v542, %v584
      %v607 = vadd.f32 %v543, %v584
      %v608 = vadd.f32 %v544, %v589
      %v609 = vadd.f32 %v545, %v589
      %v610 = vadd.f32 %v546, %v594
      %v611 = vadd.f32 %v547, %v594
      %v612 = vmax.f32 %v596, 0.0
      %v613 = vmax.f32 %v597, 0.0
      %v614 = vmax.f32 %v598, 0.0
      %v615 = vmax.f32 %v599, 0.0
      %v616 = vmax.f32 %v600, 0.0
      %v617 = vmax.f32 %v601, 0.0
      %v618 = vmax.f32 %v602, 0.0
      %v619 = vmax.f32 %v603, 0.0
      %v620 = vmax.f32 %v604, 0.0
      %v621 = vmax.f32 %v605, 0.0
      %v622 = vmax.f32 %v606, 0.0
      %v623 = vmax.f32 %v607, 0.0
      %v624 = vmax.f32 %v608, 0.0
      %v625 = vmax.f32 %v609, 0.0
      %v626 = vmax.f32 %v610, 0.0
      %v627 = vmax.f32 %v611, 0.0
      %v628 = vpack.c.bf16 %v614, %v612
      %v629 = vpack.c.bf16 %v615, %v613
      %v630 = vpack.c.bf16 %v618, %v616
      %v631 = vpack.c.bf16 %v619, %v617
      %v632 = vpack.c.bf16 %v622, %v620
      %v633 = vpack.c.bf16 %v623, %v621
      %v634 = vpack.c.bf16 %v626, %v624
      %v635 = vpack.c.bf16 %v627, %v625
      %v636 = vld [vmem:[%s1] sm:$0xf]
      %v637 = vld [vmem:[%s1 + $0x4] sm:$0xf]
      %v638 = vld [vmem:[%s1 + $0x8] sm:$0xf]
      %v639 = vld [vmem:[%s1 + $0xc] sm:$0xf]
      %v640 = vld [vmem:[%s1 + $0x10] sm:$0xf]
      %v641 = vld [vmem:[%s1 + $0x14] sm:$0xf]
      %v642 = vld [vmem:[%s1 + $0x18] sm:$0xf]
      %v643 = vld [vmem:[%s1 + $0x1c] sm:$0xf]
      %s644 = scalar_lea.vmem %s1, 32
      %v645 = vld [vmem:[%s644] sm:$0xf]
      %v646 = vld [vmem:[%s644 + $0x4] sm:$0xf]
      %v647 = vld [vmem:[%s644 + $0x8] sm:$0xf]
      %v648 = vld [vmem:[%s644 + $0xc] sm:$0xf]
      %v649 = vld [vmem:[%s644 + $0x10] sm:$0xf]
      %v650 = vld [vmem:[%s644 + $0x14] sm:$0xf]
      %v651 = vld [vmem:[%s644 + $0x18] sm:$0xf]
      %v652 = vld [vmem:[%s644 + $0x1c] sm:$0xf]
      %v661 = vunpack.c.l.b16 %v645
      %v662 = vunpack.c.l.b16 %v646
      %v663 = vunpack.c.l.b16 %v647
      %v664 = vunpack.c.l.b16 %v648
      %v665 = vunpack.c.l.b16 %v649
      %v666 = vunpack.c.l.b16 %v650
      %v667 = vunpack.c.l.b16 %v651
      %v668 = vunpack.c.l.b16 %v652
      %v669 = vpack.c.b16 %v662, %v661
      %v670 = vpack.c.b16 %v664, %v663
      %v671 = vpack.c.b16 %v666, %v665
      %v672 = vpack.c.b16 %v668, %v667
      %681 = vrot.lane.b32.xlu0 %v628, 127
      %v682 = vpop.permute.xlu0 %681
      %683 = vrot.lane.b32.xlu0 %v629, 127
      %v684 = vpop.permute.xlu0 %683
      %685 = vrot.lane.b32.xlu0 %v630, 127
      %v686 = vpop.permute.xlu0 %685
      %687 = vrot.lane.b32.xlu0 %v631, 127
      %v688 = vpop.permute.xlu0 %687
      %689 = vrot.lane.b32.xlu0 %v632, 127
      %v690 = vpop.permute.xlu0 %689
      %691 = vrot.lane.b32.xlu0 %v633, 127
      %v692 = vpop.permute.xlu0 %691
      %693 = vrot.lane.b32.xlu0 %v634, 127
      %v694 = vpop.permute.xlu0 %693
      %695 = vrot.lane.b32.xlu0 %v635, 127
      %v696 = vpop.permute.xlu0 %695
      %vm697 = vcmask 1039360
      %v698 = vsel %vm697, %v682, %v684
      %v699 = vsel %vm697, %v686, %v688
      %v700 = vsel %vm697, %v690, %v692
      %v701 = vsel %vm697, %v694, %v696
      %vm706 = vcmask 523264
      %v708 = vsel %vm706, %v669, 0
      %v711 = vsel %vm706, %v670, 0
      %v714 = vsel %vm706, %v671, 0
      %v717 = vsel %vm706, %v672, 0
      %719 = vmatprep.subr.bf16.mxu0 0
      %720 = vmatpush1.bf16.msra.mxu0 %v698
      %721 = vmatprep.subr.bf16.mxu0 0
      %722 = vmatpush1.bf16.msra.mxu0 %v699
      %723 = vmatprep.subr.bf16.mxu0 0
      %724 = vmatpush1.bf16.msra.mxu0 %v700
      %725 = vmatprep.subr.bf16.mxu0 0
      %726 = vmatpush1.bf16.msra.mxu0 %v701
      %727 = vmatprep.subr.bf16.mxu0 0
      %728 = vmatpush1.bf16.msra.mxu0 0
      %729 = vmatprep.subr.bf16.mxu0 0
      %730 = vmatpush1.bf16.msra.mxu0 0
      %731 = vmatprep.subr.bf16.mxu0 0
      %732 = vmatpush1.bf16.msra.mxu0 0
      %733 = vmatprep.subr.bf16.mxu0 0
      %734 = vmatpush1.bf16.msra.mxu0 0
      %735 = vmatprep.subr.bf16.mxu0 0
      %736 = vmatpush1.bf16.msra.mxu0 0
      %737 = vmatprep.subr.bf16.mxu0 0
      %738 = vmatpush1.bf16.msra.mxu0 0
      %739 = vmatprep.subr.bf16.mxu0 0
      %740 = vmatpush1.bf16.msra.mxu0 0
      %741 = vmatprep.subr.bf16.mxu0 0
      %742 = vmatpush1.bf16.msra.mxu0 0
      %743 = vmatprep.subr.bf16.mxu0 0
      %744 = vmatpush1.bf16.msra.mxu0 0
      %745 = vmatprep.subr.bf16.mxu0 0
      %746 = vmatpush1.bf16.msra.mxu0 0
      %747 = vmatprep.subr.bf16.mxu0 0
      %748 = vmatpush1.bf16.msra.mxu0 0
      %749 = vmatprep.subr.bf16.mxu0 0
      %750 = vmatpush1.bf16.msra.mxu0 0
      %751 = vmatprep.mubr.bf16.mxu0 0
      %752 = vmatmul.mubr.bf16.gmra.mrb[0].mxu0 %v708
      %v753 = vpop.f32.mrb[0].mxu0
      %v754 = vadd.f32 0.0, %v753
      %v755 = vpop.f32.mrb[0].mxu0
      %v756 = vpop.f32.mrb[0].mxu0
      %v757 = vadd.f32 0.0, %v756
      %v758 = vpop.f32.mrb[0].mxu0
      %759 = vmatprep.mubr.bf16.mxu0 0
      %760 = vmatmul.mubr.bf16.gmra.mrb[0].mxu0 %v711
      %v761 = vpop.f32.mrb[0].mxu0
      %v762 = vadd.f32 0.0, %v761
      %v763 = vpop.f32.mrb[0].mxu0
      %v764 = vpop.f32.mrb[0].mxu0
      %v765 = vadd.f32 0.0, %v764
      %v766 = vpop.f32.mrb[0].mxu0
      %767 = vmatprep.mubr.bf16.mxu0 0
      %768 = vmatmul.mubr.bf16.gmra.mrb[0].mxu0 %v714
      %v769 = vpop.f32.mrb[0].mxu0
      %v770 = vadd.f32 0.0, %v769
      %v771 = vpop.f32.mrb[0].mxu0
      %v772 = vpop.f32.mrb[0].mxu0
      %v773 = vadd.f32 0.0, %v772
      %v774 = vpop.f32.mrb[0].mxu0
      %775 = vmatprep.mubr.bf16.mxu0 0
      %776 = vmatmul.mubr.bf16.gmra.mrb[0].mxu0 %v717
      %v777 = vpop.f32.mrb[0].mxu0
      %v778 = vadd.f32 0.0, %v777
      %v779 = vpop.f32.mrb[0].mxu0
      %v780 = vpop.f32.mrb[0].mxu0
      %v781 = vadd.f32 0.0, %v780
      %v782 = vpop.f32.mrb[0].mxu0
      %783 = vdwg.mxu0
      %v792 = vunpack.c.l.b16 %v636
      %v793 = vunpack.c.l.b16 %v637
      %v794 = vunpack.c.l.b16 %v638
      %v795 = vunpack.c.l.b16 %v639
      %v796 = vunpack.c.l.b16 %v640
      %v797 = vunpack.c.l.b16 %v641
      %v798 = vunpack.c.l.b16 %v642
      %v799 = vunpack.c.l.b16 %v643
      %v800 = vpack.c.b16 %v793, %v792
      %v801 = vpack.c.b16 %v795, %v794
      %v802 = vpack.c.b16 %v797, %v796
      %v803 = vpack.c.b16 %v799, %v798
      %v805 = vsel %vm706, %v800, 0
      %v808 = vsel %vm706, %v801, 0
      %v811 = vsel %vm706, %v802, 0
      %v814 = vsel %vm706, %v803, 0
      %816 = vmatprep.subr.bf16.mxu0 0
      %817 = vmatpush1.bf16.msra.mxu0 %v628
      %818 = vmatprep.subr.bf16.mxu0 0
      %819 = vmatpush1.bf16.msra.mxu0 %v630
      %820 = vmatprep.subr.bf16.mxu0 0
      %821 = vmatpush1.bf16.msra.mxu0 %v632
      %822 = vmatprep.subr.bf16.mxu0 0
      %823 = vmatpush1.bf16.msra.mxu0 %v634
      %824 = vmatprep.subr.bf16.mxu0 0
      %825 = vmatpush1.bf16.msra.mxu0 0
      %826 = vmatprep.subr.bf16.mxu0 0
      %827 = vmatpush1.bf16.msra.mxu0 0
      %828 = vmatprep.subr.bf16.mxu0 0
      %829 = vmatpush1.bf16.msra.mxu0 0
      %830 = vmatprep.subr.bf16.mxu0 0
      %831 = vmatpush1.bf16.msra.mxu0 0
      %832 = vmatprep.subr.bf16.mxu0 0
      %833 = vmatpush1.bf16.msra.mxu0 0
      %834 = vmatprep.subr.bf16.mxu0 0
      %835 = vmatpush1.bf16.msra.mxu0 0
      %836 = vmatprep.subr.bf16.mxu0 0
      %837 = vmatpush1.bf16.msra.mxu0 0
      %838 = vmatprep.subr.bf16.mxu0 0
      %839 = vmatpush1.bf16.msra.mxu0 0
      %840 = vmatprep.subr.bf16.mxu0 0
      %841 = vmatpush1.bf16.msra.mxu0 0
      %842 = vmatprep.subr.bf16.mxu0 0
      %843 = vmatpush1.bf16.msra.mxu0 0
      %844 = vmatprep.subr.bf16.mxu0 0
      %845 = vmatpush1.bf16.msra.mxu0 0
      %846 = vmatprep.subr.bf16.mxu0 0
      %847 = vmatpush1.bf16.msra.mxu0 0
      %848 = vmatprep.mubr.bf16.mxu0 0
      %849 = vmatmul.mubr.bf16.gmra.mrb[0].mxu0 %v805
      %v850 = vpop.f32.mrb[0].mxu0
      %v851 = vadd.f32 %v754, %v850
      %v852 = vpop.f32.mrb[0].mxu0
      %v853 = vpop.f32.mrb[0].mxu0
      %v854 = vadd.f32 %v757, %v853
      %v855 = vpop.f32.mrb[0].mxu0
      %856 = vmatprep.mubr.bf16.mxu0 0
      %857 = vmatmul.mubr.bf16.gmra.mrb[0].mxu0 %v808
      %v858 = vpop.f32.mrb[0].mxu0
      %v859 = vadd.f32 %v762, %v858
      %v860 = vpop.f32.mrb[0].mxu0
      %v861 = vpop.f32.mrb[0].mxu0
      %v862 = vadd.f32 %v765, %v861
      %v863 = vpop.f32.mrb[0].mxu0
      %864 = vmatprep.mubr.bf16.mxu0 0
      %865 = vmatmul.mubr.bf16.gmra.mrb[0].mxu0 %v811
      %v866 = vpop.f32.mrb[0].mxu0
      %v867 = vadd.f32 %v770, %v866
      %v868 = vpop.f32.mrb[0].mxu0
      %v869 = vpop.f32.mrb[0].mxu0
      %v870 = vadd.f32 %v773, %v869
      %v871 = vpop.f32.mrb[0].mxu0
      %872 = vmatprep.mubr.bf16.mxu0 0
      %873 = vmatmul.mubr.bf16.gmra.mrb[0].mxu0 %v814
      %v874 = vpop.f32.mrb[0].mxu0
      %v875 = vadd.f32 %v778, %v874
      %v876 = vpop.f32.mrb[0].mxu0
      %v877 = vpop.f32.mrb[0].mxu0
      %v878 = vadd.f32 %v781, %v877
      %v879 = vpop.f32.mrb[0].mxu0
      %880 = vdwg.mxu0
      %s881 = scalar_lea.vmem %s1, 64
      %v882 = vld [vmem:[%s881] sm:$0xf]
      %v883 = vld [vmem:[%s881 + $0x4] sm:$0xf]
      %v884 = vld [vmem:[%s881 + $0x8] sm:$0xf]
      %v885 = vld [vmem:[%s881 + $0xc] sm:$0xf]
      %v886 = vld [vmem:[%s881 + $0x10] sm:$0xf]
      %v887 = vld [vmem:[%s881 + $0x14] sm:$0xf]
      %v888 = vld [vmem:[%s881 + $0x18] sm:$0xf]
      %v889 = vld [vmem:[%s881 + $0x1c] sm:$0xf]
      %v898 = vunpack.c.l.b16 %v882
      %v899 = vunpack.c.l.b16 %v883
      %v900 = vunpack.c.l.b16 %v884
      %v901 = vunpack.c.l.b16 %v885
      %v902 = vunpack.c.l.b16 %v886
      %v903 = vunpack.c.l.b16 %v887
      %v904 = vunpack.c.l.b16 %v888
      %v905 = vunpack.c.l.b16 %v889
      %v906 = vpack.c.b16 %v899, %v898
      %v907 = vpack.c.b16 %v901, %v900
      %v908 = vpack.c.b16 %v903, %v902
      %v909 = vpack.c.b16 %v905, %v904
      %910 = vrot.lane.b32.xlu0 %v628, 126
      %v911 = vpop.permute.xlu0 %910
      %912 = vrot.lane.b32.xlu0 %v629, 126
      %v913 = vpop.permute.xlu0 %912
      %914 = vrot.lane.b32.xlu0 %v630, 126
      %v915 = vpop.permute.xlu0 %914
      %916 = vrot.lane.b32.xlu0 %v631, 126
      %v917 = vpop.permute.xlu0 %916
      %918 = vrot.lane.b32.xlu0 %v632, 126
      %v919 = vpop.permute.xlu0 %918
      %920 = vrot.lane.b32.xlu0 %v633, 126
      %v921 = vpop.permute.xlu0 %920
      %922 = vrot.lane.b32.xlu0 %v634, 126
      %v923 = vpop.permute.xlu0 %922
      %924 = vrot.lane.b32.xlu0 %v635, 126
      %v925 = vpop.permute.xlu0 %924
      %vm926 = vcmask 1031168
      %v927 = vsel %vm926, %v911, %v913
      %v928 = vsel %vm926, %v915, %v917
      %v929 = vsel %vm926, %v919, %v921
      %v930 = vsel %vm926, %v923, %v925
      %v936 = vsel %vm706, %v906, 0
      %v939 = vsel %vm706, %v907, 0
      %v942 = vsel %vm706, %v908, 0
      %v945 = vsel %vm706, %v909, 0
      %947 = vmatprep.subr.bf16.mxu0 0
      %948 = vmatpush1.bf16.msra.mxu0 %v927
      %949 = vmatprep.subr.bf16.mxu0 0
      %950 = vmatpush1.bf16.msra.mxu0 %v928
      %951 = vmatprep.subr.bf16.mxu0 0
      %952 = vmatpush1.bf16.msra.mxu0 %v929
      %953 = vmatprep.subr.bf16.mxu0 0
      %954 = vmatpush1.bf16.msra.mxu0 %v930
      %955 = vmatprep.subr.bf16.mxu0 0
      %956 = vmatpush1.bf16.msra.mxu0 0
      %957 = vmatprep.subr.bf16.mxu0 0
      %958 = vmatpush1.bf16.msra.mxu0 0
      %959 = vmatprep.subr.bf16.mxu0 0
      %960 = vmatpush1.bf16.msra.mxu0 0
      %961 = vmatprep.subr.bf16.mxu0 0
      %962 = vmatpush1.bf16.msra.mxu0 0
      %963 = vmatprep.subr.bf16.mxu0 0
      %964 = vmatpush1.bf16.msra.mxu0 0
      %965 = vmatprep.subr.bf16.mxu0 0
      %966 = vmatpush1.bf16.msra.mxu0 0
      %967 = vmatprep.subr.bf16.mxu0 0
      %968 = vmatpush1.bf16.msra.mxu0 0
      %969 = vmatprep.subr.bf16.mxu0 0
      %970 = vmatpush1.bf16.msra.mxu0 0
      %971 = vmatprep.subr.bf16.mxu0 0
      %972 = vmatpush1.bf16.msra.mxu0 0
      %973 = vmatprep.subr.bf16.mxu0 0
      %974 = vmatpush1.bf16.msra.mxu0 0
      %975 = vmatprep.subr.bf16.mxu0 0
      %976 = vmatpush1.bf16.msra.mxu0 0
      %977 = vmatprep.subr.bf16.mxu0 0
      %978 = vmatpush1.bf16.msra.mxu0 0
      %979 = vmatprep.mubr.bf16.mxu0 0
      %980 = vmatmul.mubr.bf16.gmra.mrb[0].mxu0 %v936
      %v981 = vpop.f32.mrb[0].mxu0
      %v982 = vadd.f32 0.0, %v981
      %v983 = vpop.f32.mrb[0].mxu0
      %v984 = vpop.f32.mrb[0].mxu0
      %v985 = vadd.f32 0.0, %v984
      %v986 = vpop.f32.mrb[0].mxu0
      %987 = vmatprep.mubr.bf16.mxu0 0
      %988 = vmatmul.mubr.bf16.gmra.mrb[0].mxu0 %v939
      %v989 = vpop.f32.mrb[0].mxu0
      %v990 = vadd.f32 0.0, %v989
      %v991 = vpop.f32.mrb[0].mxu0
      %v992 = vpop.f32.mrb[0].mxu0
      %v993 = vadd.f32 0.0, %v992
      %v994 = vpop.f32.mrb[0].mxu0
      %995 = vmatprep.mubr.bf16.mxu0 0
      %996 = vmatmul.mubr.bf16.gmra.mrb[0].mxu0 %v942
      %v997 = vpop.f32.mrb[0].mxu0
      %v998 = vadd.f32 0.0, %v997
      %v999 = vpop.f32.mrb[0].mxu0
      %v1000 = vpop.f32.mrb[0].mxu0
      %v1001 = vadd.f32 0.0, %v1000
      %v1002 = vpop.f32.mrb[0].mxu0
      %1003 = vmatprep.mubr.bf16.mxu0 0
      %1004 = vmatmul.mubr.bf16.gmra.mrb[0].mxu0 %v945
      %v1005 = vpop.f32.mrb[0].mxu0
      %v1006 = vadd.f32 0.0, %v1005
      %v1007 = vpop.f32.mrb[0].mxu0
      %v1008 = vpop.f32.mrb[0].mxu0
      %v1009 = vadd.f32 0.0, %v1008
      %v1010 = vpop.f32.mrb[0].mxu0
      %1011 = vdwg.mxu0
      %v1012 = vadd.f32 %v851, %v982
      %v1013 = vadd.f32 %v854, %v985
      %v1014 = vadd.f32 %v859, %v990
      %v1015 = vadd.f32 %v862, %v993
      %v1016 = vadd.f32 %v867, %v998
      %v1017 = vadd.f32 %v870, %v1001
      %v1018 = vadd.f32 %v875, %v1006
      %v1019 = vadd.f32 %v878, %v1009
      %s1020 = scalar_lea.vmem %s1, 96
      %v1021 = vld [vmem:[%s1020] sm:$0xf]
      %v1022 = vld [vmem:[%s1020 + $0x4] sm:$0xf]
      %v1023 = vld [vmem:[%s1020 + $0x8] sm:$0xf]
      %v1024 = vld [vmem:[%s1020 + $0xc] sm:$0xf]
      %v1025 = vld [vmem:[%s1020 + $0x10] sm:$0xf]
      %v1026 = vld [vmem:[%s1020 + $0x14] sm:$0xf]
      %v1027 = vld [vmem:[%s1020 + $0x18] sm:$0xf]
      %v1028 = vld [vmem:[%s1020 + $0x1c] sm:$0xf]
      %v1037 = vunpack.c.l.b16 %v1021
      %v1038 = vunpack.c.l.b16 %v1022
      %v1039 = vunpack.c.l.b16 %v1023
      %v1040 = vunpack.c.l.b16 %v1024
      %v1041 = vunpack.c.l.b16 %v1025
      %v1042 = vunpack.c.l.b16 %v1026
      %v1043 = vunpack.c.l.b16 %v1027
      %v1044 = vunpack.c.l.b16 %v1028
      %v1045 = vpack.c.b16 %v1038, %v1037
      %v1046 = vpack.c.b16 %v1040, %v1039
      %v1047 = vpack.c.b16 %v1042, %v1041
      %v1048 = vpack.c.b16 %v1044, %v1043
      %1049 = vrot.lane.b32.xlu0 %v628, 122
      %v1050 = vpop.permute.xlu0 %1049
      %1051 = vrot.lane.b32.xlu0 %v629, 122
      %v1052 = vpop.permute.xlu0 %1051
      %1053 = vrot.lane.b32.xlu0 %v630, 122
      %v1054 = vpop.permute.xlu0 %1053
      %1055 = vrot.lane.b32.xlu0 %v631, 122
      %v1056 = vpop.permute.xlu0 %1055
      %1057 = vrot.lane.b32.xlu0 %v632, 122
      %v1058 = vpop.permute.xlu0 %1057
      %1059 = vrot.lane.b32.xlu0 %v633, 122
      %v1060 = vpop.permute.xlu0 %1059
      %1061 = vrot.lane.b32.xlu0 %v634, 122
      %v1062 = vpop.permute.xlu0 %1061
      %1063 = vrot.lane.b32.xlu0 %v635, 122
      %v1064 = vpop.permute.xlu0 %1063
      %vm1065 = vcmask 998400
      %v1066 = vsel %vm1065, %v1050, %v1052
      %v1067 = vsel %vm1065, %v1054, %v1056
      %v1068 = vsel %vm1065, %v1058, %v1060
      %v1069 = vsel %vm1065, %v1062, %v1064
      %v1075 = vsel %vm706, %v1045, 0
      %v1078 = vsel %vm706, %v1046, 0
      %v1081 = vsel %vm706, %v1047, 0
      %v1084 = vsel %vm706, %v1048, 0
      %1086 = vmatprep.subr.bf16.mxu0 0
      %1087 = vmatpush1.bf16.msra.mxu0 %v1066
      %1088 = vmatprep.subr.bf16.mxu0 0
      %1089 = vmatpush1.bf16.msra.mxu0 %v1067
      %1090 = vmatprep.subr.bf16.mxu0 0
      %1091 = vmatpush1.bf16.msra.mxu0 %v1068
      %1092 = vmatprep.subr.bf16.mxu0 0
      %1093 = vmatpush1.bf16.msra.mxu0 %v1069
      %1094 = vmatprep.subr.bf16.mxu0 0
      %1095 = vmatpush1.bf16.msra.mxu0 0
      %1096 = vmatprep.subr.bf16.mxu0 0
      %1097 = vmatpush1.bf16.msra.mxu0 0
      %1098 = vmatprep.subr.bf16.mxu0 0
      %1099 = vmatpush1.bf16.msra.mxu0 0
      %1100 = vmatprep.subr.bf16.mxu0 0
      %1101 = vmatpush1.bf16.msra.mxu0 0
      %1102 = vmatprep.subr.bf16.mxu0 0
      %1103 = vmatpush1.bf16.msra.mxu0 0
      %1104 = vmatprep.subr.bf16.mxu0 0
      %1105 = vmatpush1.bf16.msra.mxu0 0
      %1106 = vmatprep.subr.bf16.mxu0 0
      %1107 = vmatpush1.bf16.msra.mxu0 0
      %1108 = vmatprep.subr.bf16.mxu0 0
      %1109 = vmatpush1.bf16.msra.mxu0 0
      %1110 = vmatprep.subr.bf16.mxu0 0
      %1111 = vmatpush1.bf16.msra.mxu0 0
      %1112 = vmatprep.subr.bf16.mxu0 0
      %1113 = vmatpush1.bf16.msra.mxu0 0
      %1114 = vmatprep.subr.bf16.mxu0 0
      %1115 = vmatpush1.bf16.msra.mxu0 0
      %1116 = vmatprep.subr.bf16.mxu0 0
      %1117 = vmatpush1.bf16.msra.mxu0 0
      %1118 = vmatprep.mubr.bf16.mxu0 0
      %1119 = vmatmul.mubr.bf16.gmra.mrb[0].mxu0 %v1075
      %v1120 = vpop.f32.mrb[0].mxu0
      %v1121 = vadd.f32 0.0, %v1120
      %v1122 = vpop.f32.mrb[0].mxu0
      %v1123 = vpop.f32.mrb[0].mxu0
      %v1124 = vadd.f32 0.0, %v1123
      %v1125 = vpop.f32.mrb[0].mxu0
      %1126 = vmatprep.mubr.bf16.mxu0 0
      %1127 = vmatmul.mubr.bf16.gmra.mrb[0].mxu0 %v1078
      %v1128 = vpop.f32.mrb[0].mxu0
      %v1129 = vadd.f32 0.0, %v1128
      %v1130 = vpop.f32.mrb[0].mxu0
      %v1131 = vpop.f32.mrb[0].mxu0
      %v1132 = vadd.f32 0.0, %v1131
      %v1133 = vpop.f32.mrb[0].mxu0
      %1134 = vmatprep.mubr.bf16.mxu0 0
      %1135 = vmatmul.mubr.bf16.gmra.mrb[0].mxu0 %v1081
      %v1136 = vpop.f32.mrb[0].mxu0
      %v1137 = vadd.f32 0.0, %v1136
      %v1138 = vpop.f32.mrb[0].mxu0
      %v1139 = vpop.f32.mrb[0].mxu0
      %v1140 = vadd.f32 0.0, %v1139
      %v1141 = vpop.f32.mrb[0].mxu0
      %1142 = vmatprep.mubr.bf16.mxu0 0
      %1143 = vmatmul.mubr.bf16.gmra.mrb[0].mxu0 %v1084
      %v1144 = vpop.f32.mrb[0].mxu0
      %v1145 = vadd.f32 0.0, %v1144
      %v1146 = vpop.f32.mrb[0].mxu0
      %v1147 = vpop.f32.mrb[0].mxu0
      %v1148 = vadd.f32 0.0, %v1147
      %v1149 = vpop.f32.mrb[0].mxu0
      %1150 = vdwg.mxu0
      %v1151 = vadd.f32 %v1012, %v1121
      %v1152 = vadd.f32 %v1013, %v1124
      %v1153 = vadd.f32 %v1014, %v1129
      %v1154 = vadd.f32 %v1015, %v1132
      %v1155 = vadd.f32 %v1016, %v1137
      %v1156 = vadd.f32 %v1017, %v1140
      %v1157 = vadd.f32 %v1018, %v1145
      %v1158 = vadd.f32 %v1019, %v1148
      %s1159 = scalar_lea.vmem %s1, 128
      %v1160 = vld [vmem:[%s1159] sm:$0xf]
      %v1161 = vld [vmem:[%s1159 + $0x4] sm:$0xf]
      %v1162 = vld [vmem:[%s1159 + $0x8] sm:$0xf]
      %v1163 = vld [vmem:[%s1159 + $0xc] sm:$0xf]
      %v1164 = vld [vmem:[%s1159 + $0x10] sm:$0xf]
      %v1165 = vld [vmem:[%s1159 + $0x14] sm:$0xf]
      %v1166 = vld [vmem:[%s1159 + $0x18] sm:$0xf]
      %v1167 = vld [vmem:[%s1159 + $0x1c] sm:$0xf]
      %v1176 = vunpack.c.l.b16 %v1160
      %v1177 = vunpack.c.l.b16 %v1161
      %v1178 = vunpack.c.l.b16 %v1162
      %v1179 = vunpack.c.l.b16 %v1163
      %v1180 = vunpack.c.l.b16 %v1164
      %v1181 = vunpack.c.l.b16 %v1165
      %v1182 = vunpack.c.l.b16 %v1166
      %v1183 = vunpack.c.l.b16 %v1167
      %v1184 = vpack.c.b16 %v1177, %v1176
      %v1185 = vpack.c.b16 %v1179, %v1178
      %v1186 = vpack.c.b16 %v1181, %v1180
      %v1187 = vpack.c.b16 %v1183, %v1182
      %1188 = vrot.lane.b32.xlu0 %v628, 121
      %v1189 = vpop.permute.xlu0 %1188
      %1190 = vrot.lane.b32.xlu0 %v629, 121
      %v1191 = vpop.permute.xlu0 %1190
      %1192 = vrot.lane.b32.xlu0 %v630, 121
      %v1193 = vpop.permute.xlu0 %1192
      %1194 = vrot.lane.b32.xlu0 %v631, 121
      %v1195 = vpop.permute.xlu0 %1194
      %1196 = vrot.lane.b32.xlu0 %v632, 121
      %v1197 = vpop.permute.xlu0 %1196
      %1198 = vrot.lane.b32.xlu0 %v633, 121
      %v1199 = vpop.permute.xlu0 %1198
      %1200 = vrot.lane.b32.xlu0 %v634, 121
      %v1201 = vpop.permute.xlu0 %1200
      %1202 = vrot.lane.b32.xlu0 %v635, 121
      %v1203 = vpop.permute.xlu0 %1202
      %vm1204 = vcmask 990208
      %v1205 = vsel %vm1204, %v1189, %v1191
      %v1206 = vsel %vm1204, %v1193, %v1195
      %v1207 = vsel %vm1204, %v1197, %v1199
      %v1208 = vsel %vm1204, %v1201, %v1203
      %v1214 = vsel %vm706, %v1184, 0
      %v1217 = vsel %vm706, %v1185, 0
      %v1220 = vsel %vm706, %v1186, 0
      %v1223 = vsel %vm706, %v1187, 0
      %1225 = vmatprep.subr.bf16.mxu0 0
      %1226 = vmatpush1.bf16.msra.mxu0 %v1205
      %1227 = vmatprep.subr.bf16.mxu0 0
      %1228 = vmatpush1.bf16.msra.mxu0 %v1206
      %1229 = vmatprep.subr.bf16.mxu0 0
      %1230 = vmatpush1.bf16.msra.mxu0 %v1207
      %1231 = vmatprep.subr.bf16.mxu0 0
      %1232 = vmatpush1.bf16.msra.mxu0 %v1208
      %1233 = vmatprep.subr.bf16.mxu0 0
      %1234 = vmatpush1.bf16.msra.mxu0 0
      %1235 = vmatprep.subr.bf16.mxu0 0
      %1236 = vmatpush1.bf16.msra.mxu0 0
      %1237 = vmatprep.subr.bf16.mxu0 0
      %1238 = vmatpush1.bf16.msra.mxu0 0
      %1239 = vmatprep.subr.bf16.mxu0 0
      %1240 = vmatpush1.bf16.msra.mxu0 0
      %1241 = vmatprep.subr.bf16.mxu0 0
      %1242 = vmatpush1.bf16.msra.mxu0 0
      %1243 = vmatprep.subr.bf16.mxu0 0
      %1244 = vmatpush1.bf16.msra.mxu0 0
      %1245 = vmatprep.subr.bf16.mxu0 0
      %1246 = vmatpush1.bf16.msra.mxu0 0
      %1247 = vmatprep.subr.bf16.mxu0 0
      %1248 = vmatpush1.bf16.msra.mxu0 0
      %1249 = vmatprep.subr.bf16.mxu0 0
      %1250 = vmatpush1.bf16.msra.mxu0 0
      %1251 = vmatprep.subr.bf16.mxu0 0
      %1252 = vmatpush1.bf16.msra.mxu0 0
      %1253 = vmatprep.subr.bf16.mxu0 0
      %1254 = vmatpush1.bf16.msra.mxu0 0
      %1255 = vmatprep.subr.bf16.mxu0 0
      %1256 = vmatpush1.bf16.msra.mxu0 0
      %1257 = vmatprep.mubr.bf16.mxu0 0
      %1258 = vmatmul.mubr.bf16.gmra.mrb[0].mxu0 %v1214
      %v1259 = vpop.f32.mrb[0].mxu0
      %v1260 = vadd.f32 0.0, %v1259
      %v1261 = vpop.f32.mrb[0].mxu0
      %v1262 = vpop.f32.mrb[0].mxu0
      %v1263 = vadd.f32 0.0, %v1262
      %v1264 = vpop.f32.mrb[0].mxu0
      %1265 = vmatprep.mubr.bf16.mxu0 0
      %1266 = vmatmul.mubr.bf16.gmra.mrb[0].mxu0 %v1217
      %v1267 = vpop.f32.mrb[0].mxu0
      %v1268 = vadd.f32 0.0, %v1267
      %v1269 = vpop.f32.mrb[0].mxu0
      %v1270 = vpop.f32.mrb[0].mxu0
      %v1271 = vadd.f32 0.0, %v1270
      %v1272 = vpop.f32.mrb[0].mxu0
      %1273 = vmatprep.mubr.bf16.mxu0 0
      %1274 = vmatmul.mubr.bf16.gmra.mrb[0].mxu0 %v1220
      %v1275 = vpop.f32.mrb[0].mxu0
      %v1276 = vadd.f32 0.0, %v1275
      %v1277 = vpop.f32.mrb[0].mxu0
      %v1278 = vpop.f32.mrb[0].mxu0
      %v1279 = vadd.f32 0.0, %v1278
      %v1280 = vpop.f32.mrb[0].mxu0
      %1281 = vmatprep.mubr.bf16.mxu0 0
      %1282 = vmatmul.mubr.bf16.gmra.mrb[0].mxu0 %v1223
      %v1283 = vpop.f32.mrb[0].mxu0
      %v1284 = vadd.f32 0.0, %v1283
      %v1285 = vpop.f32.mrb[0].mxu0
      %v1286 = vpop.f32.mrb[0].mxu0
      %v1287 = vadd.f32 0.0, %v1286
      %v1288 = vpop.f32.mrb[0].mxu0
      %1289 = vdwg.mxu0
      %v1290 = vadd.f32 %v1151, %v1260
      %v1291 = vadd.f32 %v1152, %v1263
      %v1292 = vadd.f32 %v1153, %v1268
      %v1293 = vadd.f32 %v1154, %v1271
      %v1294 = vadd.f32 %v1155, %v1276
      %v1295 = vadd.f32 %v1156, %v1279
      %v1296 = vadd.f32 %v1157, %v1284
      %v1297 = vadd.f32 %v1158, %v1287
      %s1298 = scalar_lea.vmem %s1, 160
      %v1299 = vld [vmem:[%s1298] sm:$0xf]
      %v1300 = vld [vmem:[%s1298 + $0x4] sm:$0xf]
      %v1301 = vld [vmem:[%s1298 + $0x8] sm:$0xf]
      %v1302 = vld [vmem:[%s1298 + $0xc] sm:$0xf]
      %v1303 = vld [vmem:[%s1298 + $0x10] sm:$0xf]
      %v1304 = vld [vmem:[%s1298 + $0x14] sm:$0xf]
      %v1305 = vld [vmem:[%s1298 + $0x18] sm:$0xf]
      %v1306 = vld [vmem:[%s1298 + $0x1c] sm:$0xf]
      %v1315 = vunpack.c.l.b16 %v1299
      %v1316 = vunpack.c.l.b16 %v1300
      %v1317 = vunpack.c.l.b16 %v1301
      %v1318 = vunpack.c.l.b16 %v1302
      %v1319 = vunpack.c.l.b16 %v1303
      %v1320 = vunpack.c.l.b16 %v1304
      %v1321 = vunpack.c.l.b16 %v1305
      %v1322 = vunpack.c.l.b16 %v1306
      %v1323 = vpack.c.b16 %v1316, %v1315
      %v1324 = vpack.c.b16 %v1318, %v1317
      %v1325 = vpack.c.b16 %v1320, %v1319
      %v1326 = vpack.c.b16 %v1322, %v1321
      %1327 = vrot.lane.b32.xlu0 %v628, 120
      %v1328 = vpop.permute.xlu0 %1327
      %1329 = vrot.lane.b32.xlu0 %v629, 120
      %v1330 = vpop.permute.xlu0 %1329
      %1331 = vrot.lane.b32.xlu0 %v630, 120
      %v1332 = vpop.permute.xlu0 %1331
      %1333 = vrot.lane.b32.xlu0 %v631, 120
      %v1334 = vpop.permute.xlu0 %1333
      %1335 = vrot.lane.b32.xlu0 %v632, 120
      %v1336 = vpop.permute.xlu0 %1335
      %1337 = vrot.lane.b32.xlu0 %v633, 120
      %v1338 = vpop.permute.xlu0 %1337
      %1339 = vrot.lane.b32.xlu0 %v634, 120
      %v1340 = vpop.permute.xlu0 %1339
      %1341 = vrot.lane.b32.xlu0 %v635, 120
      %v1342 = vpop.permute.xlu0 %1341
      %vm1343 = vcmask 982016
      %v1344 = vsel %vm1343, %v1328, %v1330
      %v1345 = vsel %vm1343, %v1332, %v1334
      %v1346 = vsel %vm1343, %v1336, %v1338
      %v1347 = vsel %vm1343, %v1340, %v1342
      %v1353 = vsel %vm706, %v1323, 0
      %v1356 = vsel %vm706, %v1324, 0
      %v1359 = vsel %vm706, %v1325, 0
      %v1362 = vsel %vm706, %v1326, 0
      %1364 = vmatprep.subr.bf16.mxu0 0
      %1365 = vmatpush1.bf16.msra.mxu0 %v1344
      %1366 = vmatprep.subr.bf16.mxu0 0
      %1367 = vmatpush1.bf16.msra.mxu0 %v1345
      %1368 = vmatprep.subr.bf16.mxu0 0
      %1369 = vmatpush1.bf16.msra.mxu0 %v1346
      %1370 = vmatprep.subr.bf16.mxu0 0
      %1371 = vmatpush1.bf16.msra.mxu0 %v1347
      %1372 = vmatprep.subr.bf16.mxu0 0
      %1373 = vmatpush1.bf16.msra.mxu0 0
      %1374 = vmatprep.subr.bf16.mxu0 0
      %1375 = vmatpush1.bf16.msra.mxu0 0
      %1376 = vmatprep.subr.bf16.mxu0 0
      %1377 = vmatpush1.bf16.msra.mxu0 0
      %1378 = vmatprep.subr.bf16.mxu0 0
      %1379 = vmatpush1.bf16.msra.mxu0 0
      %1380 = vmatprep.subr.bf16.mxu0 0
      %1381 = vmatpush1.bf16.msra.mxu0 0
      %1382 = vmatprep.subr.bf16.mxu0 0
      %1383 = vmatpush1.bf16.msra.mxu0 0
      %1384 = vmatprep.subr.bf16.mxu0 0
      %1385 = vmatpush1.bf16.msra.mxu0 0
      %1386 = vmatprep.subr.bf16.mxu0 0
      %1387 = vmatpush1.bf16.msra.mxu0 0
      %1388 = vmatprep.subr.bf16.mxu0 0
      %1389 = vmatpush1.bf16.msra.mxu0 0
      %1390 = vmatprep.subr.bf16.mxu0 0
      %1391 = vmatpush1.bf16.msra.mxu0 0
      %1392 = vmatprep.subr.bf16.mxu0 0
      %1393 = vmatpush1.bf16.msra.mxu0 0
      %1394 = vmatprep.subr.bf16.mxu0 0
      %1395 = vmatpush1.bf16.msra.mxu0 0
      %1396 = vmatprep.mubr.bf16.mxu0 0
      %1397 = vmatmul.mubr.bf16.gmra.mrb[0].mxu0 %v1353
      %v1398 = vpop.f32.mrb[0].mxu0
      %v1399 = vadd.f32 0.0, %v1398
      %v1400 = vpop.f32.mrb[0].mxu0
      %v1401 = vpop.f32.mrb[0].mxu0
      %v1402 = vadd.f32 0.0, %v1401
      %v1403 = vpop.f32.mrb[0].mxu0
      %1404 = vmatprep.mubr.bf16.mxu0 0
      %1405 = vmatmul.mubr.bf16.gmra.mrb[0].mxu0 %v1356
      %v1406 = vpop.f32.mrb[0].mxu0
      %v1407 = vadd.f32 0.0, %v1406
      %v1408 = vpop.f32.mrb[0].mxu0
      %v1409 = vpop.f32.mrb[0].mxu0
      %v1410 = vadd.f32 0.0, %v1409
      %v1411 = vpop.f32.mrb[0].mxu0
      %1412 = vmatprep.mubr.bf16.mxu0 0
      %1413 = vmatmul.mubr.bf16.gmra.mrb[0].mxu0 %v1359
      %v1414 = vpop.f32.mrb[0].mxu0
      %v1415 = vadd.f32 0.0, %v1414
      %v1416 = vpop.f32.mrb[0].mxu0
      %v1417 = vpop.f32.mrb[0].mxu0
      %v1418 = vadd.f32 0.0, %v1417
      %v1419 = vpop.f32.mrb[0].mxu0
      %1420 = vmatprep.mubr.bf16.mxu0 0
      %1421 = vmatmul.mubr.bf16.gmra.mrb[0].mxu0 %v1362
      %v1422 = vpop.f32.mrb[0].mxu0
      %v1423 = vadd.f32 0.0, %v1422
      %v1424 = vpop.f32.mrb[0].mxu0
      %v1425 = vpop.f32.mrb[0].mxu0
      %v1426 = vadd.f32 0.0, %v1425
      %v1427 = vpop.f32.mrb[0].mxu0
      %1428 = vdwg.mxu0
      %v1429 = vadd.f32 %v1290, %v1399
      %v1430 = vadd.f32 %v1291, %v1402
      %v1431 = vadd.f32 %v1292, %v1407
      %v1432 = vadd.f32 %v1293, %v1410
      %v1433 = vadd.f32 %v1294, %v1415
      %v1434 = vadd.f32 %v1295, %v1418
      %v1435 = vadd.f32 %v1296, %v1423
      %v1436 = vadd.f32 %v1297, %v1426
      %s1437 = scalar_lea.vmem %s1, 192
      %v1438 = vld [vmem:[%s1437] sm:$0xf]
      %v1439 = vld [vmem:[%s1437 + $0x4] sm:$0xf]
      %v1440 = vld [vmem:[%s1437 + $0x8] sm:$0xf]
      %v1441 = vld [vmem:[%s1437 + $0xc] sm:$0xf]
      %v1442 = vld [vmem:[%s1437 + $0x10] sm:$0xf]
      %v1443 = vld [vmem:[%s1437 + $0x14] sm:$0xf]
      %v1444 = vld [vmem:[%s1437 + $0x18] sm:$0xf]
      %v1445 = vld [vmem:[%s1437 + $0x1c] sm:$0xf]
      %v1454 = vunpack.c.l.b16 %v1438
      %v1455 = vunpack.c.l.b16 %v1439
      %v1456 = vunpack.c.l.b16 %v1440
      %v1457 = vunpack.c.l.b16 %v1441
      %v1458 = vunpack.c.l.b16 %v1442
      %v1459 = vunpack.c.l.b16 %v1443
      %v1460 = vunpack.c.l.b16 %v1444
      %v1461 = vunpack.c.l.b16 %v1445
      %v1462 = vpack.c.b16 %v1455, %v1454
      %v1463 = vpack.c.b16 %v1457, %v1456
      %v1464 = vpack.c.b16 %v1459, %v1458
      %v1465 = vpack.c.b16 %v1461, %v1460
      %1466 = vrot.lane.b32.xlu0 %v628, 116
      %v1467 = vpop.permute.xlu0 %1466
      %1468 = vrot.lane.b32.xlu0 %v629, 116
      %v1469 = vpop.permute.xlu0 %1468
      %1470 = vrot.lane.b32.xlu0 %v630, 116
      %v1471 = vpop.permute.xlu0 %1470
      %1472 = vrot.lane.b32.xlu0 %v631, 116
      %v1473 = vpop.permute.xlu0 %1472
      %1474 = vrot.lane.b32.xlu0 %v632, 116
      %v1475 = vpop.permute.xlu0 %1474
      %1476 = vrot.lane.b32.xlu0 %v633, 116
      %v1477 = vpop.permute.xlu0 %1476
      %1478 = vrot.lane.b32.xlu0 %v634, 116
      %v1479 = vpop.permute.xlu0 %1478
      %1480 = vrot.lane.b32.xlu0 %v635, 116
      %v1481 = vpop.permute.xlu0 %1480
      %vm1482 = vcmask 949248
      %v1483 = vsel %vm1482, %v1467, %v1469
      %v1484 = vsel %vm1482, %v1471, %v1473
      %v1485 = vsel %vm1482, %v1475, %v1477
      %v1486 = vsel %vm1482, %v1479, %v1481
      %v1492 = vsel %vm706, %v1462, 0
      %v1495 = vsel %vm706, %v1463, 0
      %v1498 = vsel %vm706, %v1464, 0
      %v1501 = vsel %vm706, %v1465, 0
      %1503 = vmatprep.subr.bf16.mxu0 0
      %1504 = vmatpush1.bf16.msra.mxu0 %v1483
      %1505 = vmatprep.subr.bf16.mxu0 0
      %1506 = vmatpush1.bf16.msra.mxu0 %v1484
      %1507 = vmatprep.subr.bf16.mxu0 0
      %1508 = vmatpush1.bf16.msra.mxu0 %v1485
      %1509 = vmatprep.subr.bf16.mxu0 0
      %1510 = vmatpush1.bf16.msra.mxu0 %v1486
      %1511 = vmatprep.subr.bf16.mxu0 0
      %1512 = vmatpush1.bf16.msra.mxu0 0
      %1513 = vmatprep.subr.bf16.mxu0 0
      %1514 = vmatpush1.bf16.msra.mxu0 0
      %1515 = vmatprep.subr.bf16.mxu0 0
      %1516 = vmatpush1.bf16.msra.mxu0 0
      %1517 = vmatprep.subr.bf16.mxu0 0
      %1518 = vmatpush1.bf16.msra.mxu0 0
      %1519 = vmatprep.subr.bf16.mxu0 0
      %1520 = vmatpush1.bf16.msra.mxu0 0
      %1521 = vmatprep.subr.bf16.mxu0 0
      %1522 = vmatpush1.bf16.msra.mxu0 0
      %1523 = vmatprep.subr.bf16.mxu0 0
      %1524 = vmatpush1.bf16.msra.mxu0 0
      %1525 = vmatprep.subr.bf16.mxu0 0
      %1526 = vmatpush1.bf16.msra.mxu0 0
      %1527 = vmatprep.subr.bf16.mxu0 0
      %1528 = vmatpush1.bf16.msra.mxu0 0
      %1529 = vmatprep.subr.bf16.mxu0 0
      %1530 = vmatpush1.bf16.msra.mxu0 0
      %1531 = vmatprep.subr.bf16.mxu0 0
      %1532 = vmatpush1.bf16.msra.mxu0 0
      %1533 = vmatprep.subr.bf16.mxu0 0
      %1534 = vmatpush1.bf16.msra.mxu0 0
      %1535 = vmatprep.mubr.bf16.mxu0 0
      %1536 = vmatmul.mubr.bf16.gmra.mrb[0].mxu0 %v1492
      %v1537 = vpop.f32.mrb[0].mxu0
      %v1538 = vadd.f32 0.0, %v1537
      %v1539 = vpop.f32.mrb[0].mxu0
      %v1540 = vpop.f32.mrb[0].mxu0
      %v1541 = vadd.f32 0.0, %v1540
      %v1542 = vpop.f32.mrb[0].mxu0
      %1543 = vmatprep.mubr.bf16.mxu0 0
      %1544 = vmatmul.mubr.bf16.gmra.mrb[0].mxu0 %v1495
      %v1545 = vpop.f32.mrb[0].mxu0
      %v1546 = vadd.f32 0.0, %v1545
      %v1547 = vpop.f32.mrb[0].mxu0
      %v1548 = vpop.f32.mrb[0].mxu0
      %v1549 = vadd.f32 0.0, %v1548
      %v1550 = vpop.f32.mrb[0].mxu0
      %1551 = vmatprep.mubr.bf16.mxu0 0
      %1552 = vmatmul.mubr.bf16.gmra.mrb[0].mxu0 %v1498
      %v1553 = vpop.f32.mrb[0].mxu0
      %v1554 = vadd.f32 0.0, %v1553
      %v1555 = vpop.f32.mrb[0].mxu0
      %v1556 = vpop.f32.mrb[0].mxu0
      %v1557 = vadd.f32 0.0, %v1556
      %v1558 = vpop.f32.mrb[0].mxu0
      %1559 = vmatprep.mubr.bf16.mxu0 0
      %1560 = vmatmul.mubr.bf16.gmra.mrb[0].mxu0 %v1501
      %v1561 = vpop.f32.mrb[0].mxu0
      %v1562 = vadd.f32 0.0, %v1561
      %v1563 = vpop.f32.mrb[0].mxu0
      %v1564 = vpop.f32.mrb[0].mxu0
      %v1565 = vadd.f32 0.0, %v1564
      %v1566 = vpop.f32.mrb[0].mxu0
      %1567 = vdwg.mxu0
      %v1568 = vadd.f32 %v1429, %v1538
      %v1569 = vadd.f32 %v1430, %v1541
      %v1570 = vadd.f32 %v1431, %v1546
      %v1571 = vadd.f32 %v1432, %v1549
      %v1572 = vadd.f32 %v1433, %v1554
      %v1573 = vadd.f32 %v1434, %v1557
      %v1574 = vadd.f32 %v1435, %v1562
      %v1575 = vadd.f32 %v1436, %v1565
      %s1576 = scalar_lea.vmem %s1, 224
      %v1577 = vld [vmem:[%s1576] sm:$0xf]
      %v1578 = vld [vmem:[%s1576 + $0x4] sm:$0xf]
      %v1579 = vld [vmem:[%s1576 + $0x8] sm:$0xf]
      %v1580 = vld [vmem:[%s1576 + $0xc] sm:$0xf]
      %v1581 = vld [vmem:[%s1576 + $0x10] sm:$0xf]
      %v1582 = vld [vmem:[%s1576 + $0x14] sm:$0xf]
      %v1583 = vld [vmem:[%s1576 + $0x18] sm:$0xf]
      %v1584 = vld [vmem:[%s1576 + $0x1c] sm:$0xf]
      %v1593 = vunpack.c.l.b16 %v1577
      %v1594 = vunpack.c.l.b16 %v1578
      %v1595 = vunpack.c.l.b16 %v1579
      %v1596 = vunpack.c.l.b16 %v1580
      %v1597 = vunpack.c.l.b16 %v1581
      %v1598 = vunpack.c.l.b16 %v1582
      %v1599 = vunpack.c.l.b16 %v1583
      %v1600 = vunpack.c.l.b16 %v1584
      %v1601 = vpack.c.b16 %v1594, %v1593
      %v1602 = vpack.c.b16 %v1596, %v1595
      %v1603 = vpack.c.b16 %v1598, %v1597
      %v1604 = vpack.c.b16 %v1600, %v1599
      %1605 = vrot.lane.b32.xlu0 %v628, 115
      %v1606 = vpop.permute.xlu0 %1605
      %1607 = vrot.lane.b32.xlu0 %v629, 115
      %v1608 = vpop.permute.xlu0 %1607
      %1609 = vrot.lane.b32.xlu0 %v630, 115
      %v1610 = vpop.permute.xlu0 %1609
      %1611 = vrot.lane.b32.xlu0 %v631, 115
      %v1612 = vpop.permute.xlu0 %1611
      %1613 = vrot.lane.b32.xlu0 %v632, 115
      %v1614 = vpop.permute.xlu0 %1613
      %1615 = vrot.lane.b32.xlu0 %v633, 115
      %v1616 = vpop.permute.xlu0 %1615
      %1617 = vrot.lane.b32.xlu0 %v634, 115
      %v1618 = vpop.permute.xlu0 %1617
      %1619 = vrot.lane.b32.xlu0 %v635, 115
      %v1620 = vpop.permute.xlu0 %1619
      %vm1621 = vcmask 941056
      %v1622 = vsel %vm1621, %v1606, %v1608
      %v1623 = vsel %vm1621, %v1610, %v1612
      %v1624 = vsel %vm1621, %v1614, %v1616
      %v1625 = vsel %vm1621, %v1618, %v1620
      %v1631 = vsel %vm706, %v1601, 0
      %v1634 = vsel %vm706, %v1602, 0
      %v1637 = vsel %vm706, %v1603, 0
      %v1640 = vsel %vm706, %v1604, 0
      %1642 = vmatprep.subr.bf16.mxu0 0
      %1643 = vmatpush1.bf16.msra.mxu0 %v1622
      %1644 = vmatprep.subr.bf16.mxu0 0
      %1645 = vmatpush1.bf16.msra.mxu0 %v1623
      %1646 = vmatprep.subr.bf16.mxu0 0
      %1647 = vmatpush1.bf16.msra.mxu0 %v1624
      %1648 = vmatprep.subr.bf16.mxu0 0
      %1649 = vmatpush1.bf16.msra.mxu0 %v1625
      %1650 = vmatprep.subr.bf16.mxu0 0
      %1651 = vmatpush1.bf16.msra.mxu0 0
      %1652 = vmatprep.subr.bf16.mxu0 0
      %1653 = vmatpush1.bf16.msra.mxu0 0
      %1654 = vmatprep.subr.bf16.mxu0 0
      %1655 = vmatpush1.bf16.msra.mxu0 0
      %1656 = vmatprep.subr.bf16.mxu0 0
      %1657 = vmatpush1.bf16.msra.mxu0 0
      %1658 = vmatprep.subr.bf16.mxu0 0
      %1659 = vmatpush1.bf16.msra.mxu0 0
      %1660 = vmatprep.subr.bf16.mxu0 0
      %1661 = vmatpush1.bf16.msra.mxu0 0
      %1662 = vmatprep.subr.bf16.mxu0 0
      %1663 = vmatpush1.bf16.msra.mxu0 0
      %1664 = vmatprep.subr.bf16.mxu0 0
      %1665 = vmatpush1.bf16.msra.mxu0 0
      %1666 = vmatprep.subr.bf16.mxu0 0
      %1667 = vmatpush1.bf16.msra.mxu0 0
      %1668 = vmatprep.subr.bf16.mxu0 0
      %1669 = vmatpush1.bf16.msra.mxu0 0
      %1670 = vmatprep.subr.bf16.mxu0 0
      %1671 = vmatpush1.bf16.msra.mxu0 0
      %1672 = vmatprep.subr.bf16.mxu0 0
      %1673 = vmatpush1.bf16.msra.mxu0 0
      %1674 = vmatprep.mubr.bf16.mxu0 0
      %1675 = vmatmul.mubr.bf16.gmra.mrb[0].mxu0 %v1631
      %v1676 = vpop.f32.mrb[0].mxu0
      %v1677 = vadd.f32 0.0, %v1676
      %v1678 = vpop.f32.mrb[0].mxu0
      %v1679 = vpop.f32.mrb[0].mxu0
      %v1680 = vadd.f32 0.0, %v1679
      %v1681 = vpop.f32.mrb[0].mxu0
      %1682 = vmatprep.mubr.bf16.mxu0 0
      %1683 = vmatmul.mubr.bf16.gmra.mrb[0].mxu0 %v1634
      %v1684 = vpop.f32.mrb[0].mxu0
      %v1685 = vadd.f32 0.0, %v1684
      %v1686 = vpop.f32.mrb[0].mxu0
      %v1687 = vpop.f32.mrb[0].mxu0
      %v1688 = vadd.f32 0.0, %v1687
      %v1689 = vpop.f32.mrb[0].mxu0
      %1690 = vmatprep.mubr.bf16.mxu0 0
      %1691 = vmatmul.mubr.bf16.gmra.mrb[0].mxu0 %v1637
      %v1692 = vpop.f32.mrb[0].mxu0
      %v1693 = vadd.f32 0.0, %v1692
      %v1694 = vpop.f32.mrb[0].mxu0
      %v1695 = vpop.f32.mrb[0].mxu0
      %v1696 = vadd.f32 0.0, %v1695
      %v1697 = vpop.f32.mrb[0].mxu0
      %1698 = vmatprep.mubr.bf16.mxu0 0
      %1699 = vmatmul.mubr.bf16.gmra.mrb[0].mxu0 %v1640
      %v1700 = vpop.f32.mrb[0].mxu0
      %v1701 = vadd.f32 0.0, %v1700
      %v1702 = vpop.f32.mrb[0].mxu0
      %v1703 = vpop.f32.mrb[0].mxu0
      %v1704 = vadd.f32 0.0, %v1703
      %v1705 = vpop.f32.mrb[0].mxu0
      %1706 = vdwg.mxu0
      %v1707 = vadd.f32 %v1568, %v1677
      %v1708 = vadd.f32 %v1569, %v1680
      %v1709 = vadd.f32 %v1570, %v1685
      %v1710 = vadd.f32 %v1571, %v1688
      %v1711 = vadd.f32 %v1572, %v1693
      %v1712 = vadd.f32 %v1573, %v1696
      %v1713 = vadd.f32 %v1574, %v1701
      %v1714 = vadd.f32 %v1575, %v1704
      %s1715 = scalar_lea.vmem %s1, 256
      %v1716 = vld [vmem:[%s1715] sm:$0xf]
      %v1717 = vld [vmem:[%s1715 + $0x4] sm:$0xf]
      %v1718 = vld [vmem:[%s1715 + $0x8] sm:$0xf]
      %v1719 = vld [vmem:[%s1715 + $0xc] sm:$0xf]
      %v1720 = vld [vmem:[%s1715 + $0x10] sm:$0xf]
      %v1721 = vld [vmem:[%s1715 + $0x14] sm:$0xf]
      %v1722 = vld [vmem:[%s1715 + $0x18] sm:$0xf]
      %v1723 = vld [vmem:[%s1715 + $0x1c] sm:$0xf]
      %v1732 = vunpack.c.l.b16 %v1716
      %v1733 = vunpack.c.l.b16 %v1717
      %v1734 = vunpack.c.l.b16 %v1718
      %v1735 = vunpack.c.l.b16 %v1719
      %v1736 = vunpack.c.l.b16 %v1720
      %v1737 = vunpack.c.l.b16 %v1721
      %v1738 = vunpack.c.l.b16 %v1722
      %v1739 = vunpack.c.l.b16 %v1723
      %v1740 = vpack.c.b16 %v1733, %v1732
      %v1741 = vpack.c.b16 %v1735, %v1734
      %v1742 = vpack.c.b16 %v1737, %v1736
      %v1743 = vpack.c.b16 %v1739, %v1738
      %1744 = vrot.lane.b32.xlu0 %v628, 114
      %v1745 = vpop.permute.xlu0 %1744
      %1746 = vrot.lane.b32.xlu0 %v629, 114
      %v1747 = vpop.permute.xlu0 %1746
      %1748 = vrot.lane.b32.xlu0 %v630, 114
      %v1749 = vpop.permute.xlu0 %1748
      %1750 = vrot.lane.b32.xlu0 %v631, 114
      %v1751 = vpop.permute.xlu0 %1750
      %1752 = vrot.lane.b32.xlu0 %v632, 114
      %v1753 = vpop.permute.xlu0 %1752
      %1754 = vrot.lane.b32.xlu0 %v633, 114
      %v1755 = vpop.permute.xlu0 %1754
      %1756 = vrot.lane.b32.xlu0 %v634, 114
      %v1757 = vpop.permute.xlu0 %1756
      %1758 = vrot.lane.b32.xlu0 %v635, 114
      %v1759 = vpop.permute.xlu0 %1758
      %vm1760 = vcmask 932864
      %v1761 = vsel %vm1760, %v1745, %v1747
      %v1762 = vsel %vm1760, %v1749, %v1751
      %v1763 = vsel %vm1760, %v1753, %v1755
      %v1764 = vsel %vm1760, %v1757, %v1759
      %v1770 = vsel %vm706, %v1740, 0
      %v1773 = vsel %vm706, %v1741, 0
      %v1776 = vsel %vm706, %v1742, 0
      %v1779 = vsel %vm706, %v1743, 0
      %1781 = vmatprep.subr.bf16.mxu0 0
      %1782 = vmatpush1.bf16.msra.mxu0 %v1761
      %1783 = vmatprep.subr.bf16.mxu0 0
      %1784 = vmatpush1.bf16.msra.mxu0 %v1762
      %1785 = vmatprep.subr.bf16.mxu0 0
      %1786 = vmatpush1.bf16.msra.mxu0 %v1763
      %1787 = vmatprep.subr.bf16.mxu0 0
      %1788 = vmatpush1.bf16.msra.mxu0 %v1764
      %1789 = vmatprep.subr.bf16.mxu0 0
      %1790 = vmatpush1.bf16.msra.mxu0 0
      %1791 = vmatprep.subr.bf16.mxu0 0
      %1792 = vmatpush1.bf16.msra.mxu0 0
      %1793 = vmatprep.subr.bf16.mxu0 0
      %1794 = vmatpush1.bf16.msra.mxu0 0
      %1795 = vmatprep.subr.bf16.mxu0 0
      %1796 = vmatpush1.bf16.msra.mxu0 0
      %1797 = vmatprep.subr.bf16.mxu0 0
      %1798 = vmatpush1.bf16.msra.mxu0 0
      %1799 = vmatprep.subr.bf16.mxu0 0
      %1800 = vmatpush1.bf16.msra.mxu0 0
      %1801 = vmatprep.subr.bf16.mxu0 0
      %1802 = vmatpush1.bf16.msra.mxu0 0
      %1803 = vmatprep.subr.bf16.mxu0 0
      %1804 = vmatpush1.bf16.msra.mxu0 0
      %1805 = vmatprep.subr.bf16.mxu0 0
      %1806 = vmatpush1.bf16.msra.mxu0 0
      %1807 = vmatprep.subr.bf16.mxu0 0
      %1808 = vmatpush1.bf16.msra.mxu0 0
      %1809 = vmatprep.subr.bf16.mxu0 0
      %1810 = vmatpush1.bf16.msra.mxu0 0
      %1811 = vmatprep.subr.bf16.mxu0 0
      %1812 = vmatpush1.bf16.msra.mxu0 0
      %1813 = vmatprep.mubr.bf16.mxu0 0
      %1814 = vmatmul.mubr.bf16.gmra.mrb[0].mxu0 %v1770
      %v1815 = vpop.f32.mrb[0].mxu0
      %v1816 = vadd.f32 0.0, %v1815
      %v1817 = vpop.f32.mrb[0].mxu0
      %v1818 = vpop.f32.mrb[0].mxu0
      %v1819 = vadd.f32 0.0, %v1818
      %v1820 = vpop.f32.mrb[0].mxu0
      %1821 = vmatprep.mubr.bf16.mxu0 0
      %1822 = vmatmul.mubr.bf16.gmra.mrb[0].mxu0 %v1773
      %v1823 = vpop.f32.mrb[0].mxu0
      %v1824 = vadd.f32 0.0, %v1823
      %v1825 = vpop.f32.mrb[0].mxu0
      %v1826 = vpop.f32.mrb[0].mxu0
      %v1827 = vadd.f32 0.0, %v1826
      %v1828 = vpop.f32.mrb[0].mxu0
      %1829 = vmatprep.mubr.bf16.mxu0 0
      %1830 = vmatmul.mubr.bf16.gmra.mrb[0].mxu0 %v1776
      %v1831 = vpop.f32.mrb[0].mxu0
      %v1832 = vadd.f32 0.0, %v1831
      %v1833 = vpop.f32.mrb[0].mxu0
      %v1834 = vpop.f32.mrb[0].mxu0
      %v1835 = vadd.f32 0.0, %v1834
      %v1836 = vpop.f32.mrb[0].mxu0
      %1837 = vmatprep.mubr.bf16.mxu0 0
      %1838 = vmatmul.mubr.bf16.gmra.mrb[0].mxu0 %v1779
      %v1839 = vpop.f32.mrb[0].mxu0
      %v1840 = vadd.f32 0.0, %v1839
      %v1841 = vpop.f32.mrb[0].mxu0
      %v1842 = vpop.f32.mrb[0].mxu0
      %v1843 = vadd.f32 0.0, %v1842
      %v1844 = vpop.f32.mrb[0].mxu0
      %1845 = vdwg.mxu0
      %v1846 = vadd.f32 %v1707, %v1816
      %v1847 = vadd.f32 %v1708, %v1819
      %v1848 = vadd.f32 %v1709, %v1824
      %v1849 = vadd.f32 %v1710, %v1827
      %v1850 = vadd.f32 %v1711, %v1832
      %v1851 = vadd.f32 %v1712, %v1835
      %v1852 = vadd.f32 %v1713, %v1840
      %v1853 = vadd.f32 %v1714, %v1843
      %v1854 = vld [vmem:[%s2] sm:$0xff]
      %v1855 = vld [vmem:[%s2 + $0x8] sm:$0xff]
      %v1856 = vld [vmem:[%s2 + $0x10] sm:$0xff]
      %v1857 = vld [vmem:[%s2 + $0x18] sm:$0xff]
      %v1858 = vld [vmem:[%s2 + $0x20] sm:$0xff]
      %v1859 = vld [vmem:[%s2 + $0x28] sm:$0xff]
      %v1860 = vld [vmem:[%s2 + $0x30] sm:$0xff]
      %v1861 = vld [vmem:[%s2 + $0x38] sm:$0xff]
      %1863 = vset.pattern.permute.xlu0 0
      %1864 = vperm.xlu0 %1863, %v1854
      %v1865 = vpop.permute.xlu0 %1864
      %1868 = vset.pattern.permute.xlu0 0
      %1869 = vperm.xlu0 %1868, %v1855
      %v1870 = vpop.permute.xlu0 %1869
      %1873 = vset.pattern.permute.xlu0 0
      %1874 = vperm.xlu0 %1873, %v1856
      %v1875 = vpop.permute.xlu0 %1874
      %1878 = vset.pattern.permute.xlu0 0
      %1879 = vperm.xlu0 %1878, %v1857
      %v1880 = vpop.permute.xlu0 %1879
      %1883 = vset.pattern.permute.xlu0 0
      %1884 = vperm.xlu0 %1883, %v1858
      %v1885 = vpop.permute.xlu0 %1884
      %1888 = vset.pattern.permute.xlu0 0
      %1889 = vperm.xlu0 %1888, %v1859
      %v1890 = vpop.permute.xlu0 %1889
      %1893 = vset.pattern.permute.xlu0 0
      %1894 = vperm.xlu0 %1893, %v1860
      %v1895 = vpop.permute.xlu0 %1894
      %1898 = vset.pattern.permute.xlu0 0
      %1899 = vperm.xlu0 %1898, %v1861
      %v1900 = vpop.permute.xlu0 %1899
      %v1902 = vadd.f32 %v1846, %v1865
      %v1903 = vadd.f32 %v1847, %v1870
      %v1904 = vadd.f32 %v1848, %v1875
      %v1905 = vadd.f32 %v1849, %v1880
      %v1906 = vadd.f32 %v1850, %v1885
      %v1907 = vadd.f32 %v1851, %v1890
      %v1908 = vadd.f32 %v1852, %v1895
      %v1909 = vadd.f32 %v1853, %v1900
      %v1910 = vld [vmem:[%s293] sm:$0xf]
      %v1911 = vld [vmem:[%s293 + $0x4] sm:$0xf]
      %v1912 = vld [vmem:[%s293 + $0x8] sm:$0xf]
      %v1913 = vld [vmem:[%s293 + $0xc] sm:$0xf]
      %v1914 = vld [vmem:[%s293 + $0x10] sm:$0xf]
      %v1915 = vld [vmem:[%s293 + $0x14] sm:$0xf]
      %v1916 = vld [vmem:[%s293 + $0x18] sm:$0xf]
      %v1917 = vld [vmem:[%s293 + $0x1c] sm:$0xf]
      %v1918 = vunpack.c.l.bf16 %v1910
      %v1919 = vunpack.c.l.bf16 %v1911
      %v1920 = vunpack.c.l.bf16 %v1912
      %v1921 = vunpack.c.l.bf16 %v1913
      %v1922 = vunpack.c.l.bf16 %v1914
      %v1923 = vunpack.c.l.bf16 %v1915
      %v1924 = vunpack.c.l.bf16 %v1916
      %v1925 = vunpack.c.l.bf16 %v1917
      %v1926 = vadd.f32 %v1902, %v1918
      %v1927 = vadd.f32 %v1903, %v1919
      %v1928 = vadd.f32 %v1904, %v1920
      %v1929 = vadd.f32 %v1905, %v1921
      %v1930 = vadd.f32 %v1906, %v1922
      %v1931 = vadd.f32 %v1907, %v1923
      %v1932 = vadd.f32 %v1908, %v1924
      %v1933 = vadd.f32 %v1909, %v1925
      %v1934 = vpack.c.bf16 %v1927, %v1926
      %v1935 = vpack.c.bf16 %v1929, %v1928
      %v1936 = vpack.c.bf16 %v1931, %v1930
      %v1937 = vpack.c.bf16 %v1933, %v1932
      %v1942 = vunpack.c.l.b16 %v1934
      %v1943 = vunpack.c.h.b16 %v1934
      %v1944 = vunpack.c.l.b16 %v1935
      %v1945 = vunpack.c.h.b16 %v1935
      %v1946 = vunpack.c.l.b16 %v1936
      %v1947 = vunpack.c.h.b16 %v1936
      %v1948 = vunpack.c.l.b16 %v1937
      %v1949 = vunpack.c.h.b16 %v1937
      %v1950 = vpack.c.b16 %v1942, %v1942
      %v1951 = vpack.c.b16 %v1943, %v1943
      %v1952 = vpack.c.b16 %v1944, %v1944
      %v1953 = vpack.c.b16 %v1945, %v1945
      %v1954 = vpack.c.b16 %v1946, %v1946
      %v1955 = vpack.c.b16 %v1947, %v1947
      %v1956 = vpack.c.b16 %v1948, %v1948
      %v1957 = vpack.c.b16 %v1949, %v1949
      %1966 = vst [vmem:[%s298] sm:$0xf] %v1950
      %1967 = vst [vmem:[%s298 + $0x4] sm:$0xf] %v1951
      %1968 = vst [vmem:[%s298 + $0x8] sm:$0xf] %v1952
      %1969 = vst [vmem:[%s298 + $0xc] sm:$0xf] %v1953
      %1970 = vst [vmem:[%s298 + $0x10] sm:$0xf] %v1954
      %1971 = vst [vmem:[%s298 + $0x14] sm:$0xf] %v1955
      %1972 = vst [vmem:[%s298 + $0x18] sm:$0xf] %v1956
      %1973 = vst [vmem:[%s298 + $0x1c] sm:$0xf] %v1957
      %p1974 = scmp.lt.s32.totalorder %s18, 1
      %s1975 = scalar_select %p1974, %s18, 1
      %s1976 = smul.addr %s1975, 8
      %s1977 = smul.addr %s1976, 4
      %s1978 = scalar_lea.vmem %s7, %s1977
      // Predicated region
      $region49: #{s_encoder_forward.16} parent=47 // pred_check
        %p1979 = pneg %p193
      $region50: #{s_encoder_forward.16} parent=47 // pred_check_branch
        %1981 = sbr.rel (%p1979) target = $region52
      $region51: #{s_encoder_forward.16} parent=47 // pred_region
        _
      $region52: #{s_encoder_forward.16} parent=47 // pred_fallthru
        _
    $region48: #{s_encoder_forward.16} parent=5 // pred_fallthru
      _
    %p1982 = scmp.le.s32.totalorder 2, %s13
    // Predicated region
    $region53: #{s_encoder_forward.16} parent=5 // pred_check
      %p1983 = pneg %p1982
    $region54: #{s_encoder_forward.16} parent=5 // pred_check_branch
      %1985 = sbr.rel (%p1983) target = $region56
    $region55: #{s_encoder_forward.16} parent=5 // pred_region
      %s1986 = ssub.s32 %s13, 2
      // Predicated region
      $region57: #{s_encoder_forward.16} parent=55 // pred_check
        %p1987 = pneg %p199
      $region58: #{s_encoder_forward.16} parent=55 // pred_check_branch
        %1989 = sbr.rel (%p1987) target = $region60
      $region59: #{s_encoder_forward.16} parent=55 // pred_region
        %p1990 = scmp.lt.s32.totalorder %s19, 1
        %s1991 = scalar_select %p1990, %s19, 1
        %s1992 = smul.addr %s1991, 8
        %s1993 = smul.addr %s1992, 4
        %s1994 = scalar_lea.vmem %s7, %s1993
      $region60: #{s_encoder_forward.16} parent=55 // pred_fallthru
        _
    $region56: #{s_encoder_forward.16} parent=5 // pred_fallthru
      _
  $region6: #{s_encoder_forward.16} parent=0 // loop_footer
    %s17 = sadd.s32 1, %s13
  $region7: #{s_encoder_forward.16} parent=0 // loop_footer_branch
    %12 = sbr.rel target = $region3
  $region8: #{s_encoder_forward.16} parent=0 // loop_exit
    _

// kernel: s_encoder_forward.21
$region0: #{s_encoder_forward.21}
  #allocation0 [shape = 'u32[]', space=smem, size = 0x4, offset = 0x4, fixed_abs, tag = 'smem constant byte address 0x4 - core index']
  #allocation1 [shape = 'u32[144,128]{1,0:T(1,128)}', space=vmem, size = 0x12000, scoped, tag = 'internal scratch']
  %s0 = inlined_call_operand.vmem [shape: bf16[2,64,256], index: 0, kind: input, shape index: {}]
  %s1 = inlined_call_operand.vmem [shape: bf16[9,64,64], index: 1, kind: input, shape index: {}]
  %s2 = inlined_call_operand.vmem [shape: f32[64,1], index: 2, kind: input, shape index: {}]
  %s3 = inlined_call_operand.vmem [shape: f32[64,256], index: 3, kind: input, shape index: {}]
  %s4 = inlined_call_operand.vmem [shape: f32[64,1], index: 4, kind: input, shape index: {}]
  %s5 = inlined_call_operand.vmem [shape: f32[64,1], index: 5, kind: input, shape index: {}]
  %s6 = inlined_call_operand.vmem [shape: f32[2,64,128], index: 6, kind: output, shape index: {}]
  %s7 = sld [smem:[#allocation0]]
  $region57: #{s_encoder_forward.21} parent=0
    _
  %s9 = ssub.s32 1, %s7
  %s10 = scalar_select 0, %s9, %s7
  loop: start=0, step=1, limit=4
  $region2: #{s_encoder_forward.21} parent=0 // loop_pre_header
    _
  $region3: #{s_encoder_forward.21} parent=0 // loop_header
    %s12 = sphi 0, %s16
    %p13 = scmp.ge.s32.totalorder %s12, 4
    %s22 = sphi 0, %s24
    %s25 = sphi 0, %s22
    %s26 = sphi 0, %s25
    %s42 = sphi 0, %s26
    %s46 = sphi 0, %s46
    %s48 = sphi 0, %s46
    %s49 = sphi 0, %s48
    %s63 = sphi 0, %s49
    %s67 = sphi 0, %s67
    %s69 = sphi 0, %s67
    %s70 = sphi 0, %s69
    %s84 = sphi 0, %s70
    %s88 = sphi 0, %s88
    %s90 = sphi 0, %s88
    %s91 = sphi 0, %s90
    %s105 = sphi 0, %s91
    %s109 = sphi 0, %s109
    %s111 = sphi 0, %s109
    %s112 = sphi 0, %s111
    %s126 = sphi 0, %s112
    %s130 = sphi 0, %s130
    %s132 = sphi 0, %s130
    %s133 = sphi 0, %s132
    %s147 = sphi 0, %s133
    %s153 = sphi 0, %s155
    %s156 = sphi 0, %s153
    %s157 = sphi 0, %s156
    %s173 = sphi 0, %s157
  $region4: #{s_encoder_forward.21} parent=0 // loop_header_branch
    %15 = sbr.rel (%p13) target = $region8
  $region5: #{s_encoder_forward.21} parent=0 // loop_body
    %s17 = ssub.s32 %s12, 1
    %s18 = ssub.s32 %s12, 2
    %s19 = sadd.s32 %s12, 1
    %s20 = ssub.s32 %s12, %s19
    %p21 = scmp.eq.s32.totalorder %s20, 0
    %s23 = sadd.s32 %s22, 1
    %s24 = scalar_select %p21, %s22, %s23
    %p27 = pneg %p21
    %p28 = scmp.eq.s32.totalorder %s12, 1
    %p29 = por %p27, %p28
    %p30 = scmp.ne.s32.totalorder %s22, %s25
    %p31 = scmp.eq.s32.totalorder %s12, 0
    %p32 = por %p30, %p31
    %p33 = scmp.ne.s32.totalorder %s22, %s25
    %p34 = scmp.eq.s32.totalorder %s17, 1
    %p35 = por %p33, %p34
    %p36 = scmp.ne.s32.totalorder %s25, %s26
    %p37 = scmp.eq.s32.totalorder %s17, 0
    %p38 = por %p36, %p37
    %p39 = scmp.ne.s32.totalorder %s25, %s26
    %p40 = scmp.eq.s32.totalorder %s18, 1
    %p41 = por %p39, %p40
    %p43 = scmp.ne.s32.totalorder %s26, %s42
    %p44 = scmp.eq.s32.totalorder %s18, 0
    %p45 = por %p43, %p44
    %s47 = sadd.s32 %s46, 1
    %p50 = scmp.eq.s32.totalorder %s12, 1
    %p51 = scmp.ne.s32.totalorder %s46, %s48
    %p52 = scmp.eq.s32.totalorder %s12, 0
    %p53 = por %p51, %p52
    %p54 = scmp.ne.s32.totalorder %s46, %s48
    %p55 = scmp.eq.s32.totalorder %s17, 1
    %p56 = por %p54, %p55
    %p57 = scmp.ne.s32.totalorder %s48, %s49
    %p58 = scmp.eq.s32.totalorder %s17, 0
    %p59 = por %p57, %p58
    %p60 = scmp.ne.s32.totalorder %s48, %s49
    %p61 = scmp.eq.s32.totalorder %s18, 1
    %p62 = por %p60, %p61
    %p64 = scmp.ne.s32.totalorder %s49, %s63
    %p65 = scmp.eq.s32.totalorder %s18, 0
    %p66 = por %p64, %p65
    %s68 = sadd.s32 %s67, 1
    %p71 = scmp.eq.s32.totalorder %s12, 1
    %p72 = scmp.ne.s32.totalorder %s67, %s69
    %p73 = scmp.eq.s32.totalorder %s12, 0
    %p74 = por %p72, %p73
    %p75 = scmp.ne.s32.totalorder %s67, %s69
    %p76 = scmp.eq.s32.totalorder %s17, 1
    %p77 = por %p75, %p76
    %p78 = scmp.ne.s32.totalorder %s69, %s70
    %p79 = scmp.eq.s32.totalorder %s17, 0
    %p80 = por %p78, %p79
    %p81 = scmp.ne.s32.totalorder %s69, %s70
    %p82 = scmp.eq.s32.totalorder %s18, 1
    %p83 = por %p81, %p82
    %p85 = scmp.ne.s32.totalorder %s70, %s84
    %p86 = scmp.eq.s32.totalorder %s18, 0
    %p87 = por %p85, %p86
    %s89 = sadd.s32 %s88, 1
    %p92 = scmp.eq.s32.totalorder %s12, 1
    %p93 = scmp.ne.s32.totalorder %s88, %s90
    %p94 = scmp.eq.s32.totalorder %s12, 0
    %p95 = por %p93, %p94
    %p96 = scmp.ne.s32.totalorder %s88, %s90
    %p97 = scmp.eq.s32.totalorder %s17, 1
    %p98 = por %p96, %p97
    %p99 = scmp.ne.s32.totalorder %s90, %s91
    %p100 = scmp.eq.s32.totalorder %s17, 0
    %p101 = por %p99, %p100
    %p102 = scmp.ne.s32.totalorder %s90, %s91
    %p103 = scmp.eq.s32.totalorder %s18, 1
    %p104 = por %p102, %p103
    %p106 = scmp.ne.s32.totalorder %s91, %s105
    %p107 = scmp.eq.s32.totalorder %s18, 0
    %p108 = por %p106, %p107
    %s110 = sadd.s32 %s109, 1
    %p113 = scmp.eq.s32.totalorder %s12, 1
    %p114 = scmp.ne.s32.totalorder %s109, %s111
    %p115 = scmp.eq.s32.totalorder %s12, 0
    %p116 = por %p114, %p115
    %p117 = scmp.ne.s32.totalorder %s109, %s111
    %p118 = scmp.eq.s32.totalorder %s17, 1
    %p119 = por %p117, %p118
    %p120 = scmp.ne.s32.totalorder %s111, %s112
    %p121 = scmp.eq.s32.totalorder %s17, 0
    %p122 = por %p120, %p121
    %p123 = scmp.ne.s32.totalorder %s111, %s112
    %p124 = scmp.eq.s32.totalorder %s18, 1
    %p125 = por %p123, %p124
    %p127 = scmp.ne.s32.totalorder %s112, %s126
    %p128 = scmp.eq.s32.totalorder %s18, 0
    %p129 = por %p127, %p128
    %s131 = sadd.s32 %s130, 1
    %p134 = scmp.eq.s32.totalorder %s12, 1
    %p135 = scmp.ne.s32.totalorder %s130, %s132
    %p136 = scmp.eq.s32.totalorder %s12, 0
    %p137 = por %p135, %p136
    %p138 = scmp.ne.s32.totalorder %s130, %s132
    %p139 = scmp.eq.s32.totalorder %s17, 1
    %p140 = por %p138, %p139
    %p141 = scmp.ne.s32.totalorder %s132, %s133
    %p142 = scmp.eq.s32.totalorder %s17, 0
    %p143 = por %p141, %p142
    %p144 = scmp.ne.s32.totalorder %s132, %s133
    %p145 = scmp.eq.s32.totalorder %s18, 1
    %p146 = por %p144, %p145
    %p148 = scmp.ne.s32.totalorder %s133, %s147
    %p149 = scmp.eq.s32.totalorder %s18, 0
    %p150 = por %p148, %p149
    %s151 = ssub.s32 %s12, %s19
    %p152 = scmp.eq.s32.totalorder %s151, 0
    %s154 = sadd.s32 %s153, 1
    %s155 = scalar_select %p152, %s153, %s154
    %p158 = pneg %p152
    %p159 = scmp.eq.s32.totalorder %s12, 1
    %p160 = por %p158, %p159
    %p161 = scmp.ne.s32.totalorder %s153, %s156
    %p162 = scmp.eq.s32.totalorder %s12, 0
    %p163 = por %p161, %p162
    %p164 = scmp.ne.s32.totalorder %s153, %s156
    %p165 = scmp.eq.s32.totalorder %s17, 1
    %p166 = por %p164, %p165
    %p167 = scmp.ne.s32.totalorder %s156, %s157
    %p168 = scmp.eq.s32.totalorder %s17, 0
    %p169 = por %p167, %p168
    %p170 = scmp.ne.s32.totalorder %s156, %s157
    %p171 = scmp.eq.s32.totalorder %s18, 1
    %p172 = por %p170, %p171
    %p174 = scmp.ne.s32.totalorder %s157, %s173
    %p175 = scmp.eq.s32.totalorder %s18, 0
    %p176 = por %p174, %p175
    %p177 = scmp.le.s32.totalorder 1, %s12
    %p178 = scmp.lt.s32.totalorder %s12, 3
    %p179 = pnand %p177, %p178
    %p180 = pneg %p179
    // Predicated region
    $region9: #{s_encoder_forward.21} parent=5 // pred_check
      _
    $region10: #{s_encoder_forward.21} parent=5 // pred_check_branch
      %182 = sbr.rel (%p179) target = $region12
    $region11: #{s_encoder_forward.21} parent=5 // pred_region
      %s183 = ssub.s32 %s12, 1
      // Predicated region
      $region13: #{s_encoder_forward.21} parent=11 // pred_check
        %p184 = pneg %p59
      $region14: #{s_encoder_forward.21} parent=11 // pred_check_branch
        %186 = sbr.rel (%p184) target = $region16
      $region15: #{s_encoder_forward.21} parent=11 // pred_region
        _
      $region16: #{s_encoder_forward.21} parent=11 // pred_fallthru
        _
      // Predicated region
      $region17: #{s_encoder_forward.21} parent=11 // pred_check
        %p187 = pneg %p80
      $region18: #{s_encoder_forward.21} parent=11 // pred_check_branch
        %189 = sbr.rel (%p187) target = $region20
      $region19: #{s_encoder_forward.21} parent=11 // pred_region
        _
      $region20: #{s_encoder_forward.21} parent=11 // pred_fallthru
        _
      // Predicated region
      $region21: #{s_encoder_forward.21} parent=11 // pred_check
        %p190 = pneg %p101
      $region22: #{s_encoder_forward.21} parent=11 // pred_check_branch
        %192 = sbr.rel (%p190) target = $region24
      $region23: #{s_encoder_forward.21} parent=11 // pred_region
        _
      $region24: #{s_encoder_forward.21} parent=11 // pred_fallthru
        _
      // Predicated region
      $region25: #{s_encoder_forward.21} parent=11 // pred_check
        %p193 = pneg %p122
      $region26: #{s_encoder_forward.21} parent=11 // pred_check_branch
        %195 = sbr.rel (%p193) target = $region28
      $region27: #{s_encoder_forward.21} parent=11 // pred_region
        _
      $region28: #{s_encoder_forward.21} parent=11 // pred_fallthru
        _
      // Predicated region
      $region29: #{s_encoder_forward.21} parent=11 // pred_check
        %p196 = pneg %p143
      $region30: #{s_encoder_forward.21} parent=11 // pred_check_branch
        %198 = sbr.rel (%p196) target = $region32
      $region31: #{s_encoder_forward.21} parent=11 // pred_region
        _
      $region32: #{s_encoder_forward.21} parent=11 // pred_fallthru
        _
    $region12: #{s_encoder_forward.21} parent=5 // pred_fallthru
      _
    %p199 = scmp.lt.s32.totalorder %s12, 2
    // Predicated region
    $region33: #{s_encoder_forward.21} parent=5 // pred_check
      %p200 = pneg %p199
    $region34: #{s_encoder_forward.21} parent=5 // pred_check_branch
      %202 = sbr.rel (%p200) target = $region36
    $region35: #{s_encoder_forward.21} parent=5 // pred_region
      // Predicated region
      $region37: #{s_encoder_forward.21} parent=35 // pred_check
        %p203 = pneg %p32
      $region38: #{s_encoder_forward.21} parent=35 // pred_check_branch
        %205 = sbr.rel (%p203) target = $region40
      $region39: #{s_encoder_forward.21} parent=35 // pred_region
        %p206 = scmp.lt.s32.totalorder %s12, 1
        %s207 = scalar_select %p206, %s12, 1
        %s208 = smul.addr %s207, 16
        %s209 = smul.addr %s208, 4
        %s210 = scalar_lea.vmem %s0, %s209
      $region40: #{s_encoder_forward.21} parent=35 // pred_fallthru
        _
    $region36: #{s_encoder_forward.21} parent=5 // pred_fallthru
      _
    %p211 = scmp.le.s32.totalorder 1, %s12
    %p212 = scmp.lt.s32.totalorder %s12, 3
    %p213 = pnand %p211, %p212
    %p214 = pneg %p213
    // Predicated region
    $region41: #{s_encoder_forward.21} parent=5 // pred_check
      _
    $region42: #{s_encoder_forward.21} parent=5 // pred_check_branch
      %216 = sbr.rel (%p213) target = $region44
    $region43: #{s_encoder_forward.21} parent=5 // pred_region
      %s217 = ssub.s32 %s12, 1
      %p218 = scmp.lt.s32.totalorder %s17, 1
      %s219 = scalar_select %p218, %s17, 1
      %s220 = smul.addr %s219, 16
      %s221 = smul.addr %s220, 4
      %s222 = scalar_lea.vmem %s0, %s221
      %p223 = pneg %p38
      %p224 = pneg %p35
      %p225 = pneg %p59
      %p226 = pneg %p56
      %p227 = pneg %p80
      %p228 = pneg %p77
      %p229 = pneg %p101
      %p230 = pneg %p98
      %p231 = pneg %p122
      %p232 = pneg %p119
      %p233 = pneg %p143
      %p234 = pneg %p140
      %p235 = pneg %p169
      %p236 = pneg %p166
      %p237 = scmp.lt.s32.totalorder %s17, 1
      %s238 = scalar_select %p237, %s17, 1
      %s239 = smul.addr %s238, 8
      %s240 = smul.addr %s239, 8
      %s241 = scalar_lea.vmem %s6, %s240
      %p242 = scmp.lt.s32.totalorder %s17, 1
      %s243 = scalar_select %p242, %s17, 1
      %s244 = smul.addr %s243, 16
      %s245 = smul.addr %s244, 4
      %s246 = scalar_lea.vmem %s0, %s245
      %p247 = scmp.lt.s32.totalorder %s17, 1
      %s248 = scalar_select %p247, %s17, 1
      %s249 = smul.addr %s248, 8
      %s250 = smul.addr %s249, 8
      %s251 = scalar_lea.vmem %s6, %s250
      %v253 = vld [vmem:[%s246] sm:$0xff]
      %v254 = vld [vmem:[%s246 + $0x8] sm:$0xff]
      %v255 = vld [vmem:[%s246 + $0x10] sm:$0xff]
      %v256 = vld [vmem:[%s246 + $0x18] sm:$0xff]
      %v257 = vld [vmem:[%s246 + $0x20] sm:$0xff]
      %v258 = vld [vmem:[%s246 + $0x28] sm:$0xff]
      %v259 = vld [vmem:[%s246 + $0x30] sm:$0xff]
      %v260 = vld [vmem:[%s246 + $0x38] sm:$0xff]
      %v261 = vunpack.c.l.bf16 %v253
      %v262 = vunpack.c.h.bf16 %v253
      %v263 = vunpack.c.l.bf16 %v254
      %v264 = vunpack.c.h.bf16 %v254
      %v265 = vunpack.c.l.bf16 %v255
      %v266 = vunpack.c.h.bf16 %v255
      %v267 = vunpack.c.l.bf16 %v256
      %v268 = vunpack.c.h.bf16 %v256
      %v269 = vunpack.c.l.bf16 %v257
      %v270 = vunpack.c.h.bf16 %v257
      %v271 = vunpack.c.l.bf16 %v258
      %v272 = vunpack.c.h.bf16 %v258
      %v273 = vunpack.c.l.bf16 %v259
      %v274 = vunpack.c.h.bf16 %v259
      %v275 = vunpack.c.l.bf16 %v260
      %v276 = vunpack.c.h.bf16 %v260
      %v277 = vld [vmem:[%s3] sm:$0xff]
      %v278 = vld [vmem:[%s3 + $0x8] sm:$0xff]
      %v279 = vld [vmem:[%s3 + $0x10] sm:$0xff]
      %v280 = vld [vmem:[%s3 + $0x18] sm:$0xff]
      %v281 = vld [vmem:[%s3 + $0x20] sm:$0xff]
      %v282 = vld [vmem:[%s3 + $0x28] sm:$0xff]
      %v283 = vld [vmem:[%s3 + $0x30] sm:$0xff]
      %v284 = vld [vmem:[%s3 + $0x38] sm:$0xff]
      %v285 = vld [vmem:[%s3 + $0x40] sm:$0xff]
      %v286 = vld [vmem:[%s3 + $0x48] sm:$0xff]
      %v287 = vld [vmem:[%s3 + $0x50] sm:$0xff]
      %v288 = vld [vmem:[%s3 + $0x58] sm:$0xff]
      %v289 = vld [vmem:[%s3 + $0x60] sm:$0xff]
      %v290 = vld [vmem:[%s3 + $0x68] sm:$0xff]
      %v291 = vld [vmem:[%s3 + $0x70] sm:$0xff]
      %v292 = vld [vmem:[%s3 + $0x78] sm:$0xff]
      %v293 = vmul.f32 %v261, %v277
      %v294 = vmul.f32 %v262, %v278
      %v295 = vmul.f32 %v263, %v279
      %v296 = vmul.f32 %v264, %v280
      %v297 = vmul.f32 %v265, %v281
      %v298 = vmul.f32 %v266, %v282
      %v299 = vmul.f32 %v267, %v283
      %v300 = vmul.f32 %v268, %v284
      %v301 = vmul.f32 %v269, %v285
      %v302 = vmul.f32 %v270, %v286
      %v303 = vmul.f32 %v271, %v287
      %v304 = vmul.f32 %v272, %v288
      %v305 = vmul.f32 %v273, %v289
      %v306 = vmul.f32 %v274, %v290
      %v307 = vmul.f32 %v275, %v291
      %v308 = vmul.f32 %v276, %v292
      %v309 = vadd.f32 %v293, %v294
      %v310 = vadd.f32 %v309, %v295
      %v311 = vadd.f32 %v310, %v296
      %v312 = vadd.f32 %v311, %v297
      %v313 = vadd.f32 %v312, %v298
      %v314 = vadd.f32 %v313, %v299
      %v315 = vadd.f32 %v314, %v300
      %v316 = vadd.f32 %v315, %v301
      %v317 = vadd.f32 %v316, %v302
      %v318 = vadd.f32 %v317, %v303
      %v319 = vadd.f32 %v318, %v304
      %v320 = vadd.f32 %v319, %v305
      %v321 = vadd.f32 %v320, %v306
      %v322 = vadd.f32 %v321, %v307
      %v323 = vadd.f32 %v322, %v308
      %324 = vadd.xlane.f32.xlu0 %v323
      %v325 = vpop.xlane.xlu0 %324
      %v326 = vrot.slane %v325, 4
      %v327 = vadd.f32 %v325, %v326
      %v328 = vrot.slane %v327, 2
      %v329 = vadd.f32 %v327, %v328
      %v330 = vrot.slane %v329, 1
      %v331 = vadd.f32 %v329, %v330
      %s332 = vtos %v331
      %v333 = vstv %s332
      %v334 = vrcp.pop 1024.0
      %v335 = vmul.f32 %v333, %v334
      %v336 = vsub.f32 %v261, %v335
      %v337 = vsub.f32 %v262, %v335
      %v338 = vsub.f32 %v263, %v335
      %v339 = vsub.f32 %v264, %v335
      %v340 = vsub.f32 %v265, %v335
      %v341 = vsub.f32 %v266, %v335
      %v342 = vsub.f32 %v267, %v335
      %v343 = vsub.f32 %v268, %v335
      %v344 = vsub.f32 %v269, %v335
      %v345 = vsub.f32 %v270, %v335
      %v346 = vsub.f32 %v271, %v335
      %v347 = vsub.f32 %v272, %v335
      %v348 = vsub.f32 %v273, %v335
      %v349 = vsub.f32 %v274, %v335
      %v350 = vsub.f32 %v275, %v335
      %v351 = vsub.f32 %v276, %v335
      %v352 = vmul.f32 %v336, %v277
      %v353 = vmul.f32 %v337, %v278
      %v354 = vmul.f32 %v338, %v279
      %v355 = vmul.f32 %v339, %v280
      %v356 = vmul.f32 %v340, %v281
      %v357 = vmul.f32 %v341, %v282
      %v358 = vmul.f32 %v342, %v283
      %v359 = vmul.f32 %v343, %v284
      %v360 = vmul.f32 %v344, %v285
      %v361 = vmul.f32 %v345, %v286
      %v362 = vmul.f32 %v346, %v287
      %v363 = vmul.f32 %v347, %v288
      %v364 = vmul.f32 %v348, %v289
      %v365 = vmul.f32 %v349, %v290
      %v366 = vmul.f32 %v350, %v291
      %v367 = vmul.f32 %v351, %v292
      %v368 = vmul.f32 %v352, %v352
      %v369 = vmul.f32 %v353, %v353
      %v370 = vmul.f32 %v354, %v354
      %v371 = vmul.f32 %v355, %v355
      %v372 = vmul.f32 %v356, %v356
      %v373 = vmul.f32 %v357, %v357
      %v374 = vmul.f32 %v358, %v358
      %v375 = vmul.f32 %v359, %v359
      %v376 = vmul.f32 %v360, %v360
      %v377 = vmul.f32 %v361, %v361
      %v378 = vmul.f32 %v362, %v362
      %v379 = vmul.f32 %v363, %v363
      %v380 = vmul.f32 %v364, %v364
      %v381 = vmul.f32 %v365, %v365
      %v382 = vmul.f32 %v366, %v366
      %v383 = vmul.f32 %v367, %v367
      %v384 = vadd.f32 %v368, %v369
      %v385 = vadd.f32 %v384, %v370
      %v386 = vadd.f32 %v385, %v371
      %v387 = vadd.f32 %v386, %v372
      %v388 = vadd.f32 %v387, %v373
      %v389 = vadd.f32 %v388, %v374
      %v390 = vadd.f32 %v389, %v375
      %v391 = vadd.f32 %v390, %v376
      %v392 = vadd.f32 %v391, %v377
      %v393 = vadd.f32 %v392, %v378
      %v394 = vadd.f32 %v393, %v379
      %v395 = vadd.f32 %v394, %v380
      %v396 = vadd.f32 %v395, %v381
      %v397 = vadd.f32 %v396, %v382
      %v398 = vadd.f32 %v397, %v383
      %399 = vadd.xlane.f32.xlu0 %v398
      %v400 = vpop.xlane.xlu0 %399
      %v401 = vrot.slane %v400, 4
      %v402 = vadd.f32 %v400, %v401
      %v403 = vrot.slane %v402, 2
      %v404 = vadd.f32 %v402, %v403
      %v405 = vrot.slane %v404, 1
      %v406 = vadd.f32 %v404, %v405
      %s407 = vtos %v406
      %v408 = vstv %s407
      %v409 = vrcp.pop 1023.0
      %v410 = vmul.f32 %v408, %v409
      %v411 = vrsqrt.pop %v410
      %v412 = vmul.f32 %v410, %v411
      %vm413 = vcmp.eq.f32.partialorder %v410, inf
      %v414 = vsel %vm413, %v410, %v412
      %vm415 = vcmp.eq.f32.partialorder %v410, 0.0
      %v416 = vand.u32 %v410, 2147483648
      %v417 = vsel %vm415, %v416, %v414
      %v418 = vadd.f32 %v417, 1e-05
      %v419 = vrcp.pop %v418
      %v420 = vmul.f32 1.0, %v419
      %v421 = vmul.f32 %v336, %v420
      %v422 = vmul.f32 %v337, %v420
      %v423 = vmul.f32 %v338, %v420
      %v424 = vmul.f32 %v339, %v420
      %v425 = vmul.f32 %v340, %v420
      %v426 = vmul.f32 %v341, %v420
      %v427 = vmul.f32 %v342, %v420
      %v428 = vmul.f32 %v343, %v420
      %v429 = vmul.f32 %v344, %v420
      %v430 = vmul.f32 %v345, %v420
      %v431 = vmul.f32 %v346, %v420
      %v432 = vmul.f32 %v347, %v420
      %v433 = vmul.f32 %v348, %v420
      %v434 = vmul.f32 %v349, %v420
      %v435 = vmul.f32 %v350, %v420
      %v436 = vmul.f32 %v351, %v420
      %v437 = vld [vmem:[%s4] sm:$0xff]
      %v438 = vld [vmem:[%s4 + $0x8] sm:$0xff]
      %v439 = vld [vmem:[%s4 + $0x10] sm:$0xff]
      %v440 = vld [vmem:[%s4 + $0x18] sm:$0xff]
      %v441 = vld [vmem:[%s4 + $0x20] sm:$0xff]
      %v442 = vld [vmem:[%s4 + $0x28] sm:$0xff]
      %v443 = vld [vmem:[%s4 + $0x30] sm:$0xff]
      %v444 = vld [vmem:[%s4 + $0x38] sm:$0xff]
      %446 = vset.pattern.permute.xlu0 0
      %447 = vperm.xlu0 %446, %v437
      %v448 = vpop.permute.xlu0 %447
      %451 = vset.pattern.permute.xlu0 0
      %452 = vperm.xlu0 %451, %v438
      %v453 = vpop.permute.xlu0 %452
      %456 = vset.pattern.permute.xlu0 0
      %457 = vperm.xlu0 %456, %v439
      %v458 = vpop.permute.xlu0 %457
      %461 = vset.pattern.permute.xlu0 0
      %462 = vperm.xlu0 %461, %v440
      %v463 = vpop.permute.xlu0 %462
      %466 = vset.pattern.permute.xlu0 0
      %467 = vperm.xlu0 %466, %v441
      %v468 = vpop.permute.xlu0 %467
      %471 = vset.pattern.permute.xlu0 0
      %472 = vperm.xlu0 %471, %v442
      %v473 = vpop.permute.xlu0 %472
      %476 = vset.pattern.permute.xlu0 0
      %477 = vperm.xlu0 %476, %v443
      %v478 = vpop.permute.xlu0 %477
      %481 = vset.pattern.permute.xlu0 0
      %482 = vperm.xlu0 %481, %v444
      %v483 = vpop.permute.xlu0 %482
      %v485 = vmul.f32 %v421, %v448
      %v486 = vmul.f32 %v422, %v448
      %v487 = vmul.f32 %v423, %v453
      %v488 = vmul.f32 %v424, %v453
      %v489 = vmul.f32 %v425, %v458
      %v490 = vmul.f32 %v426, %v458
      %v491 = vmul.f32 %v427, %v463
      %v492 = vmul.f32 %v428, %v463
      %v493 = vmul.f32 %v429, %v468
      %v494 = vmul.f32 %v430, %v468
      %v495 = vmul.f32 %v431, %v473
      %v496 = vmul.f32 %v432, %v473
      %v497 = vmul.f32 %v433, %v478
      %v498 = vmul.f32 %v434, %v478
      %v499 = vmul.f32 %v435, %v483
      %v500 = vmul.f32 %v436, %v483
      %v501 = vld [vmem:[%s5] sm:$0xff]
      %v502 = vld [vmem:[%s5 + $0x8] sm:$0xff]
      %v503 = vld [vmem:[%s5 + $0x10] sm:$0xff]
      %v504 = vld [vmem:[%s5 + $0x18] sm:$0xff]
      %v505 = vld [vmem:[%s5 + $0x20] sm:$0xff]
      %v506 = vld [vmem:[%s5 + $0x28] sm:$0xff]
      %v507 = vld [vmem:[%s5 + $0x30] sm:$0xff]
      %v508 = vld [vmem:[%s5 + $0x38] sm:$0xff]
      %510 = vset.pattern.permute.xlu0 0
      %511 = vperm.xlu0 %510, %v501
      %v512 = vpop.permute.xlu0 %511
      %515 = vset.pattern.permute.xlu0 0
      %516 = vperm.xlu0 %515, %v502
      %v517 = vpop.permute.xlu0 %516
      %520 = vset.pattern.permute.xlu0 0
      %521 = vperm.xlu0 %520, %v503
      %v522 = vpop.permute.xlu0 %521
      %525 = vset.pattern.permute.xlu0 0
      %526 = vperm.xlu0 %525, %v504
      %v527 = vpop.permute.xlu0 %526
      %530 = vset.pattern.permute.xlu0 0
      %531 = vperm.xlu0 %530, %v505
      %v532 = vpop.permute.xlu0 %531
      %535 = vset.pattern.permute.xlu0 0
      %536 = vperm.xlu0 %535, %v506
      %v537 = vpop.permute.xlu0 %536
      %540 = vset.pattern.permute.xlu0 0
      %541 = vperm.xlu0 %540, %v507
      %v542 = vpop.permute.xlu0 %541
      %545 = vset.pattern.permute.xlu0 0
      %546 = vperm.xlu0 %545, %v508
      %v547 = vpop.permute.xlu0 %546
      %v549 = vadd.f32 %v485, %v512
      %v550 = vadd.f32 %v486, %v512
      %v551 = vadd.f32 %v487, %v517
      %v552 = vadd.f32 %v488, %v517
      %v553 = vadd.f32 %v489, %v522
      %v554 = vadd.f32 %v490, %v522
      %v555 = vadd.f32 %v491, %v527
      %v556 = vadd.f32 %v492, %v527
      %v557 = vadd.f32 %v493, %v532
      %v558 = vadd.f32 %v494, %v532
      %v559 = vadd.f32 %v495, %v537
      %v560 = vadd.f32 %v496, %v537
      %v561 = vadd.f32 %v497, %v542
      %v562 = vadd.f32 %v498, %v542
      %v563 = vadd.f32 %v499, %v547
      %v564 = vadd.f32 %v500, %v547
      %v565 = vmax.f32 %v549, 0.0
      %v566 = vmax.f32 %v550, 0.0
      %v567 = vmax.f32 %v551, 0.0
      %v568 = vmax.f32 %v552, 0.0
      %v569 = vmax.f32 %v553, 0.0
      %v570 = vmax.f32 %v554, 0.0
      %v571 = vmax.f32 %v555, 0.0
      %v572 = vmax.f32 %v556, 0.0
      %v573 = vmax.f32 %v557, 0.0
      %v574 = vmax.f32 %v558, 0.0
      %v575 = vmax.f32 %v559, 0.0
      %v576 = vmax.f32 %v560, 0.0
      %v577 = vmax.f32 %v561, 0.0
      %v578 = vmax.f32 %v562, 0.0
      %v579 = vmax.f32 %v563, 0.0
      %v580 = vmax.f32 %v564, 0.0
      %v581 = vpack.c.bf16 %v567, %v565
      %v582 = vpack.c.bf16 %v568, %v566
      %v583 = vpack.c.bf16 %v571, %v569
      %v584 = vpack.c.bf16 %v572, %v570
      %v585 = vpack.c.bf16 %v575, %v573
      %v586 = vpack.c.bf16 %v576, %v574
      %v587 = vpack.c.bf16 %v579, %v577
      %v588 = vpack.c.bf16 %v580, %v578
      %v589 = vld [vmem:[%s1] sm:$0xf]
      %v590 = vld [vmem:[%s1 + $0x4] sm:$0xf]
      %v591 = vld [vmem:[%s1 + $0x8] sm:$0xf]
      %v592 = vld [vmem:[%s1 + $0xc] sm:$0xf]
      %v593 = vld [vmem:[%s1 + $0x10] sm:$0xf]
      %v594 = vld [vmem:[%s1 + $0x14] sm:$0xf]
      %v595 = vld [vmem:[%s1 + $0x18] sm:$0xf]
      %v596 = vld [vmem:[%s1 + $0x1c] sm:$0xf]
      %s597 = scalar_lea.vmem %s1, 32
      %v598 = vld [vmem:[%s597] sm:$0xf]
      %v599 = vld [vmem:[%s597 + $0x4] sm:$0xf]
      %v600 = vld [vmem:[%s597 + $0x8] sm:$0xf]
      %v601 = vld [vmem:[%s597 + $0xc] sm:$0xf]
      %v602 = vld [vmem:[%s597 + $0x10] sm:$0xf]
      %v603 = vld [vmem:[%s597 + $0x14] sm:$0xf]
      %v604 = vld [vmem:[%s597 + $0x18] sm:$0xf]
      %v605 = vld [vmem:[%s597 + $0x1c] sm:$0xf]
      %v614 = vunpack.c.l.b16 %v598
      %v615 = vunpack.c.l.b16 %v599
      %v616 = vunpack.c.l.b16 %v600
      %v617 = vunpack.c.l.b16 %v601
      %v618 = vunpack.c.l.b16 %v602
      %v619 = vunpack.c.l.b16 %v603
      %v620 = vunpack.c.l.b16 %v604
      %v621 = vunpack.c.l.b16 %v605
      %v622 = vpack.c.b16 %v615, %v614
      %v623 = vpack.c.b16 %v617, %v616
      %v624 = vpack.c.b16 %v619, %v618
      %v625 = vpack.c.b16 %v621, %v620
      %634 = vrot.lane.b32.xlu0 %v581, 127
      %v635 = vpop.permute.xlu0 %634
      %636 = vrot.lane.b32.xlu0 %v582, 127
      %v637 = vpop.permute.xlu0 %636
      %638 = vrot.lane.b32.xlu0 %v583, 127
      %v639 = vpop.permute.xlu0 %638
      %640 = vrot.lane.b32.xlu0 %v584, 127
      %v641 = vpop.permute.xlu0 %640
      %642 = vrot.lane.b32.xlu0 %v585, 127
      %v643 = vpop.permute.xlu0 %642
      %644 = vrot.lane.b32.xlu0 %v586, 127
      %v645 = vpop.permute.xlu0 %644
      %646 = vrot.lane.b32.xlu0 %v587, 127
      %v647 = vpop.permute.xlu0 %646
      %648 = vrot.lane.b32.xlu0 %v588, 127
      %v649 = vpop.permute.xlu0 %648
      %vm650 = vcmask 1039360
      %v651 = vsel %vm650, %v635, %v637
      %v652 = vsel %vm650, %v639, %v641
      %v653 = vsel %vm650, %v643, %v645
      %v654 = vsel %vm650, %v647, %v649
      %vm659 = vcmask 523264
      %v661 = vsel %vm659, %v622, 0
      %v664 = vsel %vm659, %v623, 0
      %v667 = vsel %vm659, %v624, 0
      %v670 = vsel %vm659, %v625, 0
      %672 = vmatprep.subr.bf16.mxu0 0
      %673 = vmatpush1.bf16.msra.mxu0 %v651
      %674 = vmatprep.subr.bf16.mxu0 0
      %675 = vmatpush1.bf16.msra.mxu0 %v652
      %676 = vmatprep.subr.bf16.mxu0 0
      %677 = vmatpush1.bf16.msra.mxu0 %v653
      %678 = vmatprep.subr.bf16.mxu0 0
      %679 = vmatpush1.bf16.msra.mxu0 %v654
      %680 = vmatprep.subr.bf16.mxu0 0
      %681 = vmatpush1.bf16.msra.mxu0 0
      %682 = vmatprep.subr.bf16.mxu0 0
      %683 = vmatpush1.bf16.msra.mxu0 0
      %684 = vmatprep.subr.bf16.mxu0 0
      %685 = vmatpush1.bf16.msra.mxu0 0
      %686 = vmatprep.subr.bf16.mxu0 0
      %687 = vmatpush1.bf16.msra.mxu0 0
      %688 = vmatprep.subr.bf16.mxu0 0
      %689 = vmatpush1.bf16.msra.mxu0 0
      %690 = vmatprep.subr.bf16.mxu0 0
      %691 = vmatpush1.bf16.msra.mxu0 0
      %692 = vmatprep.subr.bf16.mxu0 0
      %693 = vmatpush1.bf16.msra.mxu0 0
      %694 = vmatprep.subr.bf16.mxu0 0
      %695 = vmatpush1.bf16.msra.mxu0 0
      %696 = vmatprep.subr.bf16.mxu0 0
      %697 = vmatpush1.bf16.msra.mxu0 0
      %698 = vmatprep.subr.bf16.mxu0 0
      %699 = vmatpush1.bf16.msra.mxu0 0
      %700 = vmatprep.subr.bf16.mxu0 0
      %701 = vmatpush1.bf16.msra.mxu0 0
      %702 = vmatprep.subr.bf16.mxu0 0
      %703 = vmatpush1.bf16.msra.mxu0 0
      %704 = vmatprep.mubr.bf16.mxu0 0
      %705 = vmatmul.mubr.bf16.gmra.mrb[0].mxu0 %v661
      %v706 = vpop.f32.mrb[0].mxu0
      %v707 = vadd.f32 0.0, %v706
      %v708 = vpop.f32.mrb[0].mxu0
      %v709 = vpop.f32.mrb[0].mxu0
      %v710 = vadd.f32 0.0, %v709
      %v711 = vpop.f32.mrb[0].mxu0
      %712 = vmatprep.mubr.bf16.mxu0 0
      %713 = vmatmul.mubr.bf16.gmra.mrb[0].mxu0 %v664
      %v714 = vpop.f32.mrb[0].mxu0
      %v715 = vadd.f32 0.0, %v714
      %v716 = vpop.f32.mrb[0].mxu0
      %v717 = vpop.f32.mrb[0].mxu0
      %v718 = vadd.f32 0.0, %v717
      %v719 = vpop.f32.mrb[0].mxu0
      %720 = vmatprep.mubr.bf16.mxu0 0
      %721 = vmatmul.mubr.bf16.gmra.mrb[0].mxu0 %v667
      %v722 = vpop.f32.mrb[0].mxu0
      %v723 = vadd.f32 0.0, %v722
      %v724 = vpop.f32.mrb[0].mxu0
      %v725 = vpop.f32.mrb[0].mxu0
      %v726 = vadd.f32 0.0, %v725
      %v727 = vpop.f32.mrb[0].mxu0
      %728 = vmatprep.mubr.bf16.mxu0 0
      %729 = vmatmul.mubr.bf16.gmra.mrb[0].mxu0 %v670
      %v730 = vpop.f32.mrb[0].mxu0
      %v731 = vadd.f32 0.0, %v730
      %v732 = vpop.f32.mrb[0].mxu0
      %v733 = vpop.f32.mrb[0].mxu0
      %v734 = vadd.f32 0.0, %v733
      %v735 = vpop.f32.mrb[0].mxu0
      %736 = vdwg.mxu0
      %v745 = vunpack.c.l.b16 %v589
      %v746 = vunpack.c.l.b16 %v590
      %v747 = vunpack.c.l.b16 %v591
      %v748 = vunpack.c.l.b16 %v592
      %v749 = vunpack.c.l.b16 %v593
      %v750 = vunpack.c.l.b16 %v594
      %v751 = vunpack.c.l.b16 %v595
      %v752 = vunpack.c.l.b16 %v596
      %v753 = vpack.c.b16 %v746, %v745
      %v754 = vpack.c.b16 %v748, %v747
      %v755 = vpack.c.b16 %v750, %v749
      %v756 = vpack.c.b16 %v752, %v751
      %v758 = vsel %vm659, %v753, 0
      %v761 = vsel %vm659, %v754, 0
      %v764 = vsel %vm659, %v755, 0
      %v767 = vsel %vm659, %v756, 0
      %769 = vmatprep.subr.bf16.mxu0 0
      %770 = vmatpush1.bf16.msra.mxu0 %v581
      %771 = vmatprep.subr.bf16.mxu0 0
      %772 = vmatpush1.bf16.msra.mxu0 %v583
      %773 = vmatprep.subr.bf16.mxu0 0
      %774 = vmatpush1.bf16.msra.mxu0 %v585
      %775 = vmatprep.subr.bf16.mxu0 0
      %776 = vmatpush1.bf16.msra.mxu0 %v587
      %777 = vmatprep.subr.bf16.mxu0 0
      %778 = vmatpush1.bf16.msra.mxu0 0
      %779 = vmatprep.subr.bf16.mxu0 0
      %780 = vmatpush1.bf16.msra.mxu0 0
      %781 = vmatprep.subr.bf16.mxu0 0
      %782 = vmatpush1.bf16.msra.mxu0 0
      %783 = vmatprep.subr.bf16.mxu0 0
      %784 = vmatpush1.bf16.msra.mxu0 0
      %785 = vmatprep.subr.bf16.mxu0 0
      %786 = vmatpush1.bf16.msra.mxu0 0
      %787 = vmatprep.subr.bf16.mxu0 0
      %788 = vmatpush1.bf16.msra.mxu0 0
      %789 = vmatprep.subr.bf16.mxu0 0
      %790 = vmatpush1.bf16.msra.mxu0 0
      %791 = vmatprep.subr.bf16.mxu0 0
      %792 = vmatpush1.bf16.msra.mxu0 0
      %793 = vmatprep.subr.bf16.mxu0 0
      %794 = vmatpush1.bf16.msra.mxu0 0
      %795 = vmatprep.subr.bf16.mxu0 0
      %796 = vmatpush1.bf16.msra.mxu0 0
      %797 = vmatprep.subr.bf16.mxu0 0
      %798 = vmatpush1.bf16.msra.mxu0 0
      %799 = vmatprep.subr.bf16.mxu0 0
      %800 = vmatpush1.bf16.msra.mxu0 0
      %801 = vmatprep.mubr.bf16.mxu0 0
      %802 = vmatmul.mubr.bf16.gmra.mrb[0].mxu0 %v758
      %v803 = vpop.f32.mrb[0].mxu0
      %v804 = vadd.f32 %v707, %v803
      %v805 = vpop.f32.mrb[0].mxu0
      %v806 = vpop.f32.mrb[0].mxu0
      %v807 = vadd.f32 %v710, %v806
      %v808 = vpop.f32.mrb[0].mxu0
      %809 = vmatprep.mubr.bf16.mxu0 0
      %810 = vmatmul.mubr.bf16.gmra.mrb[0].mxu0 %v761
      %v811 = vpop.f32.mrb[0].mxu0
      %v812 = vadd.f32 %v715, %v811
      %v813 = vpop.f32.mrb[0].mxu0
      %v814 = vpop.f32.mrb[0].mxu0
      %v815 = vadd.f32 %v718, %v814
      %v816 = vpop.f32.mrb[0].mxu0
      %817 = vmatprep.mubr.bf16.mxu0 0
      %818 = vmatmul.mubr.bf16.gmra.mrb[0].mxu0 %v764
      %v819 = vpop.f32.mrb[0].mxu0
      %v820 = vadd.f32 %v723, %v819
      %v821 = vpop.f32.mrb[0].mxu0
      %v822 = vpop.f32.mrb[0].mxu0
      %v823 = vadd.f32 %v726, %v822
      %v824 = vpop.f32.mrb[0].mxu0
      %825 = vmatprep.mubr.bf16.mxu0 0
      %826 = vmatmul.mubr.bf16.gmra.mrb[0].mxu0 %v767
      %v827 = vpop.f32.mrb[0].mxu0
      %v828 = vadd.f32 %v731, %v827
      %v829 = vpop.f32.mrb[0].mxu0
      %v830 = vpop.f32.mrb[0].mxu0
      %v831 = vadd.f32 %v734, %v830
      %v832 = vpop.f32.mrb[0].mxu0
      %833 = vdwg.mxu0
      %s834 = scalar_lea.vmem %s1, 64
      %v835 = vld [vmem:[%s834] sm:$0xf]
      %v836 = vld [vmem:[%s834 + $0x4] sm:$0xf]
      %v837 = vld [vmem:[%s834 + $0x8] sm:$0xf]
      %v838 = vld [vmem:[%s834 + $0xc] sm:$0xf]
      %v839 = vld [vmem:[%s834 + $0x10] sm:$0xf]
      %v840 = vld [vmem:[%s834 + $0x14] sm:$0xf]
      %v841 = vld [vmem:[%s834 + $0x18] sm:$0xf]
      %v842 = vld [vmem:[%s834 + $0x1c] sm:$0xf]
      %v851 = vunpack.c.l.b16 %v835
      %v852 = vunpack.c.l.b16 %v836
      %v853 = vunpack.c.l.b16 %v837
      %v854 = vunpack.c.l.b16 %v838
      %v855 = vunpack.c.l.b16 %v839
      %v856 = vunpack.c.l.b16 %v840
      %v857 = vunpack.c.l.b16 %v841
      %v858 = vunpack.c.l.b16 %v842
      %v859 = vpack.c.b16 %v852, %v851
      %v860 = vpack.c.b16 %v854, %v853
      %v861 = vpack.c.b16 %v856, %v855
      %v862 = vpack.c.b16 %v858, %v857
      %863 = vrot.lane.b32.xlu0 %v581, 126
      %v864 = vpop.permute.xlu0 %863
      %865 = vrot.lane.b32.xlu0 %v582, 126
      %v866 = vpop.permute.xlu0 %865
      %867 = vrot.lane.b32.xlu0 %v583, 126
      %v868 = vpop.permute.xlu0 %867
      %869 = vrot.lane.b32.xlu0 %v584, 126
      %v870 = vpop.permute.xlu0 %869
      %871 = vrot.lane.b32.xlu0 %v585, 126
      %v872 = vpop.permute.xlu0 %871
      %873 = vrot.lane.b32.xlu0 %v586, 126
      %v874 = vpop.permute.xlu0 %873
      %875 = vrot.lane.b32.xlu0 %v587, 126
      %v876 = vpop.permute.xlu0 %875
      %877 = vrot.lane.b32.xlu0 %v588, 126
      %v878 = vpop.permute.xlu0 %877
      %vm879 = vcmask 1031168
      %v880 = vsel %vm879, %v864, %v866
      %v881 = vsel %vm879, %v868, %v870
      %v882 = vsel %vm879, %v872, %v874
      %v883 = vsel %vm879, %v876, %v878
      %v889 = vsel %vm659, %v859, 0
      %v892 = vsel %vm659, %v860, 0
      %v895 = vsel %vm659, %v861, 0
      %v898 = vsel %vm659, %v862, 0
      %900 = vmatprep.subr.bf16.mxu0 0
      %901 = vmatpush1.bf16.msra.mxu0 %v880
      %902 = vmatprep.subr.bf16.mxu0 0
      %903 = vmatpush1.bf16.msra.mxu0 %v881
      %904 = vmatprep.subr.bf16.mxu0 0
      %905 = vmatpush1.bf16.msra.mxu0 %v882
      %906 = vmatprep.subr.bf16.mxu0 0
      %907 = vmatpush1.bf16.msra.mxu0 %v883
      %908 = vmatprep.subr.bf16.mxu0 0
      %909 = vmatpush1.bf16.msra.mxu0 0
      %910 = vmatprep.subr.bf16.mxu0 0
      %911 = vmatpush1.bf16.msra.mxu0 0
      %912 = vmatprep.subr.bf16.mxu0 0
      %913 = vmatpush1.bf16.msra.mxu0 0
      %914 = vmatprep.subr.bf16.mxu0 0
      %915 = vmatpush1.bf16.msra.mxu0 0
      %916 = vmatprep.subr.bf16.mxu0 0
      %917 = vmatpush1.bf16.msra.mxu0 0
      %918 = vmatprep.subr.bf16.mxu0 0
      %919 = vmatpush1.bf16.msra.mxu0 0
      %920 = vmatprep.subr.bf16.mxu0 0
      %921 = vmatpush1.bf16.msra.mxu0 0
      %922 = vmatprep.subr.bf16.mxu0 0
      %923 = vmatpush1.bf16.msra.mxu0 0
      %924 = vmatprep.subr.bf16.mxu0 0
      %925 = vmatpush1.bf16.msra.mxu0 0
      %926 = vmatprep.subr.bf16.mxu0 0
      %927 = vmatpush1.bf16.msra.mxu0 0
      %928 = vmatprep.subr.bf16.mxu0 0
      %929 = vmatpush1.bf16.msra.mxu0 0
      %930 = vmatprep.subr.bf16.mxu0 0
      %931 = vmatpush1.bf16.msra.mxu0 0
      %932 = vmatprep.mubr.bf16.mxu0 0
      %933 = vmatmul.mubr.bf16.gmra.mrb[0].mxu0 %v889
      %v934 = vpop.f32.mrb[0].mxu0
      %v935 = vadd.f32 0.0, %v934
      %v936 = vpop.f32.mrb[0].mxu0
      %v937 = vpop.f32.mrb[0].mxu0
      %v938 = vadd.f32 0.0, %v937
      %v939 = vpop.f32.mrb[0].mxu0
      %940 = vmatprep.mubr.bf16.mxu0 0
      %941 = vmatmul.mubr.bf16.gmra.mrb[0].mxu0 %v892
      %v942 = vpop.f32.mrb[0].mxu0
      %v943 = vadd.f32 0.0, %v942
      %v944 = vpop.f32.mrb[0].mxu0
      %v945 = vpop.f32.mrb[0].mxu0
      %v946 = vadd.f32 0.0, %v945
      %v947 = vpop.f32.mrb[0].mxu0
      %948 = vmatprep.mubr.bf16.mxu0 0
      %949 = vmatmul.mubr.bf16.gmra.mrb[0].mxu0 %v895
      %v950 = vpop.f32.mrb[0].mxu0
      %v951 = vadd.f32 0.0, %v950
      %v952 = vpop.f32.mrb[0].mxu0
      %v953 = vpop.f32.mrb[0].mxu0
      %v954 = vadd.f32 0.0, %v953
      %v955 = vpop.f32.mrb[0].mxu0
      %956 = vmatprep.mubr.bf16.mxu0 0
      %957 = vmatmul.mubr.bf16.gmra.mrb[0].mxu0 %v898
      %v958 = vpop.f32.mrb[0].mxu0
      %v959 = vadd.f32 0.0, %v958
      %v960 = vpop.f32.mrb[0].mxu0
      %v961 = vpop.f32.mrb[0].mxu0
      %v962 = vadd.f32 0.0, %v961
      %v963 = vpop.f32.mrb[0].mxu0
      %964 = vdwg.mxu0
      %v965 = vadd.f32 %v804, %v935
      %v966 = vadd.f32 %v807, %v938
      %v967 = vadd.f32 %v812, %v943
      %v968 = vadd.f32 %v815, %v946
      %v969 = vadd.f32 %v820, %v951
      %v970 = vadd.f32 %v823, %v954
      %v971 = vadd.f32 %v828, %v959
      %v972 = vadd.f32 %v831, %v962
      %s973 = scalar_lea.vmem %s1, 96
      %v974 = vld [vmem:[%s973] sm:$0xf]
      %v975 = vld [vmem:[%s973 + $0x4] sm:$0xf]
      %v976 = vld [vmem:[%s973 + $0x8] sm:$0xf]
      %v977 = vld [vmem:[%s973 + $0xc] sm:$0xf]
      %v978 = vld [vmem:[%s973 + $0x10] sm:$0xf]
      %v979 = vld [vmem:[%s973 + $0x14] sm:$0xf]
      %v980 = vld [vmem:[%s973 + $0x18] sm:$0xf]
      %v981 = vld [vmem:[%s973 + $0x1c] sm:$0xf]
      %v990 = vunpack.c.l.b16 %v974
      %v991 = vunpack.c.l.b16 %v975
      %v992 = vunpack.c.l.b16 %v976
      %v993 = vunpack.c.l.b16 %v977
      %v994 = vunpack.c.l.b16 %v978
      %v995 = vunpack.c.l.b16 %v979
      %v996 = vunpack.c.l.b16 %v980
      %v997 = vunpack.c.l.b16 %v981
      %v998 = vpack.c.b16 %v991, %v990
      %v999 = vpack.c.b16 %v993, %v992
      %v1000 = vpack.c.b16 %v995, %v994
      %v1001 = vpack.c.b16 %v997, %v996
      %1002 = vrot.lane.b32.xlu0 %v581, 122
      %v1003 = vpop.permute.xlu0 %1002
      %1004 = vrot.lane.b32.xlu0 %v582, 122
      %v1005 = vpop.permute.xlu0 %1004
      %1006 = vrot.lane.b32.xlu0 %v583, 122
      %v1007 = vpop.permute.xlu0 %1006
      %1008 = vrot.lane.b32.xlu0 %v584, 122
      %v1009 = vpop.permute.xlu0 %1008
      %1010 = vrot.lane.b32.xlu0 %v585, 122
      %v1011 = vpop.permute.xlu0 %1010
      %1012 = vrot.lane.b32.xlu0 %v586, 122
      %v1013 = vpop.permute.xlu0 %1012
      %1014 = vrot.lane.b32.xlu0 %v587, 122
      %v1015 = vpop.permute.xlu0 %1014
      %1016 = vrot.lane.b32.xlu0 %v588, 122
      %v1017 = vpop.permute.xlu0 %1016
      %vm1018 = vcmask 998400
      %v1019 = vsel %vm1018, %v1003, %v1005
      %v1020 = vsel %vm1018, %v1007, %v1009
      %v1021 = vsel %vm1018, %v1011, %v1013
      %v1022 = vsel %vm1018, %v1015, %v1017
      %v1028 = vsel %vm659, %v998, 0
      %v1031 = vsel %vm659, %v999, 0
      %v1034 = vsel %vm659, %v1000, 0
      %v1037 = vsel %vm659, %v1001, 0
      %1039 = vmatprep.subr.bf16.mxu0 0
      %1040 = vmatpush1.bf16.msra.mxu0 %v1019
      %1041 = vmatprep.subr.bf16.mxu0 0
      %1042 = vmatpush1.bf16.msra.mxu0 %v1020
      %1043 = vmatprep.subr.bf16.mxu0 0
      %1044 = vmatpush1.bf16.msra.mxu0 %v1021
      %1045 = vmatprep.subr.bf16.mxu0 0
      %1046 = vmatpush1.bf16.msra.mxu0 %v1022
      %1047 = vmatprep.subr.bf16.mxu0 0
      %1048 = vmatpush1.bf16.msra.mxu0 0
      %1049 = vmatprep.subr.bf16.mxu0 0
      %1050 = vmatpush1.bf16.msra.mxu0 0
      %1051 = vmatprep.subr.bf16.mxu0 0
      %1052 = vmatpush1.bf16.msra.mxu0 0
      %1053 = vmatprep.subr.bf16.mxu0 0
      %1054 = vmatpush1.bf16.msra.mxu0 0
      %1055 = vmatprep.subr.bf16.mxu0 0
      %1056 = vmatpush1.bf16.msra.mxu0 0
      %1057 = vmatprep.subr.bf16.mxu0 0
      %1058 = vmatpush1.bf16.msra.mxu0 0
      %1059 = vmatprep.subr.bf16.mxu0 0
      %1060 = vmatpush1.bf16.msra.mxu0 0
      %1061 = vmatprep.subr.bf16.mxu0 0
      %1062 = vmatpush1.bf16.msra.mxu0 0
      %1063 = vmatprep.subr.bf16.mxu0 0
      %1064 = vmatpush1.bf16.msra.mxu0 0
      %1065 = vmatprep.subr.bf16.mxu0 0
      %1066 = vmatpush1.bf16.msra.mxu0 0
      %1067 = vmatprep.subr.bf16.mxu0 0
      %1068 = vmatpush1.bf16.msra.mxu0 0
      %1069 = vmatprep.subr.bf16.mxu0 0
      %1070 = vmatpush1.bf16.msra.mxu0 0
      %1071 = vmatprep.mubr.bf16.mxu0 0
      %1072 = vmatmul.mubr.bf16.gmra.mrb[0].mxu0 %v1028
      %v1073 = vpop.f32.mrb[0].mxu0
      %v1074 = vadd.f32 0.0, %v1073
      %v1075 = vpop.f32.mrb[0].mxu0
      %v1076 = vpop.f32.mrb[0].mxu0
      %v1077 = vadd.f32 0.0, %v1076
      %v1078 = vpop.f32.mrb[0].mxu0
      %1079 = vmatprep.mubr.bf16.mxu0 0
      %1080 = vmatmul.mubr.bf16.gmra.mrb[0].mxu0 %v1031
      %v1081 = vpop.f32.mrb[0].mxu0
      %v1082 = vadd.f32 0.0, %v1081
      %v1083 = vpop.f32.mrb[0].mxu0
      %v1084 = vpop.f32.mrb[0].mxu0
      %v1085 = vadd.f32 0.0, %v1084
      %v1086 = vpop.f32.mrb[0].mxu0
      %1087 = vmatprep.mubr.bf16.mxu0 0
      %1088 = vmatmul.mubr.bf16.gmra.mrb[0].mxu0 %v1034
      %v1089 = vpop.f32.mrb[0].mxu0
      %v1090 = vadd.f32 0.0, %v1089
      %v1091 = vpop.f32.mrb[0].mxu0
      %v1092 = vpop.f32.mrb[0].mxu0
      %v1093 = vadd.f32 0.0, %v1092
      %v1094 = vpop.f32.mrb[0].mxu0
      %1095 = vmatprep.mubr.bf16.mxu0 0
      %1096 = vmatmul.mubr.bf16.gmra.mrb[0].mxu0 %v1037
      %v1097 = vpop.f32.mrb[0].mxu0
      %v1098 = vadd.f32 0.0, %v1097
      %v1099 = vpop.f32.mrb[0].mxu0
      %v1100 = vpop.f32.mrb[0].mxu0
      %v1101 = vadd.f32 0.0, %v1100
      %v1102 = vpop.f32.mrb[0].mxu0
      %1103 = vdwg.mxu0
      %v1104 = vadd.f32 %v965, %v1074
      %v1105 = vadd.f32 %v966, %v1077
      %v1106 = vadd.f32 %v967, %v1082
      %v1107 = vadd.f32 %v968, %v1085
      %v1108 = vadd.f32 %v969, %v1090
      %v1109 = vadd.f32 %v970, %v1093
      %v1110 = vadd.f32 %v971, %v1098
      %v1111 = vadd.f32 %v972, %v1101
      %s1112 = scalar_lea.vmem %s1, 128
      %v1113 = vld [vmem:[%s1112] sm:$0xf]
      %v1114 = vld [vmem:[%s1112 + $0x4] sm:$0xf]
      %v1115 = vld [vmem:[%s1112 + $0x8] sm:$0xf]
      %v1116 = vld [vmem:[%s1112 + $0xc] sm:$0xf]
      %v1117 = vld [vmem:[%s1112 + $0x10] sm:$0xf]
      %v1118 = vld [vmem:[%s1112 + $0x14] sm:$0xf]
      %v1119 = vld [vmem:[%s1112 + $0x18] sm:$0xf]
      %v1120 = vld [vmem:[%s1112 + $0x1c] sm:$0xf]
      %v1129 = vunpack.c.l.b16 %v1113
      %v1130 = vunpack.c.l.b16 %v1114
      %v1131 = vunpack.c.l.b16 %v1115
      %v1132 = vunpack.c.l.b16 %v1116
      %v1133 = vunpack.c.l.b16 %v1117
      %v1134 = vunpack.c.l.b16 %v1118
      %v1135 = vunpack.c.l.b16 %v1119
      %v1136 = vunpack.c.l.b16 %v1120
      %v1137 = vpack.c.b16 %v1130, %v1129
      %v1138 = vpack.c.b16 %v1132, %v1131
      %v1139 = vpack.c.b16 %v1134, %v1133
      %v1140 = vpack.c.b16 %v1136, %v1135
      %1141 = vrot.lane.b32.xlu0 %v581, 121
      %v1142 = vpop.permute.xlu0 %1141
      %1143 = vrot.lane.b32.xlu0 %v582, 121
      %v1144 = vpop.permute.xlu0 %1143
      %1145 = vrot.lane.b32.xlu0 %v583, 121
      %v1146 = vpop.permute.xlu0 %1145
      %1147 = vrot.lane.b32.xlu0 %v584, 121
      %v1148 = vpop.permute.xlu0 %1147
      %1149 = vrot.lane.b32.xlu0 %v585, 121
      %v1150 = vpop.permute.xlu0 %1149
      %1151 = vrot.lane.b32.xlu0 %v586, 121
      %v1152 = vpop.permute.xlu0 %1151
      %1153 = vrot.lane.b32.xlu0 %v587, 121
      %v1154 = vpop.permute.xlu0 %1153
      %1155 = vrot.lane.b32.xlu0 %v588, 121
      %v1156 = vpop.permute.xlu0 %1155
      %vm1157 = vcmask 990208
      %v1158 = vsel %vm1157, %v1142, %v1144
      %v1159 = vsel %vm1157, %v1146, %v1148
      %v1160 = vsel %vm1157, %v1150, %v1152
      %v1161 = vsel %vm1157, %v1154, %v1156
      %v1167 = vsel %vm659, %v1137, 0
      %v1170 = vsel %vm659, %v1138, 0
      %v1173 = vsel %vm659, %v1139, 0
      %v1176 = vsel %vm659, %v1140, 0
      %1178 = vmatprep.subr.bf16.mxu0 0
      %1179 = vmatpush1.bf16.msra.mxu0 %v1158
      %1180 = vmatprep.subr.bf16.mxu0 0
      %1181 = vmatpush1.bf16.msra.mxu0 %v1159
      %1182 = vmatprep.subr.bf16.mxu0 0
      %1183 = vmatpush1.bf16.msra.mxu0 %v1160
      %1184 = vmatprep.subr.bf16.mxu0 0
      %1185 = vmatpush1.bf16.msra.mxu0 %v1161
      %1186 = vmatprep.subr.bf16.mxu0 0
      %1187 = vmatpush1.bf16.msra.mxu0 0
      %1188 = vmatprep.subr.bf16.mxu0 0
      %1189 = vmatpush1.bf16.msra.mxu0 0
      %1190 = vmatprep.subr.bf16.mxu0 0
      %1191 = vmatpush1.bf16.msra.mxu0 0
      %1192 = vmatprep.subr.bf16.mxu0 0
      %1193 = vmatpush1.bf16.msra.mxu0 0
      %1194 = vmatprep.subr.bf16.mxu0 0
      %1195 = vmatpush1.bf16.msra.mxu0 0
      %1196 = vmatprep.subr.bf16.mxu0 0
      %1197 = vmatpush1.bf16.msra.mxu0 0
      %1198 = vmatprep.subr.bf16.mxu0 0
      %1199 = vmatpush1.bf16.msra.mxu0 0
      %1200 = vmatprep.subr.bf16.mxu0 0
      %1201 = vmatpush1.bf16.msra.mxu0 0
      %1202 = vmatprep.subr.bf16.mxu0 0
      %1203 = vmatpush1.bf16.msra.mxu0 0
      %1204 = vmatprep.subr.bf16.mxu0 0
      %1205 = vmatpush1.bf16.msra.mxu0 0
      %1206 = vmatprep.subr.bf16.mxu0 0
      %1207 = vmatpush1.bf16.msra.mxu0 0
      %1208 = vmatprep.subr.bf16.mxu0 0
      %1209 = vmatpush1.bf16.msra.mxu0 0
      %1210 = vmatprep.mubr.bf16.mxu0 0
      %1211 = vmatmul.mubr.bf16.gmra.mrb[0].mxu0 %v1167
      %v1212 = vpop.f32.mrb[0].mxu0
      %v1213 = vadd.f32 0.0, %v1212
      %v1214 = vpop.f32.mrb[0].mxu0
      %v1215 = vpop.f32.mrb[0].mxu0
      %v1216 = vadd.f32 0.0, %v1215
      %v1217 = vpop.f32.mrb[0].mxu0
      %1218 = vmatprep.mubr.bf16.mxu0 0
      %1219 = vmatmul.mubr.bf16.gmra.mrb[0].mxu0 %v1170
      %v1220 = vpop.f32.mrb[0].mxu0
      %v1221 = vadd.f32 0.0, %v1220
      %v1222 = vpop.f32.mrb[0].mxu0
      %v1223 = vpop.f32.mrb[0].mxu0
      %v1224 = vadd.f32 0.0, %v1223
      %v1225 = vpop.f32.mrb[0].mxu0
      %1226 = vmatprep.mubr.bf16.mxu0 0
      %1227 = vmatmul.mubr.bf16.gmra.mrb[0].mxu0 %v1173
      %v1228 = vpop.f32.mrb[0].mxu0
      %v1229 = vadd.f32 0.0, %v1228
      %v1230 = vpop.f32.mrb[0].mxu0
      %v1231 = vpop.f32.mrb[0].mxu0
      %v1232 = vadd.f32 0.0, %v1231
      %v1233 = vpop.f32.mrb[0].mxu0
      %1234 = vmatprep.mubr.bf16.mxu0 0
      %1235 = vmatmul.mubr.bf16.gmra.mrb[0].mxu0 %v1176
      %v1236 = vpop.f32.mrb[0].mxu0
      %v1237 = vadd.f32 0.0, %v1236
      %v1238 = vpop.f32.mrb[0].mxu0
      %v1239 = vpop.f32.mrb[0].mxu0
      %v1240 = vadd.f32 0.0, %v1239
      %v1241 = vpop.f32.mrb[0].mxu0
      %1242 = vdwg.mxu0
      %v1243 = vadd.f32 %v1104, %v1213
      %v1244 = vadd.f32 %v1105, %v1216
      %v1245 = vadd.f32 %v1106, %v1221
      %v1246 = vadd.f32 %v1107, %v1224
      %v1247 = vadd.f32 %v1108, %v1229
      %v1248 = vadd.f32 %v1109, %v1232
      %v1249 = vadd.f32 %v1110, %v1237
      %v1250 = vadd.f32 %v1111, %v1240
      %s1251 = scalar_lea.vmem %s1, 160
      %v1252 = vld [vmem:[%s1251] sm:$0xf]
      %v1253 = vld [vmem:[%s1251 + $0x4] sm:$0xf]
      %v1254 = vld [vmem:[%s1251 + $0x8] sm:$0xf]
      %v1255 = vld [vmem:[%s1251 + $0xc] sm:$0xf]
      %v1256 = vld [vmem:[%s1251 + $0x10] sm:$0xf]
      %v1257 = vld [vmem:[%s1251 + $0x14] sm:$0xf]
      %v1258 = vld [vmem:[%s1251 + $0x18] sm:$0xf]
      %v1259 = vld [vmem:[%s1251 + $0x1c] sm:$0xf]
      %v1268 = vunpack.c.l.b16 %v1252
      %v1269 = vunpack.c.l.b16 %v1253
      %v1270 = vunpack.c.l.b16 %v1254
      %v1271 = vunpack.c.l.b16 %v1255
      %v1272 = vunpack.c.l.b16 %v1256
      %v1273 = vunpack.c.l.b16 %v1257
      %v1274 = vunpack.c.l.b16 %v1258
      %v1275 = vunpack.c.l.b16 %v1259
      %v1276 = vpack.c.b16 %v1269, %v1268
      %v1277 = vpack.c.b16 %v1271, %v1270
      %v1278 = vpack.c.b16 %v1273, %v1272
      %v1279 = vpack.c.b16 %v1275, %v1274
      %1280 = vrot.lane.b32.xlu0 %v581, 120
      %v1281 = vpop.permute.xlu0 %1280
      %1282 = vrot.lane.b32.xlu0 %v582, 120
      %v1283 = vpop.permute.xlu0 %1282
      %1284 = vrot.lane.b32.xlu0 %v583, 120
      %v1285 = vpop.permute.xlu0 %1284
      %1286 = vrot.lane.b32.xlu0 %v584, 120
      %v1287 = vpop.permute.xlu0 %1286
      %1288 = vrot.lane.b32.xlu0 %v585, 120
      %v1289 = vpop.permute.xlu0 %1288
      %1290 = vrot.lane.b32.xlu0 %v586, 120
      %v1291 = vpop.permute.xlu0 %1290
      %1292 = vrot.lane.b32.xlu0 %v587, 120
      %v1293 = vpop.permute.xlu0 %1292
      %1294 = vrot.lane.b32.xlu0 %v588, 120
      %v1295 = vpop.permute.xlu0 %1294
      %vm1296 = vcmask 982016
      %v1297 = vsel %vm1296, %v1281, %v1283
      %v1298 = vsel %vm1296, %v1285, %v1287
      %v1299 = vsel %vm1296, %v1289, %v1291
      %v1300 = vsel %vm1296, %v1293, %v1295
      %v1306 = vsel %vm659, %v1276, 0
      %v1309 = vsel %vm659, %v1277, 0
      %v1312 = vsel %vm659, %v1278, 0
      %v1315 = vsel %vm659, %v1279, 0
      %1317 = vmatprep.subr.bf16.mxu0 0
      %1318 = vmatpush1.bf16.msra.mxu0 %v1297
      %1319 = vmatprep.subr.bf16.mxu0 0
      %1320 = vmatpush1.bf16.msra.mxu0 %v1298
      %1321 = vmatprep.subr.bf16.mxu0 0
      %1322 = vmatpush1.bf16.msra.mxu0 %v1299
      %1323 = vmatprep.subr.bf16.mxu0 0
      %1324 = vmatpush1.bf16.msra.mxu0 %v1300
      %1325 = vmatprep.subr.bf16.mxu0 0
      %1326 = vmatpush1.bf16.msra.mxu0 0
      %1327 = vmatprep.subr.bf16.mxu0 0
      %1328 = vmatpush1.bf16.msra.mxu0 0
      %1329 = vmatprep.subr.bf16.mxu0 0
      %1330 = vmatpush1.bf16.msra.mxu0 0
      %1331 = vmatprep.subr.bf16.mxu0 0
      %1332 = vmatpush1.bf16.msra.mxu0 0
      %1333 = vmatprep.subr.bf16.mxu0 0
      %1334 = vmatpush1.bf16.msra.mxu0 0
      %1335 = vmatprep.subr.bf16.mxu0 0
      %1336 = vmatpush1.bf16.msra.mxu0 0
      %1337 = vmatprep.subr.bf16.mxu0 0
      %1338 = vmatpush1.bf16.msra.mxu0 0
      %1339 = vmatprep.subr.bf16.mxu0 0
      %1340 = vmatpush1.bf16.msra.mxu0 0
      %1341 = vmatprep.subr.bf16.mxu0 0
      %1342 = vmatpush1.bf16.msra.mxu0 0
      %1343 = vmatprep.subr.bf16.mxu0 0
      %1344 = vmatpush1.bf16.msra.mxu0 0
      %1345 = vmatprep.subr.bf16.mxu0 0
      %1346 = vmatpush1.bf16.msra.mxu0 0
      %1347 = vmatprep.subr.bf16.mxu0 0
      %1348 = vmatpush1.bf16.msra.mxu0 0
      %1349 = vmatprep.mubr.bf16.mxu0 0
      %1350 = vmatmul.mubr.bf16.gmra.mrb[0].mxu0 %v1306
      %v1351 = vpop.f32.mrb[0].mxu0
      %v1352 = vadd.f32 0.0, %v1351
      %v1353 = vpop.f32.mrb[0].mxu0
      %v1354 = vpop.f32.mrb[0].mxu0
      %v1355 = vadd.f32 0.0, %v1354
      %v1356 = vpop.f32.mrb[0].mxu0
      %1357 = vmatprep.mubr.bf16.mxu0 0
      %1358 = vmatmul.mubr.bf16.gmra.mrb[0].mxu0 %v1309
      %v1359 = vpop.f32.mrb[0].mxu0
      %v1360 = vadd.f32 0.0, %v1359
      %v1361 = vpop.f32.mrb[0].mxu0
      %v1362 = vpop.f32.mrb[0].mxu0
      %v1363 = vadd.f32 0.0, %v1362
      %v1364 = vpop.f32.mrb[0].mxu0
      %1365 = vmatprep.mubr.bf16.mxu0 0
      %1366 = vmatmul.mubr.bf16.gmra.mrb[0].mxu0 %v1312
      %v1367 = vpop.f32.mrb[0].mxu0
      %v1368 = vadd.f32 0.0, %v1367
      %v1369 = vpop.f32.mrb[0].mxu0
      %v1370 = vpop.f32.mrb[0].mxu0
      %v1371 = vadd.f32 0.0, %v1370
      %v1372 = vpop.f32.mrb[0].mxu0
      %1373 = vmatprep.mubr.bf16.mxu0 0
      %1374 = vmatmul.mubr.bf16.gmra.mrb[0].mxu0 %v1315
      %v1375 = vpop.f32.mrb[0].mxu0
      %v1376 = vadd.f32 0.0, %v1375
      %v1377 = vpop.f32.mrb[0].mxu0
      %v1378 = vpop.f32.mrb[0].mxu0
      %v1379 = vadd.f32 0.0, %v1378
      %v1380 = vpop.f32.mrb[0].mxu0
      %1381 = vdwg.mxu0
      %v1382 = vadd.f32 %v1243, %v1352
      %v1383 = vadd.f32 %v1244, %v1355
      %v1384 = vadd.f32 %v1245, %v1360
      %v1385 = vadd.f32 %v1246, %v1363
      %v1386 = vadd.f32 %v1247, %v1368
      %v1387 = vadd.f32 %v1248, %v1371
      %v1388 = vadd.f32 %v1249, %v1376
      %v1389 = vadd.f32 %v1250, %v1379
      %s1390 = scalar_lea.vmem %s1, 192
      %v1391 = vld [vmem:[%s1390] sm:$0xf]
      %v1392 = vld [vmem:[%s1390 + $0x4] sm:$0xf]
      %v1393 = vld [vmem:[%s1390 + $0x8] sm:$0xf]
      %v1394 = vld [vmem:[%s1390 + $0xc] sm:$0xf]
      %v1395 = vld [vmem:[%s1390 + $0x10] sm:$0xf]
      %v1396 = vld [vmem:[%s1390 + $0x14] sm:$0xf]
      %v1397 = vld [vmem:[%s1390 + $0x18] sm:$0xf]
      %v1398 = vld [vmem:[%s1390 + $0x1c] sm:$0xf]
      %v1407 = vunpack.c.l.b16 %v1391
      %v1408 = vunpack.c.l.b16 %v1392
      %v1409 = vunpack.c.l.b16 %v1393
      %v1410 = vunpack.c.l.b16 %v1394
      %v1411 = vunpack.c.l.b16 %v1395
      %v1412 = vunpack.c.l.b16 %v1396
      %v1413 = vunpack.c.l.b16 %v1397
      %v1414 = vunpack.c.l.b16 %v1398
      %v1415 = vpack.c.b16 %v1408, %v1407
      %v1416 = vpack.c.b16 %v1410, %v1409
      %v1417 = vpack.c.b16 %v1412, %v1411
      %v1418 = vpack.c.b16 %v1414, %v1413
      %1419 = vrot.lane.b32.xlu0 %v581, 116
      %v1420 = vpop.permute.xlu0 %1419
      %1421 = vrot.lane.b32.xlu0 %v582, 116
      %v1422 = vpop.permute.xlu0 %1421
      %1423 = vrot.lane.b32.xlu0 %v583, 116
      %v1424 = vpop.permute.xlu0 %1423
      %1425 = vrot.lane.b32.xlu0 %v584, 116
      %v1426 = vpop.permute.xlu0 %1425
      %1427 = vrot.lane.b32.xlu0 %v585, 116
      %v1428 = vpop.permute.xlu0 %1427
      %1429 = vrot.lane.b32.xlu0 %v586, 116
      %v1430 = vpop.permute.xlu0 %1429
      %1431 = vrot.lane.b32.xlu0 %v587, 116
      %v1432 = vpop.permute.xlu0 %1431
      %1433 = vrot.lane.b32.xlu0 %v588, 116
      %v1434 = vpop.permute.xlu0 %1433
      %vm1435 = vcmask 949248
      %v1436 = vsel %vm1435, %v1420, %v1422
      %v1437 = vsel %vm1435, %v1424, %v1426
      %v1438 = vsel %vm1435, %v1428, %v1430
      %v1439 = vsel %vm1435, %v1432, %v1434
      %v1445 = vsel %vm659, %v1415, 0
      %v1448 = vsel %vm659, %v1416, 0
      %v1451 = vsel %vm659, %v1417, 0
      %v1454 = vsel %vm659, %v1418, 0
      %1456 = vmatprep.subr.bf16.mxu0 0
      %1457 = vmatpush1.bf16.msra.mxu0 %v1436
      %1458 = vmatprep.subr.bf16.mxu0 0
      %1459 = vmatpush1.bf16.msra.mxu0 %v1437
      %1460 = vmatprep.subr.bf16.mxu0 0
      %1461 = vmatpush1.bf16.msra.mxu0 %v1438
      %1462 = vmatprep.subr.bf16.mxu0 0
      %1463 = vmatpush1.bf16.msra.mxu0 %v1439
      %1464 = vmatprep.subr.bf16.mxu0 0
      %1465 = vmatpush1.bf16.msra.mxu0 0
      %1466 = vmatprep.subr.bf16.mxu0 0
      %1467 = vmatpush1.bf16.msra.mxu0 0
      %1468 = vmatprep.subr.bf16.mxu0 0
      %1469 = vmatpush1.bf16.msra.mxu0 0
      %1470 = vmatprep.subr.bf16.mxu0 0
      %1471 = vmatpush1.bf16.msra.mxu0 0
      %1472 = vmatprep.subr.bf16.mxu0 0
      %1473 = vmatpush1.bf16.msra.mxu0 0
      %1474 = vmatprep.subr.bf16.mxu0 0
      %1475 = vmatpush1.bf16.msra.mxu0 0
      %1476 = vmatprep.subr.bf16.mxu0 0
      %1477 = vmatpush1.bf16.msra.mxu0 0
      %1478 = vmatprep.subr.bf16.mxu0 0
      %1479 = vmatpush1.bf16.msra.mxu0 0
      %1480 = vmatprep.subr.bf16.mxu0 0
      %1481 = vmatpush1.bf16.msra.mxu0 0
      %1482 = vmatprep.subr.bf16.mxu0 0
      %1483 = vmatpush1.bf16.msra.mxu0 0
      %1484 = vmatprep.subr.bf16.mxu0 0
      %1485 = vmatpush1.bf16.msra.mxu0 0
      %1486 = vmatprep.subr.bf16.mxu0 0
      %1487 = vmatpush1.bf16.msra.mxu0 0
      %1488 = vmatprep.mubr.bf16.mxu0 0
      %1489 = vmatmul.mubr.bf16.gmra.mrb[0].mxu0 %v1445
      %v1490 = vpop.f32.mrb[0].mxu0
      %v1491 = vadd.f32 0.0, %v1490
      %v1492 = vpop.f32.mrb[0].mxu0
      %v1493 = vpop.f32.mrb[0].mxu0
      %v1494 = vadd.f32 0.0, %v1493
      %v1495 = vpop.f32.mrb[0].mxu0
      %1496 = vmatprep.mubr.bf16.mxu0 0
      %1497 = vmatmul.mubr.bf16.gmra.mrb[0].mxu0 %v1448
      %v1498 = vpop.f32.mrb[0].mxu0
      %v1499 = vadd.f32 0.0, %v1498
      %v1500 = vpop.f32.mrb[0].mxu0
      %v1501 = vpop.f32.mrb[0].mxu0
      %v1502 = vadd.f32 0.0, %v1501
      %v1503 = vpop.f32.mrb[0].mxu0
      %1504 = vmatprep.mubr.bf16.mxu0 0
      %1505 = vmatmul.mubr.bf16.gmra.mrb[0].mxu0 %v1451
      %v1506 = vpop.f32.mrb[0].mxu0
      %v1507 = vadd.f32 0.0, %v1506
      %v1508 = vpop.f32.mrb[0].mxu0
      %v1509 = vpop.f32.mrb[0].mxu0
      %v1510 = vadd.f32 0.0, %v1509
      %v1511 = vpop.f32.mrb[0].mxu0
      %1512 = vmatprep.mubr.bf16.mxu0 0
      %1513 = vmatmul.mubr.bf16.gmra.mrb[0].mxu0 %v1454
      %v1514 = vpop.f32.mrb[0].mxu0
      %v1515 = vadd.f32 0.0, %v1514
      %v1516 = vpop.f32.mrb[0].mxu0
      %v1517 = vpop.f32.mrb[0].mxu0
      %v1518 = vadd.f32 0.0, %v1517
      %v1519 = vpop.f32.mrb[0].mxu0
      %1520 = vdwg.mxu0
      %v1521 = vadd.f32 %v1382, %v1491
      %v1522 = vadd.f32 %v1383, %v1494
      %v1523 = vadd.f32 %v1384, %v1499
      %v1524 = vadd.f32 %v1385, %v1502
      %v1525 = vadd.f32 %v1386, %v1507
      %v1526 = vadd.f32 %v1387, %v1510
      %v1527 = vadd.f32 %v1388, %v1515
      %v1528 = vadd.f32 %v1389, %v1518
      %s1529 = scalar_lea.vmem %s1, 224
      %v1530 = vld [vmem:[%s1529] sm:$0xf]
      %v1531 = vld [vmem:[%s1529 + $0x4] sm:$0xf]
      %v1532 = vld [vmem:[%s1529 + $0x8] sm:$0xf]
      %v1533 = vld [vmem:[%s1529 + $0xc] sm:$0xf]
      %v1534 = vld [vmem:[%s1529 + $0x10] sm:$0xf]
      %v1535 = vld [vmem:[%s1529 + $0x14] sm:$0xf]
      %v1536 = vld [vmem:[%s1529 + $0x18] sm:$0xf]
      %v1537 = vld [vmem:[%s1529 + $0x1c] sm:$0xf]
      %v1546 = vunpack.c.l.b16 %v1530
      %v1547 = vunpack.c.l.b16 %v1531
      %v1548 = vunpack.c.l.b16 %v1532
      %v1549 = vunpack.c.l.b16 %v1533
      %v1550 = vunpack.c.l.b16 %v1534
      %v1551 = vunpack.c.l.b16 %v1535
      %v1552 = vunpack.c.l.b16 %v1536
      %v1553 = vunpack.c.l.b16 %v1537
      %v1554 = vpack.c.b16 %v1547, %v1546
      %v1555 = vpack.c.b16 %v1549, %v1548
      %v1556 = vpack.c.b16 %v1551, %v1550
      %v1557 = vpack.c.b16 %v1553, %v1552
      %1558 = vrot.lane.b32.xlu0 %v581, 115
      %v1559 = vpop.permute.xlu0 %1558
      %1560 = vrot.lane.b32.xlu0 %v582, 115
      %v1561 = vpop.permute.xlu0 %1560
      %1562 = vrot.lane.b32.xlu0 %v583, 115
      %v1563 = vpop.permute.xlu0 %1562
      %1564 = vrot.lane.b32.xlu0 %v584, 115
      %v1565 = vpop.permute.xlu0 %1564
      %1566 = vrot.lane.b32.xlu0 %v585, 115
      %v1567 = vpop.permute.xlu0 %1566
      %1568 = vrot.lane.b32.xlu0 %v586, 115
      %v1569 = vpop.permute.xlu0 %1568
      %1570 = vrot.lane.b32.xlu0 %v587, 115
      %v1571 = vpop.permute.xlu0 %1570
      %1572 = vrot.lane.b32.xlu0 %v588, 115
      %v1573 = vpop.permute.xlu0 %1572
      %vm1574 = vcmask 941056
      %v1575 = vsel %vm1574, %v1559, %v1561
      %v1576 = vsel %vm1574, %v1563, %v1565
      %v1577 = vsel %vm1574, %v1567, %v1569
      %v1578 = vsel %vm1574, %v1571, %v1573
      %v1584 = vsel %vm659, %v1554, 0
      %v1587 = vsel %vm659, %v1555, 0
      %v1590 = vsel %vm659, %v1556, 0
      %v1593 = vsel %vm659, %v1557, 0
      %1595 = vmatprep.subr.bf16.mxu0 0
      %1596 = vmatpush1.bf16.msra.mxu0 %v1575
      %1597 = vmatprep.subr.bf16.mxu0 0
      %1598 = vmatpush1.bf16.msra.mxu0 %v1576
      %1599 = vmatprep.subr.bf16.mxu0 0
      %1600 = vmatpush1.bf16.msra.mxu0 %v1577
      %1601 = vmatprep.subr.bf16.mxu0 0
      %1602 = vmatpush1.bf16.msra.mxu0 %v1578
      %1603 = vmatprep.subr.bf16.mxu0 0
      %1604 = vmatpush1.bf16.msra.mxu0 0
      %1605 = vmatprep.subr.bf16.mxu0 0
      %1606 = vmatpush1.bf16.msra.mxu0 0
      %1607 = vmatprep.subr.bf16.mxu0 0
      %1608 = vmatpush1.bf16.msra.mxu0 0
      %1609 = vmatprep.subr.bf16.mxu0 0
      %1610 = vmatpush1.bf16.msra.mxu0 0
      %1611 = vmatprep.subr.bf16.mxu0 0
      %1612 = vmatpush1.bf16.msra.mxu0 0
      %1613 = vmatprep.subr.bf16.mxu0 0
      %1614 = vmatpush1.bf16.msra.mxu0 0
      %1615 = vmatprep.subr.bf16.mxu0 0
      %1616 = vmatpush1.bf16.msra.mxu0 0
      %1617 = vmatprep.subr.bf16.mxu0 0
      %1618 = vmatpush1.bf16.msra.mxu0 0
      %1619 = vmatprep.subr.bf16.mxu0 0
      %1620 = vmatpush1.bf16.msra.mxu0 0
      %1621 = vmatprep.subr.bf16.mxu0 0
      %1622 = vmatpush1.bf16.msra.mxu0 0
      %1623 = vmatprep.subr.bf16.mxu0 0
      %1624 = vmatpush1.bf16.msra.mxu0 0
      %1625 = vmatprep.subr.bf16.mxu0 0
      %1626 = vmatpush1.bf16.msra.mxu0 0
      %1627 = vmatprep.mubr.bf16.mxu0 0
      %1628 = vmatmul.mubr.bf16.gmra.mrb[0].mxu0 %v1584
      %v1629 = vpop.f32.mrb[0].mxu0
      %v1630 = vadd.f32 0.0, %v1629
      %v1631 = vpop.f32.mrb[0].mxu0
      %v1632 = vpop.f32.mrb[0].mxu0
      %v1633 = vadd.f32 0.0, %v1632
      %v1634 = vpop.f32.mrb[0].mxu0
      %1635 = vmatprep.mubr.bf16.mxu0 0
      %1636 = vmatmul.mubr.bf16.gmra.mrb[0].mxu0 %v1587
      %v1637 = vpop.f32.mrb[0].mxu0
      %v1638 = vadd.f32 0.0, %v1637
      %v1639 = vpop.f32.mrb[0].mxu0
      %v1640 = vpop.f32.mrb[0].mxu0
      %v1641 = vadd.f32 0.0, %v1640
      %v1642 = vpop.f32.mrb[0].mxu0
      %1643 = vmatprep.mubr.bf16.mxu0 0
      %1644 = vmatmul.mubr.bf16.gmra.mrb[0].mxu0 %v1590
      %v1645 = vpop.f32.mrb[0].mxu0
      %v1646 = vadd.f32 0.0, %v1645
      %v1647 = vpop.f32.mrb[0].mxu0
      %v1648 = vpop.f32.mrb[0].mxu0
      %v1649 = vadd.f32 0.0, %v1648
      %v1650 = vpop.f32.mrb[0].mxu0
      %1651 = vmatprep.mubr.bf16.mxu0 0
      %1652 = vmatmul.mubr.bf16.gmra.mrb[0].mxu0 %v1593
      %v1653 = vpop.f32.mrb[0].mxu0
      %v1654 = vadd.f32 0.0, %v1653
      %v1655 = vpop.f32.mrb[0].mxu0
      %v1656 = vpop.f32.mrb[0].mxu0
      %v1657 = vadd.f32 0.0, %v1656
      %v1658 = vpop.f32.mrb[0].mxu0
      %1659 = vdwg.mxu0
      %v1660 = vadd.f32 %v1521, %v1630
      %v1661 = vadd.f32 %v1522, %v1633
      %v1662 = vadd.f32 %v1523, %v1638
      %v1663 = vadd.f32 %v1524, %v1641
      %v1664 = vadd.f32 %v1525, %v1646
      %v1665 = vadd.f32 %v1526, %v1649
      %v1666 = vadd.f32 %v1527, %v1654
      %v1667 = vadd.f32 %v1528, %v1657
      %s1668 = scalar_lea.vmem %s1, 256
      %v1669 = vld [vmem:[%s1668] sm:$0xf]
      %v1670 = vld [vmem:[%s1668 + $0x4] sm:$0xf]
      %v1671 = vld [vmem:[%s1668 + $0x8] sm:$0xf]
      %v1672 = vld [vmem:[%s1668 + $0xc] sm:$0xf]
      %v1673 = vld [vmem:[%s1668 + $0x10] sm:$0xf]
      %v1674 = vld [vmem:[%s1668 + $0x14] sm:$0xf]
      %v1675 = vld [vmem:[%s1668 + $0x18] sm:$0xf]
      %v1676 = vld [vmem:[%s1668 + $0x1c] sm:$0xf]
      %v1685 = vunpack.c.l.b16 %v1669
      %v1686 = vunpack.c.l.b16 %v1670
      %v1687 = vunpack.c.l.b16 %v1671
      %v1688 = vunpack.c.l.b16 %v1672
      %v1689 = vunpack.c.l.b16 %v1673
      %v1690 = vunpack.c.l.b16 %v1674
      %v1691 = vunpack.c.l.b16 %v1675
      %v1692 = vunpack.c.l.b16 %v1676
      %v1693 = vpack.c.b16 %v1686, %v1685
      %v1694 = vpack.c.b16 %v1688, %v1687
      %v1695 = vpack.c.b16 %v1690, %v1689
      %v1696 = vpack.c.b16 %v1692, %v1691
      %1697 = vrot.lane.b32.xlu0 %v581, 114
      %v1698 = vpop.permute.xlu0 %1697
      %1699 = vrot.lane.b32.xlu0 %v582, 114
      %v1700 = vpop.permute.xlu0 %1699
      %1701 = vrot.lane.b32.xlu0 %v583, 114
      %v1702 = vpop.permute.xlu0 %1701
      %1703 = vrot.lane.b32.xlu0 %v584, 114
      %v1704 = vpop.permute.xlu0 %1703
      %1705 = vrot.lane.b32.xlu0 %v585, 114
      %v1706 = vpop.permute.xlu0 %1705
      %1707 = vrot.lane.b32.xlu0 %v586, 114
      %v1708 = vpop.permute.xlu0 %1707
      %1709 = vrot.lane.b32.xlu0 %v587, 114
      %v1710 = vpop.permute.xlu0 %1709
      %1711 = vrot.lane.b32.xlu0 %v588, 114
      %v1712 = vpop.permute.xlu0 %1711
      %vm1713 = vcmask 932864
      %v1714 = vsel %vm1713, %v1698, %v1700
      %v1715 = vsel %vm1713, %v1702, %v1704
      %v1716 = vsel %vm1713, %v1706, %v1708
      %v1717 = vsel %vm1713, %v1710, %v1712
      %v1723 = vsel %vm659, %v1693, 0
      %v1726 = vsel %vm659, %v1694, 0
      %v1729 = vsel %vm659, %v1695, 0
      %v1732 = vsel %vm659, %v1696, 0
      %1734 = vmatprep.subr.bf16.mxu0 0
      %1735 = vmatpush1.bf16.msra.mxu0 %v1714
      %1736 = vmatprep.subr.bf16.mxu0 0
      %1737 = vmatpush1.bf16.msra.mxu0 %v1715
      %1738 = vmatprep.subr.bf16.mxu0 0
      %1739 = vmatpush1.bf16.msra.mxu0 %v1716
      %1740 = vmatprep.subr.bf16.mxu0 0
      %1741 = vmatpush1.bf16.msra.mxu0 %v1717
      %1742 = vmatprep.subr.bf16.mxu0 0
      %1743 = vmatpush1.bf16.msra.mxu0 0
      %1744 = vmatprep.subr.bf16.mxu0 0
      %1745 = vmatpush1.bf16.msra.mxu0 0
      %1746 = vmatprep.subr.bf16.mxu0 0
      %1747 = vmatpush1.bf16.msra.mxu0 0
      %1748 = vmatprep.subr.bf16.mxu0 0
      %1749 = vmatpush1.bf16.msra.mxu0 0
      %1750 = vmatprep.subr.bf16.mxu0 0
      %1751 = vmatpush1.bf16.msra.mxu0 0
      %1752 = vmatprep.subr.bf16.mxu0 0
      %1753 = vmatpush1.bf16.msra.mxu0 0
      %1754 = vmatprep.subr.bf16.mxu0 0
      %1755 = vmatpush1.bf16.msra.mxu0 0
      %1756 = vmatprep.subr.bf16.mxu0 0
      %1757 = vmatpush1.bf16.msra.mxu0 0
      %1758 = vmatprep.subr.bf16.mxu0 0
      %1759 = vmatpush1.bf16.msra.mxu0 0
      %1760 = vmatprep.subr.bf16.mxu0 0
      %1761 = vmatpush1.bf16.msra.mxu0 0
      %1762 = vmatprep.subr.bf16.mxu0 0
      %1763 = vmatpush1.bf16.msra.mxu0 0
      %1764 = vmatprep.subr.bf16.mxu0 0
      %1765 = vmatpush1.bf16.msra.mxu0 0
      %1766 = vmatprep.mubr.bf16.mxu0 0
      %1767 = vmatmul.mubr.bf16.gmra.mrb[0].mxu0 %v1723
      %v1768 = vpop.f32.mrb[0].mxu0
      %v1769 = vadd.f32 0.0, %v1768
      %v1770 = vpop.f32.mrb[0].mxu0
      %v1771 = vpop.f32.mrb[0].mxu0
      %v1772 = vadd.f32 0.0, %v1771
      %v1773 = vpop.f32.mrb[0].mxu0
      %1774 = vmatprep.mubr.bf16.mxu0 0
      %1775 = vmatmul.mubr.bf16.gmra.mrb[0].mxu0 %v1726
      %v1776 = vpop.f32.mrb[0].mxu0
      %v1777 = vadd.f32 0.0, %v1776
      %v1778 = vpop.f32.mrb[0].mxu0
      %v1779 = vpop.f32.mrb[0].mxu0
      %v1780 = vadd.f32 0.0, %v1779
      %v1781 = vpop.f32.mrb[0].mxu0
      %1782 = vmatprep.mubr.bf16.mxu0 0
      %1783 = vmatmul.mubr.bf16.gmra.mrb[0].mxu0 %v1729
      %v1784 = vpop.f32.mrb[0].mxu0
      %v1785 = vadd.f32 0.0, %v1784
      %v1786 = vpop.f32.mrb[0].mxu0
      %v1787 = vpop.f32.mrb[0].mxu0
      %v1788 = vadd.f32 0.0, %v1787
      %v1789 = vpop.f32.mrb[0].mxu0
      %1790 = vmatprep.mubr.bf16.mxu0 0
      %1791 = vmatmul.mubr.bf16.gmra.mrb[0].mxu0 %v1732
      %v1792 = vpop.f32.mrb[0].mxu0
      %v1793 = vadd.f32 0.0, %v1792
      %v1794 = vpop.f32.mrb[0].mxu0
      %v1795 = vpop.f32.mrb[0].mxu0
      %v1796 = vadd.f32 0.0, %v1795
      %v1797 = vpop.f32.mrb[0].mxu0
      %1798 = vdwg.mxu0
      %v1799 = vadd.f32 %v1660, %v1769
      %v1800 = vadd.f32 %v1661, %v1772
      %v1801 = vadd.f32 %v1662, %v1777
      %v1802 = vadd.f32 %v1663, %v1780
      %v1803 = vadd.f32 %v1664, %v1785
      %v1804 = vadd.f32 %v1665, %v1788
      %v1805 = vadd.f32 %v1666, %v1793
      %v1806 = vadd.f32 %v1667, %v1796
      %v1807 = vld [vmem:[%s2] sm:$0xff]
      %v1808 = vld [vmem:[%s2 + $0x8] sm:$0xff]
      %v1809 = vld [vmem:[%s2 + $0x10] sm:$0xff]
      %v1810 = vld [vmem:[%s2 + $0x18] sm:$0xff]
      %v1811 = vld [vmem:[%s2 + $0x20] sm:$0xff]
      %v1812 = vld [vmem:[%s2 + $0x28] sm:$0xff]
      %v1813 = vld [vmem:[%s2 + $0x30] sm:$0xff]
      %v1814 = vld [vmem:[%s2 + $0x38] sm:$0xff]
      %1816 = vset.pattern.permute.xlu0 0
      %1817 = vperm.xlu0 %1816, %v1807
      %v1818 = vpop.permute.xlu0 %1817
      %1821 = vset.pattern.permute.xlu0 0
      %1822 = vperm.xlu0 %1821, %v1808
      %v1823 = vpop.permute.xlu0 %1822
      %1826 = vset.pattern.permute.xlu0 0
      %1827 = vperm.xlu0 %1826, %v1809
      %v1828 = vpop.permute.xlu0 %1827
      %1831 = vset.pattern.permute.xlu0 0
      %1832 = vperm.xlu0 %1831, %v1810
      %v1833 = vpop.permute.xlu0 %1832
      %1836 = vset.pattern.permute.xlu0 0
      %1837 = vperm.xlu0 %1836, %v1811
      %v1838 = vpop.permute.xlu0 %1837
      %1841 = vset.pattern.permute.xlu0 0
      %1842 = vperm.xlu0 %1841, %v1812
      %v1843 = vpop.permute.xlu0 %1842
      %1846 = vset.pattern.permute.xlu0 0
      %1847 = vperm.xlu0 %1846, %v1813
      %v1848 = vpop.permute.xlu0 %1847
      %1851 = vset.pattern.permute.xlu0 0
      %1852 = vperm.xlu0 %1851, %v1814
      %v1853 = vpop.permute.xlu0 %1852
      %v1855 = vadd.f32 %v1799, %v1818
      %v1856 = vadd.f32 %v1800, %v1823
      %v1857 = vadd.f32 %v1801, %v1828
      %v1858 = vadd.f32 %v1802, %v1833
      %v1859 = vadd.f32 %v1803, %v1838
      %v1860 = vadd.f32 %v1804, %v1843
      %v1861 = vadd.f32 %v1805, %v1848
      %v1862 = vadd.f32 %v1806, %v1853
      %1863 = vst [vmem:[%s251] sm:$0xff] %v1855
      %1864 = vst [vmem:[%s251 + $0x8] sm:$0xff] %v1856
      %1865 = vst [vmem:[%s251 + $0x10] sm:$0xff] %v1857
      %1866 = vst [vmem:[%s251 + $0x18] sm:$0xff] %v1858
      %1867 = vst [vmem:[%s251 + $0x20] sm:$0xff] %v1859
      %1868 = vst [vmem:[%s251 + $0x28] sm:$0xff] %v1860
      %1869 = vst [vmem:[%s251 + $0x30] sm:$0xff] %v1861
      %1870 = vst [vmem:[%s251 + $0x38] sm:$0xff] %v1862
      %p1871 = scmp.lt.s32.totalorder %s17, 1
      %s1872 = scalar_select %p1871, %s17, 1
      %s1873 = smul.addr %s1872, 8
      %s1874 = smul.addr %s1873, 8
      %s1875 = scalar_lea.vmem %s6, %s1874
      // Predicated region
      $region45: #{s_encoder_forward.21} parent=43 // pred_check
        %p1876 = pneg %p166
      $region46: #{s_encoder_forward.21} parent=43 // pred_check_branch
        %1878 = sbr.rel (%p1876) target = $region48
      $region47: #{s_encoder_forward.21} parent=43 // pred_region
        _
      $region48: #{s_encoder_forward.21} parent=43 // pred_fallthru
        _
    $region44: #{s_encoder_forward.21} parent=5 // pred_fallthru
      _
    %p1879 = scmp.le.s32.totalorder 2, %s12
    // Predicated region
    $region49: #{s_encoder_forward.21} parent=5 // pred_check
      %p1880 = pneg %p1879
    $region50: #{s_encoder_forward.21} parent=5 // pred_check_branch
      %1882 = sbr.rel (%p1880) target = $region52
    $region51: #{s_encoder_forward.21} parent=5 // pred_region
      %s1883 = ssub.s32 %s12, 2
      // Predicated region
      $region53: #{s_encoder_forward.21} parent=51 // pred_check
        %p1884 = pneg %p172
      $region54: #{s_encoder_forward.21} parent=51 // pred_check_branch
        %1886 = sbr.rel (%p1884) target = $region56
      $region55: #{s_encoder_forward.21} parent=51 // pred_region
        %p1887 = scmp.lt.s32.totalorder %s18, 1
        %s1888 = scalar_select %p1887, %s18, 1
        %s1889 = smul.addr %s1888, 8
        %s1890 = smul.addr %s1889, 8
        %s1891 = scalar_lea.vmem %s6, %s1890
      $region56: #{s_encoder_forward.21} parent=51 // pred_fallthru
        _
    $region52: #{s_encoder_forward.21} parent=5 // pred_fallthru
      _
  $region6: #{s_encoder_forward.21} parent=0 // loop_footer
    %s16 = sadd.s32 1, %s12
  $region7: #{s_encoder_forward.21} parent=0 // loop_footer_branch
    %11 = sbr.rel target = $region3
  $region8: #{s_encoder_forward.21} parent=0 // loop_exit
    _

</llo_original>
